<compile_context>
chip_gen: v7x
topology: tpu7x:2x2x1
jax: 0.10.0
libtpu: 0.0.40
codegen_flags: <defaults>
</compile_context>

<pallas_src>
import math
from functools import partial

import jax
import jax.numpy as jnp
from jax.experimental import pallas as pl
from jax.experimental.pallas import tpu as pltpu

# Only affects the pure-JAX reference (the Pallas kernel does not use the MXU):
# makes the reference effectively exact f32 so the tolerance check is meaningful.
jax.config.update("jax_default_matmul_precision", "highest")


# ----------------------------------------------------------------------------- kernel


def _axial_attention_kernel(groups, group_planes, kernel_size, in_planes,
                            w_ref,     # SMEM (2*OP*C,)  folded qkv weights, row-major (channel, c)
                            b_ref,     # SMEM (2*OP,)    folded qkv bias
                            ob_ref,    # SMEM (OP,)      folded bn_output additive term
                            x_ref,     # VMEM (C, K, L)  lane-dense input block
                            qe_ref,    # VMEM (G, gp//2, K, K)  q_emb  * s_qr/s_qk
                            ke_ref,    # VMEM (G, gp//2, K, K)  k_emb^T * s_kr
                            ve_ref,    # VMEM (G, gp,    K, K)  v_emb  * bn_output sve scale
                            out_ref):  # VMEM (OP, K, L)
    G, gp, K, C = groups, group_planes, kernel_size, in_planes
    gpq = gp // 2

    x = x_ref[...]                                      # (C, K, L) f32

    # qkv 1x1 conv (+ every folded BN scale) as exact-f32 VPU broadcast-MACs: the
    # contraction dim C is tiny, so this beats pushing a (2*OP, C) matmul through
    # a mostly-idle MXU, and it directly yields the (K, L) planes the attention
    # math wants (no post-matmul lane-splitting relayout).
    def project(ch):
        acc = w_ref[ch * C] * x[0]
        for c in range(1, C):
            acc = acc + w_ref[ch * C + c] * x[c]
        return acc + b_ref[ch]                           # (K, L)

    for g in range(G):                                   # G is small; unrolled
        base = g * 2 * gp
        q = [project(base + c) for c in range(gpq)]            # qk-scale folded in
        k = [project(base + gpq + c) for c in range(gpq)]
        v = [project(base + 2 * gpq + c) for c in range(gp)]   # bn_output sv scale folded in

        # Similarity logits, accumulated channel-by-channel so only one
        # (K_i, K_j, L) temporary is live at a time (bounds vreg live ranges).
        logits = None
        for c in range(gpq):
            qc = q[c][:, None, :]                               # (K_i, 1,   L)
            kc = k[c][None, :, :]                               # (1,   K_j, L)
            term = qc * kc                                       # qk  (scale in q)
            term = term + qc * qe_ref[g, c][:, :, None]          # qr  (scale in qe)
            term = term + kc * ke_ref[g, c][:, :, None]          # kr  (scale in ke)
            logits = term if logits is None else logits + term   # (K_i, K_j, L)
        # bn_similarity shifts are constant along j -> they cancel in the softmax.

        # softmax over j; EUP approx reciprocal + one Newton step on the small
        # (K_i, 1, L) denominator keeps it f32-accurate at negligible cost.
        m = jnp.max(logits, axis=1, keepdims=True)
        e = jnp.exp(logits - m)
        s = jnp.sum(e, axis=1, keepdims=True)
        r = pl.reciprocal(s, approx=True)
        r = r * (2.0 - s * r)
        p = e * r                                                # (K_i, K_j, L)

        # Weighted sums + folded bn_output, stored as lane-dense (K, L) planes.
        for c in range(gp):
            ch = g * gp + c
            sv = jnp.sum(p * v[c][None, :, :], axis=1)           # (K_i, L)
            sve = jnp.sum(p * ve_ref[g, c][:, :, None], axis=1)  # (K_i, L)
            out_ref[ch] = (sv + sve + ob_ref[ch]).astype(out_ref.dtype)


def _choose_lane_block(nr):
    # Prefer a lane block that is a multiple of 128 (unmasked full-vreg loads and
    # stores) while keeping >= 2 grid steps so both v7x TensorCores get work;
    # fall back to the whole axis for small problems.
    for lb in (512, 256, 128):
        if nr % lb == 0 and nr // lb >= 2:
            return lb
    return nr


def axial_attention_pallas(x_t, params, *, groups, out_planes, group_planes,
                           kernel_size, lane_block):
    C, K, NR = x_t.shape
    OP = out_planes
    G, gp, gpq = groups, group_planes, group_planes // 2
    L = lane_block
    assert NR % L == 0

    smem_spec = pl.BlockSpec(memory_space=pltpu.MemorySpace.SMEM)

    def const_spec(shape):
        nd = len(shape)
        return pl.BlockSpec(shape, lambda n, _nd=nd: (0,) * _nd)

    grid_spec = pltpu.PrefetchScalarGridSpec(
        num_scalar_prefetch=0,
        grid=(NR // L,),
        in_specs=[
            smem_spec,                                        # folded qkv weights (scalars)
            smem_spec,                                        # folded qkv bias
            smem_spec,                                        # folded output-BN shift
            pl.BlockSpec((C, K, L), lambda n: (0, 0, n)),     # x, lane-dense block
            const_spec((G, gpq, K, K)),                       # q_emb (scales folded)
            const_spec((G, gpq, K, K)),                       # k_emb^T (scales folded)
            const_spec((G, gp, K, K)),                        # v_emb (scales folded)
        ],
        out_specs=pl.BlockSpec((OP, K, L), lambda n: (0, 0, n)),
    )

    kernel = partial(_axial_attention_kernel, groups, group_planes, kernel_size, C)
    return pl.pallas_call(
        kernel,
        out_shape=jax.ShapeDtypeStruct((OP, K, NR), jnp.float32),
        grid_spec=grid_spec,
        compiler_params=pltpu.CompilerParams(
            dimension_semantics=("parallel",)),
    )(params["w_flat"], params["b_eff"], params["out_bias"],
      x_t, params["qe_g"], params["ke_g"], params["ve_g"])


# ----------------------------------------------------------------------------- glue


def _nearest_upsample(x, size):
    # nn.Upsample((size, size), mode='nearest') on the last two dims of a 4D tensor.
    n, c, hin, win = x.shape
    hi = (jnp.arange(size) * hin // size).astype(jnp.int32)
    wi = (jnp.arange(size) * win // size).astype(jnp.int32)
    return x[:, :, hi[:, None], wi[None, :]]


def axial_attention_forward(x, params, *, out_planes, groups, kernel_size,
                            width=False, stride=1):
    # TODO(synk): AvgPool2d for stride > 1 is not implemented (stride == 1 asserted).
    assert stride == 1
    N, d1, d2, d3 = x.shape
    if d1 > d2:
        x = _nearest_upsample(x, kernel_size)
    N, C, H, W = x.shape

    # One XLA-side relayout in, one out (layout plumbing, done once on HBM) so the
    # kernel sees a lane-dense (C, K, N*rows) slab with the attended axis second.
    if width:
        x_t = jnp.transpose(x, (1, 3, 0, 2)).reshape(C, W, N * H)   # attend along W
        K, R = W, H
    else:
        x_t = jnp.transpose(x, (1, 2, 0, 3)).reshape(C, H, N * W)   # attend along H
        K, R = H, W
    assert K == kernel_size
    NR = N * R
    L = _choose_lane_block(NR)

    out_t = axial_attention_pallas(
        x_t, params, groups=groups, out_planes=out_planes,
        group_planes=out_planes // groups, kernel_size=kernel_size,
        lane_block=L)                                               # (OP, K, NR)

    o4 = out_t.reshape(out_planes, K, N, R)
    if width:
        out = jnp.transpose(o4, (2, 0, 3, 1))                       # (N, OP, H, W)
    else:
        out = jnp.transpose(o4, (2, 0, 1, 3))                       # (N, OP, H, W)
    return out


def init_params(key, in_planes, out_planes, groups, kernel_size, eps=1e-5):
    gp = out_planes // groups
    gpq = gp // 2
    G, K = groups, kernel_size
    ks = jax.random.split(key, 8)

    w_qkv = jax.random.normal(ks[0], (2 * out_planes, in_planes),
                              jnp.float32) * math.sqrt(1.0 / in_planes)
    relative = jax.random.normal(ks[1], (2 * gp, 2 * K - 1),
                                 jnp.float32) * math.sqrt(1.0 / gp)

    def bn(kk, n):
        k1, k2, k3, k4 = jax.random.split(kk, 4)
        gamma = 1.0 + 0.1 * jax.random.normal(k1, (n,), jnp.float32)
        beta = 0.1 * jax.random.normal(k2, (n,), jnp.float32)
        mean = 0.1 * jax.random.normal(k3, (n,), jnp.float32)
        var = jax.random.uniform(k4, (n,), jnp.float32, 0.5, 1.5)
        scale = gamma / jnp.sqrt(var + eps)
        shift = beta - mean * scale
        return scale, shift

    qkv_s, qkv_b = bn(ks[2], 2 * out_planes)
    sim_s, sim_b = bn(ks[3], 3 * groups)
    out_s, out_b = bn(ks[4], 2 * out_planes)

    # relative-position embeddings: all_emb[c, i, j] = relative[c, i - j + K - 1]
    idx = (jnp.arange(K)[:, None] - jnp.arange(K)[None, :] + K - 1)
    all_emb = relative[:, idx]
    q_emb = all_emb[:gpq]
    k_emb = all_emb[gpq:gp]
    v_emb = all_emb[gp:]

    # ---- fold every eval-mode BatchNorm into the projection / embeddings ------
    s_qk, s_qr, s_kr = sim_s[:G], sim_s[G:2 * G], sim_s[2 * G:3 * G]
    out_s_sv = out_s[0::2].reshape(G, gp)       # bn_output scale on sv channels
    out_s_sve = out_s[1::2].reshape(G, gp)      # bn_output scale on sve channels

    # per-row extra scale on the qkv projection (channel order per group: q, k, v)
    extra = jnp.concatenate(
        [jnp.concatenate([jnp.full((gpq,), s_qk[g], jnp.float32),   # q rows carry qk scale
                          jnp.ones((gpq,), jnp.float32),            # k rows
                          out_s_sv[g]])                             # v rows carry sv scale
         for g in range(G)])                                        # (2*OP,)

    w_eff = (qkv_s * extra)[:, None] * w_qkv                        # (2*OP, C)
    b_eff = qkv_b * extra                                           # (2*OP,)

    params = dict(
        # raw parameters (used by the pure-JAX reference)
        w_qkv=w_qkv, relative=relative,
        qkv_scale=qkv_s, qkv_shift=qkv_b,
        sim_scale=sim_s, sim_shift=sim_b,
        out_scale=out_s, out_shift=out_b,
        # kernel-ready, BN-folded parameters
        w_flat=w_eff.reshape(-1),                                   # SMEM scalars
        b_eff=b_eff,                                                # SMEM scalars
        out_bias=out_b[0::2] + out_b[1::2],                         # SMEM scalars (OP,)
        # q rows already carry s_qk, so the qr embedding carries s_qr / s_qk
        # (assumes the folded bn_similarity qk scale is nonzero, true here).
        qe_g=(s_qr / s_qk)[:, None, None, None] * q_emb[None],                 # (G, gpq, K, K)
        ke_g=s_kr[:, None, None, None] * jnp.swapaxes(k_emb, 1, 2)[None],      # (G, gpq, K, K)
        ve_g=out_s_sve[:, :, None, None] * v_emb[None],                        # (G, gp, K, K)
    )
    return params


# ----------------------------------------------------------------------------- reference (pure JAX)


def reference_forward(x, params, *, out_planes, groups, kernel_size, width=False):
    gp = out_planes // groups
    N, d1, d2, d3 = x.shape
    if d1 > d2:
        x = _nearest_upsample(x, kernel_size)
    if width:
        x = jnp.transpose(x, (0, 2, 1, 3))
    else:
        x = jnp.transpose(x, (0, 3, 1, 2))
    N, Wn, C, H = x.shape
    xf = x.reshape(N * Wn, C, H)

    qkv = jnp.einsum('oc,bch->boh', params['w_qkv'], xf)
    qkv = params['qkv_scale'][None, :, None] * qkv + params['qkv_shift'][None, :, None]
    qkv = qkv.reshape(N * Wn, groups, 2 * gp, H)
    q, k, v = qkv[:, :, :gp // 2], qkv[:, :, gp // 2:gp], qkv[:, :, gp:]

    idx = (jnp.arange(kernel_size)[:, None] - jnp.arange(kernel_size)[None, :]
           + kernel_size - 1)
    all_emb = params['relative'][:, idx]
    q_emb, k_emb, v_emb = all_emb[:gp // 2], all_emb[gp // 2:gp], all_emb[gp:]

    qr = jnp.einsum('bgci,cij->bgij', q, q_emb)
    kr = jnp.einsum('bgci,cij->bgij', k, k_emb).swapaxes(2, 3)
    qk = jnp.einsum('bgci,bgcj->bgij', q, k)
    stacked = jnp.concatenate([qk, qr, kr], axis=1)
    stacked = (params['sim_scale'][None, :, None, None] * stacked
               + params['sim_shift'][None, :, None, None])
    sim = stacked.reshape(N * Wn, 3, groups, H, H).sum(axis=1)
    sim = jax.nn.softmax(sim, axis=3)

    sv = jnp.einsum('bgij,bgcj->bgci', sim, v)
    sve = jnp.einsum('bgij,cij->bgci', sim, v_emb)
    so = jnp.concatenate([sv, sve], axis=-1).reshape(N * Wn, 2 * out_planes, H)
    so = params['out_scale'][None, :, None] * so + params['out_shift'][None, :, None]
    out = so.reshape(N, Wn, out_planes, 2, H).sum(axis=-2)
    if width:
        out = jnp.transpose(out, (0, 2, 1, 3))
    else:
        out = jnp.transpose(out, (0, 2, 3, 1))
    return out


# ----------------------------------------------------------------------------- main


if __name__ == "__main__":
    # small, consistent configuration: spatial extent == kernel_size
    N, in_planes, spatial = 2, 8, 16
    out_planes, groups, kernel_size = 8, 2, 16

    key = jax.random.PRNGKey(0)
    kx, kp = jax.random.split(key)
    x = jax.random.normal(kx, (N, in_planes, spatial, spatial), jnp.float32)
    params = init_params(kp, in_planes, out_planes, groups, kernel_size)

    for width in (False, True):
        out = axial_attention_forward(x, params, out_planes=out_planes, groups=groups,
                                      kernel_size=kernel_size, width=width, stride=1)
        out = jax.block_until_ready(out)

        ref = reference_forward(x, params, out_planes=out_planes, groups=groups,
                                kernel_size=kernel_size, width=width)
        ref = jax.block_until_ready(ref)

        assert out.shape == (N, out_planes, spatial, spatial), out.shape
        max_err = float(jnp.max(jnp.abs(out - ref)))
        # kernel is exact-f32 except the Newton-refined approx reciprocal; the
        # reference runs at 'highest' matmul precision, so the gap is tiny.
        assert max_err < 2e-3, f"width={width}: mismatch vs reference, max abs err = {max_err}"

    print("KERNEL_OK")
</pallas_src>

<mosaic_0001>
module attributes {stable_mosaic.version = 11 : i64} {
  func.func @_axial_attention_kernel(%arg0: i32, %arg1: memref<128xf32, #tpu.memory_space<smem>>, %arg2: memref<16xf32, #tpu.memory_space<smem>>, %arg3: memref<8xf32, #tpu.memory_space<smem>>, %arg4: memref<8x16x32xf32, #tpu.memory_space<vmem>>, %arg5: memref<2x2x16x16xf32, #tpu.memory_space<vmem>>, %arg6: memref<2x2x16x16xf32, #tpu.memory_space<vmem>>, %arg7: memref<2x4x16x16xf32, #tpu.memory_space<vmem>>, %arg8: memref<8x16x32xf32, #tpu.memory_space<vmem>>) attributes {dimension_semantics = [#tpu.dimension_semantics<parallel>], iteration_bounds = array<i64: 1>, scalar_prefetch = 0 : i64, scratch_operands = 0 : i64, tpu.core_type = #tpu.core_type<tc>, window_params = [{transform_indices = @transform_0, window_bounds = array<i64: 128>}, {transform_indices = @transform_1, window_bounds = array<i64: 16>}, {transform_indices = @transform_2, window_bounds = array<i64: 8>}, {transform_indices = @transform_3, window_bounds = array<i64: 8, 16, 32>}, {pipeline_mode = #tpu.pipeline_mode<synchronous>, transform_indices = @transform_4, window_bounds = array<i64: 2, 2, 16, 16>}, {pipeline_mode = #tpu.pipeline_mode<synchronous>, transform_indices = @transform_5, window_bounds = array<i64: 2, 2, 16, 16>}, {pipeline_mode = #tpu.pipeline_mode<synchronous>, transform_indices = @transform_6, window_bounds = array<i64: 2, 4, 16, 16>}, {transform_indices = @transform_7, window_bounds = array<i64: 8, 16, 32>}]} {
    %c0 = arith.constant 0 : index
    %c0_0 = arith.constant 0 : index
    %c0_1 = arith.constant 0 : index
    %0 = vector.load %arg4[%c0, %c0_0, %c0_1] : memref<8x16x32xf32, #tpu.memory_space<vmem>>, vector<8x16x32xf32>
    %c0_2 = arith.constant 0 : index
    %1 = memref.load %arg1[%c0_2] : memref<128xf32, #tpu.memory_space<smem>>
    %2 = vector.extract_strided_slice %0 {offsets = [0, 0, 0], sizes = [1, 16, 32], strides = [1, 1, 1]} : vector<8x16x32xf32> to vector<1x16x32xf32>
    %3 = vector.shape_cast %2 : vector<1x16x32xf32> to vector<16x32xf32>
    %4 = vector.broadcast %1 : f32 to vector<16x32xf32>
    %5 = arith.mulf %4, %3 : vector<16x32xf32>
    %c1 = arith.constant 1 : index
    %6 = memref.load %arg1[%c1] : memref<128xf32, #tpu.memory_space<smem>>
    %7 = vector.extract_strided_slice %0 {offsets = [1, 0, 0], sizes = [1, 16, 32], strides = [1, 1, 1]} : vector<8x16x32xf32> to vector<1x16x32xf32>
    %8 = vector.shape_cast %7 : vector<1x16x32xf32> to vector<16x32xf32>
    %9 = vector.broadcast %6 : f32 to vector<16x32xf32>
    %10 = arith.mulf %9, %8 : vector<16x32xf32>
    %11 = arith.addf %5, %10 : vector<16x32xf32>
    %c2 = arith.constant 2 : index
    %12 = memref.load %arg1[%c2] : memref<128xf32, #tpu.memory_space<smem>>
    %13 = vector.extract_strided_slice %0 {offsets = [2, 0, 0], sizes = [1, 16, 32], strides = [1, 1, 1]} : vector<8x16x32xf32> to vector<1x16x32xf32>
    %14 = vector.shape_cast %13 : vector<1x16x32xf32> to vector<16x32xf32>
    %15 = vector.broadcast %12 : f32 to vector<16x32xf32>
    %16 = arith.mulf %15, %14 : vector<16x32xf32>
    %17 = arith.addf %11, %16 : vector<16x32xf32>
    %c3 = arith.constant 3 : index
    %18 = memref.load %arg1[%c3] : memref<128xf32, #tpu.memory_space<smem>>
    %19 = vector.extract_strided_slice %0 {offsets = [3, 0, 0], sizes = [1, 16, 32], strides = [1, 1, 1]} : vector<8x16x32xf32> to vector<1x16x32xf32>
    %20 = vector.shape_cast %19 : vector<1x16x32xf32> to vector<16x32xf32>
    %21 = vector.broadcast %18 : f32 to vector<16x32xf32>
    %22 = arith.mulf %21, %20 : vector<16x32xf32>
    %23 = arith.addf %17, %22 : vector<16x32xf32>
    %c4 = arith.constant 4 : index
    %24 = memref.load %arg1[%c4] : memref<128xf32, #tpu.memory_space<smem>>
    %25 = vector.extract_strided_slice %0 {offsets = [4, 0, 0], sizes = [1, 16, 32], strides = [1, 1, 1]} : vector<8x16x32xf32> to vector<1x16x32xf32>
    %26 = vector.shape_cast %25 : vector<1x16x32xf32> to vector<16x32xf32>
    %27 = vector.broadcast %24 : f32 to vector<16x32xf32>
    %28 = arith.mulf %27, %26 : vector<16x32xf32>
    %29 = arith.addf %23, %28 : vector<16x32xf32>
    %c5 = arith.constant 5 : index
    %30 = memref.load %arg1[%c5] : memref<128xf32, #tpu.memory_space<smem>>
    %31 = vector.extract_strided_slice %0 {offsets = [5, 0, 0], sizes = [1, 16, 32], strides = [1, 1, 1]} : vector<8x16x32xf32> to vector<1x16x32xf32>
    %32 = vector.shape_cast %31 : vector<1x16x32xf32> to vector<16x32xf32>
    %33 = vector.broadcast %30 : f32 to vector<16x32xf32>
    %34 = arith.mulf %33, %32 : vector<16x32xf32>
    %35 = arith.addf %29, %34 : vector<16x32xf32>
    %c6 = arith.constant 6 : index
    %36 = memref.load %arg1[%c6] : memref<128xf32, #tpu.memory_space<smem>>
    %37 = vector.extract_strided_slice %0 {offsets = [6, 0, 0], sizes = [1, 16, 32], strides = [1, 1, 1]} : vector<8x16x32xf32> to vector<1x16x32xf32>
    %38 = vector.shape_cast %37 : vector<1x16x32xf32> to vector<16x32xf32>
    %39 = vector.broadcast %36 : f32 to vector<16x32xf32>
    %40 = arith.mulf %39, %38 : vector<16x32xf32>
    %41 = arith.addf %35, %40 : vector<16x32xf32>
    %c7 = arith.constant 7 : index
    %42 = memref.load %arg1[%c7] : memref<128xf32, #tpu.memory_space<smem>>
    %43 = vector.extract_strided_slice %0 {offsets = [7, 0, 0], sizes = [1, 16, 32], strides = [1, 1, 1]} : vector<8x16x32xf32> to vector<1x16x32xf32>
    %44 = vector.shape_cast %43 : vector<1x16x32xf32> to vector<16x32xf32>
    %45 = vector.broadcast %42 : f32 to vector<16x32xf32>
    %46 = arith.mulf %45, %44 : vector<16x32xf32>
    %47 = arith.addf %41, %46 : vector<16x32xf32>
    %c0_3 = arith.constant 0 : index
    %48 = memref.load %arg2[%c0_3] : memref<16xf32, #tpu.memory_space<smem>>
    %49 = vector.broadcast %48 : f32 to vector<16x32xf32>
    %50 = arith.addf %47, %49 : vector<16x32xf32>
    %c8 = arith.constant 8 : index
    %51 = memref.load %arg1[%c8] : memref<128xf32, #tpu.memory_space<smem>>
    %52 = vector.extract_strided_slice %0 {offsets = [0, 0, 0], sizes = [1, 16, 32], strides = [1, 1, 1]} : vector<8x16x32xf32> to vector<1x16x32xf32>
    %53 = vector.shape_cast %52 : vector<1x16x32xf32> to vector<16x32xf32>
    %54 = vector.broadcast %51 : f32 to vector<16x32xf32>
    %55 = arith.mulf %54, %53 : vector<16x32xf32>
    %c9 = arith.constant 9 : index
    %56 = memref.load %arg1[%c9] : memref<128xf32, #tpu.memory_space<smem>>
    %57 = vector.extract_strided_slice %0 {offsets = [1, 0, 0], sizes = [1, 16, 32], strides = [1, 1, 1]} : vector<8x16x32xf32> to vector<1x16x32xf32>
    %58 = vector.shape_cast %57 : vector<1x16x32xf32> to vector<16x32xf32>
    %59 = vector.broadcast %56 : f32 to vector<16x32xf32>
    %60 = arith.mulf %59, %58 : vector<16x32xf32>
    %61 = arith.addf %55, %60 : vector<16x32xf32>
    %c10 = arith.constant 10 : index
    %62 = memref.load %arg1[%c10] : memref<128xf32, #tpu.memory_space<smem>>
    %63 = vector.extract_strided_slice %0 {offsets = [2, 0, 0], sizes = [1, 16, 32], strides = [1, 1, 1]} : vector<8x16x32xf32> to vector<1x16x32xf32>
    %64 = vector.shape_cast %63 : vector<1x16x32xf32> to vector<16x32xf32>
    %65 = vector.broadcast %62 : f32 to vector<16x32xf32>
    %66 = arith.mulf %65, %64 : vector<16x32xf32>
    %67 = arith.addf %61, %66 : vector<16x32xf32>
    %c11 = arith.constant 11 : index
    %68 = memref.load %arg1[%c11] : memref<128xf32, #tpu.memory_space<smem>>
    %69 = vector.extract_strided_slice %0 {offsets = [3, 0, 0], sizes = [1, 16, 32], strides = [1, 1, 1]} : vector<8x16x32xf32> to vector<1x16x32xf32>
    %70 = vector.shape_cast %69 : vector<1x16x32xf32> to vector<16x32xf32>
    %71 = vector.broadcast %68 : f32 to vector<16x32xf32>
    %72 = arith.mulf %71, %70 : vector<16x32xf32>
    %73 = arith.addf %67, %72 : vector<16x32xf32>
    %c12 = arith.constant 12 : index
    %74 = memref.load %arg1[%c12] : memref<128xf32, #tpu.memory_space<smem>>
    %75 = vector.extract_strided_slice %0 {offsets = [4, 0, 0], sizes = [1, 16, 32], strides = [1, 1, 1]} : vector<8x16x32xf32> to vector<1x16x32xf32>
    %76 = vector.shape_cast %75 : vector<1x16x32xf32> to vector<16x32xf32>
    %77 = vector.broadcast %74 : f32 to vector<16x32xf32>
    %78 = arith.mulf %77, %76 : vector<16x32xf32>
    %79 = arith.addf %73, %78 : vector<16x32xf32>
    %c13 = arith.constant 13 : index
    %80 = memref.load %arg1[%c13] : memref<128xf32, #tpu.memory_space<smem>>
    %81 = vector.extract_strided_slice %0 {offsets = [5, 0, 0], sizes = [1, 16, 32], strides = [1, 1, 1]} : vector<8x16x32xf32> to vector<1x16x32xf32>
    %82 = vector.shape_cast %81 : vector<1x16x32xf32> to vector<16x32xf32>
    %83 = vector.broadcast %80 : f32 to vector<16x32xf32>
    %84 = arith.mulf %83, %82 : vector<16x32xf32>
    %85 = arith.addf %79, %84 : vector<16x32xf32>
    %c14 = arith.constant 14 : index
    %86 = memref.load %arg1[%c14] : memref<128xf32, #tpu.memory_space<smem>>
    %87 = vector.extract_strided_slice %0 {offsets = [6, 0, 0], sizes = [1, 16, 32], strides = [1, 1, 1]} : vector<8x16x32xf32> to vector<1x16x32xf32>
    %88 = vector.shape_cast %87 : vector<1x16x32xf32> to vector<16x32xf32>
    %89 = vector.broadcast %86 : f32 to vector<16x32xf32>
    %90 = arith.mulf %89, %88 : vector<16x32xf32>
    %91 = arith.addf %85, %90 : vector<16x32xf32>
    %c15 = arith.constant 15 : index
    %92 = memref.load %arg1[%c15] : memref<128xf32, #tpu.memory_space<smem>>
    %93 = vector.extract_strided_slice %0 {offsets = [7, 0, 0], sizes = [1, 16, 32], strides = [1, 1, 1]} : vector<8x16x32xf32> to vector<1x16x32xf32>
    %94 = vector.shape_cast %93 : vector<1x16x32xf32> to vector<16x32xf32>
    %95 = vector.broadcast %92 : f32 to vector<16x32xf32>
    %96 = arith.mulf %95, %94 : vector<16x32xf32>
    %97 = arith.addf %91, %96 : vector<16x32xf32>
    %c1_4 = arith.constant 1 : index
    %98 = memref.load %arg2[%c1_4] : memref<16xf32, #tpu.memory_space<smem>>
    %99 = vector.broadcast %98 : f32 to vector<16x32xf32>
    %100 = arith.addf %97, %99 : vector<16x32xf32>
    %c16 = arith.constant 16 : index
    %101 = memref.load %arg1[%c16] : memref<128xf32, #tpu.memory_space<smem>>
    %102 = vector.extract_strided_slice %0 {offsets = [0, 0, 0], sizes = [1, 16, 32], strides = [1, 1, 1]} : vector<8x16x32xf32> to vector<1x16x32xf32>
    %103 = vector.shape_cast %102 : vector<1x16x32xf32> to vector<16x32xf32>
    %104 = vector.broadcast %101 : f32 to vector<16x32xf32>
    %105 = arith.mulf %104, %103 : vector<16x32xf32>
    %c17 = arith.constant 17 : index
    %106 = memref.load %arg1[%c17] : memref<128xf32, #tpu.memory_space<smem>>
    %107 = vector.extract_strided_slice %0 {offsets = [1, 0, 0], sizes = [1, 16, 32], strides = [1, 1, 1]} : vector<8x16x32xf32> to vector<1x16x32xf32>
    %108 = vector.shape_cast %107 : vector<1x16x32xf32> to vector<16x32xf32>
    %109 = vector.broadcast %106 : f32 to vector<16x32xf32>
    %110 = arith.mulf %109, %108 : vector<16x32xf32>
    %111 = arith.addf %105, %110 : vector<16x32xf32>
    %c18 = arith.constant 18 : index
    %112 = memref.load %arg1[%c18] : memref<128xf32, #tpu.memory_space<smem>>
    %113 = vector.extract_strided_slice %0 {offsets = [2, 0, 0], sizes = [1, 16, 32], strides = [1, 1, 1]} : vector<8x16x32xf32> to vector<1x16x32xf32>
    %114 = vector.shape_cast %113 : vector<1x16x32xf32> to vector<16x32xf32>
    %115 = vector.broadcast %112 : f32 to vector<16x32xf32>
    %116 = arith.mulf %115, %114 : vector<16x32xf32>
    %117 = arith.addf %111, %116 : vector<16x32xf32>
    %c19 = arith.constant 19 : index
    %118 = memref.load %arg1[%c19] : memref<128xf32, #tpu.memory_space<smem>>
    %119 = vector.extract_strided_slice %0 {offsets = [3, 0, 0], sizes = [1, 16, 32], strides = [1, 1, 1]} : vector<8x16x32xf32> to vector<1x16x32xf32>
    %120 = vector.shape_cast %119 : vector<1x16x32xf32> to vector<16x32xf32>
    %121 = vector.broadcast %118 : f32 to vector<16x32xf32>
    %122 = arith.mulf %121, %120 : vector<16x32xf32>
    %123 = arith.addf %117, %122 : vector<16x32xf32>
    %c20 = arith.constant 20 : index
    %124 = memref.load %arg1[%c20] : memref<128xf32, #tpu.memory_space<smem>>
    %125 = vector.extract_strided_slice %0 {offsets = [4, 0, 0], sizes = [1, 16, 32], strides = [1, 1, 1]} : vector<8x16x32xf32> to vector<1x16x32xf32>
    %126 = vector.shape_cast %125 : vector<1x16x32xf32> to vector<16x32xf32>
    %127 = vector.broadcast %124 : f32 to vector<16x32xf32>
    %128 = arith.mulf %127, %126 : vector<16x32xf32>
    %129 = arith.addf %123, %128 : vector<16x32xf32>
    %c21 = arith.constant 21 : index
    %130 = memref.load %arg1[%c21] : memref<128xf32, #tpu.memory_space<smem>>
    %131 = vector.extract_strided_slice %0 {offsets = [5, 0, 0], sizes = [1, 16, 32], strides = [1, 1, 1]} : vector<8x16x32xf32> to vector<1x16x32xf32>
    %132 = vector.shape_cast %131 : vector<1x16x32xf32> to vector<16x32xf32>
    %133 = vector.broadcast %130 : f32 to vector<16x32xf32>
    %134 = arith.mulf %133, %132 : vector<16x32xf32>
    %135 = arith.addf %129, %134 : vector<16x32xf32>
    %c22 = arith.constant 22 : index
    %136 = memref.load %arg1[%c22] : memref<128xf32, #tpu.memory_space<smem>>
    %137 = vector.extract_strided_slice %0 {offsets = [6, 0, 0], sizes = [1, 16, 32], strides = [1, 1, 1]} : vector<8x16x32xf32> to vector<1x16x32xf32>
    %138 = vector.shape_cast %137 : vector<1x16x32xf32> to vector<16x32xf32>
    %139 = vector.broadcast %136 : f32 to vector<16x32xf32>
    %140 = arith.mulf %139, %138 : vector<16x32xf32>
    %141 = arith.addf %135, %140 : vector<16x32xf32>
    %c23 = arith.constant 23 : index
    %142 = memref.load %arg1[%c23] : memref<128xf32, #tpu.memory_space<smem>>
    %143 = vector.extract_strided_slice %0 {offsets = [7, 0, 0], sizes = [1, 16, 32], strides = [1, 1, 1]} : vector<8x16x32xf32> to vector<1x16x32xf32>
    %144 = vector.shape_cast %143 : vector<1x16x32xf32> to vector<16x32xf32>
    %145 = vector.broadcast %142 : f32 to vector<16x32xf32>
    %146 = arith.mulf %145, %144 : vector<16x32xf32>
    %147 = arith.addf %141, %146 : vector<16x32xf32>
    %c2_5 = arith.constant 2 : index
    %148 = memref.load %arg2[%c2_5] : memref<16xf32, #tpu.memory_space<smem>>
    %149 = vector.broadcast %148 : f32 to vector<16x32xf32>
    %150 = arith.addf %147, %149 : vector<16x32xf32>
    %c24 = arith.constant 24 : index
    %151 = memref.load %arg1[%c24] : memref<128xf32, #tpu.memory_space<smem>>
    %152 = vector.extract_strided_slice %0 {offsets = [0, 0, 0], sizes = [1, 16, 32], strides = [1, 1, 1]} : vector<8x16x32xf32> to vector<1x16x32xf32>
    %153 = vector.shape_cast %152 : vector<1x16x32xf32> to vector<16x32xf32>
    %154 = vector.broadcast %151 : f32 to vector<16x32xf32>
    %155 = arith.mulf %154, %153 : vector<16x32xf32>
    %c25 = arith.constant 25 : index
    %156 = memref.load %arg1[%c25] : memref<128xf32, #tpu.memory_space<smem>>
    %157 = vector.extract_strided_slice %0 {offsets = [1, 0, 0], sizes = [1, 16, 32], strides = [1, 1, 1]} : vector<8x16x32xf32> to vector<1x16x32xf32>
    %158 = vector.shape_cast %157 : vector<1x16x32xf32> to vector<16x32xf32>
    %159 = vector.broadcast %156 : f32 to vector<16x32xf32>
    %160 = arith.mulf %159, %158 : vector<16x32xf32>
    %161 = arith.addf %155, %160 : vector<16x32xf32>
    %c26 = arith.constant 26 : index
    %162 = memref.load %arg1[%c26] : memref<128xf32, #tpu.memory_space<smem>>
    %163 = vector.extract_strided_slice %0 {offsets = [2, 0, 0], sizes = [1, 16, 32], strides = [1, 1, 1]} : vector<8x16x32xf32> to vector<1x16x32xf32>
    %164 = vector.shape_cast %163 : vector<1x16x32xf32> to vector<16x32xf32>
    %165 = vector.broadcast %162 : f32 to vector<16x32xf32>
    %166 = arith.mulf %165, %164 : vector<16x32xf32>
    %167 = arith.addf %161, %166 : vector<16x32xf32>
    %c27 = arith.constant 27 : index
    %168 = memref.load %arg1[%c27] : memref<128xf32, #tpu.memory_space<smem>>
    %169 = vector.extract_strided_slice %0 {offsets = [3, 0, 0], sizes = [1, 16, 32], strides = [1, 1, 1]} : vector<8x16x32xf32> to vector<1x16x32xf32>
    %170 = vector.shape_cast %169 : vector<1x16x32xf32> to vector<16x32xf32>
    %171 = vector.broadcast %168 : f32 to vector<16x32xf32>
    %172 = arith.mulf %171, %170 : vector<16x32xf32>
    %173 = arith.addf %167, %172 : vector<16x32xf32>
    %c28 = arith.constant 28 : index
    %174 = memref.load %arg1[%c28] : memref<128xf32, #tpu.memory_space<smem>>
    %175 = vector.extract_strided_slice %0 {offsets = [4, 0, 0], sizes = [1, 16, 32], strides = [1, 1, 1]} : vector<8x16x32xf32> to vector<1x16x32xf32>
    %176 = vector.shape_cast %175 : vector<1x16x32xf32> to vector<16x32xf32>
    %177 = vector.broadcast %174 : f32 to vector<16x32xf32>
    %178 = arith.mulf %177, %176 : vector<16x32xf32>
    %179 = arith.addf %173, %178 : vector<16x32xf32>
    %c29 = arith.constant 29 : index
    %180 = memref.load %arg1[%c29] : memref<128xf32, #tpu.memory_space<smem>>
    %181 = vector.extract_strided_slice %0 {offsets = [5, 0, 0], sizes = [1, 16, 32], strides = [1, 1, 1]} : vector<8x16x32xf32> to vector<1x16x32xf32>
    %182 = vector.shape_cast %181 : vector<1x16x32xf32> to vector<16x32xf32>
    %183 = vector.broadcast %180 : f32 to vector<16x32xf32>
    %184 = arith.mulf %183, %182 : vector<16x32xf32>
    %185 = arith.addf %179, %184 : vector<16x32xf32>
    %c30 = arith.constant 30 : index
    %186 = memref.load %arg1[%c30] : memref<128xf32, #tpu.memory_space<smem>>
    %187 = vector.extract_strided_slice %0 {offsets = [6, 0, 0], sizes = [1, 16, 32], strides = [1, 1, 1]} : vector<8x16x32xf32> to vector<1x16x32xf32>
    %188 = vector.shape_cast %187 : vector<1x16x32xf32> to vector<16x32xf32>
    %189 = vector.broadcast %186 : f32 to vector<16x32xf32>
    %190 = arith.mulf %189, %188 : vector<16x32xf32>
    %191 = arith.addf %185, %190 : vector<16x32xf32>
    %c31 = arith.constant 31 : index
    %192 = memref.load %arg1[%c31] : memref<128xf32, #tpu.memory_space<smem>>
    %193 = vector.extract_strided_slice %0 {offsets = [7, 0, 0], sizes = [1, 16, 32], strides = [1, 1, 1]} : vector<8x16x32xf32> to vector<1x16x32xf32>
    %194 = vector.shape_cast %193 : vector<1x16x32xf32> to vector<16x32xf32>
    %195 = vector.broadcast %192 : f32 to vector<16x32xf32>
    %196 = arith.mulf %195, %194 : vector<16x32xf32>
    %197 = arith.addf %191, %196 : vector<16x32xf32>
    %c3_6 = arith.constant 3 : index
    %198 = memref.load %arg2[%c3_6] : memref<16xf32, #tpu.memory_space<smem>>
    %199 = vector.broadcast %198 : f32 to vector<16x32xf32>
    %200 = arith.addf %197, %199 : vector<16x32xf32>
    %c32 = arith.constant 32 : index
    %201 = memref.load %arg1[%c32] : memref<128xf32, #tpu.memory_space<smem>>
    %202 = vector.extract_strided_slice %0 {offsets = [0, 0, 0], sizes = [1, 16, 32], strides = [1, 1, 1]} : vector<8x16x32xf32> to vector<1x16x32xf32>
    %203 = vector.shape_cast %202 : vector<1x16x32xf32> to vector<16x32xf32>
    %204 = vector.broadcast %201 : f32 to vector<16x32xf32>
    %205 = arith.mulf %204, %203 : vector<16x32xf32>
    %c33 = arith.constant 33 : index
    %206 = memref.load %arg1[%c33] : memref<128xf32, #tpu.memory_space<smem>>
    %207 = vector.extract_strided_slice %0 {offsets = [1, 0, 0], sizes = [1, 16, 32], strides = [1, 1, 1]} : vector<8x16x32xf32> to vector<1x16x32xf32>
    %208 = vector.shape_cast %207 : vector<1x16x32xf32> to vector<16x32xf32>
    %209 = vector.broadcast %206 : f32 to vector<16x32xf32>
    %210 = arith.mulf %209, %208 : vector<16x32xf32>
    %211 = arith.addf %205, %210 : vector<16x32xf32>
    %c34 = arith.constant 34 : index
    %212 = memref.load %arg1[%c34] : memref<128xf32, #tpu.memory_space<smem>>
    %213 = vector.extract_strided_slice %0 {offsets = [2, 0, 0], sizes = [1, 16, 32], strides = [1, 1, 1]} : vector<8x16x32xf32> to vector<1x16x32xf32>
    %214 = vector.shape_cast %213 : vector<1x16x32xf32> to vector<16x32xf32>
    %215 = vector.broadcast %212 : f32 to vector<16x32xf32>
    %216 = arith.mulf %215, %214 : vector<16x32xf32>
    %217 = arith.addf %211, %216 : vector<16x32xf32>
    %c35 = arith.constant 35 : index
    %218 = memref.load %arg1[%c35] : memref<128xf32, #tpu.memory_space<smem>>
    %219 = vector.extract_strided_slice %0 {offsets = [3, 0, 0], sizes = [1, 16, 32], strides = [1, 1, 1]} : vector<8x16x32xf32> to vector<1x16x32xf32>
    %220 = vector.shape_cast %219 : vector<1x16x32xf32> to vector<16x32xf32>
    %221 = vector.broadcast %218 : f32 to vector<16x32xf32>
    %222 = arith.mulf %221, %220 : vector<16x32xf32>
    %223 = arith.addf %217, %222 : vector<16x32xf32>
    %c36 = arith.constant 36 : index
    %224 = memref.load %arg1[%c36] : memref<128xf32, #tpu.memory_space<smem>>
    %225 = vector.extract_strided_slice %0 {offsets = [4, 0, 0], sizes = [1, 16, 32], strides = [1, 1, 1]} : vector<8x16x32xf32> to vector<1x16x32xf32>
    %226 = vector.shape_cast %225 : vector<1x16x32xf32> to vector<16x32xf32>
    %227 = vector.broadcast %224 : f32 to vector<16x32xf32>
    %228 = arith.mulf %227, %226 : vector<16x32xf32>
    %229 = arith.addf %223, %228 : vector<16x32xf32>
    %c37 = arith.constant 37 : index
    %230 = memref.load %arg1[%c37] : memref<128xf32, #tpu.memory_space<smem>>
    %231 = vector.extract_strided_slice %0 {offsets = [5, 0, 0], sizes = [1, 16, 32], strides = [1, 1, 1]} : vector<8x16x32xf32> to vector<1x16x32xf32>
    %232 = vector.shape_cast %231 : vector<1x16x32xf32> to vector<16x32xf32>
    %233 = vector.broadcast %230 : f32 to vector<16x32xf32>
    %234 = arith.mulf %233, %232 : vector<16x32xf32>
    %235 = arith.addf %229, %234 : vector<16x32xf32>
    %c38 = arith.constant 38 : index
    %236 = memref.load %arg1[%c38] : memref<128xf32, #tpu.memory_space<smem>>
    %237 = vector.extract_strided_slice %0 {offsets = [6, 0, 0], sizes = [1, 16, 32], strides = [1, 1, 1]} : vector<8x16x32xf32> to vector<1x16x32xf32>
    %238 = vector.shape_cast %237 : vector<1x16x32xf32> to vector<16x32xf32>
    %239 = vector.broadcast %236 : f32 to vector<16x32xf32>
    %240 = arith.mulf %239, %238 : vector<16x32xf32>
    %241 = arith.addf %235, %240 : vector<16x32xf32>
    %c39 = arith.constant 39 : index
    %242 = memref.load %arg1[%c39] : memref<128xf32, #tpu.memory_space<smem>>
    %243 = vector.extract_strided_slice %0 {offsets = [7, 0, 0], sizes = [1, 16, 32], strides = [1, 1, 1]} : vector<8x16x32xf32> to vector<1x16x32xf32>
    %244 = vector.shape_cast %243 : vector<1x16x32xf32> to vector<16x32xf32>
    %245 = vector.broadcast %242 : f32 to vector<16x32xf32>
    %246 = arith.mulf %245, %244 : vector<16x32xf32>
    %247 = arith.addf %241, %246 : vector<16x32xf32>
    %c4_7 = arith.constant 4 : index
    %248 = memref.load %arg2[%c4_7] : memref<16xf32, #tpu.memory_space<smem>>
    %249 = vector.broadcast %248 : f32 to vector<16x32xf32>
    %250 = arith.addf %247, %249 : vector<16x32xf32>
    %c40 = arith.constant 40 : index
    %251 = memref.load %arg1[%c40] : memref<128xf32, #tpu.memory_space<smem>>
    %252 = vector.extract_strided_slice %0 {offsets = [0, 0, 0], sizes = [1, 16, 32], strides = [1, 1, 1]} : vector<8x16x32xf32> to vector<1x16x32xf32>
    %253 = vector.shape_cast %252 : vector<1x16x32xf32> to vector<16x32xf32>
    %254 = vector.broadcast %251 : f32 to vector<16x32xf32>
    %255 = arith.mulf %254, %253 : vector<16x32xf32>
    %c41 = arith.constant 41 : index
    %256 = memref.load %arg1[%c41] : memref<128xf32, #tpu.memory_space<smem>>
    %257 = vector.extract_strided_slice %0 {offsets = [1, 0, 0], sizes = [1, 16, 32], strides = [1, 1, 1]} : vector<8x16x32xf32> to vector<1x16x32xf32>
    %258 = vector.shape_cast %257 : vector<1x16x32xf32> to vector<16x32xf32>
    %259 = vector.broadcast %256 : f32 to vector<16x32xf32>
    %260 = arith.mulf %259, %258 : vector<16x32xf32>
    %261 = arith.addf %255, %260 : vector<16x32xf32>
    %c42 = arith.constant 42 : index
    %262 = memref.load %arg1[%c42] : memref<128xf32, #tpu.memory_space<smem>>
    %263 = vector.extract_strided_slice %0 {offsets = [2, 0, 0], sizes = [1, 16, 32], strides = [1, 1, 1]} : vector<8x16x32xf32> to vector<1x16x32xf32>
    %264 = vector.shape_cast %263 : vector<1x16x32xf32> to vector<16x32xf32>
    %265 = vector.broadcast %262 : f32 to vector<16x32xf32>
    %266 = arith.mulf %265, %264 : vector<16x32xf32>
    %267 = arith.addf %261, %266 : vector<16x32xf32>
    %c43 = arith.constant 43 : index
    %268 = memref.load %arg1[%c43] : memref<128xf32, #tpu.memory_space<smem>>
    %269 = vector.extract_strided_slice %0 {offsets = [3, 0, 0], sizes = [1, 16, 32], strides = [1, 1, 1]} : vector<8x16x32xf32> to vector<1x16x32xf32>
    %270 = vector.shape_cast %269 : vector<1x16x32xf32> to vector<16x32xf32>
    %271 = vector.broadcast %268 : f32 to vector<16x32xf32>
    %272 = arith.mulf %271, %270 : vector<16x32xf32>
    %273 = arith.addf %267, %272 : vector<16x32xf32>
    %c44 = arith.constant 44 : index
    %274 = memref.load %arg1[%c44] : memref<128xf32, #tpu.memory_space<smem>>
    %275 = vector.extract_strided_slice %0 {offsets = [4, 0, 0], sizes = [1, 16, 32], strides = [1, 1, 1]} : vector<8x16x32xf32> to vector<1x16x32xf32>
    %276 = vector.shape_cast %275 : vector<1x16x32xf32> to vector<16x32xf32>
    %277 = vector.broadcast %274 : f32 to vector<16x32xf32>
    %278 = arith.mulf %277, %276 : vector<16x32xf32>
    %279 = arith.addf %273, %278 : vector<16x32xf32>
    %c45 = arith.constant 45 : index
    %280 = memref.load %arg1[%c45] : memref<128xf32, #tpu.memory_space<smem>>
    %281 = vector.extract_strided_slice %0 {offsets = [5, 0, 0], sizes = [1, 16, 32], strides = [1, 1, 1]} : vector<8x16x32xf32> to vector<1x16x32xf32>
    %282 = vector.shape_cast %281 : vector<1x16x32xf32> to vector<16x32xf32>
    %283 = vector.broadcast %280 : f32 to vector<16x32xf32>
    %284 = arith.mulf %283, %282 : vector<16x32xf32>
    %285 = arith.addf %279, %284 : vector<16x32xf32>
    %c46 = arith.constant 46 : index
    %286 = memref.load %arg1[%c46] : memref<128xf32, #tpu.memory_space<smem>>
    %287 = vector.extract_strided_slice %0 {offsets = [6, 0, 0], sizes = [1, 16, 32], strides = [1, 1, 1]} : vector<8x16x32xf32> to vector<1x16x32xf32>
    %288 = vector.shape_cast %287 : vector<1x16x32xf32> to vector<16x32xf32>
    %289 = vector.broadcast %286 : f32 to vector<16x32xf32>
    %290 = arith.mulf %289, %288 : vector<16x32xf32>
    %291 = arith.addf %285, %290 : vector<16x32xf32>
    %c47 = arith.constant 47 : index
    %292 = memref.load %arg1[%c47] : memref<128xf32, #tpu.memory_space<smem>>
    %293 = vector.extract_strided_slice %0 {offsets = [7, 0, 0], sizes = [1, 16, 32], strides = [1, 1, 1]} : vector<8x16x32xf32> to vector<1x16x32xf32>
    %294 = vector.shape_cast %293 : vector<1x16x32xf32> to vector<16x32xf32>
    %295 = vector.broadcast %292 : f32 to vector<16x32xf32>
    %296 = arith.mulf %295, %294 : vector<16x32xf32>
    %297 = arith.addf %291, %296 : vector<16x32xf32>
    %c5_8 = arith.constant 5 : index
    %298 = memref.load %arg2[%c5_8] : memref<16xf32, #tpu.memory_space<smem>>
    %299 = vector.broadcast %298 : f32 to vector<16x32xf32>
    %300 = arith.addf %297, %299 : vector<16x32xf32>
    %c48 = arith.constant 48 : index
    %301 = memref.load %arg1[%c48] : memref<128xf32, #tpu.memory_space<smem>>
    %302 = vector.extract_strided_slice %0 {offsets = [0, 0, 0], sizes = [1, 16, 32], strides = [1, 1, 1]} : vector<8x16x32xf32> to vector<1x16x32xf32>
    %303 = vector.shape_cast %302 : vector<1x16x32xf32> to vector<16x32xf32>
    %304 = vector.broadcast %301 : f32 to vector<16x32xf32>
    %305 = arith.mulf %304, %303 : vector<16x32xf32>
    %c49 = arith.constant 49 : index
    %306 = memref.load %arg1[%c49] : memref<128xf32, #tpu.memory_space<smem>>
    %307 = vector.extract_strided_slice %0 {offsets = [1, 0, 0], sizes = [1, 16, 32], strides = [1, 1, 1]} : vector<8x16x32xf32> to vector<1x16x32xf32>
    %308 = vector.shape_cast %307 : vector<1x16x32xf32> to vector<16x32xf32>
    %309 = vector.broadcast %306 : f32 to vector<16x32xf32>
    %310 = arith.mulf %309, %308 : vector<16x32xf32>
    %311 = arith.addf %305, %310 : vector<16x32xf32>
    %c50 = arith.constant 50 : index
    %312 = memref.load %arg1[%c50] : memref<128xf32, #tpu.memory_space<smem>>
    %313 = vector.extract_strided_slice %0 {offsets = [2, 0, 0], sizes = [1, 16, 32], strides = [1, 1, 1]} : vector<8x16x32xf32> to vector<1x16x32xf32>
    %314 = vector.shape_cast %313 : vector<1x16x32xf32> to vector<16x32xf32>
    %315 = vector.broadcast %312 : f32 to vector<16x32xf32>
    %316 = arith.mulf %315, %314 : vector<16x32xf32>
    %317 = arith.addf %311, %316 : vector<16x32xf32>
    %c51 = arith.constant 51 : index
    %318 = memref.load %arg1[%c51] : memref<128xf32, #tpu.memory_space<smem>>
    %319 = vector.extract_strided_slice %0 {offsets = [3, 0, 0], sizes = [1, 16, 32], strides = [1, 1, 1]} : vector<8x16x32xf32> to vector<1x16x32xf32>
    %320 = vector.shape_cast %319 : vector<1x16x32xf32> to vector<16x32xf32>
    %321 = vector.broadcast %318 : f32 to vector<16x32xf32>
    %322 = arith.mulf %321, %320 : vector<16x32xf32>
    %323 = arith.addf %317, %322 : vector<16x32xf32>
    %c52 = arith.constant 52 : index
    %324 = memref.load %arg1[%c52] : memref<128xf32, #tpu.memory_space<smem>>
    %325 = vector.extract_strided_slice %0 {offsets = [4, 0, 0], sizes = [1, 16, 32], strides = [1, 1, 1]} : vector<8x16x32xf32> to vector<1x16x32xf32>
    %326 = vector.shape_cast %325 : vector<1x16x32xf32> to vector<16x32xf32>
    %327 = vector.broadcast %324 : f32 to vector<16x32xf32>
    %328 = arith.mulf %327, %326 : vector<16x32xf32>
    %329 = arith.addf %323, %328 : vector<16x32xf32>
    %c53 = arith.constant 53 : index
    %330 = memref.load %arg1[%c53] : memref<128xf32, #tpu.memory_space<smem>>
    %331 = vector.extract_strided_slice %0 {offsets = [5, 0, 0], sizes = [1, 16, 32], strides = [1, 1, 1]} : vector<8x16x32xf32> to vector<1x16x32xf32>
    %332 = vector.shape_cast %331 : vector<1x16x32xf32> to vector<16x32xf32>
    %333 = vector.broadcast %330 : f32 to vector<16x32xf32>
    %334 = arith.mulf %333, %332 : vector<16x32xf32>
    %335 = arith.addf %329, %334 : vector<16x32xf32>
    %c54 = arith.constant 54 : index
    %336 = memref.load %arg1[%c54] : memref<128xf32, #tpu.memory_space<smem>>
    %337 = vector.extract_strided_slice %0 {offsets = [6, 0, 0], sizes = [1, 16, 32], strides = [1, 1, 1]} : vector<8x16x32xf32> to vector<1x16x32xf32>
    %338 = vector.shape_cast %337 : vector<1x16x32xf32> to vector<16x32xf32>
    %339 = vector.broadcast %336 : f32 to vector<16x32xf32>
    %340 = arith.mulf %339, %338 : vector<16x32xf32>
    %341 = arith.addf %335, %340 : vector<16x32xf32>
    %c55 = arith.constant 55 : index
    %342 = memref.load %arg1[%c55] : memref<128xf32, #tpu.memory_space<smem>>
    %343 = vector.extract_strided_slice %0 {offsets = [7, 0, 0], sizes = [1, 16, 32], strides = [1, 1, 1]} : vector<8x16x32xf32> to vector<1x16x32xf32>
    %344 = vector.shape_cast %343 : vector<1x16x32xf32> to vector<16x32xf32>
    %345 = vector.broadcast %342 : f32 to vector<16x32xf32>
    %346 = arith.mulf %345, %344 : vector<16x32xf32>
    %347 = arith.addf %341, %346 : vector<16x32xf32>
    %c6_9 = arith.constant 6 : index
    %348 = memref.load %arg2[%c6_9] : memref<16xf32, #tpu.memory_space<smem>>
    %349 = vector.broadcast %348 : f32 to vector<16x32xf32>
    %350 = arith.addf %347, %349 : vector<16x32xf32>
    %c56 = arith.constant 56 : index
    %351 = memref.load %arg1[%c56] : memref<128xf32, #tpu.memory_space<smem>>
    %352 = vector.extract_strided_slice %0 {offsets = [0, 0, 0], sizes = [1, 16, 32], strides = [1, 1, 1]} : vector<8x16x32xf32> to vector<1x16x32xf32>
    %353 = vector.shape_cast %352 : vector<1x16x32xf32> to vector<16x32xf32>
    %354 = vector.broadcast %351 : f32 to vector<16x32xf32>
    %355 = arith.mulf %354, %353 : vector<16x32xf32>
    %c57 = arith.constant 57 : index
    %356 = memref.load %arg1[%c57] : memref<128xf32, #tpu.memory_space<smem>>
    %357 = vector.extract_strided_slice %0 {offsets = [1, 0, 0], sizes = [1, 16, 32], strides = [1, 1, 1]} : vector<8x16x32xf32> to vector<1x16x32xf32>
    %358 = vector.shape_cast %357 : vector<1x16x32xf32> to vector<16x32xf32>
    %359 = vector.broadcast %356 : f32 to vector<16x32xf32>
    %360 = arith.mulf %359, %358 : vector<16x32xf32>
    %361 = arith.addf %355, %360 : vector<16x32xf32>
    %c58 = arith.constant 58 : index
    %362 = memref.load %arg1[%c58] : memref<128xf32, #tpu.memory_space<smem>>
    %363 = vector.extract_strided_slice %0 {offsets = [2, 0, 0], sizes = [1, 16, 32], strides = [1, 1, 1]} : vector<8x16x32xf32> to vector<1x16x32xf32>
    %364 = vector.shape_cast %363 : vector<1x16x32xf32> to vector<16x32xf32>
    %365 = vector.broadcast %362 : f32 to vector<16x32xf32>
    %366 = arith.mulf %365, %364 : vector<16x32xf32>
    %367 = arith.addf %361, %366 : vector<16x32xf32>
    %c59 = arith.constant 59 : index
    %368 = memref.load %arg1[%c59] : memref<128xf32, #tpu.memory_space<smem>>
    %369 = vector.extract_strided_slice %0 {offsets = [3, 0, 0], sizes = [1, 16, 32], strides = [1, 1, 1]} : vector<8x16x32xf32> to vector<1x16x32xf32>
    %370 = vector.shape_cast %369 : vector<1x16x32xf32> to vector<16x32xf32>
    %371 = vector.broadcast %368 : f32 to vector<16x32xf32>
    %372 = arith.mulf %371, %370 : vector<16x32xf32>
    %373 = arith.addf %367, %372 : vector<16x32xf32>
    %c60 = arith.constant 60 : index
    %374 = memref.load %arg1[%c60] : memref<128xf32, #tpu.memory_space<smem>>
    %375 = vector.extract_strided_slice %0 {offsets = [4, 0, 0], sizes = [1, 16, 32], strides = [1, 1, 1]} : vector<8x16x32xf32> to vector<1x16x32xf32>
    %376 = vector.shape_cast %375 : vector<1x16x32xf32> to vector<16x32xf32>
    %377 = vector.broadcast %374 : f32 to vector<16x32xf32>
    %378 = arith.mulf %377, %376 : vector<16x32xf32>
    %379 = arith.addf %373, %378 : vector<16x32xf32>
    %c61 = arith.constant 61 : index
    %380 = memref.load %arg1[%c61] : memref<128xf32, #tpu.memory_space<smem>>
    %381 = vector.extract_strided_slice %0 {offsets = [5, 0, 0], sizes = [1, 16, 32], strides = [1, 1, 1]} : vector<8x16x32xf32> to vector<1x16x32xf32>
    %382 = vector.shape_cast %381 : vector<1x16x32xf32> to vector<16x32xf32>
    %383 = vector.broadcast %380 : f32 to vector<16x32xf32>
    %384 = arith.mulf %383, %382 : vector<16x32xf32>
    %385 = arith.addf %379, %384 : vector<16x32xf32>
    %c62 = arith.constant 62 : index
    %386 = memref.load %arg1[%c62] : memref<128xf32, #tpu.memory_space<smem>>
    %387 = vector.extract_strided_slice %0 {offsets = [6, 0, 0], sizes = [1, 16, 32], strides = [1, 1, 1]} : vector<8x16x32xf32> to vector<1x16x32xf32>
    %388 = vector.shape_cast %387 : vector<1x16x32xf32> to vector<16x32xf32>
    %389 = vector.broadcast %386 : f32 to vector<16x32xf32>
    %390 = arith.mulf %389, %388 : vector<16x32xf32>
    %391 = arith.addf %385, %390 : vector<16x32xf32>
    %c63 = arith.constant 63 : index
    %392 = memref.load %arg1[%c63] : memref<128xf32, #tpu.memory_space<smem>>
    %393 = vector.extract_strided_slice %0 {offsets = [7, 0, 0], sizes = [1, 16, 32], strides = [1, 1, 1]} : vector<8x16x32xf32> to vector<1x16x32xf32>
    %394 = vector.shape_cast %393 : vector<1x16x32xf32> to vector<16x32xf32>
    %395 = vector.broadcast %392 : f32 to vector<16x32xf32>
    %396 = arith.mulf %395, %394 : vector<16x32xf32>
    %397 = arith.addf %391, %396 : vector<16x32xf32>
    %c7_10 = arith.constant 7 : index
    %398 = memref.load %arg2[%c7_10] : memref<16xf32, #tpu.memory_space<smem>>
    %399 = vector.broadcast %398 : f32 to vector<16x32xf32>
    %400 = arith.addf %397, %399 : vector<16x32xf32>
    %401 = vector.shape_cast %50 : vector<16x32xf32> to vector<16x1x32xf32>
    %402 = vector.shape_cast %150 : vector<16x32xf32> to vector<1x16x32xf32>
    %403 = vector.broadcast %401 : vector<16x1x32xf32> to vector<16x16x32xf32>
    %404 = vector.broadcast %402 : vector<1x16x32xf32> to vector<16x16x32xf32>
    %405 = arith.mulf %403, %404 : vector<16x16x32xf32>
    %c0_11 = arith.constant 0 : index
    %c0_12 = arith.constant 0 : index
    %c0_13 = arith.constant 0 : index
    %c0_14 = arith.constant 0 : index
    %406 = vector.load %arg5[%c0_11, %c0_12, %c0_13, %c0_14] : memref<2x2x16x16xf32, #tpu.memory_space<vmem>>, vector<1x1x16x16xf32>
    %407 = vector.shape_cast %406 : vector<1x1x16x16xf32> to vector<16x16xf32>
    %408 = vector.shape_cast %407 : vector<16x16xf32> to vector<16x16x1xf32>
    %409 = vector.broadcast %401 : vector<16x1x32xf32> to vector<16x16x32xf32>
    %410 = vector.broadcast %408 : vector<16x16x1xf32> to vector<16x16x32xf32>
    %411 = arith.mulf %409, %410 : vector<16x16x32xf32>
    %412 = arith.addf %405, %411 : vector<16x16x32xf32>
    %c0_15 = arith.constant 0 : index
    %c0_16 = arith.constant 0 : index
    %c0_17 = arith.constant 0 : index
    %c0_18 = arith.constant 0 : index
    %413 = vector.load %arg6[%c0_15, %c0_16, %c0_17, %c0_18] : memref<2x2x16x16xf32, #tpu.memory_space<vmem>>, vector<1x1x16x16xf32>
    %414 = vector.shape_cast %413 : vector<1x1x16x16xf32> to vector<16x16xf32>
    %415 = vector.shape_cast %414 : vector<16x16xf32> to vector<16x16x1xf32>
    %416 = vector.broadcast %402 : vector<1x16x32xf32> to vector<16x16x32xf32>
    %417 = vector.broadcast %415 : vector<16x16x1xf32> to vector<16x16x32xf32>
    %418 = arith.mulf %416, %417 : vector<16x16x32xf32>
    %419 = arith.addf %412, %418 : vector<16x16x32xf32>
    %420 = vector.shape_cast %100 : vector<16x32xf32> to vector<16x1x32xf32>
    %421 = vector.shape_cast %200 : vector<16x32xf32> to vector<1x16x32xf32>
    %422 = vector.broadcast %420 : vector<16x1x32xf32> to vector<16x16x32xf32>
    %423 = vector.broadcast %421 : vector<1x16x32xf32> to vector<16x16x32xf32>
    %424 = arith.mulf %422, %423 : vector<16x16x32xf32>
    %c0_19 = arith.constant 0 : index
    %c1_20 = arith.constant 1 : index
    %c0_21 = arith.constant 0 : index
    %c0_22 = arith.constant 0 : index
    %425 = vector.load %arg5[%c0_19, %c1_20, %c0_21, %c0_22] : memref<2x2x16x16xf32, #tpu.memory_space<vmem>>, vector<1x1x16x16xf32>
    %426 = vector.shape_cast %425 : vector<1x1x16x16xf32> to vector<16x16xf32>
    %427 = vector.shape_cast %426 : vector<16x16xf32> to vector<16x16x1xf32>
    %428 = vector.broadcast %420 : vector<16x1x32xf32> to vector<16x16x32xf32>
    %429 = vector.broadcast %427 : vector<16x16x1xf32> to vector<16x16x32xf32>
    %430 = arith.mulf %428, %429 : vector<16x16x32xf32>
    %431 = arith.addf %424, %430 : vector<16x16x32xf32>
    %c0_23 = arith.constant 0 : index
    %c1_24 = arith.constant 1 : index
    %c0_25 = arith.constant 0 : index
    %c0_26 = arith.constant 0 : index
    %432 = vector.load %arg6[%c0_23, %c1_24, %c0_25, %c0_26] : memref<2x2x16x16xf32, #tpu.memory_space<vmem>>, vector<1x1x16x16xf32>
    %433 = vector.shape_cast %432 : vector<1x1x16x16xf32> to vector<16x16xf32>
    %434 = vector.shape_cast %433 : vector<16x16xf32> to vector<16x16x1xf32>
    %435 = vector.broadcast %421 : vector<1x16x32xf32> to vector<16x16x32xf32>
    %436 = vector.broadcast %434 : vector<16x16x1xf32> to vector<16x16x32xf32>
    %437 = arith.mulf %435, %436 : vector<16x16x32xf32>
    %438 = arith.addf %431, %437 : vector<16x16x32xf32>
    %439 = arith.addf %419, %438 : vector<16x16x32xf32>
    %cst = arith.constant dense<0xFF800000> : vector<16x32xf32>
    %440 = vector.multi_reduction <maximumf>, %439, %cst [1] : vector<16x16x32xf32> to vector<16x32xf32>
    %441 = vector.shape_cast %440 : vector<16x32xf32> to vector<16x1x32xf32>
    %442 = vector.broadcast %441 : vector<16x1x32xf32> to vector<16x16x32xf32>
    %443 = arith.subf %439, %442 : vector<16x16x32xf32>
    %444 = math.exp %443 : vector<16x16x32xf32>
    %cst_27 = arith.constant dense<0.000000e+00> : vector<16x32xf32>
    %445 = vector.multi_reduction <add>, %444, %cst_27 [1] : vector<16x16x32xf32> to vector<16x32xf32>
    %446 = vector.shape_cast %445 : vector<16x32xf32> to vector<16x1x32xf32>
    %447 = tpu.reciprocal %446 {approx = true} : vector<16x1x32xf32> -> vector<16x1x32xf32>
    %448 = arith.mulf %446, %447 : vector<16x1x32xf32>
    %cst_28 = arith.constant 2.000000e+00 : f32
    %449 = vector.broadcast %cst_28 : f32 to vector<16x1x32xf32>
    %450 = arith.subf %449, %448 : vector<16x1x32xf32>
    %451 = arith.mulf %447, %450 : vector<16x1x32xf32>
    %452 = vector.broadcast %451 : vector<16x1x32xf32> to vector<16x16x32xf32>
    %453 = arith.mulf %444, %452 : vector<16x16x32xf32>
    %454 = vector.shape_cast %250 : vector<16x32xf32> to vector<1x16x32xf32>
    %455 = vector.broadcast %454 : vector<1x16x32xf32> to vector<16x16x32xf32>
    %456 = arith.mulf %453, %455 : vector<16x16x32xf32>
    %cst_29 = arith.constant dense<0.000000e+00> : vector<16x32xf32>
    %457 = vector.multi_reduction <add>, %456, %cst_29 [1] : vector<16x16x32xf32> to vector<16x32xf32>
    %c0_30 = arith.constant 0 : index
    %c0_31 = arith.constant 0 : index
    %c0_32 = arith.constant 0 : index
    %c0_33 = arith.constant 0 : index
    %458 = vector.load %arg7[%c0_30, %c0_31, %c0_32, %c0_33] : memref<2x4x16x16xf32, #tpu.memory_space<vmem>>, vector<1x1x16x16xf32>
    %459 = vector.shape_cast %458 : vector<1x1x16x16xf32> to vector<16x16xf32>
    %460 = vector.shape_cast %459 : vector<16x16xf32> to vector<16x16x1xf32>
    %461 = vector.broadcast %460 : vector<16x16x1xf32> to vector<16x16x32xf32>
    %462 = arith.mulf %453, %461 : vector<16x16x32xf32>
    %cst_34 = arith.constant dense<0.000000e+00> : vector<16x32xf32>
    %463 = vector.multi_reduction <add>, %462, %cst_34 [1] : vector<16x16x32xf32> to vector<16x32xf32>
    %464 = arith.addf %457, %463 : vector<16x32xf32>
    %c0_35 = arith.constant 0 : index
    %465 = memref.load %arg3[%c0_35] : memref<8xf32, #tpu.memory_space<smem>>
    %466 = vector.broadcast %465 : f32 to vector<16x32xf32>
    %467 = arith.addf %464, %466 : vector<16x32xf32>
    %c0_36 = arith.constant 0 : index
    %c0_37 = arith.constant 0 : index
    %c0_38 = arith.constant 0 : index
    %468 = vector.load %arg8[%c0_36, %c0_37, %c0_38] : memref<8x16x32xf32, #tpu.memory_space<vmem>>, vector<1x16x32xf32>
    %469 = vector.shape_cast %468 : vector<1x16x32xf32> to vector<16x32xf32>
    %470 = vector.shape_cast %467 : vector<16x32xf32> to vector<1x16x32xf32>
    tpu.vector_store %arg8[%c0_36, %c0_37, %c0_38], %470 {strides = array<i32>} : memref<8x16x32xf32, #tpu.memory_space<vmem>>, vector<1x16x32xf32>,
    %471 = vector.shape_cast %300 : vector<16x32xf32> to vector<1x16x32xf32>
    %472 = vector.broadcast %471 : vector<1x16x32xf32> to vector<16x16x32xf32>
    %473 = arith.mulf %453, %472 : vector<16x16x32xf32>
    %cst_39 = arith.constant dense<0.000000e+00> : vector<16x32xf32>
    %474 = vector.multi_reduction <add>, %473, %cst_39 [1] : vector<16x16x32xf32> to vector<16x32xf32>
    %c0_40 = arith.constant 0 : index
    %c1_41 = arith.constant 1 : index
    %c0_42 = arith.constant 0 : index
    %c0_43 = arith.constant 0 : index
    %475 = vector.load %arg7[%c0_40, %c1_41, %c0_42, %c0_43] : memref<2x4x16x16xf32, #tpu.memory_space<vmem>>, vector<1x1x16x16xf32>
    %476 = vector.shape_cast %475 : vector<1x1x16x16xf32> to vector<16x16xf32>
    %477 = vector.shape_cast %476 : vector<16x16xf32> to vector<16x16x1xf32>
    %478 = vector.broadcast %477 : vector<16x16x1xf32> to vector<16x16x32xf32>
    %479 = arith.mulf %453, %478 : vector<16x16x32xf32>
    %cst_44 = arith.constant dense<0.000000e+00> : vector<16x32xf32>
    %480 = vector.multi_reduction <add>, %479, %cst_44 [1] : vector<16x16x32xf32> to vector<16x32xf32>
    %481 = arith.addf %474, %480 : vector<16x32xf32>
    %c1_45 = arith.constant 1 : index
    %482 = memref.load %arg3[%c1_45] : memref<8xf32, #tpu.memory_space<smem>>
    %483 = vector.broadcast %482 : f32 to vector<16x32xf32>
    %484 = arith.addf %481, %483 : vector<16x32xf32>
    %c1_46 = arith.constant 1 : index
    %c0_47 = arith.constant 0 : index
    %c0_48 = arith.constant 0 : index
    %485 = vector.load %arg8[%c1_46, %c0_47, %c0_48] : memref<8x16x32xf32, #tpu.memory_space<vmem>>, vector<1x16x32xf32>
    %486 = vector.shape_cast %485 : vector<1x16x32xf32> to vector<16x32xf32>
    %487 = vector.shape_cast %484 : vector<16x32xf32> to vector<1x16x32xf32>
    tpu.vector_store %arg8[%c1_46, %c0_47, %c0_48], %487 {strides = array<i32>} : memref<8x16x32xf32, #tpu.memory_space<vmem>>, vector<1x16x32xf32>,
    %488 = vector.shape_cast %350 : vector<16x32xf32> to vector<1x16x32xf32>
    %489 = vector.broadcast %488 : vector<1x16x32xf32> to vector<16x16x32xf32>
    %490 = arith.mulf %453, %489 : vector<16x16x32xf32>
    %cst_49 = arith.constant dense<0.000000e+00> : vector<16x32xf32>
    %491 = vector.multi_reduction <add>, %490, %cst_49 [1] : vector<16x16x32xf32> to vector<16x32xf32>
    %c0_50 = arith.constant 0 : index
    %c2_51 = arith.constant 2 : index
    %c0_52 = arith.constant 0 : index
    %c0_53 = arith.constant 0 : index
    %492 = vector.load %arg7[%c0_50, %c2_51, %c0_52, %c0_53] : memref<2x4x16x16xf32, #tpu.memory_space<vmem>>, vector<1x1x16x16xf32>
    %493 = vector.shape_cast %492 : vector<1x1x16x16xf32> to vector<16x16xf32>
    %494 = vector.shape_cast %493 : vector<16x16xf32> to vector<16x16x1xf32>
    %495 = vector.broadcast %494 : vector<16x16x1xf32> to vector<16x16x32xf32>
    %496 = arith.mulf %453, %495 : vector<16x16x32xf32>
    %cst_54 = arith.constant dense<0.000000e+00> : vector<16x32xf32>
    %497 = vector.multi_reduction <add>, %496, %cst_54 [1] : vector<16x16x32xf32> to vector<16x32xf32>
    %498 = arith.addf %491, %497 : vector<16x32xf32>
    %c2_55 = arith.constant 2 : index
    %499 = memref.load %arg3[%c2_55] : memref<8xf32, #tpu.memory_space<smem>>
    %500 = vector.broadcast %499 : f32 to vector<16x32xf32>
    %501 = arith.addf %498, %500 : vector<16x32xf32>
    %c2_56 = arith.constant 2 : index
    %c0_57 = arith.constant 0 : index
    %c0_58 = arith.constant 0 : index
    %502 = vector.load %arg8[%c2_56, %c0_57, %c0_58] : memref<8x16x32xf32, #tpu.memory_space<vmem>>, vector<1x16x32xf32>
    %503 = vector.shape_cast %502 : vector<1x16x32xf32> to vector<16x32xf32>
    %504 = vector.shape_cast %501 : vector<16x32xf32> to vector<1x16x32xf32>
    tpu.vector_store %arg8[%c2_56, %c0_57, %c0_58], %504 {strides = array<i32>} : memref<8x16x32xf32, #tpu.memory_space<vmem>>, vector<1x16x32xf32>,
    %505 = vector.shape_cast %400 : vector<16x32xf32> to vector<1x16x32xf32>
    %506 = vector.broadcast %505 : vector<1x16x32xf32> to vector<16x16x32xf32>
    %507 = arith.mulf %453, %506 : vector<16x16x32xf32>
    %cst_59 = arith.constant dense<0.000000e+00> : vector<16x32xf32>
    %508 = vector.multi_reduction <add>, %507, %cst_59 [1] : vector<16x16x32xf32> to vector<16x32xf32>
    %c0_60 = arith.constant 0 : index
    %c3_61 = arith.constant 3 : index
    %c0_62 = arith.constant 0 : index
    %c0_63 = arith.constant 0 : index
    %509 = vector.load %arg7[%c0_60, %c3_61, %c0_62, %c0_63] : memref<2x4x16x16xf32, #tpu.memory_space<vmem>>, vector<1x1x16x16xf32>
    %510 = vector.shape_cast %509 : vector<1x1x16x16xf32> to vector<16x16xf32>
    %511 = vector.shape_cast %510 : vector<16x16xf32> to vector<16x16x1xf32>
    %512 = vector.broadcast %511 : vector<16x16x1xf32> to vector<16x16x32xf32>
    %513 = arith.mulf %453, %512 : vector<16x16x32xf32>
    %cst_64 = arith.constant dense<0.000000e+00> : vector<16x32xf32>
    %514 = vector.multi_reduction <add>, %513, %cst_64 [1] : vector<16x16x32xf32> to vector<16x32xf32>
    %515 = arith.addf %508, %514 : vector<16x32xf32>
    %c3_65 = arith.constant 3 : index
    %516 = memref.load %arg3[%c3_65] : memref<8xf32, #tpu.memory_space<smem>>
    %517 = vector.broadcast %516 : f32 to vector<16x32xf32>
    %518 = arith.addf %515, %517 : vector<16x32xf32>
    %c3_66 = arith.constant 3 : index
    %c0_67 = arith.constant 0 : index
    %c0_68 = arith.constant 0 : index
    %519 = vector.load %arg8[%c3_66, %c0_67, %c0_68] : memref<8x16x32xf32, #tpu.memory_space<vmem>>, vector<1x16x32xf32>
    %520 = vector.shape_cast %519 : vector<1x16x32xf32> to vector<16x32xf32>
    %521 = vector.shape_cast %518 : vector<16x32xf32> to vector<1x16x32xf32>
    tpu.vector_store %arg8[%c3_66, %c0_67, %c0_68], %521 {strides = array<i32>} : memref<8x16x32xf32, #tpu.memory_space<vmem>>, vector<1x16x32xf32>,
    %c64 = arith.constant 64 : index
    %522 = memref.load %arg1[%c64] : memref<128xf32, #tpu.memory_space<smem>>
    %523 = vector.extract_strided_slice %0 {offsets = [0, 0, 0], sizes = [1, 16, 32], strides = [1, 1, 1]} : vector<8x16x32xf32> to vector<1x16x32xf32>
    %524 = vector.shape_cast %523 : vector<1x16x32xf32> to vector<16x32xf32>
    %525 = vector.broadcast %522 : f32 to vector<16x32xf32>
    %526 = arith.mulf %525, %524 : vector<16x32xf32>
    %c65 = arith.constant 65 : index
    %527 = memref.load %arg1[%c65] : memref<128xf32, #tpu.memory_space<smem>>
    %528 = vector.extract_strided_slice %0 {offsets = [1, 0, 0], sizes = [1, 16, 32], strides = [1, 1, 1]} : vector<8x16x32xf32> to vector<1x16x32xf32>
    %529 = vector.shape_cast %528 : vector<1x16x32xf32> to vector<16x32xf32>
    %530 = vector.broadcast %527 : f32 to vector<16x32xf32>
    %531 = arith.mulf %530, %529 : vector<16x32xf32>
    %532 = arith.addf %526, %531 : vector<16x32xf32>
    %c66 = arith.constant 66 : index
    %533 = memref.load %arg1[%c66] : memref<128xf32, #tpu.memory_space<smem>>
    %534 = vector.extract_strided_slice %0 {offsets = [2, 0, 0], sizes = [1, 16, 32], strides = [1, 1, 1]} : vector<8x16x32xf32> to vector<1x16x32xf32>
    %535 = vector.shape_cast %534 : vector<1x16x32xf32> to vector<16x32xf32>
    %536 = vector.broadcast %533 : f32 to vector<16x32xf32>
    %537 = arith.mulf %536, %535 : vector<16x32xf32>
    %538 = arith.addf %532, %537 : vector<16x32xf32>
    %c67 = arith.constant 67 : index
    %539 = memref.load %arg1[%c67] : memref<128xf32, #tpu.memory_space<smem>>
    %540 = vector.extract_strided_slice %0 {offsets = [3, 0, 0], sizes = [1, 16, 32], strides = [1, 1, 1]} : vector<8x16x32xf32> to vector<1x16x32xf32>
    %541 = vector.shape_cast %540 : vector<1x16x32xf32> to vector<16x32xf32>
    %542 = vector.broadcast %539 : f32 to vector<16x32xf32>
    %543 = arith.mulf %542, %541 : vector<16x32xf32>
    %544 = arith.addf %538, %543 : vector<16x32xf32>
    %c68 = arith.constant 68 : index
    %545 = memref.load %arg1[%c68] : memref<128xf32, #tpu.memory_space<smem>>
    %546 = vector.extract_strided_slice %0 {offsets = [4, 0, 0], sizes = [1, 16, 32], strides = [1, 1, 1]} : vector<8x16x32xf32> to vector<1x16x32xf32>
    %547 = vector.shape_cast %546 : vector<1x16x32xf32> to vector<16x32xf32>
    %548 = vector.broadcast %545 : f32 to vector<16x32xf32>
    %549 = arith.mulf %548, %547 : vector<16x32xf32>
    %550 = arith.addf %544, %549 : vector<16x32xf32>
    %c69 = arith.constant 69 : index
    %551 = memref.load %arg1[%c69] : memref<128xf32, #tpu.memory_space<smem>>
    %552 = vector.extract_strided_slice %0 {offsets = [5, 0, 0], sizes = [1, 16, 32], strides = [1, 1, 1]} : vector<8x16x32xf32> to vector<1x16x32xf32>
    %553 = vector.shape_cast %552 : vector<1x16x32xf32> to vector<16x32xf32>
    %554 = vector.broadcast %551 : f32 to vector<16x32xf32>
    %555 = arith.mulf %554, %553 : vector<16x32xf32>
    %556 = arith.addf %550, %555 : vector<16x32xf32>
    %c70 = arith.constant 70 : index
    %557 = memref.load %arg1[%c70] : memref<128xf32, #tpu.memory_space<smem>>
    %558 = vector.extract_strided_slice %0 {offsets = [6, 0, 0], sizes = [1, 16, 32], strides = [1, 1, 1]} : vector<8x16x32xf32> to vector<1x16x32xf32>
    %559 = vector.shape_cast %558 : vector<1x16x32xf32> to vector<16x32xf32>
    %560 = vector.broadcast %557 : f32 to vector<16x32xf32>
    %561 = arith.mulf %560, %559 : vector<16x32xf32>
    %562 = arith.addf %556, %561 : vector<16x32xf32>
    %c71 = arith.constant 71 : index
    %563 = memref.load %arg1[%c71] : memref<128xf32, #tpu.memory_space<smem>>
    %564 = vector.extract_strided_slice %0 {offsets = [7, 0, 0], sizes = [1, 16, 32], strides = [1, 1, 1]} : vector<8x16x32xf32> to vector<1x16x32xf32>
    %565 = vector.shape_cast %564 : vector<1x16x32xf32> to vector<16x32xf32>
    %566 = vector.broadcast %563 : f32 to vector<16x32xf32>
    %567 = arith.mulf %566, %565 : vector<16x32xf32>
    %568 = arith.addf %562, %567 : vector<16x32xf32>
    %c8_69 = arith.constant 8 : index
    %569 = memref.load %arg2[%c8_69] : memref<16xf32, #tpu.memory_space<smem>>
    %570 = vector.broadcast %569 : f32 to vector<16x32xf32>
    %571 = arith.addf %568, %570 : vector<16x32xf32>
    %c72 = arith.constant 72 : index
    %572 = memref.load %arg1[%c72] : memref<128xf32, #tpu.memory_space<smem>>
    %573 = vector.extract_strided_slice %0 {offsets = [0, 0, 0], sizes = [1, 16, 32], strides = [1, 1, 1]} : vector<8x16x32xf32> to vector<1x16x32xf32>
    %574 = vector.shape_cast %573 : vector<1x16x32xf32> to vector<16x32xf32>
    %575 = vector.broadcast %572 : f32 to vector<16x32xf32>
    %576 = arith.mulf %575, %574 : vector<16x32xf32>
    %c73 = arith.constant 73 : index
    %577 = memref.load %arg1[%c73] : memref<128xf32, #tpu.memory_space<smem>>
    %578 = vector.extract_strided_slice %0 {offsets = [1, 0, 0], sizes = [1, 16, 32], strides = [1, 1, 1]} : vector<8x16x32xf32> to vector<1x16x32xf32>
    %579 = vector.shape_cast %578 : vector<1x16x32xf32> to vector<16x32xf32>
    %580 = vector.broadcast %577 : f32 to vector<16x32xf32>
    %581 = arith.mulf %580, %579 : vector<16x32xf32>
    %582 = arith.addf %576, %581 : vector<16x32xf32>
    %c74 = arith.constant 74 : index
    %583 = memref.load %arg1[%c74] : memref<128xf32, #tpu.memory_space<smem>>
    %584 = vector.extract_strided_slice %0 {offsets = [2, 0, 0], sizes = [1, 16, 32], strides = [1, 1, 1]} : vector<8x16x32xf32> to vector<1x16x32xf32>
    %585 = vector.shape_cast %584 : vector<1x16x32xf32> to vector<16x32xf32>
    %586 = vector.broadcast %583 : f32 to vector<16x32xf32>
    %587 = arith.mulf %586, %585 : vector<16x32xf32>
    %588 = arith.addf %582, %587 : vector<16x32xf32>
    %c75 = arith.constant 75 : index
    %589 = memref.load %arg1[%c75] : memref<128xf32, #tpu.memory_space<smem>>
    %590 = vector.extract_strided_slice %0 {offsets = [3, 0, 0], sizes = [1, 16, 32], strides = [1, 1, 1]} : vector<8x16x32xf32> to vector<1x16x32xf32>
    %591 = vector.shape_cast %590 : vector<1x16x32xf32> to vector<16x32xf32>
    %592 = vector.broadcast %589 : f32 to vector<16x32xf32>
    %593 = arith.mulf %592, %591 : vector<16x32xf32>
    %594 = arith.addf %588, %593 : vector<16x32xf32>
    %c76 = arith.constant 76 : index
    %595 = memref.load %arg1[%c76] : memref<128xf32, #tpu.memory_space<smem>>
    %596 = vector.extract_strided_slice %0 {offsets = [4, 0, 0], sizes = [1, 16, 32], strides = [1, 1, 1]} : vector<8x16x32xf32> to vector<1x16x32xf32>
    %597 = vector.shape_cast %596 : vector<1x16x32xf32> to vector<16x32xf32>
    %598 = vector.broadcast %595 : f32 to vector<16x32xf32>
    %599 = arith.mulf %598, %597 : vector<16x32xf32>
    %600 = arith.addf %594, %599 : vector<16x32xf32>
    %c77 = arith.constant 77 : index
    %601 = memref.load %arg1[%c77] : memref<128xf32, #tpu.memory_space<smem>>
    %602 = vector.extract_strided_slice %0 {offsets = [5, 0, 0], sizes = [1, 16, 32], strides = [1, 1, 1]} : vector<8x16x32xf32> to vector<1x16x32xf32>
    %603 = vector.shape_cast %602 : vector<1x16x32xf32> to vector<16x32xf32>
    %604 = vector.broadcast %601 : f32 to vector<16x32xf32>
    %605 = arith.mulf %604, %603 : vector<16x32xf32>
    %606 = arith.addf %600, %605 : vector<16x32xf32>
    %c78 = arith.constant 78 : index
    %607 = memref.load %arg1[%c78] : memref<128xf32, #tpu.memory_space<smem>>
    %608 = vector.extract_strided_slice %0 {offsets = [6, 0, 0], sizes = [1, 16, 32], strides = [1, 1, 1]} : vector<8x16x32xf32> to vector<1x16x32xf32>
    %609 = vector.shape_cast %608 : vector<1x16x32xf32> to vector<16x32xf32>
    %610 = vector.broadcast %607 : f32 to vector<16x32xf32>
    %611 = arith.mulf %610, %609 : vector<16x32xf32>
    %612 = arith.addf %606, %611 : vector<16x32xf32>
    %c79 = arith.constant 79 : index
    %613 = memref.load %arg1[%c79] : memref<128xf32, #tpu.memory_space<smem>>
    %614 = vector.extract_strided_slice %0 {offsets = [7, 0, 0], sizes = [1, 16, 32], strides = [1, 1, 1]} : vector<8x16x32xf32> to vector<1x16x32xf32>
    %615 = vector.shape_cast %614 : vector<1x16x32xf32> to vector<16x32xf32>
    %616 = vector.broadcast %613 : f32 to vector<16x32xf32>
    %617 = arith.mulf %616, %615 : vector<16x32xf32>
    %618 = arith.addf %612, %617 : vector<16x32xf32>
    %c9_70 = arith.constant 9 : index
    %619 = memref.load %arg2[%c9_70] : memref<16xf32, #tpu.memory_space<smem>>
    %620 = vector.broadcast %619 : f32 to vector<16x32xf32>
    %621 = arith.addf %618, %620 : vector<16x32xf32>
    %c80 = arith.constant 80 : index
    %622 = memref.load %arg1[%c80] : memref<128xf32, #tpu.memory_space<smem>>
    %623 = vector.extract_strided_slice %0 {offsets = [0, 0, 0], sizes = [1, 16, 32], strides = [1, 1, 1]} : vector<8x16x32xf32> to vector<1x16x32xf32>
    %624 = vector.shape_cast %623 : vector<1x16x32xf32> to vector<16x32xf32>
    %625 = vector.broadcast %622 : f32 to vector<16x32xf32>
    %626 = arith.mulf %625, %624 : vector<16x32xf32>
    %c81 = arith.constant 81 : index
    %627 = memref.load %arg1[%c81] : memref<128xf32, #tpu.memory_space<smem>>
    %628 = vector.extract_strided_slice %0 {offsets = [1, 0, 0], sizes = [1, 16, 32], strides = [1, 1, 1]} : vector<8x16x32xf32> to vector<1x16x32xf32>
    %629 = vector.shape_cast %628 : vector<1x16x32xf32> to vector<16x32xf32>
    %630 = vector.broadcast %627 : f32 to vector<16x32xf32>
    %631 = arith.mulf %630, %629 : vector<16x32xf32>
    %632 = arith.addf %626, %631 : vector<16x32xf32>
    %c82 = arith.constant 82 : index
    %633 = memref.load %arg1[%c82] : memref<128xf32, #tpu.memory_space<smem>>
    %634 = vector.extract_strided_slice %0 {offsets = [2, 0, 0], sizes = [1, 16, 32], strides = [1, 1, 1]} : vector<8x16x32xf32> to vector<1x16x32xf32>
    %635 = vector.shape_cast %634 : vector<1x16x32xf32> to vector<16x32xf32>
    %636 = vector.broadcast %633 : f32 to vector<16x32xf32>
    %637 = arith.mulf %636, %635 : vector<16x32xf32>
    %638 = arith.addf %632, %637 : vector<16x32xf32>
    %c83 = arith.constant 83 : index
    %639 = memref.load %arg1[%c83] : memref<128xf32, #tpu.memory_space<smem>>
    %640 = vector.extract_strided_slice %0 {offsets = [3, 0, 0], sizes = [1, 16, 32], strides = [1, 1, 1]} : vector<8x16x32xf32> to vector<1x16x32xf32>
    %641 = vector.shape_cast %640 : vector<1x16x32xf32> to vector<16x32xf32>
    %642 = vector.broadcast %639 : f32 to vector<16x32xf32>
    %643 = arith.mulf %642, %641 : vector<16x32xf32>
    %644 = arith.addf %638, %643 : vector<16x32xf32>
    %c84 = arith.constant 84 : index
    %645 = memref.load %arg1[%c84] : memref<128xf32, #tpu.memory_space<smem>>
    %646 = vector.extract_strided_slice %0 {offsets = [4, 0, 0], sizes = [1, 16, 32], strides = [1, 1, 1]} : vector<8x16x32xf32> to vector<1x16x32xf32>
    %647 = vector.shape_cast %646 : vector<1x16x32xf32> to vector<16x32xf32>
    %648 = vector.broadcast %645 : f32 to vector<16x32xf32>
    %649 = arith.mulf %648, %647 : vector<16x32xf32>
    %650 = arith.addf %644, %649 : vector<16x32xf32>
    %c85 = arith.constant 85 : index
    %651 = memref.load %arg1[%c85] : memref<128xf32, #tpu.memory_space<smem>>
    %652 = vector.extract_strided_slice %0 {offsets = [5, 0, 0], sizes = [1, 16, 32], strides = [1, 1, 1]} : vector<8x16x32xf32> to vector<1x16x32xf32>
    %653 = vector.shape_cast %652 : vector<1x16x32xf32> to vector<16x32xf32>
    %654 = vector.broadcast %651 : f32 to vector<16x32xf32>
    %655 = arith.mulf %654, %653 : vector<16x32xf32>
    %656 = arith.addf %650, %655 : vector<16x32xf32>
    %c86 = arith.constant 86 : index
    %657 = memref.load %arg1[%c86] : memref<128xf32, #tpu.memory_space<smem>>
    %658 = vector.extract_strided_slice %0 {offsets = [6, 0, 0], sizes = [1, 16, 32], strides = [1, 1, 1]} : vector<8x16x32xf32> to vector<1x16x32xf32>
    %659 = vector.shape_cast %658 : vector<1x16x32xf32> to vector<16x32xf32>
    %660 = vector.broadcast %657 : f32 to vector<16x32xf32>
    %661 = arith.mulf %660, %659 : vector<16x32xf32>
    %662 = arith.addf %656, %661 : vector<16x32xf32>
    %c87 = arith.constant 87 : index
    %663 = memref.load %arg1[%c87] : memref<128xf32, #tpu.memory_space<smem>>
    %664 = vector.extract_strided_slice %0 {offsets = [7, 0, 0], sizes = [1, 16, 32], strides = [1, 1, 1]} : vector<8x16x32xf32> to vector<1x16x32xf32>
    %665 = vector.shape_cast %664 : vector<1x16x32xf32> to vector<16x32xf32>
    %666 = vector.broadcast %663 : f32 to vector<16x32xf32>
    %667 = arith.mulf %666, %665 : vector<16x32xf32>
    %668 = arith.addf %662, %667 : vector<16x32xf32>
    %c10_71 = arith.constant 10 : index
    %669 = memref.load %arg2[%c10_71] : memref<16xf32, #tpu.memory_space<smem>>
    %670 = vector.broadcast %669 : f32 to vector<16x32xf32>
    %671 = arith.addf %668, %670 : vector<16x32xf32>
    %c88 = arith.constant 88 : index
    %672 = memref.load %arg1[%c88] : memref<128xf32, #tpu.memory_space<smem>>
    %673 = vector.extract_strided_slice %0 {offsets = [0, 0, 0], sizes = [1, 16, 32], strides = [1, 1, 1]} : vector<8x16x32xf32> to vector<1x16x32xf32>
    %674 = vector.shape_cast %673 : vector<1x16x32xf32> to vector<16x32xf32>
    %675 = vector.broadcast %672 : f32 to vector<16x32xf32>
    %676 = arith.mulf %675, %674 : vector<16x32xf32>
    %c89 = arith.constant 89 : index
    %677 = memref.load %arg1[%c89] : memref<128xf32, #tpu.memory_space<smem>>
    %678 = vector.extract_strided_slice %0 {offsets = [1, 0, 0], sizes = [1, 16, 32], strides = [1, 1, 1]} : vector<8x16x32xf32> to vector<1x16x32xf32>
    %679 = vector.shape_cast %678 : vector<1x16x32xf32> to vector<16x32xf32>
    %680 = vector.broadcast %677 : f32 to vector<16x32xf32>
    %681 = arith.mulf %680, %679 : vector<16x32xf32>
    %682 = arith.addf %676, %681 : vector<16x32xf32>
    %c90 = arith.constant 90 : index
    %683 = memref.load %arg1[%c90] : memref<128xf32, #tpu.memory_space<smem>>
    %684 = vector.extract_strided_slice %0 {offsets = [2, 0, 0], sizes = [1, 16, 32], strides = [1, 1, 1]} : vector<8x16x32xf32> to vector<1x16x32xf32>
    %685 = vector.shape_cast %684 : vector<1x16x32xf32> to vector<16x32xf32>
    %686 = vector.broadcast %683 : f32 to vector<16x32xf32>
    %687 = arith.mulf %686, %685 : vector<16x32xf32>
    %688 = arith.addf %682, %687 : vector<16x32xf32>
    %c91 = arith.constant 91 : index
    %689 = memref.load %arg1[%c91] : memref<128xf32, #tpu.memory_space<smem>>
    %690 = vector.extract_strided_slice %0 {offsets = [3, 0, 0], sizes = [1, 16, 32], strides = [1, 1, 1]} : vector<8x16x32xf32> to vector<1x16x32xf32>
    %691 = vector.shape_cast %690 : vector<1x16x32xf32> to vector<16x32xf32>
    %692 = vector.broadcast %689 : f32 to vector<16x32xf32>
    %693 = arith.mulf %692, %691 : vector<16x32xf32>
    %694 = arith.addf %688, %693 : vector<16x32xf32>
    %c92 = arith.constant 92 : index
    %695 = memref.load %arg1[%c92] : memref<128xf32, #tpu.memory_space<smem>>
    %696 = vector.extract_strided_slice %0 {offsets = [4, 0, 0], sizes = [1, 16, 32], strides = [1, 1, 1]} : vector<8x16x32xf32> to vector<1x16x32xf32>
    %697 = vector.shape_cast %696 : vector<1x16x32xf32> to vector<16x32xf32>
    %698 = vector.broadcast %695 : f32 to vector<16x32xf32>
    %699 = arith.mulf %698, %697 : vector<16x32xf32>
    %700 = arith.addf %694, %699 : vector<16x32xf32>
    %c93 = arith.constant 93 : index
    %701 = memref.load %arg1[%c93] : memref<128xf32, #tpu.memory_space<smem>>
    %702 = vector.extract_strided_slice %0 {offsets = [5, 0, 0], sizes = [1, 16, 32], strides = [1, 1, 1]} : vector<8x16x32xf32> to vector<1x16x32xf32>
    %703 = vector.shape_cast %702 : vector<1x16x32xf32> to vector<16x32xf32>
    %704 = vector.broadcast %701 : f32 to vector<16x32xf32>
    %705 = arith.mulf %704, %703 : vector<16x32xf32>
    %706 = arith.addf %700, %705 : vector<16x32xf32>
    %c94 = arith.constant 94 : index
    %707 = memref.load %arg1[%c94] : memref<128xf32, #tpu.memory_space<smem>>
    %708 = vector.extract_strided_slice %0 {offsets = [6, 0, 0], sizes = [1, 16, 32], strides = [1, 1, 1]} : vector<8x16x32xf32> to vector<1x16x32xf32>
    %709 = vector.shape_cast %708 : vector<1x16x32xf32> to vector<16x32xf32>
    %710 = vector.broadcast %707 : f32 to vector<16x32xf32>
    %711 = arith.mulf %710, %709 : vector<16x32xf32>
    %712 = arith.addf %706, %711 : vector<16x32xf32>
    %c95 = arith.constant 95 : index
    %713 = memref.load %arg1[%c95] : memref<128xf32, #tpu.memory_space<smem>>
    %714 = vector.extract_strided_slice %0 {offsets = [7, 0, 0], sizes = [1, 16, 32], strides = [1, 1, 1]} : vector<8x16x32xf32> to vector<1x16x32xf32>
    %715 = vector.shape_cast %714 : vector<1x16x32xf32> to vector<16x32xf32>
    %716 = vector.broadcast %713 : f32 to vector<16x32xf32>
    %717 = arith.mulf %716, %715 : vector<16x32xf32>
    %718 = arith.addf %712, %717 : vector<16x32xf32>
    %c11_72 = arith.constant 11 : index
    %719 = memref.load %arg2[%c11_72] : memref<16xf32, #tpu.memory_space<smem>>
    %720 = vector.broadcast %719 : f32 to vector<16x32xf32>
    %721 = arith.addf %718, %720 : vector<16x32xf32>
    %c96 = arith.constant 96 : index
    %722 = memref.load %arg1[%c96] : memref<128xf32, #tpu.memory_space<smem>>
    %723 = vector.extract_strided_slice %0 {offsets = [0, 0, 0], sizes = [1, 16, 32], strides = [1, 1, 1]} : vector<8x16x32xf32> to vector<1x16x32xf32>
    %724 = vector.shape_cast %723 : vector<1x16x32xf32> to vector<16x32xf32>
    %725 = vector.broadcast %722 : f32 to vector<16x32xf32>
    %726 = arith.mulf %725, %724 : vector<16x32xf32>
    %c97 = arith.constant 97 : index
    %727 = memref.load %arg1[%c97] : memref<128xf32, #tpu.memory_space<smem>>
    %728 = vector.extract_strided_slice %0 {offsets = [1, 0, 0], sizes = [1, 16, 32], strides = [1, 1, 1]} : vector<8x16x32xf32> to vector<1x16x32xf32>
    %729 = vector.shape_cast %728 : vector<1x16x32xf32> to vector<16x32xf32>
    %730 = vector.broadcast %727 : f32 to vector<16x32xf32>
    %731 = arith.mulf %730, %729 : vector<16x32xf32>
    %732 = arith.addf %726, %731 : vector<16x32xf32>
    %c98 = arith.constant 98 : index
    %733 = memref.load %arg1[%c98] : memref<128xf32, #tpu.memory_space<smem>>
    %734 = vector.extract_strided_slice %0 {offsets = [2, 0, 0], sizes = [1, 16, 32], strides = [1, 1, 1]} : vector<8x16x32xf32> to vector<1x16x32xf32>
    %735 = vector.shape_cast %734 : vector<1x16x32xf32> to vector<16x32xf32>
    %736 = vector.broadcast %733 : f32 to vector<16x32xf32>
    %737 = arith.mulf %736, %735 : vector<16x32xf32>
    %738 = arith.addf %732, %737 : vector<16x32xf32>
    %c99 = arith.constant 99 : index
    %739 = memref.load %arg1[%c99] : memref<128xf32, #tpu.memory_space<smem>>
    %740 = vector.extract_strided_slice %0 {offsets = [3, 0, 0], sizes = [1, 16, 32], strides = [1, 1, 1]} : vector<8x16x32xf32> to vector<1x16x32xf32>
    %741 = vector.shape_cast %740 : vector<1x16x32xf32> to vector<16x32xf32>
    %742 = vector.broadcast %739 : f32 to vector<16x32xf32>
    %743 = arith.mulf %742, %741 : vector<16x32xf32>
    %744 = arith.addf %738, %743 : vector<16x32xf32>
    %c100 = arith.constant 100 : index
    %745 = memref.load %arg1[%c100] : memref<128xf32, #tpu.memory_space<smem>>
    %746 = vector.extract_strided_slice %0 {offsets = [4, 0, 0], sizes = [1, 16, 32], strides = [1, 1, 1]} : vector<8x16x32xf32> to vector<1x16x32xf32>
    %747 = vector.shape_cast %746 : vector<1x16x32xf32> to vector<16x32xf32>
    %748 = vector.broadcast %745 : f32 to vector<16x32xf32>
    %749 = arith.mulf %748, %747 : vector<16x32xf32>
    %750 = arith.addf %744, %749 : vector<16x32xf32>
    %c101 = arith.constant 101 : index
    %751 = memref.load %arg1[%c101] : memref<128xf32, #tpu.memory_space<smem>>
    %752 = vector.extract_strided_slice %0 {offsets = [5, 0, 0], sizes = [1, 16, 32], strides = [1, 1, 1]} : vector<8x16x32xf32> to vector<1x16x32xf32>
    %753 = vector.shape_cast %752 : vector<1x16x32xf32> to vector<16x32xf32>
    %754 = vector.broadcast %751 : f32 to vector<16x32xf32>
    %755 = arith.mulf %754, %753 : vector<16x32xf32>
    %756 = arith.addf %750, %755 : vector<16x32xf32>
    %c102 = arith.constant 102 : index
    %757 = memref.load %arg1[%c102] : memref<128xf32, #tpu.memory_space<smem>>
    %758 = vector.extract_strided_slice %0 {offsets = [6, 0, 0], sizes = [1, 16, 32], strides = [1, 1, 1]} : vector<8x16x32xf32> to vector<1x16x32xf32>
    %759 = vector.shape_cast %758 : vector<1x16x32xf32> to vector<16x32xf32>
    %760 = vector.broadcast %757 : f32 to vector<16x32xf32>
    %761 = arith.mulf %760, %759 : vector<16x32xf32>
    %762 = arith.addf %756, %761 : vector<16x32xf32>
    %c103 = arith.constant 103 : index
    %763 = memref.load %arg1[%c103] : memref<128xf32, #tpu.memory_space<smem>>
    %764 = vector.extract_strided_slice %0 {offsets = [7, 0, 0], sizes = [1, 16, 32], strides = [1, 1, 1]} : vector<8x16x32xf32> to vector<1x16x32xf32>
    %765 = vector.shape_cast %764 : vector<1x16x32xf32> to vector<16x32xf32>
    %766 = vector.broadcast %763 : f32 to vector<16x32xf32>
    %767 = arith.mulf %766, %765 : vector<16x32xf32>
    %768 = arith.addf %762, %767 : vector<16x32xf32>
    %c12_73 = arith.constant 12 : index
    %769 = memref.load %arg2[%c12_73] : memref<16xf32, #tpu.memory_space<smem>>
    %770 = vector.broadcast %769 : f32 to vector<16x32xf32>
    %771 = arith.addf %768, %770 : vector<16x32xf32>
    %c104 = arith.constant 104 : index
    %772 = memref.load %arg1[%c104] : memref<128xf32, #tpu.memory_space<smem>>
    %773 = vector.extract_strided_slice %0 {offsets = [0, 0, 0], sizes = [1, 16, 32], strides = [1, 1, 1]} : vector<8x16x32xf32> to vector<1x16x32xf32>
    %774 = vector.shape_cast %773 : vector<1x16x32xf32> to vector<16x32xf32>
    %775 = vector.broadcast %772 : f32 to vector<16x32xf32>
    %776 = arith.mulf %775, %774 : vector<16x32xf32>
    %c105 = arith.constant 105 : index
    %777 = memref.load %arg1[%c105] : memref<128xf32, #tpu.memory_space<smem>>
    %778 = vector.extract_strided_slice %0 {offsets = [1, 0, 0], sizes = [1, 16, 32], strides = [1, 1, 1]} : vector<8x16x32xf32> to vector<1x16x32xf32>
    %779 = vector.shape_cast %778 : vector<1x16x32xf32> to vector<16x32xf32>
    %780 = vector.broadcast %777 : f32 to vector<16x32xf32>
    %781 = arith.mulf %780, %779 : vector<16x32xf32>
    %782 = arith.addf %776, %781 : vector<16x32xf32>
    %c106 = arith.constant 106 : index
    %783 = memref.load %arg1[%c106] : memref<128xf32, #tpu.memory_space<smem>>
    %784 = vector.extract_strided_slice %0 {offsets = [2, 0, 0], sizes = [1, 16, 32], strides = [1, 1, 1]} : vector<8x16x32xf32> to vector<1x16x32xf32>
    %785 = vector.shape_cast %784 : vector<1x16x32xf32> to vector<16x32xf32>
    %786 = vector.broadcast %783 : f32 to vector<16x32xf32>
    %787 = arith.mulf %786, %785 : vector<16x32xf32>
    %788 = arith.addf %782, %787 : vector<16x32xf32>
    %c107 = arith.constant 107 : index
    %789 = memref.load %arg1[%c107] : memref<128xf32, #tpu.memory_space<smem>>
    %790 = vector.extract_strided_slice %0 {offsets = [3, 0, 0], sizes = [1, 16, 32], strides = [1, 1, 1]} : vector<8x16x32xf32> to vector<1x16x32xf32>
    %791 = vector.shape_cast %790 : vector<1x16x32xf32> to vector<16x32xf32>
    %792 = vector.broadcast %789 : f32 to vector<16x32xf32>
    %793 = arith.mulf %792, %791 : vector<16x32xf32>
    %794 = arith.addf %788, %793 : vector<16x32xf32>
    %c108 = arith.constant 108 : index
    %795 = memref.load %arg1[%c108] : memref<128xf32, #tpu.memory_space<smem>>
    %796 = vector.extract_strided_slice %0 {offsets = [4, 0, 0], sizes = [1, 16, 32], strides = [1, 1, 1]} : vector<8x16x32xf32> to vector<1x16x32xf32>
    %797 = vector.shape_cast %796 : vector<1x16x32xf32> to vector<16x32xf32>
    %798 = vector.broadcast %795 : f32 to vector<16x32xf32>
    %799 = arith.mulf %798, %797 : vector<16x32xf32>
    %800 = arith.addf %794, %799 : vector<16x32xf32>
    %c109 = arith.constant 109 : index
    %801 = memref.load %arg1[%c109] : memref<128xf32, #tpu.memory_space<smem>>
    %802 = vector.extract_strided_slice %0 {offsets = [5, 0, 0], sizes = [1, 16, 32], strides = [1, 1, 1]} : vector<8x16x32xf32> to vector<1x16x32xf32>
    %803 = vector.shape_cast %802 : vector<1x16x32xf32> to vector<16x32xf32>
    %804 = vector.broadcast %801 : f32 to vector<16x32xf32>
    %805 = arith.mulf %804, %803 : vector<16x32xf32>
    %806 = arith.addf %800, %805 : vector<16x32xf32>
    %c110 = arith.constant 110 : index
    %807 = memref.load %arg1[%c110] : memref<128xf32, #tpu.memory_space<smem>>
    %808 = vector.extract_strided_slice %0 {offsets = [6, 0, 0], sizes = [1, 16, 32], strides = [1, 1, 1]} : vector<8x16x32xf32> to vector<1x16x32xf32>
    %809 = vector.shape_cast %808 : vector<1x16x32xf32> to vector<16x32xf32>
    %810 = vector.broadcast %807 : f32 to vector<16x32xf32>
    %811 = arith.mulf %810, %809 : vector<16x32xf32>
    %812 = arith.addf %806, %811 : vector<16x32xf32>
    %c111 = arith.constant 111 : index
    %813 = memref.load %arg1[%c111] : memref<128xf32, #tpu.memory_space<smem>>
    %814 = vector.extract_strided_slice %0 {offsets = [7, 0, 0], sizes = [1, 16, 32], strides = [1, 1, 1]} : vector<8x16x32xf32> to vector<1x16x32xf32>
    %815 = vector.shape_cast %814 : vector<1x16x32xf32> to vector<16x32xf32>
    %816 = vector.broadcast %813 : f32 to vector<16x32xf32>
    %817 = arith.mulf %816, %815 : vector<16x32xf32>
    %818 = arith.addf %812, %817 : vector<16x32xf32>
    %c13_74 = arith.constant 13 : index
    %819 = memref.load %arg2[%c13_74] : memref<16xf32, #tpu.memory_space<smem>>
    %820 = vector.broadcast %819 : f32 to vector<16x32xf32>
    %821 = arith.addf %818, %820 : vector<16x32xf32>
    %c112 = arith.constant 112 : index
    %822 = memref.load %arg1[%c112] : memref<128xf32, #tpu.memory_space<smem>>
    %823 = vector.extract_strided_slice %0 {offsets = [0, 0, 0], sizes = [1, 16, 32], strides = [1, 1, 1]} : vector<8x16x32xf32> to vector<1x16x32xf32>
    %824 = vector.shape_cast %823 : vector<1x16x32xf32> to vector<16x32xf32>
    %825 = vector.broadcast %822 : f32 to vector<16x32xf32>
    %826 = arith.mulf %825, %824 : vector<16x32xf32>
    %c113 = arith.constant 113 : index
    %827 = memref.load %arg1[%c113] : memref<128xf32, #tpu.memory_space<smem>>
    %828 = vector.extract_strided_slice %0 {offsets = [1, 0, 0], sizes = [1, 16, 32], strides = [1, 1, 1]} : vector<8x16x32xf32> to vector<1x16x32xf32>
    %829 = vector.shape_cast %828 : vector<1x16x32xf32> to vector<16x32xf32>
    %830 = vector.broadcast %827 : f32 to vector<16x32xf32>
    %831 = arith.mulf %830, %829 : vector<16x32xf32>
    %832 = arith.addf %826, %831 : vector<16x32xf32>
    %c114 = arith.constant 114 : index
    %833 = memref.load %arg1[%c114] : memref<128xf32, #tpu.memory_space<smem>>
    %834 = vector.extract_strided_slice %0 {offsets = [2, 0, 0], sizes = [1, 16, 32], strides = [1, 1, 1]} : vector<8x16x32xf32> to vector<1x16x32xf32>
    %835 = vector.shape_cast %834 : vector<1x16x32xf32> to vector<16x32xf32>
    %836 = vector.broadcast %833 : f32 to vector<16x32xf32>
    %837 = arith.mulf %836, %835 : vector<16x32xf32>
    %838 = arith.addf %832, %837 : vector<16x32xf32>
    %c115 = arith.constant 115 : index
    %839 = memref.load %arg1[%c115] : memref<128xf32, #tpu.memory_space<smem>>
    %840 = vector.extract_strided_slice %0 {offsets = [3, 0, 0], sizes = [1, 16, 32], strides = [1, 1, 1]} : vector<8x16x32xf32> to vector<1x16x32xf32>
    %841 = vector.shape_cast %840 : vector<1x16x32xf32> to vector<16x32xf32>
    %842 = vector.broadcast %839 : f32 to vector<16x32xf32>
    %843 = arith.mulf %842, %841 : vector<16x32xf32>
    %844 = arith.addf %838, %843 : vector<16x32xf32>
    %c116 = arith.constant 116 : index
    %845 = memref.load %arg1[%c116] : memref<128xf32, #tpu.memory_space<smem>>
    %846 = vector.extract_strided_slice %0 {offsets = [4, 0, 0], sizes = [1, 16, 32], strides = [1, 1, 1]} : vector<8x16x32xf32> to vector<1x16x32xf32>
    %847 = vector.shape_cast %846 : vector<1x16x32xf32> to vector<16x32xf32>
    %848 = vector.broadcast %845 : f32 to vector<16x32xf32>
    %849 = arith.mulf %848, %847 : vector<16x32xf32>
    %850 = arith.addf %844, %849 : vector<16x32xf32>
    %c117 = arith.constant 117 : index
    %851 = memref.load %arg1[%c117] : memref<128xf32, #tpu.memory_space<smem>>
    %852 = vector.extract_strided_slice %0 {offsets = [5, 0, 0], sizes = [1, 16, 32], strides = [1, 1, 1]} : vector<8x16x32xf32> to vector<1x16x32xf32>
    %853 = vector.shape_cast %852 : vector<1x16x32xf32> to vector<16x32xf32>
    %854 = vector.broadcast %851 : f32 to vector<16x32xf32>
    %855 = arith.mulf %854, %853 : vector<16x32xf32>
    %856 = arith.addf %850, %855 : vector<16x32xf32>
    %c118 = arith.constant 118 : index
    %857 = memref.load %arg1[%c118] : memref<128xf32, #tpu.memory_space<smem>>
    %858 = vector.extract_strided_slice %0 {offsets = [6, 0, 0], sizes = [1, 16, 32], strides = [1, 1, 1]} : vector<8x16x32xf32> to vector<1x16x32xf32>
    %859 = vector.shape_cast %858 : vector<1x16x32xf32> to vector<16x32xf32>
    %860 = vector.broadcast %857 : f32 to vector<16x32xf32>
    %861 = arith.mulf %860, %859 : vector<16x32xf32>
    %862 = arith.addf %856, %861 : vector<16x32xf32>
    %c119 = arith.constant 119 : index
    %863 = memref.load %arg1[%c119] : memref<128xf32, #tpu.memory_space<smem>>
    %864 = vector.extract_strided_slice %0 {offsets = [7, 0, 0], sizes = [1, 16, 32], strides = [1, 1, 1]} : vector<8x16x32xf32> to vector<1x16x32xf32>
    %865 = vector.shape_cast %864 : vector<1x16x32xf32> to vector<16x32xf32>
    %866 = vector.broadcast %863 : f32 to vector<16x32xf32>
    %867 = arith.mulf %866, %865 : vector<16x32xf32>
    %868 = arith.addf %862, %867 : vector<16x32xf32>
    %c14_75 = arith.constant 14 : index
    %869 = memref.load %arg2[%c14_75] : memref<16xf32, #tpu.memory_space<smem>>
    %870 = vector.broadcast %869 : f32 to vector<16x32xf32>
    %871 = arith.addf %868, %870 : vector<16x32xf32>
    %c120 = arith.constant 120 : index
    %872 = memref.load %arg1[%c120] : memref<128xf32, #tpu.memory_space<smem>>
    %873 = vector.extract_strided_slice %0 {offsets = [0, 0, 0], sizes = [1, 16, 32], strides = [1, 1, 1]} : vector<8x16x32xf32> to vector<1x16x32xf32>
    %874 = vector.shape_cast %873 : vector<1x16x32xf32> to vector<16x32xf32>
    %875 = vector.broadcast %872 : f32 to vector<16x32xf32>
    %876 = arith.mulf %875, %874 : vector<16x32xf32>
    %c121 = arith.constant 121 : index
    %877 = memref.load %arg1[%c121] : memref<128xf32, #tpu.memory_space<smem>>
    %878 = vector.extract_strided_slice %0 {offsets = [1, 0, 0], sizes = [1, 16, 32], strides = [1, 1, 1]} : vector<8x16x32xf32> to vector<1x16x32xf32>
    %879 = vector.shape_cast %878 : vector<1x16x32xf32> to vector<16x32xf32>
    %880 = vector.broadcast %877 : f32 to vector<16x32xf32>
    %881 = arith.mulf %880, %879 : vector<16x32xf32>
    %882 = arith.addf %876, %881 : vector<16x32xf32>
    %c122 = arith.constant 122 : index
    %883 = memref.load %arg1[%c122] : memref<128xf32, #tpu.memory_space<smem>>
    %884 = vector.extract_strided_slice %0 {offsets = [2, 0, 0], sizes = [1, 16, 32], strides = [1, 1, 1]} : vector<8x16x32xf32> to vector<1x16x32xf32>
    %885 = vector.shape_cast %884 : vector<1x16x32xf32> to vector<16x32xf32>
    %886 = vector.broadcast %883 : f32 to vector<16x32xf32>
    %887 = arith.mulf %886, %885 : vector<16x32xf32>
    %888 = arith.addf %882, %887 : vector<16x32xf32>
    %c123 = arith.constant 123 : index
    %889 = memref.load %arg1[%c123] : memref<128xf32, #tpu.memory_space<smem>>
    %890 = vector.extract_strided_slice %0 {offsets = [3, 0, 0], sizes = [1, 16, 32], strides = [1, 1, 1]} : vector<8x16x32xf32> to vector<1x16x32xf32>
    %891 = vector.shape_cast %890 : vector<1x16x32xf32> to vector<16x32xf32>
    %892 = vector.broadcast %889 : f32 to vector<16x32xf32>
    %893 = arith.mulf %892, %891 : vector<16x32xf32>
    %894 = arith.addf %888, %893 : vector<16x32xf32>
    %c124 = arith.constant 124 : index
    %895 = memref.load %arg1[%c124] : memref<128xf32, #tpu.memory_space<smem>>
    %896 = vector.extract_strided_slice %0 {offsets = [4, 0, 0], sizes = [1, 16, 32], strides = [1, 1, 1]} : vector<8x16x32xf32> to vector<1x16x32xf32>
    %897 = vector.shape_cast %896 : vector<1x16x32xf32> to vector<16x32xf32>
    %898 = vector.broadcast %895 : f32 to vector<16x32xf32>
    %899 = arith.mulf %898, %897 : vector<16x32xf32>
    %900 = arith.addf %894, %899 : vector<16x32xf32>
    %c125 = arith.constant 125 : index
    %901 = memref.load %arg1[%c125] : memref<128xf32, #tpu.memory_space<smem>>
    %902 = vector.extract_strided_slice %0 {offsets = [5, 0, 0], sizes = [1, 16, 32], strides = [1, 1, 1]} : vector<8x16x32xf32> to vector<1x16x32xf32>
    %903 = vector.shape_cast %902 : vector<1x16x32xf32> to vector<16x32xf32>
    %904 = vector.broadcast %901 : f32 to vector<16x32xf32>
    %905 = arith.mulf %904, %903 : vector<16x32xf32>
    %906 = arith.addf %900, %905 : vector<16x32xf32>
    %c126 = arith.constant 126 : index
    %907 = memref.load %arg1[%c126] : memref<128xf32, #tpu.memory_space<smem>>
    %908 = vector.extract_strided_slice %0 {offsets = [6, 0, 0], sizes = [1, 16, 32], strides = [1, 1, 1]} : vector<8x16x32xf32> to vector<1x16x32xf32>
    %909 = vector.shape_cast %908 : vector<1x16x32xf32> to vector<16x32xf32>
    %910 = vector.broadcast %907 : f32 to vector<16x32xf32>
    %911 = arith.mulf %910, %909 : vector<16x32xf32>
    %912 = arith.addf %906, %911 : vector<16x32xf32>
    %c127 = arith.constant 127 : index
    %913 = memref.load %arg1[%c127] : memref<128xf32, #tpu.memory_space<smem>>
    %914 = vector.extract_strided_slice %0 {offsets = [7, 0, 0], sizes = [1, 16, 32], strides = [1, 1, 1]} : vector<8x16x32xf32> to vector<1x16x32xf32>
    %915 = vector.shape_cast %914 : vector<1x16x32xf32> to vector<16x32xf32>
    %916 = vector.broadcast %913 : f32 to vector<16x32xf32>
    %917 = arith.mulf %916, %915 : vector<16x32xf32>
    %918 = arith.addf %912, %917 : vector<16x32xf32>
    %c15_76 = arith.constant 15 : index
    %919 = memref.load %arg2[%c15_76] : memref<16xf32, #tpu.memory_space<smem>>
    %920 = vector.broadcast %919 : f32 to vector<16x32xf32>
    %921 = arith.addf %918, %920 : vector<16x32xf32>
    %922 = vector.shape_cast %571 : vector<16x32xf32> to vector<16x1x32xf32>
    %923 = vector.shape_cast %671 : vector<16x32xf32> to vector<1x16x32xf32>
    %924 = vector.broadcast %922 : vector<16x1x32xf32> to vector<16x16x32xf32>
    %925 = vector.broadcast %923 : vector<1x16x32xf32> to vector<16x16x32xf32>
    %926 = arith.mulf %924, %925 : vector<16x16x32xf32>
    %c1_77 = arith.constant 1 : index
    %c0_78 = arith.constant 0 : index
    %c0_79 = arith.constant 0 : index
    %c0_80 = arith.constant 0 : index
    %927 = vector.load %arg5[%c1_77, %c0_78, %c0_79, %c0_80] : memref<2x2x16x16xf32, #tpu.memory_space<vmem>>, vector<1x1x16x16xf32>
    %928 = vector.shape_cast %927 : vector<1x1x16x16xf32> to vector<16x16xf32>
    %929 = vector.shape_cast %928 : vector<16x16xf32> to vector<16x16x1xf32>
    %930 = vector.broadcast %922 : vector<16x1x32xf32> to vector<16x16x32xf32>
    %931 = vector.broadcast %929 : vector<16x16x1xf32> to vector<16x16x32xf32>
    %932 = arith.mulf %930, %931 : vector<16x16x32xf32>
    %933 = arith.addf %926, %932 : vector<16x16x32xf32>
    %c1_81 = arith.constant 1 : index
    %c0_82 = arith.constant 0 : index
    %c0_83 = arith.constant 0 : index
    %c0_84 = arith.constant 0 : index
    %934 = vector.load %arg6[%c1_81, %c0_82, %c0_83, %c0_84] : memref<2x2x16x16xf32, #tpu.memory_space<vmem>>, vector<1x1x16x16xf32>
    %935 = vector.shape_cast %934 : vector<1x1x16x16xf32> to vector<16x16xf32>
    %936 = vector.shape_cast %935 : vector<16x16xf32> to vector<16x16x1xf32>
    %937 = vector.broadcast %923 : vector<1x16x32xf32> to vector<16x16x32xf32>
    %938 = vector.broadcast %936 : vector<16x16x1xf32> to vector<16x16x32xf32>
    %939 = arith.mulf %937, %938 : vector<16x16x32xf32>
    %940 = arith.addf %933, %939 : vector<16x16x32xf32>
    %941 = vector.shape_cast %621 : vector<16x32xf32> to vector<16x1x32xf32>
    %942 = vector.shape_cast %721 : vector<16x32xf32> to vector<1x16x32xf32>
    %943 = vector.broadcast %941 : vector<16x1x32xf32> to vector<16x16x32xf32>
    %944 = vector.broadcast %942 : vector<1x16x32xf32> to vector<16x16x32xf32>
    %945 = arith.mulf %943, %944 : vector<16x16x32xf32>
    %c1_85 = arith.constant 1 : index
    %c1_86 = arith.constant 1 : index
    %c0_87 = arith.constant 0 : index
    %c0_88 = arith.constant 0 : index
    %946 = vector.load %arg5[%c1_85, %c1_86, %c0_87, %c0_88] : memref<2x2x16x16xf32, #tpu.memory_space<vmem>>, vector<1x1x16x16xf32>
    %947 = vector.shape_cast %946 : vector<1x1x16x16xf32> to vector<16x16xf32>
    %948 = vector.shape_cast %947 : vector<16x16xf32> to vector<16x16x1xf32>
    %949 = vector.broadcast %941 : vector<16x1x32xf32> to vector<16x16x32xf32>
    %950 = vector.broadcast %948 : vector<16x16x1xf32> to vector<16x16x32xf32>
    %951 = arith.mulf %949, %950 : vector<16x16x32xf32>
    %952 = arith.addf %945, %951 : vector<16x16x32xf32>
    %c1_89 = arith.constant 1 : index
    %c1_90 = arith.constant 1 : index
    %c0_91 = arith.constant 0 : index
    %c0_92 = arith.constant 0 : index
    %953 = vector.load %arg6[%c1_89, %c1_90, %c0_91, %c0_92] : memref<2x2x16x16xf32, #tpu.memory_space<vmem>>, vector<1x1x16x16xf32>
    %954 = vector.shape_cast %953 : vector<1x1x16x16xf32> to vector<16x16xf32>
    %955 = vector.shape_cast %954 : vector<16x16xf32> to vector<16x16x1xf32>
    %956 = vector.broadcast %942 : vector<1x16x32xf32> to vector<16x16x32xf32>
    %957 = vector.broadcast %955 : vector<16x16x1xf32> to vector<16x16x32xf32>
    %958 = arith.mulf %956, %957 : vector<16x16x32xf32>
    %959 = arith.addf %952, %958 : vector<16x16x32xf32>
    %960 = arith.addf %940, %959 : vector<16x16x32xf32>
    %cst_93 = arith.constant dense<0xFF800000> : vector<16x32xf32>
    %961 = vector.multi_reduction <maximumf>, %960, %cst_93 [1] : vector<16x16x32xf32> to vector<16x32xf32>
    %962 = vector.shape_cast %961 : vector<16x32xf32> to vector<16x1x32xf32>
    %963 = vector.broadcast %962 : vector<16x1x32xf32> to vector<16x16x32xf32>
    %964 = arith.subf %960, %963 : vector<16x16x32xf32>
    %965 = math.exp %964 : vector<16x16x32xf32>
    %cst_94 = arith.constant dense<0.000000e+00> : vector<16x32xf32>
    %966 = vector.multi_reduction <add>, %965, %cst_94 [1] : vector<16x16x32xf32> to vector<16x32xf32>
    %967 = vector.shape_cast %966 : vector<16x32xf32> to vector<16x1x32xf32>
    %968 = tpu.reciprocal %967 {approx = true} : vector<16x1x32xf32> -> vector<16x1x32xf32>
    %969 = arith.mulf %967, %968 : vector<16x1x32xf32>
    %cst_95 = arith.constant 2.000000e+00 : f32
    %970 = vector.broadcast %cst_95 : f32 to vector<16x1x32xf32>
    %971 = arith.subf %970, %969 : vector<16x1x32xf32>
    %972 = arith.mulf %968, %971 : vector<16x1x32xf32>
    %973 = vector.broadcast %972 : vector<16x1x32xf32> to vector<16x16x32xf32>
    %974 = arith.mulf %965, %973 : vector<16x16x32xf32>
    %975 = vector.shape_cast %771 : vector<16x32xf32> to vector<1x16x32xf32>
    %976 = vector.broadcast %975 : vector<1x16x32xf32> to vector<16x16x32xf32>
    %977 = arith.mulf %974, %976 : vector<16x16x32xf32>
    %cst_96 = arith.constant dense<0.000000e+00> : vector<16x32xf32>
    %978 = vector.multi_reduction <add>, %977, %cst_96 [1] : vector<16x16x32xf32> to vector<16x32xf32>
    %c1_97 = arith.constant 1 : index
    %c0_98 = arith.constant 0 : index
    %c0_99 = arith.constant 0 : index
    %c0_100 = arith.constant 0 : index
    %979 = vector.load %arg7[%c1_97, %c0_98, %c0_99, %c0_100] : memref<2x4x16x16xf32, #tpu.memory_space<vmem>>, vector<1x1x16x16xf32>
    %980 = vector.shape_cast %979 : vector<1x1x16x16xf32> to vector<16x16xf32>
    %981 = vector.shape_cast %980 : vector<16x16xf32> to vector<16x16x1xf32>
    %982 = vector.broadcast %981 : vector<16x16x1xf32> to vector<16x16x32xf32>
    %983 = arith.mulf %974, %982 : vector<16x16x32xf32>
    %cst_101 = arith.constant dense<0.000000e+00> : vector<16x32xf32>
    %984 = vector.multi_reduction <add>, %983, %cst_101 [1] : vector<16x16x32xf32> to vector<16x32xf32>
    %985 = arith.addf %978, %984 : vector<16x32xf32>
    %c4_102 = arith.constant 4 : index
    %986 = memref.load %arg3[%c4_102] : memref<8xf32, #tpu.memory_space<smem>>
    %987 = vector.broadcast %986 : f32 to vector<16x32xf32>
    %988 = arith.addf %985, %987 : vector<16x32xf32>
    %c4_103 = arith.constant 4 : index
    %c0_104 = arith.constant 0 : index
    %c0_105 = arith.constant 0 : index
    %989 = vector.load %arg8[%c4_103, %c0_104, %c0_105] : memref<8x16x32xf32, #tpu.memory_space<vmem>>, vector<1x16x32xf32>
    %990 = vector.shape_cast %989 : vector<1x16x32xf32> to vector<16x32xf32>
    %991 = vector.shape_cast %988 : vector<16x32xf32> to vector<1x16x32xf32>
    tpu.vector_store %arg8[%c4_103, %c0_104, %c0_105], %991 {strides = array<i32>} : memref<8x16x32xf32, #tpu.memory_space<vmem>>, vector<1x16x32xf32>,
    %992 = vector.shape_cast %821 : vector<16x32xf32> to vector<1x16x32xf32>
    %993 = vector.broadcast %992 : vector<1x16x32xf32> to vector<16x16x32xf32>
    %994 = arith.mulf %974, %993 : vector<16x16x32xf32>
    %cst_106 = arith.constant dense<0.000000e+00> : vector<16x32xf32>
    %995 = vector.multi_reduction <add>, %994, %cst_106 [1] : vector<16x16x32xf32> to vector<16x32xf32>
    %c1_107 = arith.constant 1 : index
    %c1_108 = arith.constant 1 : index
    %c0_109 = arith.constant 0 : index
    %c0_110 = arith.constant 0 : index
    %996 = vector.load %arg7[%c1_107, %c1_108, %c0_109, %c0_110] : memref<2x4x16x16xf32, #tpu.memory_space<vmem>>, vector<1x1x16x16xf32>
    %997 = vector.shape_cast %996 : vector<1x1x16x16xf32> to vector<16x16xf32>
    %998 = vector.shape_cast %997 : vector<16x16xf32> to vector<16x16x1xf32>
    %999 = vector.broadcast %998 : vector<16x16x1xf32> to vector<16x16x32xf32>
    %1000 = arith.mulf %974, %999 : vector<16x16x32xf32>
    %cst_111 = arith.constant dense<0.000000e+00> : vector<16x32xf32>
    %1001 = vector.multi_reduction <add>, %1000, %cst_111 [1] : vector<16x16x32xf32> to vector<16x32xf32>
    %1002 = arith.addf %995, %1001 : vector<16x32xf32>
    %c5_112 = arith.constant 5 : index
    %1003 = memref.load %arg3[%c5_112] : memref<8xf32, #tpu.memory_space<smem>>
    %1004 = vector.broadcast %1003 : f32 to vector<16x32xf32>
    %1005 = arith.addf %1002, %1004 : vector<16x32xf32>
    %c5_113 = arith.constant 5 : index
    %c0_114 = arith.constant 0 : index
    %c0_115 = arith.constant 0 : index
    %1006 = vector.load %arg8[%c5_113, %c0_114, %c0_115] : memref<8x16x32xf32, #tpu.memory_space<vmem>>, vector<1x16x32xf32>
    %1007 = vector.shape_cast %1006 : vector<1x16x32xf32> to vector<16x32xf32>
    %1008 = vector.shape_cast %1005 : vector<16x32xf32> to vector<1x16x32xf32>
    tpu.vector_store %arg8[%c5_113, %c0_114, %c0_115], %1008 {strides = array<i32>} : memref<8x16x32xf32, #tpu.memory_space<vmem>>, vector<1x16x32xf32>,
    %1009 = vector.shape_cast %871 : vector<16x32xf32> to vector<1x16x32xf32>
    %1010 = vector.broadcast %1009 : vector<1x16x32xf32> to vector<16x16x32xf32>
    %1011 = arith.mulf %974, %1010 : vector<16x16x32xf32>
    %cst_116 = arith.constant dense<0.000000e+00> : vector<16x32xf32>
    %1012 = vector.multi_reduction <add>, %1011, %cst_116 [1] : vector<16x16x32xf32> to vector<16x32xf32>
    %c1_117 = arith.constant 1 : index
    %c2_118 = arith.constant 2 : index
    %c0_119 = arith.constant 0 : index
    %c0_120 = arith.constant 0 : index
    %1013 = vector.load %arg7[%c1_117, %c2_118, %c0_119, %c0_120] : memref<2x4x16x16xf32, #tpu.memory_space<vmem>>, vector<1x1x16x16xf32>
    %1014 = vector.shape_cast %1013 : vector<1x1x16x16xf32> to vector<16x16xf32>
    %1015 = vector.shape_cast %1014 : vector<16x16xf32> to vector<16x16x1xf32>
    %1016 = vector.broadcast %1015 : vector<16x16x1xf32> to vector<16x16x32xf32>
    %1017 = arith.mulf %974, %1016 : vector<16x16x32xf32>
    %cst_121 = arith.constant dense<0.000000e+00> : vector<16x32xf32>
    %1018 = vector.multi_reduction <add>, %1017, %cst_121 [1] : vector<16x16x32xf32> to vector<16x32xf32>
    %1019 = arith.addf %1012, %1018 : vector<16x32xf32>
    %c6_122 = arith.constant 6 : index
    %1020 = memref.load %arg3[%c6_122] : memref<8xf32, #tpu.memory_space<smem>>
    %1021 = vector.broadcast %1020 : f32 to vector<16x32xf32>
    %1022 = arith.addf %1019, %1021 : vector<16x32xf32>
    %c6_123 = arith.constant 6 : index
    %c0_124 = arith.constant 0 : index
    %c0_125 = arith.constant 0 : index
    %1023 = vector.load %arg8[%c6_123, %c0_124, %c0_125] : memref<8x16x32xf32, #tpu.memory_space<vmem>>, vector<1x16x32xf32>
    %1024 = vector.shape_cast %1023 : vector<1x16x32xf32> to vector<16x32xf32>
    %1025 = vector.shape_cast %1022 : vector<16x32xf32> to vector<1x16x32xf32>
    tpu.vector_store %arg8[%c6_123, %c0_124, %c0_125], %1025 {strides = array<i32>} : memref<8x16x32xf32, #tpu.memory_space<vmem>>, vector<1x16x32xf32>,
    %1026 = vector.shape_cast %921 : vector<16x32xf32> to vector<1x16x32xf32>
    %1027 = vector.broadcast %1026 : vector<1x16x32xf32> to vector<16x16x32xf32>
    %1028 = arith.mulf %974, %1027 : vector<16x16x32xf32>
    %cst_126 = arith.constant dense<0.000000e+00> : vector<16x32xf32>
    %1029 = vector.multi_reduction <add>, %1028, %cst_126 [1] : vector<16x16x32xf32> to vector<16x32xf32>
    %c1_127 = arith.constant 1 : index
    %c3_128 = arith.constant 3 : index
    %c0_129 = arith.constant 0 : index
    %c0_130 = arith.constant 0 : index
    %1030 = vector.load %arg7[%c1_127, %c3_128, %c0_129, %c0_130] : memref<2x4x16x16xf32, #tpu.memory_space<vmem>>, vector<1x1x16x16xf32>
    %1031 = vector.shape_cast %1030 : vector<1x1x16x16xf32> to vector<16x16xf32>
    %1032 = vector.shape_cast %1031 : vector<16x16xf32> to vector<16x16x1xf32>
    %1033 = vector.broadcast %1032 : vector<16x16x1xf32> to vector<16x16x32xf32>
    %1034 = arith.mulf %974, %1033 : vector<16x16x32xf32>
    %cst_131 = arith.constant dense<0.000000e+00> : vector<16x32xf32>
    %1035 = vector.multi_reduction <add>, %1034, %cst_131 [1] : vector<16x16x32xf32> to vector<16x32xf32>
    %1036 = arith.addf %1029, %1035 : vector<16x32xf32>
    %c7_132 = arith.constant 7 : index
    %1037 = memref.load %arg3[%c7_132] : memref<8xf32, #tpu.memory_space<smem>>
    %1038 = vector.broadcast %1037 : f32 to vector<16x32xf32>
    %1039 = arith.addf %1036, %1038 : vector<16x32xf32>
    %c7_133 = arith.constant 7 : index
    %c0_134 = arith.constant 0 : index
    %c0_135 = arith.constant 0 : index
    %1040 = vector.load %arg8[%c7_133, %c0_134, %c0_135] : memref<8x16x32xf32, #tpu.memory_space<vmem>>, vector<1x16x32xf32>
    %1041 = vector.shape_cast %1040 : vector<1x16x32xf32> to vector<16x32xf32>
    %1042 = vector.shape_cast %1039 : vector<16x32xf32> to vector<1x16x32xf32>
    tpu.vector_store %arg8[%c7_133, %c0_134, %c0_135], %1042 {strides = array<i32>} : memref<8x16x32xf32, #tpu.memory_space<vmem>>, vector<1x16x32xf32>,
    return
  }
  func.func @transform_0(%arg0: i32) -> i32 {
    %c0_i32 = arith.constant 0 : i32
    %c0_i32_0 = arith.constant 0 : i32
    return %c0_i32 : i32
  }
  func.func @transform_1(%arg0: i32) -> i32 {
    %c0_i32 = arith.constant 0 : i32
    %c0_i32_0 = arith.constant 0 : i32
    return %c0_i32 : i32
  }
  func.func @transform_2(%arg0: i32) -> i32 {
    %c0_i32 = arith.constant 0 : i32
    %c0_i32_0 = arith.constant 0 : i32
    return %c0_i32 : i32
  }
  func.func @transform_3(%arg0: i32) -> (i32, i32, i32) {
    %c0_i32 = arith.constant 0 : i32
    %c0_i32_0 = arith.constant 0 : i32
    %c0_i32_1 = arith.constant 0 : i32
    return %c0_i32, %c0_i32_0, %arg0 : i32, i32, i32
  }
  func.func @transform_4(%arg0: i32) -> (i32, i32, i32, i32) {
    %c0_i32 = arith.constant 0 : i32
    %c0_i32_0 = arith.constant 0 : i32
    %c0_i32_1 = arith.constant 0 : i32
    %c0_i32_2 = arith.constant 0 : i32
    %c0_i32_3 = arith.constant 0 : i32
    return %c0_i32, %c0_i32_0, %c0_i32_1, %c0_i32_2 : i32, i32, i32, i32
  }
  func.func @transform_5(%arg0: i32) -> (i32, i32, i32, i32) {
    %c0_i32 = arith.constant 0 : i32
    %c0_i32_0 = arith.constant 0 : i32
    %c0_i32_1 = arith.constant 0 : i32
    %c0_i32_2 = arith.constant 0 : i32
    %c0_i32_3 = arith.constant 0 : i32
    return %c0_i32, %c0_i32_0, %c0_i32_1, %c0_i32_2 : i32, i32, i32, i32
  }
  func.func @transform_6(%arg0: i32) -> (i32, i32, i32, i32) {
    %c0_i32 = arith.constant 0 : i32
    %c0_i32_0 = arith.constant 0 : i32
    %c0_i32_1 = arith.constant 0 : i32
    %c0_i32_2 = arith.constant 0 : i32
    %c0_i32_3 = arith.constant 0 : i32
    return %c0_i32, %c0_i32_0, %c0_i32_1, %c0_i32_2 : i32, i32, i32, i32
  }
  func.func @transform_7(%arg0: i32) -> (i32, i32, i32) {
    %c0_i32 = arith.constant 0 : i32
    %c0_i32_0 = arith.constant 0 : i32
    %c0_i32_1 = arith.constant 0 : i32
    return %c0_i32, %c0_i32_0, %arg0 : i32, i32, i32
  }
}

</mosaic_0001>

<llo_original>
// kernel: tpu_custom_call.1
$region0: #{tpu_custom_call.1}
  #allocation0 [shape = 'u32[]', space=smem, size = 0x4, offset = 0x4, fixed_abs, tag = 'smem constant byte address 0x4 - core index']
  #allocation1 [shape = 'u32[144,128]{1,0:T(1,128)}', space=vmem, size = 0x12000, scoped, tag = 'internal scratch']
  %s0 = inlined_call_operand.hbm [shape: f32[128], index: 0, kind: input, shape index: {}]
  %s1 = inlined_call_operand.vmem [shape: f32[16], index: 1, kind: input, shape index: {}]
  %s2 = inlined_call_operand.vmem [shape: f32[8], index: 2, kind: input, shape index: {}]
  %s3 = inlined_call_operand.hbm [shape: f32[8,16,32], index: 3, kind: input, shape index: {}]
  %s4 = inlined_call_operand.hbm [shape: f32[2,2,16,16], index: 4, kind: input, shape index: {}]
  %s5 = inlined_call_operand.hbm [shape: f32[2,2,16,16], index: 5, kind: input, shape index: {}]
  %s6 = inlined_call_operand.hbm [shape: f32[2,4,16,16], index: 6, kind: input, shape index: {}]
  %s7 = inlined_call_operand.hbm [shape: f32[8,16,32], index: 7, kind: output, shape index: {}]
  %s8 = sld [smem:[#allocation0]]
  $region66: #{tpu_custom_call.1} parent=0
    _
  %s10 = ssub.s32 1, %s8
  %s11 = scalar_select 0, %s10, %s8
  $region1: #{tpu_custom_call.1} parent=0
    #allocation2 [shape = 'u8[512]{0}', space=smem, size = 0x200, scoped, tag = 'input window, operand 0, single buffered']
    #allocation3 [shape = 's32[1]{0}', space=sflag, size = 0x4, scoped, tag = 'scoped memory for tpu_custom_call.1']
    #allocation4 [shape = 's32[1]{0}', space=sflag, size = 0x4, scoped, tag = 'scoped memory for tpu_custom_call.1']
    #allocation5 [shape = 's32[1]{0}', space=sflag, size = 0x4, scoped, tag = 'scoped memory for tpu_custom_call.1']
    #allocation6 [shape = 's32[1]{0}', space=sflag, size = 0x4, scoped, tag = 'scoped memory for tpu_custom_call.1']
    #allocation7 [shape = 'u8[512]{0}', space=smem, size = 0x200, scoped, tag = 'input window, operand 1, single buffered']
    #allocation8 [shape = 'u8[512]{0}', space=smem, size = 0x200, scoped, tag = 'input window, operand 2, single buffered']
    #allocation9 [shape = 's32[1]{0}', space=sflag, size = 0x4, scoped, tag = 'scoped memory for tpu_custom_call.1']
    #allocation10 [shape = 'u8[65536]{0}', space=vmem, size = 0x10000, scoped, tag = 'input window, operand 3, single buffered']
    #allocation11 [shape = 'u8[32768]{0}', space=vmem, size = 0x8000, scoped, tag = 'input window, operand 4, single buffered']
    #allocation12 [shape = 's32[1]{0}', space=sflag, size = 0x4, scoped, tag = 'scoped memory for tpu_custom_call.1']
    #allocation13 [shape = 'u8[32768]{0}', space=vmem, size = 0x8000, scoped, tag = 'input window, operand 5, single buffered']
    #allocation14 [shape = 'u8[65536]{0}', space=vmem, size = 0x10000, scoped, tag = 'input window, operand 6, single buffered']
    #allocation15 [shape = 's32[1]{0}', space=sflag, size = 0x4, scoped, tag = 'scoped memory for tpu_custom_call.1']
    #allocation16 [shape = 'u8[65536]{0}', space=vmem, size = 0x10000, scoped, tag = 'output window, operand 0, single buffered']
    %12 = vsyncpa [#allocation5], 0
    %13 = vsyncpa [#allocation6], 0
    %14 = vsyncpa [#allocation9], 0
    %15 = vsyncpa [#allocation3], 0
    %16 = vsyncpa [#allocation12], 0
    %17 = vsyncpa [#allocation15], 0
    %18 = vsyncpa [#allocation4], 0
    // Predicated region
    $region2: #{tpu_custom_call.1} parent=1 // pred_check
      _
    $region3: #{tpu_custom_call.1} parent=1 // pred_check_branch
      %20 = sbr.rel (0) target = $region5
    $region4: #{tpu_custom_call.1} parent=1 // pred_region
      %s22 = ssub.s32 16, 16
      %23 = vsyncadd [#allocation5], %s22
      %26 = dma.hbm_to_smem %s0, 16, [#allocation2], [#allocation5]
    $region5: #{tpu_custom_call.1} parent=1 // pred_fallthru
      _
    // Predicated region
    $region6: #{tpu_custom_call.1} parent=1 // pred_check
      _
    $region7: #{tpu_custom_call.1} parent=1 // pred_check_branch
      %28 = sbr.rel (0) target = $region9
    $region8: #{tpu_custom_call.1} parent=1 // pred_region
      %s30 = ssub.s32 16, 16
      %31 = vsyncadd [#allocation6], %s30
      %s33 = sshll.u32 %s1, 4
      %s34 = int_to_ptr.vmem [resolvable:$true] %s33
      %36 = dma.vmem_to_smem %s34, 16, [#allocation7], [#allocation6]
    $region9: #{tpu_custom_call.1} parent=1 // pred_fallthru
      _
    // Predicated region
    $region10: #{tpu_custom_call.1} parent=1 // pred_check
      _
    $region11: #{tpu_custom_call.1} parent=1 // pred_check_branch
      %38 = sbr.rel (0) target = $region13
    $region12: #{tpu_custom_call.1} parent=1 // pred_region
      %s40 = ssub.s32 16, 16
      %41 = vsyncadd [#allocation9], %s40
      %s43 = sshll.u32 %s2, 4
      %s44 = int_to_ptr.vmem [resolvable:$true] %s43
      %46 = dma.vmem_to_smem %s44, 16, [#allocation8], [#allocation9]
    $region13: #{tpu_custom_call.1} parent=1 // pred_fallthru
      _
    // Predicated region
    $region14: #{tpu_custom_call.1} parent=1 // pred_check
      _
    $region15: #{tpu_custom_call.1} parent=1 // pred_check_branch
      %48 = sbr.rel (0) target = $region17
    $region16: #{tpu_custom_call.1} parent=1 // pred_region
      %s50 = ssub.s32 2048, 2048
      %51 = vsyncadd [#allocation3], %s50
      %s52 = sshll.u32 [#allocation10], 4
      %s53 = int_to_ptr.vmem [resolvable:$true] %s52
      %58 = dma.hbm_to_vmem [thread:$0]  %s3, 2048, %s53, [#allocation3], 128, 128, 8
    $region17: #{tpu_custom_call.1} parent=1 // pred_fallthru
      _
    // Predicated region
    $region18: #{tpu_custom_call.1} parent=1 // pred_check
      _
    $region19: #{tpu_custom_call.1} parent=1 // pred_check_branch
      %60 = sbr.rel (0) target = $region21
    $region20: #{tpu_custom_call.1} parent=1 // pred_region
      %s62 = ssub.s32 1024, 1024
      %63 = vsyncadd [#allocation12], %s62
      %s64 = sshll.u32 [#allocation11], 4
      %s65 = int_to_ptr.vmem [resolvable:$true] %s64
      %70 = dma.hbm_to_vmem [thread:$0]  %s4, 1024, %s65, [#allocation12], 128, 128, 8
    $region21: #{tpu_custom_call.1} parent=1 // pred_fallthru
      _
    // Predicated region
    $region22: #{tpu_custom_call.1} parent=1 // pred_check
      _
    $region23: #{tpu_custom_call.1} parent=1 // pred_check_branch
      %72 = sbr.rel (0) target = $region25
    $region24: #{tpu_custom_call.1} parent=1 // pred_region
      %s74 = ssub.s32 1024, 1024
      %75 = vsyncadd [#allocation12], %s74
      %s76 = sshll.u32 [#allocation13], 4
      %s77 = int_to_ptr.vmem [resolvable:$true] %s76
      %82 = dma.hbm_to_vmem [thread:$0]  %s5, 1024, %s77, [#allocation12], 128, 128, 8
    $region25: #{tpu_custom_call.1} parent=1 // pred_fallthru
      _
    // Predicated region
    $region26: #{tpu_custom_call.1} parent=1 // pred_check
      _
    $region27: #{tpu_custom_call.1} parent=1 // pred_check_branch
      %84 = sbr.rel (0) target = $region29
    $region28: #{tpu_custom_call.1} parent=1 // pred_region
      %s86 = ssub.s32 2048, 2048
      %87 = vsyncadd [#allocation15], %s86
      %s88 = sshll.u32 [#allocation14], 4
      %s89 = int_to_ptr.vmem [resolvable:$true] %s88
      %94 = dma.hbm_to_vmem [thread:$0]  %s6, 2048, %s89, [#allocation15], 128, 128, 8
    $region29: #{tpu_custom_call.1} parent=1 // pred_fallthru
      _
    // Predicated region
    $region30: #{tpu_custom_call.1} parent=1 // pred_check
      _
    $region31: #{tpu_custom_call.1} parent=1 // pred_check_branch
      %96 = sbr.rel (0) target = $region33
    $region32: #{tpu_custom_call.1} parent=1 // pred_region
      %97 = dma.done [#allocation5], 16
    $region33: #{tpu_custom_call.1} parent=1 // pred_fallthru
      _
    // Predicated region
    $region34: #{tpu_custom_call.1} parent=1 // pred_check
      _
    $region35: #{tpu_custom_call.1} parent=1 // pred_check_branch
      %99 = sbr.rel (0) target = $region37
    $region36: #{tpu_custom_call.1} parent=1 // pred_region
      %100 = dma.done [#allocation6], 16
    $region37: #{tpu_custom_call.1} parent=1 // pred_fallthru
      _
    // Predicated region
    $region38: #{tpu_custom_call.1} parent=1 // pred_check
      _
    $region39: #{tpu_custom_call.1} parent=1 // pred_check_branch
      %102 = sbr.rel (0) target = $region41
    $region40: #{tpu_custom_call.1} parent=1 // pred_region
      %103 = dma.done [#allocation9], 16
    $region41: #{tpu_custom_call.1} parent=1 // pred_fallthru
      _
    // Predicated region
    $region42: #{tpu_custom_call.1} parent=1 // pred_check
      _
    $region43: #{tpu_custom_call.1} parent=1 // pred_check_branch
      %105 = sbr.rel (0) target = $region45
    $region44: #{tpu_custom_call.1} parent=1 // pred_region
      %106 = dma.done [#allocation3], 2048
    $region45: #{tpu_custom_call.1} parent=1 // pred_fallthru
      _
    // Predicated region
    $region46: #{tpu_custom_call.1} parent=1 // pred_check
      _
    $region47: #{tpu_custom_call.1} parent=1 // pred_check_branch
      %108 = sbr.rel (0) target = $region49
    $region48: #{tpu_custom_call.1} parent=1 // pred_region
      %109 = dma.done [#allocation12], 1024
    $region49: #{tpu_custom_call.1} parent=1 // pred_fallthru
      _
    // Predicated region
    $region50: #{tpu_custom_call.1} parent=1 // pred_check
      _
    $region51: #{tpu_custom_call.1} parent=1 // pred_check_branch
      %111 = sbr.rel (0) target = $region53
    $region52: #{tpu_custom_call.1} parent=1 // pred_region
      %112 = dma.done [#allocation12], 1024
    $region53: #{tpu_custom_call.1} parent=1 // pred_fallthru
      _
    // Predicated region
    $region54: #{tpu_custom_call.1} parent=1 // pred_check
      _
    $region55: #{tpu_custom_call.1} parent=1 // pred_check_branch
      %114 = sbr.rel (0) target = $region57
    $region56: #{tpu_custom_call.1} parent=1 // pred_region
      %115 = dma.done [#allocation15], 2048
    $region57: #{tpu_custom_call.1} parent=1 // pred_fallthru
      _
    %116 = sfence
    %v117 = vld [vmem:[#allocation10] sm:$0xff]
    %v118 = vld [vmem:[#allocation10 + $0x8] sm:$0xff]
    %v119 = vld [vmem:[#allocation10 + $0x10] sm:$0xff]
    %v120 = vld [vmem:[#allocation10 + $0x18] sm:$0xff]
    %v121 = vld [vmem:[#allocation10 + $0x20] sm:$0xff]
    %v122 = vld [vmem:[#allocation10 + $0x28] sm:$0xff]
    %v123 = vld [vmem:[#allocation10 + $0x30] sm:$0xff]
    %v124 = vld [vmem:[#allocation10 + $0x38] sm:$0xff]
    %v125 = vld [vmem:[#allocation10 + $0x40] sm:$0xff]
    %v126 = vld [vmem:[#allocation10 + $0x48] sm:$0xff]
    %v127 = vld [vmem:[#allocation10 + $0x50] sm:$0xff]
    %v128 = vld [vmem:[#allocation10 + $0x58] sm:$0xff]
    %v129 = vld [vmem:[#allocation10 + $0x60] sm:$0xff]
    %v130 = vld [vmem:[#allocation10 + $0x68] sm:$0xff]
    %v131 = vld [vmem:[#allocation10 + $0x70] sm:$0xff]
    %v132 = vld [vmem:[#allocation10 + $0x78] sm:$0xff]
    %s133 = sld [smem:[#allocation2]]
    %v134 = vstv %s133
    %v135 = vmul.f32 %v134, %v117
    %v136 = vmul.f32 %v134, %v118
    %s137 = sld [smem:[#allocation2 + $0x1]]
    %v138 = vstv %s137
    %v139 = vmul.f32 %v138, %v119
    %v140 = vmul.f32 %v138, %v120
    %v141 = vadd.f32 %v135, %v139
    %v142 = vadd.f32 %v136, %v140
    %s143 = sld [smem:[#allocation2 + $0x2]]
    %v144 = vstv %s143
    %v145 = vmul.f32 %v144, %v121
    %v146 = vmul.f32 %v144, %v122
    %v147 = vadd.f32 %v141, %v145
    %v148 = vadd.f32 %v142, %v146
    %s149 = sld [smem:[#allocation2 + $0x3]]
    %v150 = vstv %s149
    %v151 = vmul.f32 %v150, %v123
    %v152 = vmul.f32 %v150, %v124
    %v153 = vadd.f32 %v147, %v151
    %v154 = vadd.f32 %v148, %v152
    %s155 = sld [smem:[#allocation2 + $0x4]]
    %v156 = vstv %s155
    %v157 = vmul.f32 %v156, %v125
    %v158 = vmul.f32 %v156, %v126
    %v159 = vadd.f32 %v153, %v157
    %v160 = vadd.f32 %v154, %v158
    %s161 = sld [smem:[#allocation2 + $0x5]]
    %v162 = vstv %s161
    %v163 = vmul.f32 %v162, %v127
    %v164 = vmul.f32 %v162, %v128
    %v165 = vadd.f32 %v159, %v163
    %v166 = vadd.f32 %v160, %v164
    %s167 = sld [smem:[#allocation2 + $0x6]]
    %v168 = vstv %s167
    %v169 = vmul.f32 %v168, %v129
    %v170 = vmul.f32 %v168, %v130
    %v171 = vadd.f32 %v165, %v169
    %v172 = vadd.f32 %v166, %v170
    %s173 = sld [smem:[#allocation2 + $0x7]]
    %v174 = vstv %s173
    %v175 = vmul.f32 %v174, %v131
    %v176 = vmul.f32 %v174, %v132
    %v177 = vadd.f32 %v171, %v175
    %v178 = vadd.f32 %v172, %v176
    %s179 = sld [smem:[#allocation7]]
    %v180 = vstv %s179
    %v181 = vadd.f32 %v177, %v180
    %v182 = vadd.f32 %v178, %v180
    %s183 = sld [smem:[#allocation2 + $0x8]]
    %v184 = vstv %s183
    %v185 = vmul.f32 %v184, %v117
    %v186 = vmul.f32 %v184, %v118
    %s187 = sld [smem:[#allocation2 + $0x9]]
    %v188 = vstv %s187
    %v189 = vmul.f32 %v188, %v119
    %v190 = vmul.f32 %v188, %v120
    %v191 = vadd.f32 %v185, %v189
    %v192 = vadd.f32 %v186, %v190
    %s193 = sld [smem:[#allocation2 + $0xa]]
    %v194 = vstv %s193
    %v195 = vmul.f32 %v194, %v121
    %v196 = vmul.f32 %v194, %v122
    %v197 = vadd.f32 %v191, %v195
    %v198 = vadd.f32 %v192, %v196
    %s199 = sld [smem:[#allocation2 + $0xb]]
    %v200 = vstv %s199
    %v201 = vmul.f32 %v200, %v123
    %v202 = vmul.f32 %v200, %v124
    %v203 = vadd.f32 %v197, %v201
    %v204 = vadd.f32 %v198, %v202
    %s205 = sld [smem:[#allocation2 + $0xc]]
    %v206 = vstv %s205
    %v207 = vmul.f32 %v206, %v125
    %v208 = vmul.f32 %v206, %v126
    %v209 = vadd.f32 %v203, %v207
    %v210 = vadd.f32 %v204, %v208
    %s211 = sld [smem:[#allocation2 + $0xd]]
    %v212 = vstv %s211
    %v213 = vmul.f32 %v212, %v127
    %v214 = vmul.f32 %v212, %v128
    %v215 = vadd.f32 %v209, %v213
    %v216 = vadd.f32 %v210, %v214
    %s217 = sld [smem:[#allocation2 + $0xe]]
    %v218 = vstv %s217
    %v219 = vmul.f32 %v218, %v129
    %v220 = vmul.f32 %v218, %v130
    %v221 = vadd.f32 %v215, %v219
    %v222 = vadd.f32 %v216, %v220
    %s223 = sld [smem:[#allocation2 + $0xf]]
    %v224 = vstv %s223
    %v225 = vmul.f32 %v224, %v131
    %v226 = vmul.f32 %v224, %v132
    %v227 = vadd.f32 %v221, %v225
    %v228 = vadd.f32 %v222, %v226
    %s229 = sld [smem:[#allocation7 + $0x1]]
    %v230 = vstv %s229
    %v231 = vadd.f32 %v227, %v230
    %v232 = vadd.f32 %v228, %v230
    %s233 = sld [smem:[#allocation2 + $0x10]]
    %v234 = vstv %s233
    %v235 = vmul.f32 %v234, %v117
    %v236 = vmul.f32 %v234, %v118
    %s237 = sld [smem:[#allocation2 + $0x11]]
    %v238 = vstv %s237
    %v239 = vmul.f32 %v238, %v119
    %v240 = vmul.f32 %v238, %v120
    %v241 = vadd.f32 %v235, %v239
    %v242 = vadd.f32 %v236, %v240
    %s243 = sld [smem:[#allocation2 + $0x12]]
    %v244 = vstv %s243
    %v245 = vmul.f32 %v244, %v121
    %v246 = vmul.f32 %v244, %v122
    %v247 = vadd.f32 %v241, %v245
    %v248 = vadd.f32 %v242, %v246
    %s249 = sld [smem:[#allocation2 + $0x13]]
    %v250 = vstv %s249
    %v251 = vmul.f32 %v250, %v123
    %v252 = vmul.f32 %v250, %v124
    %v253 = vadd.f32 %v247, %v251
    %v254 = vadd.f32 %v248, %v252
    %s255 = sld [smem:[#allocation2 + $0x14]]
    %v256 = vstv %s255
    %v257 = vmul.f32 %v256, %v125
    %v258 = vmul.f32 %v256, %v126
    %v259 = vadd.f32 %v253, %v257
    %v260 = vadd.f32 %v254, %v258
    %s261 = sld [smem:[#allocation2 + $0x15]]
    %v262 = vstv %s261
    %v263 = vmul.f32 %v262, %v127
    %v264 = vmul.f32 %v262, %v128
    %v265 = vadd.f32 %v259, %v263
    %v266 = vadd.f32 %v260, %v264
    %s267 = sld [smem:[#allocation2 + $0x16]]
    %v268 = vstv %s267
    %v269 = vmul.f32 %v268, %v129
    %v270 = vmul.f32 %v268, %v130
    %v271 = vadd.f32 %v265, %v269
    %v272 = vadd.f32 %v266, %v270
    %s273 = sld [smem:[#allocation2 + $0x17]]
    %v274 = vstv %s273
    %v275 = vmul.f32 %v274, %v131
    %v276 = vmul.f32 %v274, %v132
    %v277 = vadd.f32 %v271, %v275
    %v278 = vadd.f32 %v272, %v276
    %s279 = sld [smem:[#allocation7 + $0x2]]
    %v280 = vstv %s279
    %v281 = vadd.f32 %v277, %v280
    %v282 = vadd.f32 %v278, %v280
    %s283 = sld [smem:[#allocation2 + $0x18]]
    %v284 = vstv %s283
    %v285 = vmul.f32 %v284, %v117
    %v286 = vmul.f32 %v284, %v118
    %s287 = sld [smem:[#allocation2 + $0x19]]
    %v288 = vstv %s287
    %v289 = vmul.f32 %v288, %v119
    %v290 = vmul.f32 %v288, %v120
    %v291 = vadd.f32 %v285, %v289
    %v292 = vadd.f32 %v286, %v290
    %s293 = sld [smem:[#allocation2 + $0x1a]]
    %v294 = vstv %s293
    %v295 = vmul.f32 %v294, %v121
    %v296 = vmul.f32 %v294, %v122
    %v297 = vadd.f32 %v291, %v295
    %v298 = vadd.f32 %v292, %v296
    %s299 = sld [smem:[#allocation2 + $0x1b]]
    %v300 = vstv %s299
    %v301 = vmul.f32 %v300, %v123
    %v302 = vmul.f32 %v300, %v124
    %v303 = vadd.f32 %v297, %v301
    %v304 = vadd.f32 %v298, %v302
    %s305 = sld [smem:[#allocation2 + $0x1c]]
    %v306 = vstv %s305
    %v307 = vmul.f32 %v306, %v125
    %v308 = vmul.f32 %v306, %v126
    %v309 = vadd.f32 %v303, %v307
    %v310 = vadd.f32 %v304, %v308
    %s311 = sld [smem:[#allocation2 + $0x1d]]
    %v312 = vstv %s311
    %v313 = vmul.f32 %v312, %v127
    %v314 = vmul.f32 %v312, %v128
    %v315 = vadd.f32 %v309, %v313
    %v316 = vadd.f32 %v310, %v314
    %s317 = sld [smem:[#allocation2 + $0x1e]]
    %v318 = vstv %s317
    %v319 = vmul.f32 %v318, %v129
    %v320 = vmul.f32 %v318, %v130
    %v321 = vadd.f32 %v315, %v319
    %v322 = vadd.f32 %v316, %v320
    %s323 = sld [smem:[#allocation2 + $0x1f]]
    %v324 = vstv %s323
    %v325 = vmul.f32 %v324, %v131
    %v326 = vmul.f32 %v324, %v132
    %v327 = vadd.f32 %v321, %v325
    %v328 = vadd.f32 %v322, %v326
    %s329 = sld [smem:[#allocation7 + $0x3]]
    %v330 = vstv %s329
    %v331 = vadd.f32 %v327, %v330
    %v332 = vadd.f32 %v328, %v330
    %s333 = sld [smem:[#allocation2 + $0x20]]
    %v334 = vstv %s333
    %v335 = vmul.f32 %v334, %v117
    %v336 = vmul.f32 %v334, %v118
    %s337 = sld [smem:[#allocation2 + $0x21]]
    %v338 = vstv %s337
    %v339 = vmul.f32 %v338, %v119
    %v340 = vmul.f32 %v338, %v120
    %v341 = vadd.f32 %v335, %v339
    %v342 = vadd.f32 %v336, %v340
    %s343 = sld [smem:[#allocation2 + $0x22]]
    %v344 = vstv %s343
    %v345 = vmul.f32 %v344, %v121
    %v346 = vmul.f32 %v344, %v122
    %v347 = vadd.f32 %v341, %v345
    %v348 = vadd.f32 %v342, %v346
    %s349 = sld [smem:[#allocation2 + $0x23]]
    %v350 = vstv %s349
    %v351 = vmul.f32 %v350, %v123
    %v352 = vmul.f32 %v350, %v124
    %v353 = vadd.f32 %v347, %v351
    %v354 = vadd.f32 %v348, %v352
    %s355 = sld [smem:[#allocation2 + $0x24]]
    %v356 = vstv %s355
    %v357 = vmul.f32 %v356, %v125
    %v358 = vmul.f32 %v356, %v126
    %v359 = vadd.f32 %v353, %v357
    %v360 = vadd.f32 %v354, %v358
    %s361 = sld [smem:[#allocation2 + $0x25]]
    %v362 = vstv %s361
    %v363 = vmul.f32 %v362, %v127
    %v364 = vmul.f32 %v362, %v128
    %v365 = vadd.f32 %v359, %v363
    %v366 = vadd.f32 %v360, %v364
    %s367 = sld [smem:[#allocation2 + $0x26]]
    %v368 = vstv %s367
    %v369 = vmul.f32 %v368, %v129
    %v370 = vmul.f32 %v368, %v130
    %v371 = vadd.f32 %v365, %v369
    %v372 = vadd.f32 %v366, %v370
    %s373 = sld [smem:[#allocation2 + $0x27]]
    %v374 = vstv %s373
    %v375 = vmul.f32 %v374, %v131
    %v376 = vmul.f32 %v374, %v132
    %v377 = vadd.f32 %v371, %v375
    %v378 = vadd.f32 %v372, %v376
    %s379 = sld [smem:[#allocation7 + $0x4]]
    %v380 = vstv %s379
    %v381 = vadd.f32 %v377, %v380
    %v382 = vadd.f32 %v378, %v380
    %s383 = sld [smem:[#allocation2 + $0x28]]
    %v384 = vstv %s383
    %v385 = vmul.f32 %v384, %v117
    %v386 = vmul.f32 %v384, %v118
    %s387 = sld [smem:[#allocation2 + $0x29]]
    %v388 = vstv %s387
    %v389 = vmul.f32 %v388, %v119
    %v390 = vmul.f32 %v388, %v120
    %v391 = vadd.f32 %v385, %v389
    %v392 = vadd.f32 %v386, %v390
    %s393 = sld [smem:[#allocation2 + $0x2a]]
    %v394 = vstv %s393
    %v395 = vmul.f32 %v394, %v121
    %v396 = vmul.f32 %v394, %v122
    %v397 = vadd.f32 %v391, %v395
    %v398 = vadd.f32 %v392, %v396
    %s399 = sld [smem:[#allocation2 + $0x2b]]
    %v400 = vstv %s399
    %v401 = vmul.f32 %v400, %v123
    %v402 = vmul.f32 %v400, %v124
    %v403 = vadd.f32 %v397, %v401
    %v404 = vadd.f32 %v398, %v402
    %s405 = sld [smem:[#allocation2 + $0x2c]]
    %v406 = vstv %s405
    %v407 = vmul.f32 %v406, %v125
    %v408 = vmul.f32 %v406, %v126
    %v409 = vadd.f32 %v403, %v407
    %v410 = vadd.f32 %v404, %v408
    %s411 = sld [smem:[#allocation2 + $0x2d]]
    %v412 = vstv %s411
    %v413 = vmul.f32 %v412, %v127
    %v414 = vmul.f32 %v412, %v128
    %v415 = vadd.f32 %v409, %v413
    %v416 = vadd.f32 %v410, %v414
    %s417 = sld [smem:[#allocation2 + $0x2e]]
    %v418 = vstv %s417
    %v419 = vmul.f32 %v418, %v129
    %v420 = vmul.f32 %v418, %v130
    %v421 = vadd.f32 %v415, %v419
    %v422 = vadd.f32 %v416, %v420
    %s423 = sld [smem:[#allocation2 + $0x2f]]
    %v424 = vstv %s423
    %v425 = vmul.f32 %v424, %v131
    %v426 = vmul.f32 %v424, %v132
    %v427 = vadd.f32 %v421, %v425
    %v428 = vadd.f32 %v422, %v426
    %s429 = sld [smem:[#allocation7 + $0x5]]
    %v430 = vstv %s429
    %v431 = vadd.f32 %v427, %v430
    %v432 = vadd.f32 %v428, %v430
    %s433 = sld [smem:[#allocation2 + $0x30]]
    %v434 = vstv %s433
    %v435 = vmul.f32 %v434, %v117
    %v436 = vmul.f32 %v434, %v118
    %s437 = sld [smem:[#allocation2 + $0x31]]
    %v438 = vstv %s437
    %v439 = vmul.f32 %v438, %v119
    %v440 = vmul.f32 %v438, %v120
    %v441 = vadd.f32 %v435, %v439
    %v442 = vadd.f32 %v436, %v440
    %s443 = sld [smem:[#allocation2 + $0x32]]
    %v444 = vstv %s443
    %v445 = vmul.f32 %v444, %v121
    %v446 = vmul.f32 %v444, %v122
    %v447 = vadd.f32 %v441, %v445
    %v448 = vadd.f32 %v442, %v446
    %s449 = sld [smem:[#allocation2 + $0x33]]
    %v450 = vstv %s449
    %v451 = vmul.f32 %v450, %v123
    %v452 = vmul.f32 %v450, %v124
    %v453 = vadd.f32 %v447, %v451
    %v454 = vadd.f32 %v448, %v452
    %s455 = sld [smem:[#allocation2 + $0x34]]
    %v456 = vstv %s455
    %v457 = vmul.f32 %v456, %v125
    %v458 = vmul.f32 %v456, %v126
    %v459 = vadd.f32 %v453, %v457
    %v460 = vadd.f32 %v454, %v458
    %s461 = sld [smem:[#allocation2 + $0x35]]
    %v462 = vstv %s461
    %v463 = vmul.f32 %v462, %v127
    %v464 = vmul.f32 %v462, %v128
    %v465 = vadd.f32 %v459, %v463
    %v466 = vadd.f32 %v460, %v464
    %s467 = sld [smem:[#allocation2 + $0x36]]
    %v468 = vstv %s467
    %v469 = vmul.f32 %v468, %v129
    %v470 = vmul.f32 %v468, %v130
    %v471 = vadd.f32 %v465, %v469
    %v472 = vadd.f32 %v466, %v470
    %s473 = sld [smem:[#allocation2 + $0x37]]
    %v474 = vstv %s473
    %v475 = vmul.f32 %v474, %v131
    %v476 = vmul.f32 %v474, %v132
    %v477 = vadd.f32 %v471, %v475
    %v478 = vadd.f32 %v472, %v476
    %s479 = sld [smem:[#allocation7 + $0x6]]
    %v480 = vstv %s479
    %v481 = vadd.f32 %v477, %v480
    %v482 = vadd.f32 %v478, %v480
    %s483 = sld [smem:[#allocation2 + $0x38]]
    %v484 = vstv %s483
    %v485 = vmul.f32 %v484, %v117
    %v486 = vmul.f32 %v484, %v118
    %s487 = sld [smem:[#allocation2 + $0x39]]
    %v488 = vstv %s487
    %v489 = vmul.f32 %v488, %v119
    %v490 = vmul.f32 %v488, %v120
    %v491 = vadd.f32 %v485, %v489
    %v492 = vadd.f32 %v486, %v490
    %s493 = sld [smem:[#allocation2 + $0x3a]]
    %v494 = vstv %s493
    %v495 = vmul.f32 %v494, %v121
    %v496 = vmul.f32 %v494, %v122
    %v497 = vadd.f32 %v491, %v495
    %v498 = vadd.f32 %v492, %v496
    %s499 = sld [smem:[#allocation2 + $0x3b]]
    %v500 = vstv %s499
    %v501 = vmul.f32 %v500, %v123
    %v502 = vmul.f32 %v500, %v124
    %v503 = vadd.f32 %v497, %v501
    %v504 = vadd.f32 %v498, %v502
    %s505 = sld [smem:[#allocation2 + $0x3c]]
    %v506 = vstv %s505
    %v507 = vmul.f32 %v506, %v125
    %v508 = vmul.f32 %v506, %v126
    %v509 = vadd.f32 %v503, %v507
    %v510 = vadd.f32 %v504, %v508
    %s511 = sld [smem:[#allocation2 + $0x3d]]
    %v512 = vstv %s511
    %v513 = vmul.f32 %v512, %v127
    %v514 = vmul.f32 %v512, %v128
    %v515 = vadd.f32 %v509, %v513
    %v516 = vadd.f32 %v510, %v514
    %s517 = sld [smem:[#allocation2 + $0x3e]]
    %v518 = vstv %s517
    %v519 = vmul.f32 %v518, %v129
    %v520 = vmul.f32 %v518, %v130
    %v521 = vadd.f32 %v515, %v519
    %v522 = vadd.f32 %v516, %v520
    %s523 = sld [smem:[#allocation2 + $0x3f]]
    %v524 = vstv %s523
    %v525 = vmul.f32 %v524, %v131
    %v526 = vmul.f32 %v524, %v132
    %v527 = vadd.f32 %v521, %v525
    %v528 = vadd.f32 %v522, %v526
    %s529 = sld [smem:[#allocation7 + $0x7]]
    %v530 = vstv %s529
    %v531 = vadd.f32 %v527, %v530
    %v532 = vadd.f32 %v528, %v530
    %v535 = vcombine.high %v181, %v181
    %v537 = vunpack.c.l.s4 1966171168
    %v538 = vunpack.c.0.s8 %v537
    %v539 = vlaneseq
    %v540 = vshrl.u32 %v539, 7
    %v541 = vsub.s32 %v538, %v540
    %v542 = vrot.slane %v181, %v541
    %v544 = vunpack.c.l.s4 1966171168
    %v545 = vunpack.c.0.s8 %v544
    %v546 = vlaneseq
    %v547 = vshrl.u32 %v546, 7
    %v548 = vsub.s32 %v545, %v547
    %v549 = vrot.slane %v535, %v548
    %v550 = vcombine.high %v542, %v542
    %v551 = vcombine.high %v549, %v549
    %v553 = vunpack.c.l.s4 1966171168
    %v554 = vunpack.c.0.s8 %v553
    %v555 = vlaneseq
    %v556 = vshrl.u32 %v555, 7
    %v557 = vsub.s32 %v554, %v556
    %v558 = vrot.slane %v542, %v557
    %v560 = vunpack.c.l.s4 1966171168
    %v561 = vunpack.c.0.s8 %v560
    %v562 = vlaneseq
    %v563 = vshrl.u32 %v562, 7
    %v564 = vsub.s32 %v561, %v563
    %v565 = vrot.slane %v549, %v564
    %v567 = vunpack.c.l.s4 1966171168
    %v568 = vunpack.c.0.s8 %v567
    %v569 = vlaneseq
    %v570 = vshrl.u32 %v569, 7
    %v571 = vsub.s32 %v568, %v570
    %v572 = vrot.slane %v550, %v571
    %v574 = vunpack.c.l.s4 1966171168
    %v575 = vunpack.c.0.s8 %v574
    %v576 = vlaneseq
    %v577 = vshrl.u32 %v576, 7
    %v578 = vsub.s32 %v575, %v577
    %v579 = vrot.slane %v551, %v578
    %v580 = vcombine.high %v558, %v558
    %v581 = vcombine.high %v565, %v565
    %v582 = vcombine.high %v572, %v572
    %v583 = vcombine.high %v579, %v579
    %v584 = vcombine.high %v182, %v182
    %v586 = vunpack.c.l.s4 1966171168
    %v587 = vunpack.c.0.s8 %v586
    %v588 = vlaneseq
    %v589 = vshrl.u32 %v588, 7
    %v590 = vsub.s32 %v587, %v589
    %v591 = vrot.slane %v182, %v590
    %v593 = vunpack.c.l.s4 1966171168
    %v594 = vunpack.c.0.s8 %v593
    %v595 = vlaneseq
    %v596 = vshrl.u32 %v595, 7
    %v597 = vsub.s32 %v594, %v596
    %v598 = vrot.slane %v584, %v597
    %v599 = vcombine.high %v591, %v591
    %v600 = vcombine.high %v598, %v598
    %v602 = vunpack.c.l.s4 1966171168
    %v603 = vunpack.c.0.s8 %v602
    %v604 = vlaneseq
    %v605 = vshrl.u32 %v604, 7
    %v606 = vsub.s32 %v603, %v605
    %v607 = vrot.slane %v591, %v606
    %v609 = vunpack.c.l.s4 1966171168
    %v610 = vunpack.c.0.s8 %v609
    %v611 = vlaneseq
    %v612 = vshrl.u32 %v611, 7
    %v613 = vsub.s32 %v610, %v612
    %v614 = vrot.slane %v598, %v613
    %v616 = vunpack.c.l.s4 1966171168
    %v617 = vunpack.c.0.s8 %v616
    %v618 = vlaneseq
    %v619 = vshrl.u32 %v618, 7
    %v620 = vsub.s32 %v617, %v619
    %v621 = vrot.slane %v599, %v620
    %v623 = vunpack.c.l.s4 1966171168
    %v624 = vunpack.c.0.s8 %v623
    %v625 = vlaneseq
    %v626 = vshrl.u32 %v625, 7
    %v627 = vsub.s32 %v624, %v626
    %v628 = vrot.slane %v600, %v627
    %v629 = vcombine.high %v607, %v607
    %v630 = vcombine.high %v614, %v614
    %v631 = vcombine.high %v621, %v621
    %v632 = vcombine.high %v628, %v628
    %v633 = vlaneseq
    %v634 = vshrl.u32 %v633, 7
    %v635 = vsub.s32 0, %v634
    %v636 = vrot.slane %v558, %v635
    %v637 = vlaneseq
    %v638 = vshrl.u32 %v637, 7
    %v639 = vsub.s32 0, %v638
    %v640 = vrot.slane %v572, %v639
    %v641 = vlaneseq
    %v642 = vshrl.u32 %v641, 7
    %v643 = vsub.s32 0, %v642
    %v644 = vrot.slane %v580, %v643
    %v645 = vlaneseq
    %v646 = vshrl.u32 %v645, 7
    %v647 = vsub.s32 0, %v646
    %v648 = vrot.slane %v582, %v647
    %v649 = vlaneseq
    %v650 = vshrl.u32 %v649, 7
    %v651 = vsub.s32 0, %v650
    %v652 = vrot.slane %v565, %v651
    %v653 = vlaneseq
    %v654 = vshrl.u32 %v653, 7
    %v655 = vsub.s32 0, %v654
    %v656 = vrot.slane %v579, %v655
    %v657 = vlaneseq
    %v658 = vshrl.u32 %v657, 7
    %v659 = vsub.s32 0, %v658
    %v660 = vrot.slane %v581, %v659
    %v661 = vlaneseq
    %v662 = vshrl.u32 %v661, 7
    %v663 = vsub.s32 0, %v662
    %v664 = vrot.slane %v583, %v663
    %v665 = vlaneseq
    %v666 = vshrl.u32 %v665, 7
    %v667 = vsub.s32 0, %v666
    %v668 = vrot.slane %v607, %v667
    %v669 = vlaneseq
    %v670 = vshrl.u32 %v669, 7
    %v671 = vsub.s32 0, %v670
    %v672 = vrot.slane %v621, %v671
    %v673 = vlaneseq
    %v674 = vshrl.u32 %v673, 7
    %v675 = vsub.s32 0, %v674
    %v676 = vrot.slane %v629, %v675
    %v677 = vlaneseq
    %v678 = vshrl.u32 %v677, 7
    %v679 = vsub.s32 0, %v678
    %v680 = vrot.slane %v631, %v679
    %v681 = vlaneseq
    %v682 = vshrl.u32 %v681, 7
    %v683 = vsub.s32 0, %v682
    %v684 = vrot.slane %v614, %v683
    %v685 = vlaneseq
    %v686 = vshrl.u32 %v685, 7
    %v687 = vsub.s32 0, %v686
    %v688 = vrot.slane %v628, %v687
    %v689 = vlaneseq
    %v690 = vshrl.u32 %v689, 7
    %v691 = vsub.s32 0, %v690
    %v692 = vrot.slane %v630, %v691
    %v693 = vlaneseq
    %v694 = vshrl.u32 %v693, 7
    %v695 = vsub.s32 0, %v694
    %v696 = vrot.slane %v632, %v695
    %v713 = vmul.f32 %v636, %v281
    %v714 = vmul.f32 %v636, %v282
    %v715 = vmul.f32 %v640, %v281
    %v716 = vmul.f32 %v640, %v282
    %v717 = vmul.f32 %v644, %v281
    %v718 = vmul.f32 %v644, %v282
    %v719 = vmul.f32 %v648, %v281
    %v720 = vmul.f32 %v648, %v282
    %v721 = vmul.f32 %v652, %v281
    %v722 = vmul.f32 %v652, %v282
    %v723 = vmul.f32 %v656, %v281
    %v724 = vmul.f32 %v656, %v282
    %v725 = vmul.f32 %v660, %v281
    %v726 = vmul.f32 %v660, %v282
    %v727 = vmul.f32 %v664, %v281
    %v728 = vmul.f32 %v664, %v282
    %v729 = vmul.f32 %v668, %v281
    %v730 = vmul.f32 %v668, %v282
    %v731 = vmul.f32 %v672, %v281
    %v732 = vmul.f32 %v672, %v282
    %v733 = vmul.f32 %v676, %v281
    %v734 = vmul.f32 %v676, %v282
    %v735 = vmul.f32 %v680, %v281
    %v736 = vmul.f32 %v680, %v282
    %v737 = vmul.f32 %v684, %v281
    %v738 = vmul.f32 %v684, %v282
    %v739 = vmul.f32 %v688, %v281
    %v740 = vmul.f32 %v688, %v282
    %v741 = vmul.f32 %v692, %v281
    %v742 = vmul.f32 %v692, %v282
    %v743 = vmul.f32 %v696, %v281
    %v744 = vmul.f32 %v696, %v282
    %v745 = vld [vmem:[#allocation11] sm:$0xff]
    %v746 = vld [vmem:[#allocation11 + $0x8] sm:$0xff]
    %v747 = vlaneseq
    %v748 = vshrl.u32 %v747, 7
    %v749 = vsub.s32 0, %v748
    %v750 = vrot.slane %v745, %v749
    %752 = vbcast.lane.b32.xlu0 %v750, 256
    %v753 = vpop.permute.xlu0 %752
    %s755 = sor.u32 256, 8
    %756 = vbcast.lane.b32.xlu0 %v750, %s755
    %v757 = vpop.permute.xlu0 %756
    %v758 = vlaneseq
    %v759 = vshrl.u32 %v758, 7
    %v760 = vsub.s32 1, %v759
    %v761 = vrot.slane %v745, %v760
    %763 = vbcast.lane.b32.xlu0 %v761, 256
    %v764 = vpop.permute.xlu0 %763
    %s766 = sor.u32 256, 8
    %767 = vbcast.lane.b32.xlu0 %v761, %s766
    %v768 = vpop.permute.xlu0 %767
    %v769 = vlaneseq
    %v770 = vshrl.u32 %v769, 7
    %v771 = vsub.s32 2, %v770
    %v772 = vrot.slane %v745, %v771
    %774 = vbcast.lane.b32.xlu0 %v772, 256
    %v775 = vpop.permute.xlu0 %774
    %s777 = sor.u32 256, 8
    %778 = vbcast.lane.b32.xlu0 %v772, %s777
    %v779 = vpop.permute.xlu0 %778
    %v780 = vlaneseq
    %v781 = vshrl.u32 %v780, 7
    %v782 = vsub.s32 3, %v781
    %v783 = vrot.slane %v745, %v782
    %785 = vbcast.lane.b32.xlu0 %v783, 256
    %v786 = vpop.permute.xlu0 %785
    %s788 = sor.u32 256, 8
    %789 = vbcast.lane.b32.xlu0 %v783, %s788
    %v790 = vpop.permute.xlu0 %789
    %v791 = vlaneseq
    %v792 = vshrl.u32 %v791, 7
    %v793 = vsub.s32 4, %v792
    %v794 = vrot.slane %v745, %v793
    %796 = vbcast.lane.b32.xlu0 %v794, 256
    %v797 = vpop.permute.xlu0 %796
    %s799 = sor.u32 256, 8
    %800 = vbcast.lane.b32.xlu0 %v794, %s799
    %v801 = vpop.permute.xlu0 %800
    %v802 = vlaneseq
    %v803 = vshrl.u32 %v802, 7
    %v804 = vsub.s32 5, %v803
    %v805 = vrot.slane %v745, %v804
    %807 = vbcast.lane.b32.xlu0 %v805, 256
    %v808 = vpop.permute.xlu0 %807
    %s810 = sor.u32 256, 8
    %811 = vbcast.lane.b32.xlu0 %v805, %s810
    %v812 = vpop.permute.xlu0 %811
    %v813 = vlaneseq
    %v814 = vshrl.u32 %v813, 7
    %v815 = vsub.s32 6, %v814
    %v816 = vrot.slane %v745, %v815
    %818 = vbcast.lane.b32.xlu0 %v816, 256
    %v819 = vpop.permute.xlu0 %818
    %s821 = sor.u32 256, 8
    %822 = vbcast.lane.b32.xlu0 %v816, %s821
    %v823 = vpop.permute.xlu0 %822
    %v824 = vlaneseq
    %v825 = vshrl.u32 %v824, 7
    %v826 = vsub.s32 7, %v825
    %v827 = vrot.slane %v745, %v826
    %829 = vbcast.lane.b32.xlu0 %v827, 256
    %v830 = vpop.permute.xlu0 %829
    %s832 = sor.u32 256, 8
    %833 = vbcast.lane.b32.xlu0 %v827, %s832
    %v834 = vpop.permute.xlu0 %833
    %v835 = vlaneseq
    %v836 = vshrl.u32 %v835, 7
    %v837 = vsub.s32 0, %v836
    %v838 = vrot.slane %v746, %v837
    %840 = vbcast.lane.b32.xlu0 %v838, 256
    %v841 = vpop.permute.xlu0 %840
    %s843 = sor.u32 256, 8
    %844 = vbcast.lane.b32.xlu0 %v838, %s843
    %v845 = vpop.permute.xlu0 %844
    %v846 = vlaneseq
    %v847 = vshrl.u32 %v846, 7
    %v848 = vsub.s32 1, %v847
    %v849 = vrot.slane %v746, %v848
    %851 = vbcast.lane.b32.xlu0 %v849, 256
    %v852 = vpop.permute.xlu0 %851
    %s854 = sor.u32 256, 8
    %855 = vbcast.lane.b32.xlu0 %v849, %s854
    %v856 = vpop.permute.xlu0 %855
    %v857 = vlaneseq
    %v858 = vshrl.u32 %v857, 7
    %v859 = vsub.s32 2, %v858
    %v860 = vrot.slane %v746, %v859
    %862 = vbcast.lane.b32.xlu0 %v860, 256
    %v863 = vpop.permute.xlu0 %862
    %s865 = sor.u32 256, 8
    %866 = vbcast.lane.b32.xlu0 %v860, %s865
    %v867 = vpop.permute.xlu0 %866
    %v868 = vlaneseq
    %v869 = vshrl.u32 %v868, 7
    %v870 = vsub.s32 3, %v869
    %v871 = vrot.slane %v746, %v870
    %873 = vbcast.lane.b32.xlu0 %v871, 256
    %v874 = vpop.permute.xlu0 %873
    %s876 = sor.u32 256, 8
    %877 = vbcast.lane.b32.xlu0 %v871, %s876
    %v878 = vpop.permute.xlu0 %877
    %v879 = vlaneseq
    %v880 = vshrl.u32 %v879, 7
    %v881 = vsub.s32 4, %v880
    %v882 = vrot.slane %v746, %v881
    %884 = vbcast.lane.b32.xlu0 %v882, 256
    %v885 = vpop.permute.xlu0 %884
    %s887 = sor.u32 256, 8
    %888 = vbcast.lane.b32.xlu0 %v882, %s887
    %v889 = vpop.permute.xlu0 %888
    %v890 = vlaneseq
    %v891 = vshrl.u32 %v890, 7
    %v892 = vsub.s32 5, %v891
    %v893 = vrot.slane %v746, %v892
    %895 = vbcast.lane.b32.xlu0 %v893, 256
    %v896 = vpop.permute.xlu0 %895
    %s898 = sor.u32 256, 8
    %899 = vbcast.lane.b32.xlu0 %v893, %s898
    %v900 = vpop.permute.xlu0 %899
    %v901 = vlaneseq
    %v902 = vshrl.u32 %v901, 7
    %v903 = vsub.s32 6, %v902
    %v904 = vrot.slane %v746, %v903
    %906 = vbcast.lane.b32.xlu0 %v904, 256
    %v907 = vpop.permute.xlu0 %906
    %s909 = sor.u32 256, 8
    %910 = vbcast.lane.b32.xlu0 %v904, %s909
    %v911 = vpop.permute.xlu0 %910
    %v912 = vlaneseq
    %v913 = vshrl.u32 %v912, 7
    %v914 = vsub.s32 7, %v913
    %v915 = vrot.slane %v746, %v914
    %917 = vbcast.lane.b32.xlu0 %v915, 256
    %v918 = vpop.permute.xlu0 %917
    %s920 = sor.u32 256, 8
    %921 = vbcast.lane.b32.xlu0 %v915, %s920
    %v922 = vpop.permute.xlu0 %921
    %v923 = vmul.f32 %v636, %v753
    %v924 = vmul.f32 %v636, %v757
    %v925 = vmul.f32 %v640, %v764
    %v926 = vmul.f32 %v640, %v768
    %v927 = vmul.f32 %v644, %v775
    %v928 = vmul.f32 %v644, %v779
    %v929 = vmul.f32 %v648, %v786
    %v930 = vmul.f32 %v648, %v790
    %v931 = vmul.f32 %v652, %v797
    %v932 = vmul.f32 %v652, %v801
    %v933 = vmul.f32 %v656, %v808
    %v934 = vmul.f32 %v656, %v812
    %v935 = vmul.f32 %v660, %v819
    %v936 = vmul.f32 %v660, %v823
    %v937 = vmul.f32 %v664, %v830
    %v938 = vmul.f32 %v664, %v834
    %v939 = vmul.f32 %v668, %v841
    %v940 = vmul.f32 %v668, %v845
    %v941 = vmul.f32 %v672, %v852
    %v942 = vmul.f32 %v672, %v856
    %v943 = vmul.f32 %v676, %v863
    %v944 = vmul.f32 %v676, %v867
    %v945 = vmul.f32 %v680, %v874
    %v946 = vmul.f32 %v680, %v878
    %v947 = vmul.f32 %v684, %v885
    %v948 = vmul.f32 %v684, %v889
    %v949 = vmul.f32 %v688, %v896
    %v950 = vmul.f32 %v688, %v900
    %v951 = vmul.f32 %v692, %v907
    %v952 = vmul.f32 %v692, %v911
    %v953 = vmul.f32 %v696, %v918
    %v954 = vmul.f32 %v696, %v922
    %v955 = vadd.f32 %v713, %v923
    %v956 = vadd.f32 %v714, %v924
    %v957 = vadd.f32 %v715, %v925
    %v958 = vadd.f32 %v716, %v926
    %v959 = vadd.f32 %v717, %v927
    %v960 = vadd.f32 %v718, %v928
    %v961 = vadd.f32 %v719, %v929
    %v962 = vadd.f32 %v720, %v930
    %v963 = vadd.f32 %v721, %v931
    %v964 = vadd.f32 %v722, %v932
    %v965 = vadd.f32 %v723, %v933
    %v966 = vadd.f32 %v724, %v934
    %v967 = vadd.f32 %v725, %v935
    %v968 = vadd.f32 %v726, %v936
    %v969 = vadd.f32 %v727, %v937
    %v970 = vadd.f32 %v728, %v938
    %v971 = vadd.f32 %v729, %v939
    %v972 = vadd.f32 %v730, %v940
    %v973 = vadd.f32 %v731, %v941
    %v974 = vadd.f32 %v732, %v942
    %v975 = vadd.f32 %v733, %v943
    %v976 = vadd.f32 %v734, %v944
    %v977 = vadd.f32 %v735, %v945
    %v978 = vadd.f32 %v736, %v946
    %v979 = vadd.f32 %v737, %v947
    %v980 = vadd.f32 %v738, %v948
    %v981 = vadd.f32 %v739, %v949
    %v982 = vadd.f32 %v740, %v950
    %v983 = vadd.f32 %v741, %v951
    %v984 = vadd.f32 %v742, %v952
    %v985 = vadd.f32 %v743, %v953
    %v986 = vadd.f32 %v744, %v954
    %v987 = vld [vmem:[#allocation13] sm:$0xff]
    %v988 = vld [vmem:[#allocation13 + $0x8] sm:$0xff]
    %v989 = vlaneseq
    %v990 = vshrl.u32 %v989, 7
    %v991 = vsub.s32 0, %v990
    %v992 = vrot.slane %v987, %v991
    %994 = vbcast.lane.b32.xlu0 %v992, 256
    %v995 = vpop.permute.xlu0 %994
    %s997 = sor.u32 256, 8
    %998 = vbcast.lane.b32.xlu0 %v992, %s997
    %v999 = vpop.permute.xlu0 %998
    %v1000 = vlaneseq
    %v1001 = vshrl.u32 %v1000, 7
    %v1002 = vsub.s32 1, %v1001
    %v1003 = vrot.slane %v987, %v1002
    %1005 = vbcast.lane.b32.xlu0 %v1003, 256
    %v1006 = vpop.permute.xlu0 %1005
    %s1008 = sor.u32 256, 8
    %1009 = vbcast.lane.b32.xlu0 %v1003, %s1008
    %v1010 = vpop.permute.xlu0 %1009
    %v1011 = vlaneseq
    %v1012 = vshrl.u32 %v1011, 7
    %v1013 = vsub.s32 2, %v1012
    %v1014 = vrot.slane %v987, %v1013
    %1016 = vbcast.lane.b32.xlu0 %v1014, 256
    %v1017 = vpop.permute.xlu0 %1016
    %s1019 = sor.u32 256, 8
    %1020 = vbcast.lane.b32.xlu0 %v1014, %s1019
    %v1021 = vpop.permute.xlu0 %1020
    %v1022 = vlaneseq
    %v1023 = vshrl.u32 %v1022, 7
    %v1024 = vsub.s32 3, %v1023
    %v1025 = vrot.slane %v987, %v1024
    %1027 = vbcast.lane.b32.xlu0 %v1025, 256
    %v1028 = vpop.permute.xlu0 %1027
    %s1030 = sor.u32 256, 8
    %1031 = vbcast.lane.b32.xlu0 %v1025, %s1030
    %v1032 = vpop.permute.xlu0 %1031
    %v1033 = vlaneseq
    %v1034 = vshrl.u32 %v1033, 7
    %v1035 = vsub.s32 4, %v1034
    %v1036 = vrot.slane %v987, %v1035
    %1038 = vbcast.lane.b32.xlu0 %v1036, 256
    %v1039 = vpop.permute.xlu0 %1038
    %s1041 = sor.u32 256, 8
    %1042 = vbcast.lane.b32.xlu0 %v1036, %s1041
    %v1043 = vpop.permute.xlu0 %1042
    %v1044 = vlaneseq
    %v1045 = vshrl.u32 %v1044, 7
    %v1046 = vsub.s32 5, %v1045
    %v1047 = vrot.slane %v987, %v1046
    %1049 = vbcast.lane.b32.xlu0 %v1047, 256
    %v1050 = vpop.permute.xlu0 %1049
    %s1052 = sor.u32 256, 8
    %1053 = vbcast.lane.b32.xlu0 %v1047, %s1052
    %v1054 = vpop.permute.xlu0 %1053
    %v1055 = vlaneseq
    %v1056 = vshrl.u32 %v1055, 7
    %v1057 = vsub.s32 6, %v1056
    %v1058 = vrot.slane %v987, %v1057
    %1060 = vbcast.lane.b32.xlu0 %v1058, 256
    %v1061 = vpop.permute.xlu0 %1060
    %s1063 = sor.u32 256, 8
    %1064 = vbcast.lane.b32.xlu0 %v1058, %s1063
    %v1065 = vpop.permute.xlu0 %1064
    %v1066 = vlaneseq
    %v1067 = vshrl.u32 %v1066, 7
    %v1068 = vsub.s32 7, %v1067
    %v1069 = vrot.slane %v987, %v1068
    %1071 = vbcast.lane.b32.xlu0 %v1069, 256
    %v1072 = vpop.permute.xlu0 %1071
    %s1074 = sor.u32 256, 8
    %1075 = vbcast.lane.b32.xlu0 %v1069, %s1074
    %v1076 = vpop.permute.xlu0 %1075
    %v1077 = vlaneseq
    %v1078 = vshrl.u32 %v1077, 7
    %v1079 = vsub.s32 0, %v1078
    %v1080 = vrot.slane %v988, %v1079
    %1082 = vbcast.lane.b32.xlu0 %v1080, 256
    %v1083 = vpop.permute.xlu0 %1082
    %s1085 = sor.u32 256, 8
    %1086 = vbcast.lane.b32.xlu0 %v1080, %s1085
    %v1087 = vpop.permute.xlu0 %1086
    %v1088 = vlaneseq
    %v1089 = vshrl.u32 %v1088, 7
    %v1090 = vsub.s32 1, %v1089
    %v1091 = vrot.slane %v988, %v1090
    %1093 = vbcast.lane.b32.xlu0 %v1091, 256
    %v1094 = vpop.permute.xlu0 %1093
    %s1096 = sor.u32 256, 8
    %1097 = vbcast.lane.b32.xlu0 %v1091, %s1096
    %v1098 = vpop.permute.xlu0 %1097
    %v1099 = vlaneseq
    %v1100 = vshrl.u32 %v1099, 7
    %v1101 = vsub.s32 2, %v1100
    %v1102 = vrot.slane %v988, %v1101
    %1104 = vbcast.lane.b32.xlu0 %v1102, 256
    %v1105 = vpop.permute.xlu0 %1104
    %s1107 = sor.u32 256, 8
    %1108 = vbcast.lane.b32.xlu0 %v1102, %s1107
    %v1109 = vpop.permute.xlu0 %1108
    %v1110 = vlaneseq
    %v1111 = vshrl.u32 %v1110, 7
    %v1112 = vsub.s32 3, %v1111
    %v1113 = vrot.slane %v988, %v1112
    %1115 = vbcast.lane.b32.xlu0 %v1113, 256
    %v1116 = vpop.permute.xlu0 %1115
    %s1118 = sor.u32 256, 8
    %1119 = vbcast.lane.b32.xlu0 %v1113, %s1118
    %v1120 = vpop.permute.xlu0 %1119
    %v1121 = vlaneseq
    %v1122 = vshrl.u32 %v1121, 7
    %v1123 = vsub.s32 4, %v1122
    %v1124 = vrot.slane %v988, %v1123
    %1126 = vbcast.lane.b32.xlu0 %v1124, 256
    %v1127 = vpop.permute.xlu0 %1126
    %s1129 = sor.u32 256, 8
    %1130 = vbcast.lane.b32.xlu0 %v1124, %s1129
    %v1131 = vpop.permute.xlu0 %1130
    %v1132 = vlaneseq
    %v1133 = vshrl.u32 %v1132, 7
    %v1134 = vsub.s32 5, %v1133
    %v1135 = vrot.slane %v988, %v1134
    %1137 = vbcast.lane.b32.xlu0 %v1135, 256
    %v1138 = vpop.permute.xlu0 %1137
    %s1140 = sor.u32 256, 8
    %1141 = vbcast.lane.b32.xlu0 %v1135, %s1140
    %v1142 = vpop.permute.xlu0 %1141
    %v1143 = vlaneseq
    %v1144 = vshrl.u32 %v1143, 7
    %v1145 = vsub.s32 6, %v1144
    %v1146 = vrot.slane %v988, %v1145
    %1148 = vbcast.lane.b32.xlu0 %v1146, 256
    %v1149 = vpop.permute.xlu0 %1148
    %s1151 = sor.u32 256, 8
    %1152 = vbcast.lane.b32.xlu0 %v1146, %s1151
    %v1153 = vpop.permute.xlu0 %1152
    %v1154 = vlaneseq
    %v1155 = vshrl.u32 %v1154, 7
    %v1156 = vsub.s32 7, %v1155
    %v1157 = vrot.slane %v988, %v1156
    %1159 = vbcast.lane.b32.xlu0 %v1157, 256
    %v1160 = vpop.permute.xlu0 %1159
    %s1162 = sor.u32 256, 8
    %1163 = vbcast.lane.b32.xlu0 %v1157, %s1162
    %v1164 = vpop.permute.xlu0 %1163
    %v1165 = vmul.f32 %v281, %v995
    %v1166 = vmul.f32 %v282, %v999
    %v1167 = vmul.f32 %v281, %v1006
    %v1168 = vmul.f32 %v282, %v1010
    %v1169 = vmul.f32 %v281, %v1017
    %v1170 = vmul.f32 %v282, %v1021
    %v1171 = vmul.f32 %v281, %v1028
    %v1172 = vmul.f32 %v282, %v1032
    %v1173 = vmul.f32 %v281, %v1039
    %v1174 = vmul.f32 %v282, %v1043
    %v1175 = vmul.f32 %v281, %v1050
    %v1176 = vmul.f32 %v282, %v1054
    %v1177 = vmul.f32 %v281, %v1061
    %v1178 = vmul.f32 %v282, %v1065
    %v1179 = vmul.f32 %v281, %v1072
    %v1180 = vmul.f32 %v282, %v1076
    %v1181 = vmul.f32 %v281, %v1083
    %v1182 = vmul.f32 %v282, %v1087
    %v1183 = vmul.f32 %v281, %v1094
    %v1184 = vmul.f32 %v282, %v1098
    %v1185 = vmul.f32 %v281, %v1105
    %v1186 = vmul.f32 %v282, %v1109
    %v1187 = vmul.f32 %v281, %v1116
    %v1188 = vmul.f32 %v282, %v1120
    %v1189 = vmul.f32 %v281, %v1127
    %v1190 = vmul.f32 %v282, %v1131
    %v1191 = vmul.f32 %v281, %v1138
    %v1192 = vmul.f32 %v282, %v1142
    %v1193 = vmul.f32 %v281, %v1149
    %v1194 = vmul.f32 %v282, %v1153
    %v1195 = vmul.f32 %v281, %v1160
    %v1196 = vmul.f32 %v282, %v1164
    %v1197 = vadd.f32 %v955, %v1165
    %v1198 = vadd.f32 %v956, %v1166
    %v1199 = vadd.f32 %v957, %v1167
    %v1200 = vadd.f32 %v958, %v1168
    %v1201 = vadd.f32 %v959, %v1169
    %v1202 = vadd.f32 %v960, %v1170
    %v1203 = vadd.f32 %v961, %v1171
    %v1204 = vadd.f32 %v962, %v1172
    %v1205 = vadd.f32 %v963, %v1173
    %v1206 = vadd.f32 %v964, %v1174
    %v1207 = vadd.f32 %v965, %v1175
    %v1208 = vadd.f32 %v966, %v1176
    %v1209 = vadd.f32 %v967, %v1177
    %v1210 = vadd.f32 %v968, %v1178
    %v1211 = vadd.f32 %v969, %v1179
    %v1212 = vadd.f32 %v970, %v1180
    %v1213 = vadd.f32 %v971, %v1181
    %v1214 = vadd.f32 %v972, %v1182
    %v1215 = vadd.f32 %v973, %v1183
    %v1216 = vadd.f32 %v974, %v1184
    %v1217 = vadd.f32 %v975, %v1185
    %v1218 = vadd.f32 %v976, %v1186
    %v1219 = vadd.f32 %v977, %v1187
    %v1220 = vadd.f32 %v978, %v1188
    %v1221 = vadd.f32 %v979, %v1189
    %v1222 = vadd.f32 %v980, %v1190
    %v1223 = vadd.f32 %v981, %v1191
    %v1224 = vadd.f32 %v982, %v1192
    %v1225 = vadd.f32 %v983, %v1193
    %v1226 = vadd.f32 %v984, %v1194
    %v1227 = vadd.f32 %v985, %v1195
    %v1228 = vadd.f32 %v986, %v1196
    %v1231 = vcombine.high %v231, %v231
    %v1233 = vunpack.c.l.s4 1966171168
    %v1234 = vunpack.c.0.s8 %v1233
    %v1235 = vlaneseq
    %v1236 = vshrl.u32 %v1235, 7
    %v1237 = vsub.s32 %v1234, %v1236
    %v1238 = vrot.slane %v231, %v1237
    %v1240 = vunpack.c.l.s4 1966171168
    %v1241 = vunpack.c.0.s8 %v1240
    %v1242 = vlaneseq
    %v1243 = vshrl.u32 %v1242, 7
    %v1244 = vsub.s32 %v1241, %v1243
    %v1245 = vrot.slane %v1231, %v1244
    %v1246 = vcombine.high %v1238, %v1238
    %v1247 = vcombine.high %v1245, %v1245
    %v1249 = vunpack.c.l.s4 1966171168
    %v1250 = vunpack.c.0.s8 %v1249
    %v1251 = vlaneseq
    %v1252 = vshrl.u32 %v1251, 7
    %v1253 = vsub.s32 %v1250, %v1252
    %v1254 = vrot.slane %v1238, %v1253
    %v1256 = vunpack.c.l.s4 1966171168
    %v1257 = vunpack.c.0.s8 %v1256
    %v1258 = vlaneseq
    %v1259 = vshrl.u32 %v1258, 7
    %v1260 = vsub.s32 %v1257, %v1259
    %v1261 = vrot.slane %v1245, %v1260
    %v1263 = vunpack.c.l.s4 1966171168
    %v1264 = vunpack.c.0.s8 %v1263
    %v1265 = vlaneseq
    %v1266 = vshrl.u32 %v1265, 7
    %v1267 = vsub.s32 %v1264, %v1266
    %v1268 = vrot.slane %v1246, %v1267
    %v1270 = vunpack.c.l.s4 1966171168
    %v1271 = vunpack.c.0.s8 %v1270
    %v1272 = vlaneseq
    %v1273 = vshrl.u32 %v1272, 7
    %v1274 = vsub.s32 %v1271, %v1273
    %v1275 = vrot.slane %v1247, %v1274
    %v1276 = vcombine.high %v1254, %v1254
    %v1277 = vcombine.high %v1261, %v1261
    %v1278 = vcombine.high %v1268, %v1268
    %v1279 = vcombine.high %v1275, %v1275
    %v1280 = vcombine.high %v232, %v232
    %v1282 = vunpack.c.l.s4 1966171168
    %v1283 = vunpack.c.0.s8 %v1282
    %v1284 = vlaneseq
    %v1285 = vshrl.u32 %v1284, 7
    %v1286 = vsub.s32 %v1283, %v1285
    %v1287 = vrot.slane %v232, %v1286
    %v1289 = vunpack.c.l.s4 1966171168
    %v1290 = vunpack.c.0.s8 %v1289
    %v1291 = vlaneseq
    %v1292 = vshrl.u32 %v1291, 7
    %v1293 = vsub.s32 %v1290, %v1292
    %v1294 = vrot.slane %v1280, %v1293
    %v1295 = vcombine.high %v1287, %v1287
    %v1296 = vcombine.high %v1294, %v1294
    %v1298 = vunpack.c.l.s4 1966171168
    %v1299 = vunpack.c.0.s8 %v1298
    %v1300 = vlaneseq
    %v1301 = vshrl.u32 %v1300, 7
    %v1302 = vsub.s32 %v1299, %v1301
    %v1303 = vrot.slane %v1287, %v1302
    %v1305 = vunpack.c.l.s4 1966171168
    %v1306 = vunpack.c.0.s8 %v1305
    %v1307 = vlaneseq
    %v1308 = vshrl.u32 %v1307, 7
    %v1309 = vsub.s32 %v1306, %v1308
    %v1310 = vrot.slane %v1294, %v1309
    %v1312 = vunpack.c.l.s4 1966171168
    %v1313 = vunpack.c.0.s8 %v1312
    %v1314 = vlaneseq
    %v1315 = vshrl.u32 %v1314, 7
    %v1316 = vsub.s32 %v1313, %v1315
    %v1317 = vrot.slane %v1295, %v1316
    %v1319 = vunpack.c.l.s4 1966171168
    %v1320 = vunpack.c.0.s8 %v1319
    %v1321 = vlaneseq
    %v1322 = vshrl.u32 %v1321, 7
    %v1323 = vsub.s32 %v1320, %v1322
    %v1324 = vrot.slane %v1296, %v1323
    %v1325 = vcombine.high %v1303, %v1303
    %v1326 = vcombine.high %v1310, %v1310
    %v1327 = vcombine.high %v1317, %v1317
    %v1328 = vcombine.high %v1324, %v1324
    %v1329 = vlaneseq
    %v1330 = vshrl.u32 %v1329, 7
    %v1331 = vsub.s32 0, %v1330
    %v1332 = vrot.slane %v1254, %v1331
    %v1333 = vlaneseq
    %v1334 = vshrl.u32 %v1333, 7
    %v1335 = vsub.s32 0, %v1334
    %v1336 = vrot.slane %v1268, %v1335
    %v1337 = vlaneseq
    %v1338 = vshrl.u32 %v1337, 7
    %v1339 = vsub.s32 0, %v1338
    %v1340 = vrot.slane %v1276, %v1339
    %v1341 = vlaneseq
    %v1342 = vshrl.u32 %v1341, 7
    %v1343 = vsub.s32 0, %v1342
    %v1344 = vrot.slane %v1278, %v1343
    %v1345 = vlaneseq
    %v1346 = vshrl.u32 %v1345, 7
    %v1347 = vsub.s32 0, %v1346
    %v1348 = vrot.slane %v1261, %v1347
    %v1349 = vlaneseq
    %v1350 = vshrl.u32 %v1349, 7
    %v1351 = vsub.s32 0, %v1350
    %v1352 = vrot.slane %v1275, %v1351
    %v1353 = vlaneseq
    %v1354 = vshrl.u32 %v1353, 7
    %v1355 = vsub.s32 0, %v1354
    %v1356 = vrot.slane %v1277, %v1355
    %v1357 = vlaneseq
    %v1358 = vshrl.u32 %v1357, 7
    %v1359 = vsub.s32 0, %v1358
    %v1360 = vrot.slane %v1279, %v1359
    %v1361 = vlaneseq
    %v1362 = vshrl.u32 %v1361, 7
    %v1363 = vsub.s32 0, %v1362
    %v1364 = vrot.slane %v1303, %v1363
    %v1365 = vlaneseq
    %v1366 = vshrl.u32 %v1365, 7
    %v1367 = vsub.s32 0, %v1366
    %v1368 = vrot.slane %v1317, %v1367
    %v1369 = vlaneseq
    %v1370 = vshrl.u32 %v1369, 7
    %v1371 = vsub.s32 0, %v1370
    %v1372 = vrot.slane %v1325, %v1371
    %v1373 = vlaneseq
    %v1374 = vshrl.u32 %v1373, 7
    %v1375 = vsub.s32 0, %v1374
    %v1376 = vrot.slane %v1327, %v1375
    %v1377 = vlaneseq
    %v1378 = vshrl.u32 %v1377, 7
    %v1379 = vsub.s32 0, %v1378
    %v1380 = vrot.slane %v1310, %v1379
    %v1381 = vlaneseq
    %v1382 = vshrl.u32 %v1381, 7
    %v1383 = vsub.s32 0, %v1382
    %v1384 = vrot.slane %v1324, %v1383
    %v1385 = vlaneseq
    %v1386 = vshrl.u32 %v1385, 7
    %v1387 = vsub.s32 0, %v1386
    %v1388 = vrot.slane %v1326, %v1387
    %v1389 = vlaneseq
    %v1390 = vshrl.u32 %v1389, 7
    %v1391 = vsub.s32 0, %v1390
    %v1392 = vrot.slane %v1328, %v1391
    %v1409 = vmul.f32 %v1332, %v331
    %v1410 = vmul.f32 %v1332, %v332
    %v1411 = vmul.f32 %v1336, %v331
    %v1412 = vmul.f32 %v1336, %v332
    %v1413 = vmul.f32 %v1340, %v331
    %v1414 = vmul.f32 %v1340, %v332
    %v1415 = vmul.f32 %v1344, %v331
    %v1416 = vmul.f32 %v1344, %v332
    %v1417 = vmul.f32 %v1348, %v331
    %v1418 = vmul.f32 %v1348, %v332
    %v1419 = vmul.f32 %v1352, %v331
    %v1420 = vmul.f32 %v1352, %v332
    %v1421 = vmul.f32 %v1356, %v331
    %v1422 = vmul.f32 %v1356, %v332
    %v1423 = vmul.f32 %v1360, %v331
    %v1424 = vmul.f32 %v1360, %v332
    %v1425 = vmul.f32 %v1364, %v331
    %v1426 = vmul.f32 %v1364, %v332
    %v1427 = vmul.f32 %v1368, %v331
    %v1428 = vmul.f32 %v1368, %v332
    %v1429 = vmul.f32 %v1372, %v331
    %v1430 = vmul.f32 %v1372, %v332
    %v1431 = vmul.f32 %v1376, %v331
    %v1432 = vmul.f32 %v1376, %v332
    %v1433 = vmul.f32 %v1380, %v331
    %v1434 = vmul.f32 %v1380, %v332
    %v1435 = vmul.f32 %v1384, %v331
    %v1436 = vmul.f32 %v1384, %v332
    %v1437 = vmul.f32 %v1388, %v331
    %v1438 = vmul.f32 %v1388, %v332
    %v1439 = vmul.f32 %v1392, %v331
    %v1440 = vmul.f32 %v1392, %v332
    %s1441 = scalar_lea.vmem [#allocation11], 16
    %v1442 = vld [vmem:[%s1441] sm:$0xff]
    %v1443 = vld [vmem:[%s1441 + $0x8] sm:$0xff]
    %v1444 = vlaneseq
    %v1445 = vshrl.u32 %v1444, 7
    %v1446 = vsub.s32 0, %v1445
    %v1447 = vrot.slane %v1442, %v1446
    %1449 = vbcast.lane.b32.xlu0 %v1447, 256
    %v1450 = vpop.permute.xlu0 %1449
    %s1452 = sor.u32 256, 8
    %1453 = vbcast.lane.b32.xlu0 %v1447, %s1452
    %v1454 = vpop.permute.xlu0 %1453
    %v1455 = vlaneseq
    %v1456 = vshrl.u32 %v1455, 7
    %v1457 = vsub.s32 1, %v1456
    %v1458 = vrot.slane %v1442, %v1457
    %1460 = vbcast.lane.b32.xlu0 %v1458, 256
    %v1461 = vpop.permute.xlu0 %1460
    %s1463 = sor.u32 256, 8
    %1464 = vbcast.lane.b32.xlu0 %v1458, %s1463
    %v1465 = vpop.permute.xlu0 %1464
    %v1466 = vlaneseq
    %v1467 = vshrl.u32 %v1466, 7
    %v1468 = vsub.s32 2, %v1467
    %v1469 = vrot.slane %v1442, %v1468
    %1471 = vbcast.lane.b32.xlu0 %v1469, 256
    %v1472 = vpop.permute.xlu0 %1471
    %s1474 = sor.u32 256, 8
    %1475 = vbcast.lane.b32.xlu0 %v1469, %s1474
    %v1476 = vpop.permute.xlu0 %1475
    %v1477 = vlaneseq
    %v1478 = vshrl.u32 %v1477, 7
    %v1479 = vsub.s32 3, %v1478
    %v1480 = vrot.slane %v1442, %v1479
    %1482 = vbcast.lane.b32.xlu0 %v1480, 256
    %v1483 = vpop.permute.xlu0 %1482
    %s1485 = sor.u32 256, 8
    %1486 = vbcast.lane.b32.xlu0 %v1480, %s1485
    %v1487 = vpop.permute.xlu0 %1486
    %v1488 = vlaneseq
    %v1489 = vshrl.u32 %v1488, 7
    %v1490 = vsub.s32 4, %v1489
    %v1491 = vrot.slane %v1442, %v1490
    %1493 = vbcast.lane.b32.xlu0 %v1491, 256
    %v1494 = vpop.permute.xlu0 %1493
    %s1496 = sor.u32 256, 8
    %1497 = vbcast.lane.b32.xlu0 %v1491, %s1496
    %v1498 = vpop.permute.xlu0 %1497
    %v1499 = vlaneseq
    %v1500 = vshrl.u32 %v1499, 7
    %v1501 = vsub.s32 5, %v1500
    %v1502 = vrot.slane %v1442, %v1501
    %1504 = vbcast.lane.b32.xlu0 %v1502, 256
    %v1505 = vpop.permute.xlu0 %1504
    %s1507 = sor.u32 256, 8
    %1508 = vbcast.lane.b32.xlu0 %v1502, %s1507
    %v1509 = vpop.permute.xlu0 %1508
    %v1510 = vlaneseq
    %v1511 = vshrl.u32 %v1510, 7
    %v1512 = vsub.s32 6, %v1511
    %v1513 = vrot.slane %v1442, %v1512
    %1515 = vbcast.lane.b32.xlu0 %v1513, 256
    %v1516 = vpop.permute.xlu0 %1515
    %s1518 = sor.u32 256, 8
    %1519 = vbcast.lane.b32.xlu0 %v1513, %s1518
    %v1520 = vpop.permute.xlu0 %1519
    %v1521 = vlaneseq
    %v1522 = vshrl.u32 %v1521, 7
    %v1523 = vsub.s32 7, %v1522
    %v1524 = vrot.slane %v1442, %v1523
    %1526 = vbcast.lane.b32.xlu0 %v1524, 256
    %v1527 = vpop.permute.xlu0 %1526
    %s1529 = sor.u32 256, 8
    %1530 = vbcast.lane.b32.xlu0 %v1524, %s1529
    %v1531 = vpop.permute.xlu0 %1530
    %v1532 = vlaneseq
    %v1533 = vshrl.u32 %v1532, 7
    %v1534 = vsub.s32 0, %v1533
    %v1535 = vrot.slane %v1443, %v1534
    %1537 = vbcast.lane.b32.xlu0 %v1535, 256
    %v1538 = vpop.permute.xlu0 %1537
    %s1540 = sor.u32 256, 8
    %1541 = vbcast.lane.b32.xlu0 %v1535, %s1540
    %v1542 = vpop.permute.xlu0 %1541
    %v1543 = vlaneseq
    %v1544 = vshrl.u32 %v1543, 7
    %v1545 = vsub.s32 1, %v1544
    %v1546 = vrot.slane %v1443, %v1545
    %1548 = vbcast.lane.b32.xlu0 %v1546, 256
    %v1549 = vpop.permute.xlu0 %1548
    %s1551 = sor.u32 256, 8
    %1552 = vbcast.lane.b32.xlu0 %v1546, %s1551
    %v1553 = vpop.permute.xlu0 %1552
    %v1554 = vlaneseq
    %v1555 = vshrl.u32 %v1554, 7
    %v1556 = vsub.s32 2, %v1555
    %v1557 = vrot.slane %v1443, %v1556
    %1559 = vbcast.lane.b32.xlu0 %v1557, 256
    %v1560 = vpop.permute.xlu0 %1559
    %s1562 = sor.u32 256, 8
    %1563 = vbcast.lane.b32.xlu0 %v1557, %s1562
    %v1564 = vpop.permute.xlu0 %1563
    %v1565 = vlaneseq
    %v1566 = vshrl.u32 %v1565, 7
    %v1567 = vsub.s32 3, %v1566
    %v1568 = vrot.slane %v1443, %v1567
    %1570 = vbcast.lane.b32.xlu0 %v1568, 256
    %v1571 = vpop.permute.xlu0 %1570
    %s1573 = sor.u32 256, 8
    %1574 = vbcast.lane.b32.xlu0 %v1568, %s1573
    %v1575 = vpop.permute.xlu0 %1574
    %v1576 = vlaneseq
    %v1577 = vshrl.u32 %v1576, 7
    %v1578 = vsub.s32 4, %v1577
    %v1579 = vrot.slane %v1443, %v1578
    %1581 = vbcast.lane.b32.xlu0 %v1579, 256
    %v1582 = vpop.permute.xlu0 %1581
    %s1584 = sor.u32 256, 8
    %1585 = vbcast.lane.b32.xlu0 %v1579, %s1584
    %v1586 = vpop.permute.xlu0 %1585
    %v1587 = vlaneseq
    %v1588 = vshrl.u32 %v1587, 7
    %v1589 = vsub.s32 5, %v1588
    %v1590 = vrot.slane %v1443, %v1589
    %1592 = vbcast.lane.b32.xlu0 %v1590, 256
    %v1593 = vpop.permute.xlu0 %1592
    %s1595 = sor.u32 256, 8
    %1596 = vbcast.lane.b32.xlu0 %v1590, %s1595
    %v1597 = vpop.permute.xlu0 %1596
    %v1598 = vlaneseq
    %v1599 = vshrl.u32 %v1598, 7
    %v1600 = vsub.s32 6, %v1599
    %v1601 = vrot.slane %v1443, %v1600
    %1603 = vbcast.lane.b32.xlu0 %v1601, 256
    %v1604 = vpop.permute.xlu0 %1603
    %s1606 = sor.u32 256, 8
    %1607 = vbcast.lane.b32.xlu0 %v1601, %s1606
    %v1608 = vpop.permute.xlu0 %1607
    %v1609 = vlaneseq
    %v1610 = vshrl.u32 %v1609, 7
    %v1611 = vsub.s32 7, %v1610
    %v1612 = vrot.slane %v1443, %v1611
    %1614 = vbcast.lane.b32.xlu0 %v1612, 256
    %v1615 = vpop.permute.xlu0 %1614
    %s1617 = sor.u32 256, 8
    %1618 = vbcast.lane.b32.xlu0 %v1612, %s1617
    %v1619 = vpop.permute.xlu0 %1618
    %v1620 = vmul.f32 %v1332, %v1450
    %v1621 = vmul.f32 %v1332, %v1454
    %v1622 = vmul.f32 %v1336, %v1461
    %v1623 = vmul.f32 %v1336, %v1465
    %v1624 = vmul.f32 %v1340, %v1472
    %v1625 = vmul.f32 %v1340, %v1476
    %v1626 = vmul.f32 %v1344, %v1483
    %v1627 = vmul.f32 %v1344, %v1487
    %v1628 = vmul.f32 %v1348, %v1494
    %v1629 = vmul.f32 %v1348, %v1498
    %v1630 = vmul.f32 %v1352, %v1505
    %v1631 = vmul.f32 %v1352, %v1509
    %v1632 = vmul.f32 %v1356, %v1516
    %v1633 = vmul.f32 %v1356, %v1520
    %v1634 = vmul.f32 %v1360, %v1527
    %v1635 = vmul.f32 %v1360, %v1531
    %v1636 = vmul.f32 %v1364, %v1538
    %v1637 = vmul.f32 %v1364, %v1542
    %v1638 = vmul.f32 %v1368, %v1549
    %v1639 = vmul.f32 %v1368, %v1553
    %v1640 = vmul.f32 %v1372, %v1560
    %v1641 = vmul.f32 %v1372, %v1564
    %v1642 = vmul.f32 %v1376, %v1571
    %v1643 = vmul.f32 %v1376, %v1575
    %v1644 = vmul.f32 %v1380, %v1582
    %v1645 = vmul.f32 %v1380, %v1586
    %v1646 = vmul.f32 %v1384, %v1593
    %v1647 = vmul.f32 %v1384, %v1597
    %v1648 = vmul.f32 %v1388, %v1604
    %v1649 = vmul.f32 %v1388, %v1608
    %v1650 = vmul.f32 %v1392, %v1615
    %v1651 = vmul.f32 %v1392, %v1619
    %v1652 = vadd.f32 %v1409, %v1620
    %v1653 = vadd.f32 %v1410, %v1621
    %v1654 = vadd.f32 %v1411, %v1622
    %v1655 = vadd.f32 %v1412, %v1623
    %v1656 = vadd.f32 %v1413, %v1624
    %v1657 = vadd.f32 %v1414, %v1625
    %v1658 = vadd.f32 %v1415, %v1626
    %v1659 = vadd.f32 %v1416, %v1627
    %v1660 = vadd.f32 %v1417, %v1628
    %v1661 = vadd.f32 %v1418, %v1629
    %v1662 = vadd.f32 %v1419, %v1630
    %v1663 = vadd.f32 %v1420, %v1631
    %v1664 = vadd.f32 %v1421, %v1632
    %v1665 = vadd.f32 %v1422, %v1633
    %v1666 = vadd.f32 %v1423, %v1634
    %v1667 = vadd.f32 %v1424, %v1635
    %v1668 = vadd.f32 %v1425, %v1636
    %v1669 = vadd.f32 %v1426, %v1637
    %v1670 = vadd.f32 %v1427, %v1638
    %v1671 = vadd.f32 %v1428, %v1639
    %v1672 = vadd.f32 %v1429, %v1640
    %v1673 = vadd.f32 %v1430, %v1641
    %v1674 = vadd.f32 %v1431, %v1642
    %v1675 = vadd.f32 %v1432, %v1643
    %v1676 = vadd.f32 %v1433, %v1644
    %v1677 = vadd.f32 %v1434, %v1645
    %v1678 = vadd.f32 %v1435, %v1646
    %v1679 = vadd.f32 %v1436, %v1647
    %v1680 = vadd.f32 %v1437, %v1648
    %v1681 = vadd.f32 %v1438, %v1649
    %v1682 = vadd.f32 %v1439, %v1650
    %v1683 = vadd.f32 %v1440, %v1651
    %s1684 = scalar_lea.vmem [#allocation13], 16
    %v1685 = vld [vmem:[%s1684] sm:$0xff]
    %v1686 = vld [vmem:[%s1684 + $0x8] sm:$0xff]
    %v1687 = vlaneseq
    %v1688 = vshrl.u32 %v1687, 7
    %v1689 = vsub.s32 0, %v1688
    %v1690 = vrot.slane %v1685, %v1689
    %1692 = vbcast.lane.b32.xlu0 %v1690, 256
    %v1693 = vpop.permute.xlu0 %1692
    %s1695 = sor.u32 256, 8
    %1696 = vbcast.lane.b32.xlu0 %v1690, %s1695
    %v1697 = vpop.permute.xlu0 %1696
    %v1698 = vlaneseq
    %v1699 = vshrl.u32 %v1698, 7
    %v1700 = vsub.s32 1, %v1699
    %v1701 = vrot.slane %v1685, %v1700
    %1703 = vbcast.lane.b32.xlu0 %v1701, 256
    %v1704 = vpop.permute.xlu0 %1703
    %s1706 = sor.u32 256, 8
    %1707 = vbcast.lane.b32.xlu0 %v1701, %s1706
    %v1708 = vpop.permute.xlu0 %1707
    %v1709 = vlaneseq
    %v1710 = vshrl.u32 %v1709, 7
    %v1711 = vsub.s32 2, %v1710
    %v1712 = vrot.slane %v1685, %v1711
    %1714 = vbcast.lane.b32.xlu0 %v1712, 256
    %v1715 = vpop.permute.xlu0 %1714
    %s1717 = sor.u32 256, 8
    %1718 = vbcast.lane.b32.xlu0 %v1712, %s1717
    %v1719 = vpop.permute.xlu0 %1718
    %v1720 = vlaneseq
    %v1721 = vshrl.u32 %v1720, 7
    %v1722 = vsub.s32 3, %v1721
    %v1723 = vrot.slane %v1685, %v1722
    %1725 = vbcast.lane.b32.xlu0 %v1723, 256
    %v1726 = vpop.permute.xlu0 %1725
    %s1728 = sor.u32 256, 8
    %1729 = vbcast.lane.b32.xlu0 %v1723, %s1728
    %v1730 = vpop.permute.xlu0 %1729
    %v1731 = vlaneseq
    %v1732 = vshrl.u32 %v1731, 7
    %v1733 = vsub.s32 4, %v1732
    %v1734 = vrot.slane %v1685, %v1733
    %1736 = vbcast.lane.b32.xlu0 %v1734, 256
    %v1737 = vpop.permute.xlu0 %1736
    %s1739 = sor.u32 256, 8
    %1740 = vbcast.lane.b32.xlu0 %v1734, %s1739
    %v1741 = vpop.permute.xlu0 %1740
    %v1742 = vlaneseq
    %v1743 = vshrl.u32 %v1742, 7
    %v1744 = vsub.s32 5, %v1743
    %v1745 = vrot.slane %v1685, %v1744
    %1747 = vbcast.lane.b32.xlu0 %v1745, 256
    %v1748 = vpop.permute.xlu0 %1747
    %s1750 = sor.u32 256, 8
    %1751 = vbcast.lane.b32.xlu0 %v1745, %s1750
    %v1752 = vpop.permute.xlu0 %1751
    %v1753 = vlaneseq
    %v1754 = vshrl.u32 %v1753, 7
    %v1755 = vsub.s32 6, %v1754
    %v1756 = vrot.slane %v1685, %v1755
    %1758 = vbcast.lane.b32.xlu0 %v1756, 256
    %v1759 = vpop.permute.xlu0 %1758
    %s1761 = sor.u32 256, 8
    %1762 = vbcast.lane.b32.xlu0 %v1756, %s1761
    %v1763 = vpop.permute.xlu0 %1762
    %v1764 = vlaneseq
    %v1765 = vshrl.u32 %v1764, 7
    %v1766 = vsub.s32 7, %v1765
    %v1767 = vrot.slane %v1685, %v1766
    %1769 = vbcast.lane.b32.xlu0 %v1767, 256
    %v1770 = vpop.permute.xlu0 %1769
    %s1772 = sor.u32 256, 8
    %1773 = vbcast.lane.b32.xlu0 %v1767, %s1772
    %v1774 = vpop.permute.xlu0 %1773
    %v1775 = vlaneseq
    %v1776 = vshrl.u32 %v1775, 7
    %v1777 = vsub.s32 0, %v1776
    %v1778 = vrot.slane %v1686, %v1777
    %1780 = vbcast.lane.b32.xlu0 %v1778, 256
    %v1781 = vpop.permute.xlu0 %1780
    %s1783 = sor.u32 256, 8
    %1784 = vbcast.lane.b32.xlu0 %v1778, %s1783
    %v1785 = vpop.permute.xlu0 %1784
    %v1786 = vlaneseq
    %v1787 = vshrl.u32 %v1786, 7
    %v1788 = vsub.s32 1, %v1787
    %v1789 = vrot.slane %v1686, %v1788
    %1791 = vbcast.lane.b32.xlu0 %v1789, 256
    %v1792 = vpop.permute.xlu0 %1791
    %s1794 = sor.u32 256, 8
    %1795 = vbcast.lane.b32.xlu0 %v1789, %s1794
    %v1796 = vpop.permute.xlu0 %1795
    %v1797 = vlaneseq
    %v1798 = vshrl.u32 %v1797, 7
    %v1799 = vsub.s32 2, %v1798
    %v1800 = vrot.slane %v1686, %v1799
    %1802 = vbcast.lane.b32.xlu0 %v1800, 256
    %v1803 = vpop.permute.xlu0 %1802
    %s1805 = sor.u32 256, 8
    %1806 = vbcast.lane.b32.xlu0 %v1800, %s1805
    %v1807 = vpop.permute.xlu0 %1806
    %v1808 = vlaneseq
    %v1809 = vshrl.u32 %v1808, 7
    %v1810 = vsub.s32 3, %v1809
    %v1811 = vrot.slane %v1686, %v1810
    %1813 = vbcast.lane.b32.xlu0 %v1811, 256
    %v1814 = vpop.permute.xlu0 %1813
    %s1816 = sor.u32 256, 8
    %1817 = vbcast.lane.b32.xlu0 %v1811, %s1816
    %v1818 = vpop.permute.xlu0 %1817
    %v1819 = vlaneseq
    %v1820 = vshrl.u32 %v1819, 7
    %v1821 = vsub.s32 4, %v1820
    %v1822 = vrot.slane %v1686, %v1821
    %1824 = vbcast.lane.b32.xlu0 %v1822, 256
    %v1825 = vpop.permute.xlu0 %1824
    %s1827 = sor.u32 256, 8
    %1828 = vbcast.lane.b32.xlu0 %v1822, %s1827
    %v1829 = vpop.permute.xlu0 %1828
    %v1830 = vlaneseq
    %v1831 = vshrl.u32 %v1830, 7
    %v1832 = vsub.s32 5, %v1831
    %v1833 = vrot.slane %v1686, %v1832
    %1835 = vbcast.lane.b32.xlu0 %v1833, 256
    %v1836 = vpop.permute.xlu0 %1835
    %s1838 = sor.u32 256, 8
    %1839 = vbcast.lane.b32.xlu0 %v1833, %s1838
    %v1840 = vpop.permute.xlu0 %1839
    %v1841 = vlaneseq
    %v1842 = vshrl.u32 %v1841, 7
    %v1843 = vsub.s32 6, %v1842
    %v1844 = vrot.slane %v1686, %v1843
    %1846 = vbcast.lane.b32.xlu0 %v1844, 256
    %v1847 = vpop.permute.xlu0 %1846
    %s1849 = sor.u32 256, 8
    %1850 = vbcast.lane.b32.xlu0 %v1844, %s1849
    %v1851 = vpop.permute.xlu0 %1850
    %v1852 = vlaneseq
    %v1853 = vshrl.u32 %v1852, 7
    %v1854 = vsub.s32 7, %v1853
    %v1855 = vrot.slane %v1686, %v1854
    %1857 = vbcast.lane.b32.xlu0 %v1855, 256
    %v1858 = vpop.permute.xlu0 %1857
    %s1860 = sor.u32 256, 8
    %1861 = vbcast.lane.b32.xlu0 %v1855, %s1860
    %v1862 = vpop.permute.xlu0 %1861
    %v1863 = vmul.f32 %v331, %v1693
    %v1864 = vmul.f32 %v332, %v1697
    %v1865 = vmul.f32 %v331, %v1704
    %v1866 = vmul.f32 %v332, %v1708
    %v1867 = vmul.f32 %v331, %v1715
    %v1868 = vmul.f32 %v332, %v1719
    %v1869 = vmul.f32 %v331, %v1726
    %v1870 = vmul.f32 %v332, %v1730
    %v1871 = vmul.f32 %v331, %v1737
    %v1872 = vmul.f32 %v332, %v1741
    %v1873 = vmul.f32 %v331, %v1748
    %v1874 = vmul.f32 %v332, %v1752
    %v1875 = vmul.f32 %v331, %v1759
    %v1876 = vmul.f32 %v332, %v1763
    %v1877 = vmul.f32 %v331, %v1770
    %v1878 = vmul.f32 %v332, %v1774
    %v1879 = vmul.f32 %v331, %v1781
    %v1880 = vmul.f32 %v332, %v1785
    %v1881 = vmul.f32 %v331, %v1792
    %v1882 = vmul.f32 %v332, %v1796
    %v1883 = vmul.f32 %v331, %v1803
    %v1884 = vmul.f32 %v332, %v1807
    %v1885 = vmul.f32 %v331, %v1814
    %v1886 = vmul.f32 %v332, %v1818
    %v1887 = vmul.f32 %v331, %v1825
    %v1888 = vmul.f32 %v332, %v1829
    %v1889 = vmul.f32 %v331, %v1836
    %v1890 = vmul.f32 %v332, %v1840
    %v1891 = vmul.f32 %v331, %v1847
    %v1892 = vmul.f32 %v332, %v1851
    %v1893 = vmul.f32 %v331, %v1858
    %v1894 = vmul.f32 %v332, %v1862
    %v1895 = vadd.f32 %v1652, %v1863
    %v1896 = vadd.f32 %v1653, %v1864
    %v1897 = vadd.f32 %v1654, %v1865
    %v1898 = vadd.f32 %v1655, %v1866
    %v1899 = vadd.f32 %v1656, %v1867
    %v1900 = vadd.f32 %v1657, %v1868
    %v1901 = vadd.f32 %v1658, %v1869
    %v1902 = vadd.f32 %v1659, %v1870
    %v1903 = vadd.f32 %v1660, %v1871
    %v1904 = vadd.f32 %v1661, %v1872
    %v1905 = vadd.f32 %v1662, %v1873
    %v1906 = vadd.f32 %v1663, %v1874
    %v1907 = vadd.f32 %v1664, %v1875
    %v1908 = vadd.f32 %v1665, %v1876
    %v1909 = vadd.f32 %v1666, %v1877
    %v1910 = vadd.f32 %v1667, %v1878
    %v1911 = vadd.f32 %v1668, %v1879
    %v1912 = vadd.f32 %v1669, %v1880
    %v1913 = vadd.f32 %v1670, %v1881
    %v1914 = vadd.f32 %v1671, %v1882
    %v1915 = vadd.f32 %v1672, %v1883
    %v1916 = vadd.f32 %v1673, %v1884
    %v1917 = vadd.f32 %v1674, %v1885
    %v1918 = vadd.f32 %v1675, %v1886
    %v1919 = vadd.f32 %v1676, %v1887
    %v1920 = vadd.f32 %v1677, %v1888
    %v1921 = vadd.f32 %v1678, %v1889
    %v1922 = vadd.f32 %v1679, %v1890
    %v1923 = vadd.f32 %v1680, %v1891
    %v1924 = vadd.f32 %v1681, %v1892
    %v1925 = vadd.f32 %v1682, %v1893
    %v1926 = vadd.f32 %v1683, %v1894
    %v1927 = vadd.f32 %v1197, %v1895
    %v1928 = vadd.f32 %v1198, %v1896
    %v1929 = vadd.f32 %v1199, %v1897
    %v1930 = vadd.f32 %v1200, %v1898
    %v1931 = vadd.f32 %v1201, %v1899
    %v1932 = vadd.f32 %v1202, %v1900
    %v1933 = vadd.f32 %v1203, %v1901
    %v1934 = vadd.f32 %v1204, %v1902
    %v1935 = vadd.f32 %v1205, %v1903
    %v1936 = vadd.f32 %v1206, %v1904
    %v1937 = vadd.f32 %v1207, %v1905
    %v1938 = vadd.f32 %v1208, %v1906
    %v1939 = vadd.f32 %v1209, %v1907
    %v1940 = vadd.f32 %v1210, %v1908
    %v1941 = vadd.f32 %v1211, %v1909
    %v1942 = vadd.f32 %v1212, %v1910
    %v1943 = vadd.f32 %v1213, %v1911
    %v1944 = vadd.f32 %v1214, %v1912
    %v1945 = vadd.f32 %v1215, %v1913
    %v1946 = vadd.f32 %v1216, %v1914
    %v1947 = vadd.f32 %v1217, %v1915
    %v1948 = vadd.f32 %v1218, %v1916
    %v1949 = vadd.f32 %v1219, %v1917
    %v1950 = vadd.f32 %v1220, %v1918
    %v1951 = vadd.f32 %v1221, %v1919
    %v1952 = vadd.f32 %v1222, %v1920
    %v1953 = vadd.f32 %v1223, %v1921
    %v1954 = vadd.f32 %v1224, %v1922
    %v1955 = vadd.f32 %v1225, %v1923
    %v1956 = vadd.f32 %v1226, %v1924
    %v1957 = vadd.f32 %v1227, %v1925
    %v1958 = vadd.f32 %v1228, %v1926
    %vm1959 = vcmask 261120
    %v1960 = vsel %vm1959, %v1927, -inf
    %v1961 = vsel %vm1959, %v1928, -inf
    %v1962 = vmax.f32 %v1960, %v1961
    %v1963 = vrot.slane %v1962, 4
    %v1964 = vmax.f32 %v1962, %v1963
    %v1965 = vrot.slane %v1964, 2
    %v1966 = vmax.f32 %v1964, %v1965
    %v1967 = vrot.slane %v1966, 1
    %v1968 = vmax.f32 %v1966, %v1967
    %v1969 = vsel %vm1959, %v1929, -inf
    %v1970 = vsel %vm1959, %v1930, -inf
    %v1971 = vmax.f32 %v1969, %v1970
    %v1972 = vrot.slane %v1971, 4
    %v1973 = vmax.f32 %v1971, %v1972
    %v1974 = vrot.slane %v1973, 2
    %v1975 = vmax.f32 %v1973, %v1974
    %v1976 = vrot.slane %v1975, 1
    %v1977 = vmax.f32 %v1975, %v1976
    %v1978 = vsel %vm1959, %v1931, -inf
    %v1979 = vsel %vm1959, %v1932, -inf
    %v1980 = vmax.f32 %v1978, %v1979
    %v1981 = vrot.slane %v1980, 4
    %v1982 = vmax.f32 %v1980, %v1981
    %v1983 = vrot.slane %v1982, 2
    %v1984 = vmax.f32 %v1982, %v1983
    %v1985 = vrot.slane %v1984, 1
    %v1986 = vmax.f32 %v1984, %v1985
    %v1987 = vsel %vm1959, %v1933, -inf
    %v1988 = vsel %vm1959, %v1934, -inf
    %v1989 = vmax.f32 %v1987, %v1988
    %v1990 = vrot.slane %v1989, 4
    %v1991 = vmax.f32 %v1989, %v1990
    %v1992 = vrot.slane %v1991, 2
    %v1993 = vmax.f32 %v1991, %v1992
    %v1994 = vrot.slane %v1993, 1
    %v1995 = vmax.f32 %v1993, %v1994
    %v1996 = vsel %vm1959, %v1935, -inf
    %v1997 = vsel %vm1959, %v1936, -inf
    %v1998 = vmax.f32 %v1996, %v1997
    %v1999 = vrot.slane %v1998, 4
    %v2000 = vmax.f32 %v1998, %v1999
    %v2001 = vrot.slane %v2000, 2
    %v2002 = vmax.f32 %v2000, %v2001
    %v2003 = vrot.slane %v2002, 1
    %v2004 = vmax.f32 %v2002, %v2003
    %v2005 = vsel %vm1959, %v1937, -inf
    %v2006 = vsel %vm1959, %v1938, -inf
    %v2007 = vmax.f32 %v2005, %v2006
    %v2008 = vrot.slane %v2007, 4
    %v2009 = vmax.f32 %v2007, %v2008
    %v2010 = vrot.slane %v2009, 2
    %v2011 = vmax.f32 %v2009, %v2010
    %v2012 = vrot.slane %v2011, 1
    %v2013 = vmax.f32 %v2011, %v2012
    %v2014 = vsel %vm1959, %v1939, -inf
    %v2015 = vsel %vm1959, %v1940, -inf
    %v2016 = vmax.f32 %v2014, %v2015
    %v2017 = vrot.slane %v2016, 4
    %v2018 = vmax.f32 %v2016, %v2017
    %v2019 = vrot.slane %v2018, 2
    %v2020 = vmax.f32 %v2018, %v2019
    %v2021 = vrot.slane %v2020, 1
    %v2022 = vmax.f32 %v2020, %v2021
    %v2023 = vsel %vm1959, %v1941, -inf
    %v2024 = vsel %vm1959, %v1942, -inf
    %v2025 = vmax.f32 %v2023, %v2024
    %v2026 = vrot.slane %v2025, 4
    %v2027 = vmax.f32 %v2025, %v2026
    %v2028 = vrot.slane %v2027, 2
    %v2029 = vmax.f32 %v2027, %v2028
    %v2030 = vrot.slane %v2029, 1
    %v2031 = vmax.f32 %v2029, %v2030
    %v2032 = vsel %vm1959, %v1943, -inf
    %v2033 = vsel %vm1959, %v1944, -inf
    %v2034 = vmax.f32 %v2032, %v2033
    %v2035 = vrot.slane %v2034, 4
    %v2036 = vmax.f32 %v2034, %v2035
    %v2037 = vrot.slane %v2036, 2
    %v2038 = vmax.f32 %v2036, %v2037
    %v2039 = vrot.slane %v2038, 1
    %v2040 = vmax.f32 %v2038, %v2039
    %v2041 = vsel %vm1959, %v1945, -inf
    %v2042 = vsel %vm1959, %v1946, -inf
    %v2043 = vmax.f32 %v2041, %v2042
    %v2044 = vrot.slane %v2043, 4
    %v2045 = vmax.f32 %v2043, %v2044
    %v2046 = vrot.slane %v2045, 2
    %v2047 = vmax.f32 %v2045, %v2046
    %v2048 = vrot.slane %v2047, 1
    %v2049 = vmax.f32 %v2047, %v2048
    %v2050 = vsel %vm1959, %v1947, -inf
    %v2051 = vsel %vm1959, %v1948, -inf
    %v2052 = vmax.f32 %v2050, %v2051
    %v2053 = vrot.slane %v2052, 4
    %v2054 = vmax.f32 %v2052, %v2053
    %v2055 = vrot.slane %v2054, 2
    %v2056 = vmax.f32 %v2054, %v2055
    %v2057 = vrot.slane %v2056, 1
    %v2058 = vmax.f32 %v2056, %v2057
    %v2059 = vsel %vm1959, %v1949, -inf
    %v2060 = vsel %vm1959, %v1950, -inf
    %v2061 = vmax.f32 %v2059, %v2060
    %v2062 = vrot.slane %v2061, 4
    %v2063 = vmax.f32 %v2061, %v2062
    %v2064 = vrot.slane %v2063, 2
    %v2065 = vmax.f32 %v2063, %v2064
    %v2066 = vrot.slane %v2065, 1
    %v2067 = vmax.f32 %v2065, %v2066
    %v2068 = vsel %vm1959, %v1951, -inf
    %v2069 = vsel %vm1959, %v1952, -inf
    %v2070 = vmax.f32 %v2068, %v2069
    %v2071 = vrot.slane %v2070, 4
    %v2072 = vmax.f32 %v2070, %v2071
    %v2073 = vrot.slane %v2072, 2
    %v2074 = vmax.f32 %v2072, %v2073
    %v2075 = vrot.slane %v2074, 1
    %v2076 = vmax.f32 %v2074, %v2075
    %v2077 = vsel %vm1959, %v1953, -inf
    %v2078 = vsel %vm1959, %v1954, -inf
    %v2079 = vmax.f32 %v2077, %v2078
    %v2080 = vrot.slane %v2079, 4
    %v2081 = vmax.f32 %v2079, %v2080
    %v2082 = vrot.slane %v2081, 2
    %v2083 = vmax.f32 %v2081, %v2082
    %v2084 = vrot.slane %v2083, 1
    %v2085 = vmax.f32 %v2083, %v2084
    %v2086 = vsel %vm1959, %v1955, -inf
    %v2087 = vsel %vm1959, %v1956, -inf
    %v2088 = vmax.f32 %v2086, %v2087
    %v2089 = vrot.slane %v2088, 4
    %v2090 = vmax.f32 %v2088, %v2089
    %v2091 = vrot.slane %v2090, 2
    %v2092 = vmax.f32 %v2090, %v2091
    %v2093 = vrot.slane %v2092, 1
    %v2094 = vmax.f32 %v2092, %v2093
    %v2095 = vsel %vm1959, %v1957, -inf
    %v2096 = vsel %vm1959, %v1958, -inf
    %v2097 = vmax.f32 %v2095, %v2096
    %v2098 = vrot.slane %v2097, 4
    %v2099 = vmax.f32 %v2097, %v2098
    %v2100 = vrot.slane %v2099, 2
    %v2101 = vmax.f32 %v2099, %v2100
    %v2102 = vrot.slane %v2101, 1
    %v2103 = vmax.f32 %v2101, %v2102
    %v2104 = vsub.f32 %v1927, %v1968
    %v2105 = vsub.f32 %v1928, %v1968
    %v2106 = vsub.f32 %v1929, %v1977
    %v2107 = vsub.f32 %v1930, %v1977
    %v2108 = vsub.f32 %v1931, %v1986
    %v2109 = vsub.f32 %v1932, %v1986
    %v2110 = vsub.f32 %v1933, %v1995
    %v2111 = vsub.f32 %v1934, %v1995
    %v2112 = vsub.f32 %v1935, %v2004
    %v2113 = vsub.f32 %v1936, %v2004
    %v2114 = vsub.f32 %v1937, %v2013
    %v2115 = vsub.f32 %v1938, %v2013
    %v2116 = vsub.f32 %v1939, %v2022
    %v2117 = vsub.f32 %v1940, %v2022
    %v2118 = vsub.f32 %v1941, %v2031
    %v2119 = vsub.f32 %v1942, %v2031
    %v2120 = vsub.f32 %v1943, %v2040
    %v2121 = vsub.f32 %v1944, %v2040
    %v2122 = vsub.f32 %v1945, %v2049
    %v2123 = vsub.f32 %v1946, %v2049
    %v2124 = vsub.f32 %v1947, %v2058
    %v2125 = vsub.f32 %v1948, %v2058
    %v2126 = vsub.f32 %v1949, %v2067
    %v2127 = vsub.f32 %v1950, %v2067
    %v2128 = vsub.f32 %v1951, %v2076
    %v2129 = vsub.f32 %v1952, %v2076
    %v2130 = vsub.f32 %v1953, %v2085
    %v2131 = vsub.f32 %v1954, %v2085
    %v2132 = vsub.f32 %v1955, %v2094
    %v2133 = vsub.f32 %v1956, %v2094
    %v2134 = vsub.f32 %v1957, %v2103
    %v2135 = vsub.f32 %v1958, %v2103
    %v2136 = vmul.f32 %v2104, 1.442695
    %v2137 = vpow.pop %v2136
    %v2138 = vmul.f32 %v2105, 1.442695
    %v2139 = vpow.pop %v2138
    %v2140 = vmul.f32 %v2106, 1.442695
    %v2141 = vpow.pop %v2140
    %v2142 = vmul.f32 %v2107, 1.442695
    %v2143 = vpow.pop %v2142
    %v2144 = vmul.f32 %v2108, 1.442695
    %v2145 = vpow.pop %v2144
    %v2146 = vmul.f32 %v2109, 1.442695
    %v2147 = vpow.pop %v2146
    %v2148 = vmul.f32 %v2110, 1.442695
    %v2149 = vpow.pop %v2148
    %v2150 = vmul.f32 %v2111, 1.442695
    %v2151 = vpow.pop %v2150
    %v2152 = vmul.f32 %v2112, 1.442695
    %v2153 = vpow.pop %v2152
    %v2154 = vmul.f32 %v2113, 1.442695
    %v2155 = vpow.pop %v2154
    %v2156 = vmul.f32 %v2114, 1.442695
    %v2157 = vpow.pop %v2156
    %v2158 = vmul.f32 %v2115, 1.442695
    %v2159 = vpow.pop %v2158
    %v2160 = vmul.f32 %v2116, 1.442695
    %v2161 = vpow.pop %v2160
    %v2162 = vmul.f32 %v2117, 1.442695
    %v2163 = vpow.pop %v2162
    %v2164 = vmul.f32 %v2118, 1.442695
    %v2165 = vpow.pop %v2164
    %v2166 = vmul.f32 %v2119, 1.442695
    %v2167 = vpow.pop %v2166
    %v2168 = vmul.f32 %v2120, 1.442695
    %v2169 = vpow.pop %v2168
    %v2170 = vmul.f32 %v2121, 1.442695
    %v2171 = vpow.pop %v2170
    %v2172 = vmul.f32 %v2122, 1.442695
    %v2173 = vpow.pop %v2172
    %v2174 = vmul.f32 %v2123, 1.442695
    %v2175 = vpow.pop %v2174
    %v2176 = vmul.f32 %v2124, 1.442695
    %v2177 = vpow.pop %v2176
    %v2178 = vmul.f32 %v2125, 1.442695
    %v2179 = vpow.pop %v2178
    %v2180 = vmul.f32 %v2126, 1.442695
    %v2181 = vpow.pop %v2180
    %v2182 = vmul.f32 %v2127, 1.442695
    %v2183 = vpow.pop %v2182
    %v2184 = vmul.f32 %v2128, 1.442695
    %v2185 = vpow.pop %v2184
    %v2186 = vmul.f32 %v2129, 1.442695
    %v2187 = vpow.pop %v2186
    %v2188 = vmul.f32 %v2130, 1.442695
    %v2189 = vpow.pop %v2188
    %v2190 = vmul.f32 %v2131, 1.442695
    %v2191 = vpow.pop %v2190
    %v2192 = vmul.f32 %v2132, 1.442695
    %v2193 = vpow.pop %v2192
    %v2194 = vmul.f32 %v2133, 1.442695
    %v2195 = vpow.pop %v2194
    %v2196 = vmul.f32 %v2134, 1.442695
    %v2197 = vpow.pop %v2196
    %v2198 = vmul.f32 %v2135, 1.442695
    %v2199 = vpow.pop %v2198
    %v2200 = vsel %vm1959, %v2137, 0.0
    %v2201 = vsel %vm1959, %v2139, 0.0
    %v2202 = vadd.f32 %v2200, %v2201
    %v2203 = vrot.slane %v2202, 4
    %v2204 = vadd.f32 %v2202, %v2203
    %v2205 = vrot.slane %v2204, 2
    %v2206 = vadd.f32 %v2204, %v2205
    %v2207 = vrot.slane %v2206, 1
    %v2208 = vadd.f32 %v2206, %v2207
    %v2209 = vsel %vm1959, %v2141, 0.0
    %v2210 = vsel %vm1959, %v2143, 0.0
    %v2211 = vadd.f32 %v2209, %v2210
    %v2212 = vrot.slane %v2211, 4
    %v2213 = vadd.f32 %v2211, %v2212
    %v2214 = vrot.slane %v2213, 2
    %v2215 = vadd.f32 %v2213, %v2214
    %v2216 = vrot.slane %v2215, 1
    %v2217 = vadd.f32 %v2215, %v2216
    %v2218 = vsel %vm1959, %v2145, 0.0
    %v2219 = vsel %vm1959, %v2147, 0.0
    %v2220 = vadd.f32 %v2218, %v2219
    %v2221 = vrot.slane %v2220, 4
    %v2222 = vadd.f32 %v2220, %v2221
    %v2223 = vrot.slane %v2222, 2
    %v2224 = vadd.f32 %v2222, %v2223
    %v2225 = vrot.slane %v2224, 1
    %v2226 = vadd.f32 %v2224, %v2225
    %v2227 = vsel %vm1959, %v2149, 0.0
    %v2228 = vsel %vm1959, %v2151, 0.0
    %v2229 = vadd.f32 %v2227, %v2228
    %v2230 = vrot.slane %v2229, 4
    %v2231 = vadd.f32 %v2229, %v2230
    %v2232 = vrot.slane %v2231, 2
    %v2233 = vadd.f32 %v2231, %v2232
    %v2234 = vrot.slane %v2233, 1
    %v2235 = vadd.f32 %v2233, %v2234
    %v2236 = vsel %vm1959, %v2153, 0.0
    %v2237 = vsel %vm1959, %v2155, 0.0
    %v2238 = vadd.f32 %v2236, %v2237
    %v2239 = vrot.slane %v2238, 4
    %v2240 = vadd.f32 %v2238, %v2239
    %v2241 = vrot.slane %v2240, 2
    %v2242 = vadd.f32 %v2240, %v2241
    %v2243 = vrot.slane %v2242, 1
    %v2244 = vadd.f32 %v2242, %v2243
    %v2245 = vsel %vm1959, %v2157, 0.0
    %v2246 = vsel %vm1959, %v2159, 0.0
    %v2247 = vadd.f32 %v2245, %v2246
    %v2248 = vrot.slane %v2247, 4
    %v2249 = vadd.f32 %v2247, %v2248
    %v2250 = vrot.slane %v2249, 2
    %v2251 = vadd.f32 %v2249, %v2250
    %v2252 = vrot.slane %v2251, 1
    %v2253 = vadd.f32 %v2251, %v2252
    %v2254 = vsel %vm1959, %v2161, 0.0
    %v2255 = vsel %vm1959, %v2163, 0.0
    %v2256 = vadd.f32 %v2254, %v2255
    %v2257 = vrot.slane %v2256, 4
    %v2258 = vadd.f32 %v2256, %v2257
    %v2259 = vrot.slane %v2258, 2
    %v2260 = vadd.f32 %v2258, %v2259
    %v2261 = vrot.slane %v2260, 1
    %v2262 = vadd.f32 %v2260, %v2261
    %v2263 = vsel %vm1959, %v2165, 0.0
    %v2264 = vsel %vm1959, %v2167, 0.0
    %v2265 = vadd.f32 %v2263, %v2264
    %v2266 = vrot.slane %v2265, 4
    %v2267 = vadd.f32 %v2265, %v2266
    %v2268 = vrot.slane %v2267, 2
    %v2269 = vadd.f32 %v2267, %v2268
    %v2270 = vrot.slane %v2269, 1
    %v2271 = vadd.f32 %v2269, %v2270
    %v2272 = vsel %vm1959, %v2169, 0.0
    %v2273 = vsel %vm1959, %v2171, 0.0
    %v2274 = vadd.f32 %v2272, %v2273
    %v2275 = vrot.slane %v2274, 4
    %v2276 = vadd.f32 %v2274, %v2275
    %v2277 = vrot.slane %v2276, 2
    %v2278 = vadd.f32 %v2276, %v2277
    %v2279 = vrot.slane %v2278, 1
    %v2280 = vadd.f32 %v2278, %v2279
    %v2281 = vsel %vm1959, %v2173, 0.0
    %v2282 = vsel %vm1959, %v2175, 0.0
    %v2283 = vadd.f32 %v2281, %v2282
    %v2284 = vrot.slane %v2283, 4
    %v2285 = vadd.f32 %v2283, %v2284
    %v2286 = vrot.slane %v2285, 2
    %v2287 = vadd.f32 %v2285, %v2286
    %v2288 = vrot.slane %v2287, 1
    %v2289 = vadd.f32 %v2287, %v2288
    %v2290 = vsel %vm1959, %v2177, 0.0
    %v2291 = vsel %vm1959, %v2179, 0.0
    %v2292 = vadd.f32 %v2290, %v2291
    %v2293 = vrot.slane %v2292, 4
    %v2294 = vadd.f32 %v2292, %v2293
    %v2295 = vrot.slane %v2294, 2
    %v2296 = vadd.f32 %v2294, %v2295
    %v2297 = vrot.slane %v2296, 1
    %v2298 = vadd.f32 %v2296, %v2297
    %v2299 = vsel %vm1959, %v2181, 0.0
    %v2300 = vsel %vm1959, %v2183, 0.0
    %v2301 = vadd.f32 %v2299, %v2300
    %v2302 = vrot.slane %v2301, 4
    %v2303 = vadd.f32 %v2301, %v2302
    %v2304 = vrot.slane %v2303, 2
    %v2305 = vadd.f32 %v2303, %v2304
    %v2306 = vrot.slane %v2305, 1
    %v2307 = vadd.f32 %v2305, %v2306
    %v2308 = vsel %vm1959, %v2185, 0.0
    %v2309 = vsel %vm1959, %v2187, 0.0
    %v2310 = vadd.f32 %v2308, %v2309
    %v2311 = vrot.slane %v2310, 4
    %v2312 = vadd.f32 %v2310, %v2311
    %v2313 = vrot.slane %v2312, 2
    %v2314 = vadd.f32 %v2312, %v2313
    %v2315 = vrot.slane %v2314, 1
    %v2316 = vadd.f32 %v2314, %v2315
    %v2317 = vsel %vm1959, %v2189, 0.0
    %v2318 = vsel %vm1959, %v2191, 0.0
    %v2319 = vadd.f32 %v2317, %v2318
    %v2320 = vrot.slane %v2319, 4
    %v2321 = vadd.f32 %v2319, %v2320
    %v2322 = vrot.slane %v2321, 2
    %v2323 = vadd.f32 %v2321, %v2322
    %v2324 = vrot.slane %v2323, 1
    %v2325 = vadd.f32 %v2323, %v2324
    %v2326 = vsel %vm1959, %v2193, 0.0
    %v2327 = vsel %vm1959, %v2195, 0.0
    %v2328 = vadd.f32 %v2326, %v2327
    %v2329 = vrot.slane %v2328, 4
    %v2330 = vadd.f32 %v2328, %v2329
    %v2331 = vrot.slane %v2330, 2
    %v2332 = vadd.f32 %v2330, %v2331
    %v2333 = vrot.slane %v2332, 1
    %v2334 = vadd.f32 %v2332, %v2333
    %v2335 = vsel %vm1959, %v2197, 0.0
    %v2336 = vsel %vm1959, %v2199, 0.0
    %v2337 = vadd.f32 %v2335, %v2336
    %v2338 = vrot.slane %v2337, 4
    %v2339 = vadd.f32 %v2337, %v2338
    %v2340 = vrot.slane %v2339, 2
    %v2341 = vadd.f32 %v2339, %v2340
    %v2342 = vrot.slane %v2341, 1
    %v2343 = vadd.f32 %v2341, %v2342
    %v2344 = vrcp.pop %v2208
    %v2345 = vrcp.pop %v2217
    %v2346 = vrcp.pop %v2226
    %v2347 = vrcp.pop %v2235
    %v2348 = vrcp.pop %v2244
    %v2349 = vrcp.pop %v2253
    %v2350 = vrcp.pop %v2262
    %v2351 = vrcp.pop %v2271
    %v2352 = vrcp.pop %v2280
    %v2353 = vrcp.pop %v2289
    %v2354 = vrcp.pop %v2298
    %v2355 = vrcp.pop %v2307
    %v2356 = vrcp.pop %v2316
    %v2357 = vrcp.pop %v2325
    %v2358 = vrcp.pop %v2334
    %v2359 = vrcp.pop %v2343
    %v2360 = vmul.f32 %v2208, %v2344
    %v2361 = vmul.f32 %v2217, %v2345
    %v2362 = vmul.f32 %v2226, %v2346
    %v2363 = vmul.f32 %v2235, %v2347
    %v2364 = vmul.f32 %v2244, %v2348
    %v2365 = vmul.f32 %v2253, %v2349
    %v2366 = vmul.f32 %v2262, %v2350
    %v2367 = vmul.f32 %v2271, %v2351
    %v2368 = vmul.f32 %v2280, %v2352
    %v2369 = vmul.f32 %v2289, %v2353
    %v2370 = vmul.f32 %v2298, %v2354
    %v2371 = vmul.f32 %v2307, %v2355
    %v2372 = vmul.f32 %v2316, %v2356
    %v2373 = vmul.f32 %v2325, %v2357
    %v2374 = vmul.f32 %v2334, %v2358
    %v2375 = vmul.f32 %v2343, %v2359
    %v2376 = vsub.f32 2.0, %v2360
    %v2377 = vsub.f32 2.0, %v2361
    %v2378 = vsub.f32 2.0, %v2362
    %v2379 = vsub.f32 2.0, %v2363
    %v2380 = vsub.f32 2.0, %v2364
    %v2381 = vsub.f32 2.0, %v2365
    %v2382 = vsub.f32 2.0, %v2366
    %v2383 = vsub.f32 2.0, %v2367
    %v2384 = vsub.f32 2.0, %v2368
    %v2385 = vsub.f32 2.0, %v2369
    %v2386 = vsub.f32 2.0, %v2370
    %v2387 = vsub.f32 2.0, %v2371
    %v2388 = vsub.f32 2.0, %v2372
    %v2389 = vsub.f32 2.0, %v2373
    %v2390 = vsub.f32 2.0, %v2374
    %v2391 = vsub.f32 2.0, %v2375
    %v2392 = vmul.f32 %v2344, %v2376
    %v2393 = vmul.f32 %v2345, %v2377
    %v2394 = vmul.f32 %v2346, %v2378
    %v2395 = vmul.f32 %v2347, %v2379
    %v2396 = vmul.f32 %v2348, %v2380
    %v2397 = vmul.f32 %v2349, %v2381
    %v2398 = vmul.f32 %v2350, %v2382
    %v2399 = vmul.f32 %v2351, %v2383
    %v2400 = vmul.f32 %v2352, %v2384
    %v2401 = vmul.f32 %v2353, %v2385
    %v2402 = vmul.f32 %v2354, %v2386
    %v2403 = vmul.f32 %v2355, %v2387
    %v2404 = vmul.f32 %v2356, %v2388
    %v2405 = vmul.f32 %v2357, %v2389
    %v2406 = vmul.f32 %v2358, %v2390
    %v2407 = vmul.f32 %v2359, %v2391
    %v2408 = vmul.f32 %v2137, %v2392
    %v2409 = vmul.f32 %v2139, %v2392
    %v2410 = vmul.f32 %v2141, %v2393
    %v2411 = vmul.f32 %v2143, %v2393
    %v2412 = vmul.f32 %v2145, %v2394
    %v2413 = vmul.f32 %v2147, %v2394
    %v2414 = vmul.f32 %v2149, %v2395
    %v2415 = vmul.f32 %v2151, %v2395
    %v2416 = vmul.f32 %v2153, %v2396
    %v2417 = vmul.f32 %v2155, %v2396
    %v2418 = vmul.f32 %v2157, %v2397
    %v2419 = vmul.f32 %v2159, %v2397
    %v2420 = vmul.f32 %v2161, %v2398
    %v2421 = vmul.f32 %v2163, %v2398
    %v2422 = vmul.f32 %v2165, %v2399
    %v2423 = vmul.f32 %v2167, %v2399
    %v2424 = vmul.f32 %v2169, %v2400
    %v2425 = vmul.f32 %v2171, %v2400
    %v2426 = vmul.f32 %v2173, %v2401
    %v2427 = vmul.f32 %v2175, %v2401
    %v2428 = vmul.f32 %v2177, %v2402
    %v2429 = vmul.f32 %v2179, %v2402
    %v2430 = vmul.f32 %v2181, %v2403
    %v2431 = vmul.f32 %v2183, %v2403
    %v2432 = vmul.f32 %v2185, %v2404
    %v2433 = vmul.f32 %v2187, %v2404
    %v2434 = vmul.f32 %v2189, %v2405
    %v2435 = vmul.f32 %v2191, %v2405
    %v2436 = vmul.f32 %v2193, %v2406
    %v2437 = vmul.f32 %v2195, %v2406
    %v2438 = vmul.f32 %v2197, %v2407
    %v2439 = vmul.f32 %v2199, %v2407
    %v2440 = vmul.f32 %v2408, %v381
    %v2441 = vmul.f32 %v2409, %v382
    %v2442 = vmul.f32 %v2410, %v381
    %v2443 = vmul.f32 %v2411, %v382
    %v2444 = vmul.f32 %v2412, %v381
    %v2445 = vmul.f32 %v2413, %v382
    %v2446 = vmul.f32 %v2414, %v381
    %v2447 = vmul.f32 %v2415, %v382
    %v2448 = vmul.f32 %v2416, %v381
    %v2449 = vmul.f32 %v2417, %v382
    %v2450 = vmul.f32 %v2418, %v381
    %v2451 = vmul.f32 %v2419, %v382
    %v2452 = vmul.f32 %v2420, %v381
    %v2453 = vmul.f32 %v2421, %v382
    %v2454 = vmul.f32 %v2422, %v381
    %v2455 = vmul.f32 %v2423, %v382
    %v2456 = vmul.f32 %v2424, %v381
    %v2457 = vmul.f32 %v2425, %v382
    %v2458 = vmul.f32 %v2426, %v381
    %v2459 = vmul.f32 %v2427, %v382
    %v2460 = vmul.f32 %v2428, %v381
    %v2461 = vmul.f32 %v2429, %v382
    %v2462 = vmul.f32 %v2430, %v381
    %v2463 = vmul.f32 %v2431, %v382
    %v2464 = vmul.f32 %v2432, %v381
    %v2465 = vmul.f32 %v2433, %v382
    %v2466 = vmul.f32 %v2434, %v381
    %v2467 = vmul.f32 %v2435, %v382
    %v2468 = vmul.f32 %v2436, %v381
    %v2469 = vmul.f32 %v2437, %v382
    %v2470 = vmul.f32 %v2438, %v381
    %v2471 = vmul.f32 %v2439, %v382
    %v2472 = vsel %vm1959, %v2440, 0.0
    %v2473 = vsel %vm1959, %v2441, 0.0
    %v2474 = vadd.f32 %v2472, %v2473
    %v2475 = vrot.slane %v2474, 4
    %v2476 = vadd.f32 %v2474, %v2475
    %v2477 = vrot.slane %v2476, 2
    %v2478 = vadd.f32 %v2476, %v2477
    %v2479 = vrot.slane %v2478, 1
    %v2480 = vadd.f32 %v2478, %v2479
    %v2481 = vsel %vm1959, %v2442, 0.0
    %v2482 = vsel %vm1959, %v2443, 0.0
    %v2483 = vadd.f32 %v2481, %v2482
    %v2484 = vrot.slane %v2483, 4
    %v2485 = vadd.f32 %v2483, %v2484
    %v2486 = vrot.slane %v2485, 2
    %v2487 = vadd.f32 %v2485, %v2486
    %v2488 = vrot.slane %v2487, 1
    %v2489 = vadd.f32 %v2487, %v2488
    %v2490 = vsel %vm1959, %v2444, 0.0
    %v2491 = vsel %vm1959, %v2445, 0.0
    %v2492 = vadd.f32 %v2490, %v2491
    %v2493 = vrot.slane %v2492, 4
    %v2494 = vadd.f32 %v2492, %v2493
    %v2495 = vrot.slane %v2494, 2
    %v2496 = vadd.f32 %v2494, %v2495
    %v2497 = vrot.slane %v2496, 1
    %v2498 = vadd.f32 %v2496, %v2497
    %v2499 = vsel %vm1959, %v2446, 0.0
    %v2500 = vsel %vm1959, %v2447, 0.0
    %v2501 = vadd.f32 %v2499, %v2500
    %v2502 = vrot.slane %v2501, 4
    %v2503 = vadd.f32 %v2501, %v2502
    %v2504 = vrot.slane %v2503, 2
    %v2505 = vadd.f32 %v2503, %v2504
    %v2506 = vrot.slane %v2505, 1
    %v2507 = vadd.f32 %v2505, %v2506
    %v2508 = vsel %vm1959, %v2448, 0.0
    %v2509 = vsel %vm1959, %v2449, 0.0
    %v2510 = vadd.f32 %v2508, %v2509
    %v2511 = vrot.slane %v2510, 4
    %v2512 = vadd.f32 %v2510, %v2511
    %v2513 = vrot.slane %v2512, 2
    %v2514 = vadd.f32 %v2512, %v2513
    %v2515 = vrot.slane %v2514, 1
    %v2516 = vadd.f32 %v2514, %v2515
    %v2517 = vsel %vm1959, %v2450, 0.0
    %v2518 = vsel %vm1959, %v2451, 0.0
    %v2519 = vadd.f32 %v2517, %v2518
    %v2520 = vrot.slane %v2519, 4
    %v2521 = vadd.f32 %v2519, %v2520
    %v2522 = vrot.slane %v2521, 2
    %v2523 = vadd.f32 %v2521, %v2522
    %v2524 = vrot.slane %v2523, 1
    %v2525 = vadd.f32 %v2523, %v2524
    %v2526 = vsel %vm1959, %v2452, 0.0
    %v2527 = vsel %vm1959, %v2453, 0.0
    %v2528 = vadd.f32 %v2526, %v2527
    %v2529 = vrot.slane %v2528, 4
    %v2530 = vadd.f32 %v2528, %v2529
    %v2531 = vrot.slane %v2530, 2
    %v2532 = vadd.f32 %v2530, %v2531
    %v2533 = vrot.slane %v2532, 1
    %v2534 = vadd.f32 %v2532, %v2533
    %v2535 = vsel %vm1959, %v2454, 0.0
    %v2536 = vsel %vm1959, %v2455, 0.0
    %v2537 = vadd.f32 %v2535, %v2536
    %v2538 = vrot.slane %v2537, 4
    %v2539 = vadd.f32 %v2537, %v2538
    %v2540 = vrot.slane %v2539, 2
    %v2541 = vadd.f32 %v2539, %v2540
    %v2542 = vrot.slane %v2541, 1
    %v2543 = vadd.f32 %v2541, %v2542
    %v2544 = vsel %vm1959, %v2456, 0.0
    %v2545 = vsel %vm1959, %v2457, 0.0
    %v2546 = vadd.f32 %v2544, %v2545
    %v2547 = vrot.slane %v2546, 4
    %v2548 = vadd.f32 %v2546, %v2547
    %v2549 = vrot.slane %v2548, 2
    %v2550 = vadd.f32 %v2548, %v2549
    %v2551 = vrot.slane %v2550, 1
    %v2552 = vadd.f32 %v2550, %v2551
    %v2553 = vsel %vm1959, %v2458, 0.0
    %v2554 = vsel %vm1959, %v2459, 0.0
    %v2555 = vadd.f32 %v2553, %v2554
    %v2556 = vrot.slane %v2555, 4
    %v2557 = vadd.f32 %v2555, %v2556
    %v2558 = vrot.slane %v2557, 2
    %v2559 = vadd.f32 %v2557, %v2558
    %v2560 = vrot.slane %v2559, 1
    %v2561 = vadd.f32 %v2559, %v2560
    %v2562 = vsel %vm1959, %v2460, 0.0
    %v2563 = vsel %vm1959, %v2461, 0.0
    %v2564 = vadd.f32 %v2562, %v2563
    %v2565 = vrot.slane %v2564, 4
    %v2566 = vadd.f32 %v2564, %v2565
    %v2567 = vrot.slane %v2566, 2
    %v2568 = vadd.f32 %v2566, %v2567
    %v2569 = vrot.slane %v2568, 1
    %v2570 = vadd.f32 %v2568, %v2569
    %v2571 = vsel %vm1959, %v2462, 0.0
    %v2572 = vsel %vm1959, %v2463, 0.0
    %v2573 = vadd.f32 %v2571, %v2572
    %v2574 = vrot.slane %v2573, 4
    %v2575 = vadd.f32 %v2573, %v2574
    %v2576 = vrot.slane %v2575, 2
    %v2577 = vadd.f32 %v2575, %v2576
    %v2578 = vrot.slane %v2577, 1
    %v2579 = vadd.f32 %v2577, %v2578
    %v2580 = vsel %vm1959, %v2464, 0.0
    %v2581 = vsel %vm1959, %v2465, 0.0
    %v2582 = vadd.f32 %v2580, %v2581
    %v2583 = vrot.slane %v2582, 4
    %v2584 = vadd.f32 %v2582, %v2583
    %v2585 = vrot.slane %v2584, 2
    %v2586 = vadd.f32 %v2584, %v2585
    %v2587 = vrot.slane %v2586, 1
    %v2588 = vadd.f32 %v2586, %v2587
    %v2589 = vsel %vm1959, %v2466, 0.0
    %v2590 = vsel %vm1959, %v2467, 0.0
    %v2591 = vadd.f32 %v2589, %v2590
    %v2592 = vrot.slane %v2591, 4
    %v2593 = vadd.f32 %v2591, %v2592
    %v2594 = vrot.slane %v2593, 2
    %v2595 = vadd.f32 %v2593, %v2594
    %v2596 = vrot.slane %v2595, 1
    %v2597 = vadd.f32 %v2595, %v2596
    %v2598 = vsel %vm1959, %v2468, 0.0
    %v2599 = vsel %vm1959, %v2469, 0.0
    %v2600 = vadd.f32 %v2598, %v2599
    %v2601 = vrot.slane %v2600, 4
    %v2602 = vadd.f32 %v2600, %v2601
    %v2603 = vrot.slane %v2602, 2
    %v2604 = vadd.f32 %v2602, %v2603
    %v2605 = vrot.slane %v2604, 1
    %v2606 = vadd.f32 %v2604, %v2605
    %v2607 = vsel %vm1959, %v2470, 0.0
    %v2608 = vsel %vm1959, %v2471, 0.0
    %v2609 = vadd.f32 %v2607, %v2608
    %v2610 = vrot.slane %v2609, 4
    %v2611 = vadd.f32 %v2609, %v2610
    %v2612 = vrot.slane %v2611, 2
    %v2613 = vadd.f32 %v2611, %v2612
    %v2614 = vrot.slane %v2613, 1
    %v2615 = vadd.f32 %v2613, %v2614
    %v2616 = vld [vmem:[#allocation14] sm:$0xff]
    %v2617 = vld [vmem:[#allocation14 + $0x8] sm:$0xff]
    %v2618 = vlaneseq
    %v2619 = vshrl.u32 %v2618, 7
    %v2620 = vsub.s32 0, %v2619
    %v2621 = vrot.slane %v2616, %v2620
    %2623 = vbcast.lane.b32.xlu0 %v2621, 256
    %v2624 = vpop.permute.xlu0 %2623
    %s2626 = sor.u32 256, 8
    %2627 = vbcast.lane.b32.xlu0 %v2621, %s2626
    %v2628 = vpop.permute.xlu0 %2627
    %v2629 = vlaneseq
    %v2630 = vshrl.u32 %v2629, 7
    %v2631 = vsub.s32 1, %v2630
    %v2632 = vrot.slane %v2616, %v2631
    %2634 = vbcast.lane.b32.xlu0 %v2632, 256
    %v2635 = vpop.permute.xlu0 %2634
    %s2637 = sor.u32 256, 8
    %2638 = vbcast.lane.b32.xlu0 %v2632, %s2637
    %v2639 = vpop.permute.xlu0 %2638
    %v2640 = vlaneseq
    %v2641 = vshrl.u32 %v2640, 7
    %v2642 = vsub.s32 2, %v2641
    %v2643 = vrot.slane %v2616, %v2642
    %2645 = vbcast.lane.b32.xlu0 %v2643, 256
    %v2646 = vpop.permute.xlu0 %2645
    %s2648 = sor.u32 256, 8
    %2649 = vbcast.lane.b32.xlu0 %v2643, %s2648
    %v2650 = vpop.permute.xlu0 %2649
    %v2651 = vlaneseq
    %v2652 = vshrl.u32 %v2651, 7
    %v2653 = vsub.s32 3, %v2652
    %v2654 = vrot.slane %v2616, %v2653
    %2656 = vbcast.lane.b32.xlu0 %v2654, 256
    %v2657 = vpop.permute.xlu0 %2656
    %s2659 = sor.u32 256, 8
    %2660 = vbcast.lane.b32.xlu0 %v2654, %s2659
    %v2661 = vpop.permute.xlu0 %2660
    %v2662 = vlaneseq
    %v2663 = vshrl.u32 %v2662, 7
    %v2664 = vsub.s32 4, %v2663
    %v2665 = vrot.slane %v2616, %v2664
    %2667 = vbcast.lane.b32.xlu0 %v2665, 256
    %v2668 = vpop.permute.xlu0 %2667
    %s2670 = sor.u32 256, 8
    %2671 = vbcast.lane.b32.xlu0 %v2665, %s2670
    %v2672 = vpop.permute.xlu0 %2671
    %v2673 = vlaneseq
    %v2674 = vshrl.u32 %v2673, 7
    %v2675 = vsub.s32 5, %v2674
    %v2676 = vrot.slane %v2616, %v2675
    %2678 = vbcast.lane.b32.xlu0 %v2676, 256
    %v2679 = vpop.permute.xlu0 %2678
    %s2681 = sor.u32 256, 8
    %2682 = vbcast.lane.b32.xlu0 %v2676, %s2681
    %v2683 = vpop.permute.xlu0 %2682
    %v2684 = vlaneseq
    %v2685 = vshrl.u32 %v2684, 7
    %v2686 = vsub.s32 6, %v2685
    %v2687 = vrot.slane %v2616, %v2686
    %2689 = vbcast.lane.b32.xlu0 %v2687, 256
    %v2690 = vpop.permute.xlu0 %2689
    %s2692 = sor.u32 256, 8
    %2693 = vbcast.lane.b32.xlu0 %v2687, %s2692
    %v2694 = vpop.permute.xlu0 %2693
    %v2695 = vlaneseq
    %v2696 = vshrl.u32 %v2695, 7
    %v2697 = vsub.s32 7, %v2696
    %v2698 = vrot.slane %v2616, %v2697
    %2700 = vbcast.lane.b32.xlu0 %v2698, 256
    %v2701 = vpop.permute.xlu0 %2700
    %s2703 = sor.u32 256, 8
    %2704 = vbcast.lane.b32.xlu0 %v2698, %s2703
    %v2705 = vpop.permute.xlu0 %2704
    %v2706 = vlaneseq
    %v2707 = vshrl.u32 %v2706, 7
    %v2708 = vsub.s32 0, %v2707
    %v2709 = vrot.slane %v2617, %v2708
    %2711 = vbcast.lane.b32.xlu0 %v2709, 256
    %v2712 = vpop.permute.xlu0 %2711
    %s2714 = sor.u32 256, 8
    %2715 = vbcast.lane.b32.xlu0 %v2709, %s2714
    %v2716 = vpop.permute.xlu0 %2715
    %v2717 = vlaneseq
    %v2718 = vshrl.u32 %v2717, 7
    %v2719 = vsub.s32 1, %v2718
    %v2720 = vrot.slane %v2617, %v2719
    %2722 = vbcast.lane.b32.xlu0 %v2720, 256
    %v2723 = vpop.permute.xlu0 %2722
    %s2725 = sor.u32 256, 8
    %2726 = vbcast.lane.b32.xlu0 %v2720, %s2725
    %v2727 = vpop.permute.xlu0 %2726
    %v2728 = vlaneseq
    %v2729 = vshrl.u32 %v2728, 7
    %v2730 = vsub.s32 2, %v2729
    %v2731 = vrot.slane %v2617, %v2730
    %2733 = vbcast.lane.b32.xlu0 %v2731, 256
    %v2734 = vpop.permute.xlu0 %2733
    %s2736 = sor.u32 256, 8
    %2737 = vbcast.lane.b32.xlu0 %v2731, %s2736
    %v2738 = vpop.permute.xlu0 %2737
    %v2739 = vlaneseq
    %v2740 = vshrl.u32 %v2739, 7
    %v2741 = vsub.s32 3, %v2740
    %v2742 = vrot.slane %v2617, %v2741
    %2744 = vbcast.lane.b32.xlu0 %v2742, 256
    %v2745 = vpop.permute.xlu0 %2744
    %s2747 = sor.u32 256, 8
    %2748 = vbcast.lane.b32.xlu0 %v2742, %s2747
    %v2749 = vpop.permute.xlu0 %2748
    %v2750 = vlaneseq
    %v2751 = vshrl.u32 %v2750, 7
    %v2752 = vsub.s32 4, %v2751
    %v2753 = vrot.slane %v2617, %v2752
    %2755 = vbcast.lane.b32.xlu0 %v2753, 256
    %v2756 = vpop.permute.xlu0 %2755
    %s2758 = sor.u32 256, 8
    %2759 = vbcast.lane.b32.xlu0 %v2753, %s2758
    %v2760 = vpop.permute.xlu0 %2759
    %v2761 = vlaneseq
    %v2762 = vshrl.u32 %v2761, 7
    %v2763 = vsub.s32 5, %v2762
    %v2764 = vrot.slane %v2617, %v2763
    %2766 = vbcast.lane.b32.xlu0 %v2764, 256
    %v2767 = vpop.permute.xlu0 %2766
    %s2769 = sor.u32 256, 8
    %2770 = vbcast.lane.b32.xlu0 %v2764, %s2769
    %v2771 = vpop.permute.xlu0 %2770
    %v2772 = vlaneseq
    %v2773 = vshrl.u32 %v2772, 7
    %v2774 = vsub.s32 6, %v2773
    %v2775 = vrot.slane %v2617, %v2774
    %2777 = vbcast.lane.b32.xlu0 %v2775, 256
    %v2778 = vpop.permute.xlu0 %2777
    %s2780 = sor.u32 256, 8
    %2781 = vbcast.lane.b32.xlu0 %v2775, %s2780
    %v2782 = vpop.permute.xlu0 %2781
    %v2783 = vlaneseq
    %v2784 = vshrl.u32 %v2783, 7
    %v2785 = vsub.s32 7, %v2784
    %v2786 = vrot.slane %v2617, %v2785
    %2788 = vbcast.lane.b32.xlu0 %v2786, 256
    %v2789 = vpop.permute.xlu0 %2788
    %s2791 = sor.u32 256, 8
    %2792 = vbcast.lane.b32.xlu0 %v2786, %s2791
    %v2793 = vpop.permute.xlu0 %2792
    %v2794 = vmul.f32 %v2408, %v2624
    %v2795 = vmul.f32 %v2409, %v2628
    %v2796 = vmul.f32 %v2410, %v2635
    %v2797 = vmul.f32 %v2411, %v2639
    %v2798 = vmul.f32 %v2412, %v2646
    %v2799 = vmul.f32 %v2413, %v2650
    %v2800 = vmul.f32 %v2414, %v2657
    %v2801 = vmul.f32 %v2415, %v2661
    %v2802 = vmul.f32 %v2416, %v2668
    %v2803 = vmul.f32 %v2417, %v2672
    %v2804 = vmul.f32 %v2418, %v2679
    %v2805 = vmul.f32 %v2419, %v2683
    %v2806 = vmul.f32 %v2420, %v2690
    %v2807 = vmul.f32 %v2421, %v2694
    %v2808 = vmul.f32 %v2422, %v2701
    %v2809 = vmul.f32 %v2423, %v2705
    %v2810 = vmul.f32 %v2424, %v2712
    %v2811 = vmul.f32 %v2425, %v2716
    %v2812 = vmul.f32 %v2426, %v2723
    %v2813 = vmul.f32 %v2427, %v2727
    %v2814 = vmul.f32 %v2428, %v2734
    %v2815 = vmul.f32 %v2429, %v2738
    %v2816 = vmul.f32 %v2430, %v2745
    %v2817 = vmul.f32 %v2431, %v2749
    %v2818 = vmul.f32 %v2432, %v2756
    %v2819 = vmul.f32 %v2433, %v2760
    %v2820 = vmul.f32 %v2434, %v2767
    %v2821 = vmul.f32 %v2435, %v2771
    %v2822 = vmul.f32 %v2436, %v2778
    %v2823 = vmul.f32 %v2437, %v2782
    %v2824 = vmul.f32 %v2438, %v2789
    %v2825 = vmul.f32 %v2439, %v2793
    %v2826 = vsel %vm1959, %v2794, 0.0
    %v2827 = vsel %vm1959, %v2795, 0.0
    %v2828 = vadd.f32 %v2826, %v2827
    %v2829 = vrot.slane %v2828, 4
    %v2830 = vadd.f32 %v2828, %v2829
    %v2831 = vrot.slane %v2830, 2
    %v2832 = vadd.f32 %v2830, %v2831
    %v2833 = vrot.slane %v2832, 1
    %v2834 = vadd.f32 %v2832, %v2833
    %v2835 = vsel %vm1959, %v2796, 0.0
    %v2836 = vsel %vm1959, %v2797, 0.0
    %v2837 = vadd.f32 %v2835, %v2836
    %v2838 = vrot.slane %v2837, 4
    %v2839 = vadd.f32 %v2837, %v2838
    %v2840 = vrot.slane %v2839, 2
    %v2841 = vadd.f32 %v2839, %v2840
    %v2842 = vrot.slane %v2841, 1
    %v2843 = vadd.f32 %v2841, %v2842
    %v2844 = vsel %vm1959, %v2798, 0.0
    %v2845 = vsel %vm1959, %v2799, 0.0
    %v2846 = vadd.f32 %v2844, %v2845
    %v2847 = vrot.slane %v2846, 4
    %v2848 = vadd.f32 %v2846, %v2847
    %v2849 = vrot.slane %v2848, 2
    %v2850 = vadd.f32 %v2848, %v2849
    %v2851 = vrot.slane %v2850, 1
    %v2852 = vadd.f32 %v2850, %v2851
    %v2853 = vsel %vm1959, %v2800, 0.0
    %v2854 = vsel %vm1959, %v2801, 0.0
    %v2855 = vadd.f32 %v2853, %v2854
    %v2856 = vrot.slane %v2855, 4
    %v2857 = vadd.f32 %v2855, %v2856
    %v2858 = vrot.slane %v2857, 2
    %v2859 = vadd.f32 %v2857, %v2858
    %v2860 = vrot.slane %v2859, 1
    %v2861 = vadd.f32 %v2859, %v2860
    %v2862 = vsel %vm1959, %v2802, 0.0
    %v2863 = vsel %vm1959, %v2803, 0.0
    %v2864 = vadd.f32 %v2862, %v2863
    %v2865 = vrot.slane %v2864, 4
    %v2866 = vadd.f32 %v2864, %v2865
    %v2867 = vrot.slane %v2866, 2
    %v2868 = vadd.f32 %v2866, %v2867
    %v2869 = vrot.slane %v2868, 1
    %v2870 = vadd.f32 %v2868, %v2869
    %v2871 = vsel %vm1959, %v2804, 0.0
    %v2872 = vsel %vm1959, %v2805, 0.0
    %v2873 = vadd.f32 %v2871, %v2872
    %v2874 = vrot.slane %v2873, 4
    %v2875 = vadd.f32 %v2873, %v2874
    %v2876 = vrot.slane %v2875, 2
    %v2877 = vadd.f32 %v2875, %v2876
    %v2878 = vrot.slane %v2877, 1
    %v2879 = vadd.f32 %v2877, %v2878
    %v2880 = vsel %vm1959, %v2806, 0.0
    %v2881 = vsel %vm1959, %v2807, 0.0
    %v2882 = vadd.f32 %v2880, %v2881
    %v2883 = vrot.slane %v2882, 4
    %v2884 = vadd.f32 %v2882, %v2883
    %v2885 = vrot.slane %v2884, 2
    %v2886 = vadd.f32 %v2884, %v2885
    %v2887 = vrot.slane %v2886, 1
    %v2888 = vadd.f32 %v2886, %v2887
    %v2889 = vsel %vm1959, %v2808, 0.0
    %v2890 = vsel %vm1959, %v2809, 0.0
    %v2891 = vadd.f32 %v2889, %v2890
    %v2892 = vrot.slane %v2891, 4
    %v2893 = vadd.f32 %v2891, %v2892
    %v2894 = vrot.slane %v2893, 2
    %v2895 = vadd.f32 %v2893, %v2894
    %v2896 = vrot.slane %v2895, 1
    %v2897 = vadd.f32 %v2895, %v2896
    %v2898 = vsel %vm1959, %v2810, 0.0
    %v2899 = vsel %vm1959, %v2811, 0.0
    %v2900 = vadd.f32 %v2898, %v2899
    %v2901 = vrot.slane %v2900, 4
    %v2902 = vadd.f32 %v2900, %v2901
    %v2903 = vrot.slane %v2902, 2
    %v2904 = vadd.f32 %v2902, %v2903
    %v2905 = vrot.slane %v2904, 1
    %v2906 = vadd.f32 %v2904, %v2905
    %v2907 = vsel %vm1959, %v2812, 0.0
    %v2908 = vsel %vm1959, %v2813, 0.0
    %v2909 = vadd.f32 %v2907, %v2908
    %v2910 = vrot.slane %v2909, 4
    %v2911 = vadd.f32 %v2909, %v2910
    %v2912 = vrot.slane %v2911, 2
    %v2913 = vadd.f32 %v2911, %v2912
    %v2914 = vrot.slane %v2913, 1
    %v2915 = vadd.f32 %v2913, %v2914
    %v2916 = vsel %vm1959, %v2814, 0.0
    %v2917 = vsel %vm1959, %v2815, 0.0
    %v2918 = vadd.f32 %v2916, %v2917
    %v2919 = vrot.slane %v2918, 4
    %v2920 = vadd.f32 %v2918, %v2919
    %v2921 = vrot.slane %v2920, 2
    %v2922 = vadd.f32 %v2920, %v2921
    %v2923 = vrot.slane %v2922, 1
    %v2924 = vadd.f32 %v2922, %v2923
    %v2925 = vsel %vm1959, %v2816, 0.0
    %v2926 = vsel %vm1959, %v2817, 0.0
    %v2927 = vadd.f32 %v2925, %v2926
    %v2928 = vrot.slane %v2927, 4
    %v2929 = vadd.f32 %v2927, %v2928
    %v2930 = vrot.slane %v2929, 2
    %v2931 = vadd.f32 %v2929, %v2930
    %v2932 = vrot.slane %v2931, 1
    %v2933 = vadd.f32 %v2931, %v2932
    %v2934 = vsel %vm1959, %v2818, 0.0
    %v2935 = vsel %vm1959, %v2819, 0.0
    %v2936 = vadd.f32 %v2934, %v2935
    %v2937 = vrot.slane %v2936, 4
    %v2938 = vadd.f32 %v2936, %v2937
    %v2939 = vrot.slane %v2938, 2
    %v2940 = vadd.f32 %v2938, %v2939
    %v2941 = vrot.slane %v2940, 1
    %v2942 = vadd.f32 %v2940, %v2941
    %v2943 = vsel %vm1959, %v2820, 0.0
    %v2944 = vsel %vm1959, %v2821, 0.0
    %v2945 = vadd.f32 %v2943, %v2944
    %v2946 = vrot.slane %v2945, 4
    %v2947 = vadd.f32 %v2945, %v2946
    %v2948 = vrot.slane %v2947, 2
    %v2949 = vadd.f32 %v2947, %v2948
    %v2950 = vrot.slane %v2949, 1
    %v2951 = vadd.f32 %v2949, %v2950
    %v2952 = vsel %vm1959, %v2822, 0.0
    %v2953 = vsel %vm1959, %v2823, 0.0
    %v2954 = vadd.f32 %v2952, %v2953
    %v2955 = vrot.slane %v2954, 4
    %v2956 = vadd.f32 %v2954, %v2955
    %v2957 = vrot.slane %v2956, 2
    %v2958 = vadd.f32 %v2956, %v2957
    %v2959 = vrot.slane %v2958, 1
    %v2960 = vadd.f32 %v2958, %v2959
    %v2961 = vsel %vm1959, %v2824, 0.0
    %v2962 = vsel %vm1959, %v2825, 0.0
    %v2963 = vadd.f32 %v2961, %v2962
    %v2964 = vrot.slane %v2963, 4
    %v2965 = vadd.f32 %v2963, %v2964
    %v2966 = vrot.slane %v2965, 2
    %v2967 = vadd.f32 %v2965, %v2966
    %v2968 = vrot.slane %v2967, 1
    %v2969 = vadd.f32 %v2967, %v2968
    %v2970 = vadd.f32 %v2480, %v2834
    %v2971 = vadd.f32 %v2489, %v2843
    %v2972 = vadd.f32 %v2498, %v2852
    %v2973 = vadd.f32 %v2507, %v2861
    %v2974 = vadd.f32 %v2516, %v2870
    %v2975 = vadd.f32 %v2525, %v2879
    %v2976 = vadd.f32 %v2534, %v2888
    %v2977 = vadd.f32 %v2543, %v2897
    %v2978 = vadd.f32 %v2552, %v2906
    %v2979 = vadd.f32 %v2561, %v2915
    %v2980 = vadd.f32 %v2570, %v2924
    %v2981 = vadd.f32 %v2579, %v2933
    %v2982 = vadd.f32 %v2588, %v2942
    %v2983 = vadd.f32 %v2597, %v2951
    %v2984 = vadd.f32 %v2606, %v2960
    %v2985 = vadd.f32 %v2615, %v2969
    %s2986 = sld [smem:[#allocation8]]
    %v2987 = vstv %s2986
    %v2988 = vadd.f32 %v2970, %v2987
    %v2989 = vadd.f32 %v2971, %v2987
    %v2990 = vadd.f32 %v2972, %v2987
    %v2991 = vadd.f32 %v2973, %v2987
    %v2992 = vadd.f32 %v2974, %v2987
    %v2993 = vadd.f32 %v2975, %v2987
    %v2994 = vadd.f32 %v2976, %v2987
    %v2995 = vadd.f32 %v2977, %v2987
    %v2996 = vadd.f32 %v2978, %v2987
    %v2997 = vadd.f32 %v2979, %v2987
    %v2998 = vadd.f32 %v2980, %v2987
    %v2999 = vadd.f32 %v2981, %v2987
    %v3000 = vadd.f32 %v2982, %v2987
    %v3001 = vadd.f32 %v2983, %v2987
    %v3002 = vadd.f32 %v2984, %v2987
    %v3003 = vadd.f32 %v2985, %v2987
    %vm3020 = vcmask 1041409
    %v3021 = vsel %vm3020, %v2989, %v2988
    %vm3022 = vcmask 1042434
    %v3023 = vsel %vm3022, %v2990, %v3021
    %vm3024 = vcmask 1043459
    %v3025 = vsel %vm3024, %v2991, %v3023
    %vm3026 = vcmask 1044484
    %v3027 = vsel %vm3026, %v2992, %v3025
    %vm3028 = vcmask 1045509
    %v3029 = vsel %vm3028, %v2993, %v3027
    %vm3030 = vcmask 1046534
    %v3031 = vsel %vm3030, %v2994, %v3029
    %vm3032 = vcmask 1047559
    %v3033 = vsel %vm3032, %v2995, %v3031
    %v3034 = vsel %vm3020, %v2997, %v2996
    %v3035 = vsel %vm3022, %v2998, %v3034
    %v3036 = vsel %vm3024, %v2999, %v3035
    %v3037 = vsel %vm3026, %v3000, %v3036
    %v3038 = vsel %vm3028, %v3001, %v3037
    %v3039 = vsel %vm3030, %v3002, %v3038
    %v3040 = vsel %vm3032, %v3003, %v3039
    %3043 = vst.msk [vmem:[#allocation16] sm:$0xff] %vm1959, %v3033
    %3044 = vst.msk [vmem:[#allocation16 + $0x8] sm:$0xff] %vm1959, %v3040
    %v3045 = vmul.f32 %v2408, %v431
    %v3046 = vmul.f32 %v2409, %v432
    %v3047 = vmul.f32 %v2410, %v431
    %v3048 = vmul.f32 %v2411, %v432
    %v3049 = vmul.f32 %v2412, %v431
    %v3050 = vmul.f32 %v2413, %v432
    %v3051 = vmul.f32 %v2414, %v431
    %v3052 = vmul.f32 %v2415, %v432
    %v3053 = vmul.f32 %v2416, %v431
    %v3054 = vmul.f32 %v2417, %v432
    %v3055 = vmul.f32 %v2418, %v431
    %v3056 = vmul.f32 %v2419, %v432
    %v3057 = vmul.f32 %v2420, %v431
    %v3058 = vmul.f32 %v2421, %v432
    %v3059 = vmul.f32 %v2422, %v431
    %v3060 = vmul.f32 %v2423, %v432
    %v3061 = vmul.f32 %v2424, %v431
    %v3062 = vmul.f32 %v2425, %v432
    %v3063 = vmul.f32 %v2426, %v431
    %v3064 = vmul.f32 %v2427, %v432
    %v3065 = vmul.f32 %v2428, %v431
    %v3066 = vmul.f32 %v2429, %v432
    %v3067 = vmul.f32 %v2430, %v431
    %v3068 = vmul.f32 %v2431, %v432
    %v3069 = vmul.f32 %v2432, %v431
    %v3070 = vmul.f32 %v2433, %v432
    %v3071 = vmul.f32 %v2434, %v431
    %v3072 = vmul.f32 %v2435, %v432
    %v3073 = vmul.f32 %v2436, %v431
    %v3074 = vmul.f32 %v2437, %v432
    %v3075 = vmul.f32 %v2438, %v431
    %v3076 = vmul.f32 %v2439, %v432
    %v3077 = vsel %vm1959, %v3045, 0.0
    %v3078 = vsel %vm1959, %v3046, 0.0
    %v3079 = vadd.f32 %v3077, %v3078
    %v3080 = vrot.slane %v3079, 4
    %v3081 = vadd.f32 %v3079, %v3080
    %v3082 = vrot.slane %v3081, 2
    %v3083 = vadd.f32 %v3081, %v3082
    %v3084 = vrot.slane %v3083, 1
    %v3085 = vadd.f32 %v3083, %v3084
    %v3086 = vsel %vm1959, %v3047, 0.0
    %v3087 = vsel %vm1959, %v3048, 0.0
    %v3088 = vadd.f32 %v3086, %v3087
    %v3089 = vrot.slane %v3088, 4
    %v3090 = vadd.f32 %v3088, %v3089
    %v3091 = vrot.slane %v3090, 2
    %v3092 = vadd.f32 %v3090, %v3091
    %v3093 = vrot.slane %v3092, 1
    %v3094 = vadd.f32 %v3092, %v3093
    %v3095 = vsel %vm1959, %v3049, 0.0
    %v3096 = vsel %vm1959, %v3050, 0.0
    %v3097 = vadd.f32 %v3095, %v3096
    %v3098 = vrot.slane %v3097, 4
    %v3099 = vadd.f32 %v3097, %v3098
    %v3100 = vrot.slane %v3099, 2
    %v3101 = vadd.f32 %v3099, %v3100
    %v3102 = vrot.slane %v3101, 1
    %v3103 = vadd.f32 %v3101, %v3102
    %v3104 = vsel %vm1959, %v3051, 0.0
    %v3105 = vsel %vm1959, %v3052, 0.0
    %v3106 = vadd.f32 %v3104, %v3105
    %v3107 = vrot.slane %v3106, 4
    %v3108 = vadd.f32 %v3106, %v3107
    %v3109 = vrot.slane %v3108, 2
    %v3110 = vadd.f32 %v3108, %v3109
    %v3111 = vrot.slane %v3110, 1
    %v3112 = vadd.f32 %v3110, %v3111
    %v3113 = vsel %vm1959, %v3053, 0.0
    %v3114 = vsel %vm1959, %v3054, 0.0
    %v3115 = vadd.f32 %v3113, %v3114
    %v3116 = vrot.slane %v3115, 4
    %v3117 = vadd.f32 %v3115, %v3116
    %v3118 = vrot.slane %v3117, 2
    %v3119 = vadd.f32 %v3117, %v3118
    %v3120 = vrot.slane %v3119, 1
    %v3121 = vadd.f32 %v3119, %v3120
    %v3122 = vsel %vm1959, %v3055, 0.0
    %v3123 = vsel %vm1959, %v3056, 0.0
    %v3124 = vadd.f32 %v3122, %v3123
    %v3125 = vrot.slane %v3124, 4
    %v3126 = vadd.f32 %v3124, %v3125
    %v3127 = vrot.slane %v3126, 2
    %v3128 = vadd.f32 %v3126, %v3127
    %v3129 = vrot.slane %v3128, 1
    %v3130 = vadd.f32 %v3128, %v3129
    %v3131 = vsel %vm1959, %v3057, 0.0
    %v3132 = vsel %vm1959, %v3058, 0.0
    %v3133 = vadd.f32 %v3131, %v3132
    %v3134 = vrot.slane %v3133, 4
    %v3135 = vadd.f32 %v3133, %v3134
    %v3136 = vrot.slane %v3135, 2
    %v3137 = vadd.f32 %v3135, %v3136
    %v3138 = vrot.slane %v3137, 1
    %v3139 = vadd.f32 %v3137, %v3138
    %v3140 = vsel %vm1959, %v3059, 0.0
    %v3141 = vsel %vm1959, %v3060, 0.0
    %v3142 = vadd.f32 %v3140, %v3141
    %v3143 = vrot.slane %v3142, 4
    %v3144 = vadd.f32 %v3142, %v3143
    %v3145 = vrot.slane %v3144, 2
    %v3146 = vadd.f32 %v3144, %v3145
    %v3147 = vrot.slane %v3146, 1
    %v3148 = vadd.f32 %v3146, %v3147
    %v3149 = vsel %vm1959, %v3061, 0.0
    %v3150 = vsel %vm1959, %v3062, 0.0
    %v3151 = vadd.f32 %v3149, %v3150
    %v3152 = vrot.slane %v3151, 4
    %v3153 = vadd.f32 %v3151, %v3152
    %v3154 = vrot.slane %v3153, 2
    %v3155 = vadd.f32 %v3153, %v3154
    %v3156 = vrot.slane %v3155, 1
    %v3157 = vadd.f32 %v3155, %v3156
    %v3158 = vsel %vm1959, %v3063, 0.0
    %v3159 = vsel %vm1959, %v3064, 0.0
    %v3160 = vadd.f32 %v3158, %v3159
    %v3161 = vrot.slane %v3160, 4
    %v3162 = vadd.f32 %v3160, %v3161
    %v3163 = vrot.slane %v3162, 2
    %v3164 = vadd.f32 %v3162, %v3163
    %v3165 = vrot.slane %v3164, 1
    %v3166 = vadd.f32 %v3164, %v3165
    %v3167 = vsel %vm1959, %v3065, 0.0
    %v3168 = vsel %vm1959, %v3066, 0.0
    %v3169 = vadd.f32 %v3167, %v3168
    %v3170 = vrot.slane %v3169, 4
    %v3171 = vadd.f32 %v3169, %v3170
    %v3172 = vrot.slane %v3171, 2
    %v3173 = vadd.f32 %v3171, %v3172
    %v3174 = vrot.slane %v3173, 1
    %v3175 = vadd.f32 %v3173, %v3174
    %v3176 = vsel %vm1959, %v3067, 0.0
    %v3177 = vsel %vm1959, %v3068, 0.0
    %v3178 = vadd.f32 %v3176, %v3177
    %v3179 = vrot.slane %v3178, 4
    %v3180 = vadd.f32 %v3178, %v3179
    %v3181 = vrot.slane %v3180, 2
    %v3182 = vadd.f32 %v3180, %v3181
    %v3183 = vrot.slane %v3182, 1
    %v3184 = vadd.f32 %v3182, %v3183
    %v3185 = vsel %vm1959, %v3069, 0.0
    %v3186 = vsel %vm1959, %v3070, 0.0
    %v3187 = vadd.f32 %v3185, %v3186
    %v3188 = vrot.slane %v3187, 4
    %v3189 = vadd.f32 %v3187, %v3188
    %v3190 = vrot.slane %v3189, 2
    %v3191 = vadd.f32 %v3189, %v3190
    %v3192 = vrot.slane %v3191, 1
    %v3193 = vadd.f32 %v3191, %v3192
    %v3194 = vsel %vm1959, %v3071, 0.0
    %v3195 = vsel %vm1959, %v3072, 0.0
    %v3196 = vadd.f32 %v3194, %v3195
    %v3197 = vrot.slane %v3196, 4
    %v3198 = vadd.f32 %v3196, %v3197
    %v3199 = vrot.slane %v3198, 2
    %v3200 = vadd.f32 %v3198, %v3199
    %v3201 = vrot.slane %v3200, 1
    %v3202 = vadd.f32 %v3200, %v3201
    %v3203 = vsel %vm1959, %v3073, 0.0
    %v3204 = vsel %vm1959, %v3074, 0.0
    %v3205 = vadd.f32 %v3203, %v3204
    %v3206 = vrot.slane %v3205, 4
    %v3207 = vadd.f32 %v3205, %v3206
    %v3208 = vrot.slane %v3207, 2
    %v3209 = vadd.f32 %v3207, %v3208
    %v3210 = vrot.slane %v3209, 1
    %v3211 = vadd.f32 %v3209, %v3210
    %v3212 = vsel %vm1959, %v3075, 0.0
    %v3213 = vsel %vm1959, %v3076, 0.0
    %v3214 = vadd.f32 %v3212, %v3213
    %v3215 = vrot.slane %v3214, 4
    %v3216 = vadd.f32 %v3214, %v3215
    %v3217 = vrot.slane %v3216, 2
    %v3218 = vadd.f32 %v3216, %v3217
    %v3219 = vrot.slane %v3218, 1
    %v3220 = vadd.f32 %v3218, %v3219
    %s3221 = scalar_lea.vmem [#allocation14], 16
    %v3222 = vld [vmem:[%s3221] sm:$0xff]
    %v3223 = vld [vmem:[%s3221 + $0x8] sm:$0xff]
    %v3224 = vlaneseq
    %v3225 = vshrl.u32 %v3224, 7
    %v3226 = vsub.s32 0, %v3225
    %v3227 = vrot.slane %v3222, %v3226
    %3229 = vbcast.lane.b32.xlu0 %v3227, 256
    %v3230 = vpop.permute.xlu0 %3229
    %s3232 = sor.u32 256, 8
    %3233 = vbcast.lane.b32.xlu0 %v3227, %s3232
    %v3234 = vpop.permute.xlu0 %3233
    %v3235 = vlaneseq
    %v3236 = vshrl.u32 %v3235, 7
    %v3237 = vsub.s32 1, %v3236
    %v3238 = vrot.slane %v3222, %v3237
    %3240 = vbcast.lane.b32.xlu0 %v3238, 256
    %v3241 = vpop.permute.xlu0 %3240
    %s3243 = sor.u32 256, 8
    %3244 = vbcast.lane.b32.xlu0 %v3238, %s3243
    %v3245 = vpop.permute.xlu0 %3244
    %v3246 = vlaneseq
    %v3247 = vshrl.u32 %v3246, 7
    %v3248 = vsub.s32 2, %v3247
    %v3249 = vrot.slane %v3222, %v3248
    %3251 = vbcast.lane.b32.xlu0 %v3249, 256
    %v3252 = vpop.permute.xlu0 %3251
    %s3254 = sor.u32 256, 8
    %3255 = vbcast.lane.b32.xlu0 %v3249, %s3254
    %v3256 = vpop.permute.xlu0 %3255
    %v3257 = vlaneseq
    %v3258 = vshrl.u32 %v3257, 7
    %v3259 = vsub.s32 3, %v3258
    %v3260 = vrot.slane %v3222, %v3259
    %3262 = vbcast.lane.b32.xlu0 %v3260, 256
    %v3263 = vpop.permute.xlu0 %3262
    %s3265 = sor.u32 256, 8
    %3266 = vbcast.lane.b32.xlu0 %v3260, %s3265
    %v3267 = vpop.permute.xlu0 %3266
    %v3268 = vlaneseq
    %v3269 = vshrl.u32 %v3268, 7
    %v3270 = vsub.s32 4, %v3269
    %v3271 = vrot.slane %v3222, %v3270
    %3273 = vbcast.lane.b32.xlu0 %v3271, 256
    %v3274 = vpop.permute.xlu0 %3273
    %s3276 = sor.u32 256, 8
    %3277 = vbcast.lane.b32.xlu0 %v3271, %s3276
    %v3278 = vpop.permute.xlu0 %3277
    %v3279 = vlaneseq
    %v3280 = vshrl.u32 %v3279, 7
    %v3281 = vsub.s32 5, %v3280
    %v3282 = vrot.slane %v3222, %v3281
    %3284 = vbcast.lane.b32.xlu0 %v3282, 256
    %v3285 = vpop.permute.xlu0 %3284
    %s3287 = sor.u32 256, 8
    %3288 = vbcast.lane.b32.xlu0 %v3282, %s3287
    %v3289 = vpop.permute.xlu0 %3288
    %v3290 = vlaneseq
    %v3291 = vshrl.u32 %v3290, 7
    %v3292 = vsub.s32 6, %v3291
    %v3293 = vrot.slane %v3222, %v3292
    %3295 = vbcast.lane.b32.xlu0 %v3293, 256
    %v3296 = vpop.permute.xlu0 %3295
    %s3298 = sor.u32 256, 8
    %3299 = vbcast.lane.b32.xlu0 %v3293, %s3298
    %v3300 = vpop.permute.xlu0 %3299
    %v3301 = vlaneseq
    %v3302 = vshrl.u32 %v3301, 7
    %v3303 = vsub.s32 7, %v3302
    %v3304 = vrot.slane %v3222, %v3303
    %3306 = vbcast.lane.b32.xlu0 %v3304, 256
    %v3307 = vpop.permute.xlu0 %3306
    %s3309 = sor.u32 256, 8
    %3310 = vbcast.lane.b32.xlu0 %v3304, %s3309
    %v3311 = vpop.permute.xlu0 %3310
    %v3312 = vlaneseq
    %v3313 = vshrl.u32 %v3312, 7
    %v3314 = vsub.s32 0, %v3313
    %v3315 = vrot.slane %v3223, %v3314
    %3317 = vbcast.lane.b32.xlu0 %v3315, 256
    %v3318 = vpop.permute.xlu0 %3317
    %s3320 = sor.u32 256, 8
    %3321 = vbcast.lane.b32.xlu0 %v3315, %s3320
    %v3322 = vpop.permute.xlu0 %3321
    %v3323 = vlaneseq
    %v3324 = vshrl.u32 %v3323, 7
    %v3325 = vsub.s32 1, %v3324
    %v3326 = vrot.slane %v3223, %v3325
    %3328 = vbcast.lane.b32.xlu0 %v3326, 256
    %v3329 = vpop.permute.xlu0 %3328
    %s3331 = sor.u32 256, 8
    %3332 = vbcast.lane.b32.xlu0 %v3326, %s3331
    %v3333 = vpop.permute.xlu0 %3332
    %v3334 = vlaneseq
    %v3335 = vshrl.u32 %v3334, 7
    %v3336 = vsub.s32 2, %v3335
    %v3337 = vrot.slane %v3223, %v3336
    %3339 = vbcast.lane.b32.xlu0 %v3337, 256
    %v3340 = vpop.permute.xlu0 %3339
    %s3342 = sor.u32 256, 8
    %3343 = vbcast.lane.b32.xlu0 %v3337, %s3342
    %v3344 = vpop.permute.xlu0 %3343
    %v3345 = vlaneseq
    %v3346 = vshrl.u32 %v3345, 7
    %v3347 = vsub.s32 3, %v3346
    %v3348 = vrot.slane %v3223, %v3347
    %3350 = vbcast.lane.b32.xlu0 %v3348, 256
    %v3351 = vpop.permute.xlu0 %3350
    %s3353 = sor.u32 256, 8
    %3354 = vbcast.lane.b32.xlu0 %v3348, %s3353
    %v3355 = vpop.permute.xlu0 %3354
    %v3356 = vlaneseq
    %v3357 = vshrl.u32 %v3356, 7
    %v3358 = vsub.s32 4, %v3357
    %v3359 = vrot.slane %v3223, %v3358
    %3361 = vbcast.lane.b32.xlu0 %v3359, 256
    %v3362 = vpop.permute.xlu0 %3361
    %s3364 = sor.u32 256, 8
    %3365 = vbcast.lane.b32.xlu0 %v3359, %s3364
    %v3366 = vpop.permute.xlu0 %3365
    %v3367 = vlaneseq
    %v3368 = vshrl.u32 %v3367, 7
    %v3369 = vsub.s32 5, %v3368
    %v3370 = vrot.slane %v3223, %v3369
    %3372 = vbcast.lane.b32.xlu0 %v3370, 256
    %v3373 = vpop.permute.xlu0 %3372
    %s3375 = sor.u32 256, 8
    %3376 = vbcast.lane.b32.xlu0 %v3370, %s3375
    %v3377 = vpop.permute.xlu0 %3376
    %v3378 = vlaneseq
    %v3379 = vshrl.u32 %v3378, 7
    %v3380 = vsub.s32 6, %v3379
    %v3381 = vrot.slane %v3223, %v3380
    %3383 = vbcast.lane.b32.xlu0 %v3381, 256
    %v3384 = vpop.permute.xlu0 %3383
    %s3386 = sor.u32 256, 8
    %3387 = vbcast.lane.b32.xlu0 %v3381, %s3386
    %v3388 = vpop.permute.xlu0 %3387
    %v3389 = vlaneseq
    %v3390 = vshrl.u32 %v3389, 7
    %v3391 = vsub.s32 7, %v3390
    %v3392 = vrot.slane %v3223, %v3391
    %3394 = vbcast.lane.b32.xlu0 %v3392, 256
    %v3395 = vpop.permute.xlu0 %3394
    %s3397 = sor.u32 256, 8
    %3398 = vbcast.lane.b32.xlu0 %v3392, %s3397
    %v3399 = vpop.permute.xlu0 %3398
    %v3400 = vmul.f32 %v2408, %v3230
    %v3401 = vmul.f32 %v2409, %v3234
    %v3402 = vmul.f32 %v2410, %v3241
    %v3403 = vmul.f32 %v2411, %v3245
    %v3404 = vmul.f32 %v2412, %v3252
    %v3405 = vmul.f32 %v2413, %v3256
    %v3406 = vmul.f32 %v2414, %v3263
    %v3407 = vmul.f32 %v2415, %v3267
    %v3408 = vmul.f32 %v2416, %v3274
    %v3409 = vmul.f32 %v2417, %v3278
    %v3410 = vmul.f32 %v2418, %v3285
    %v3411 = vmul.f32 %v2419, %v3289
    %v3412 = vmul.f32 %v2420, %v3296
    %v3413 = vmul.f32 %v2421, %v3300
    %v3414 = vmul.f32 %v2422, %v3307
    %v3415 = vmul.f32 %v2423, %v3311
    %v3416 = vmul.f32 %v2424, %v3318
    %v3417 = vmul.f32 %v2425, %v3322
    %v3418 = vmul.f32 %v2426, %v3329
    %v3419 = vmul.f32 %v2427, %v3333
    %v3420 = vmul.f32 %v2428, %v3340
    %v3421 = vmul.f32 %v2429, %v3344
    %v3422 = vmul.f32 %v2430, %v3351
    %v3423 = vmul.f32 %v2431, %v3355
    %v3424 = vmul.f32 %v2432, %v3362
    %v3425 = vmul.f32 %v2433, %v3366
    %v3426 = vmul.f32 %v2434, %v3373
    %v3427 = vmul.f32 %v2435, %v3377
    %v3428 = vmul.f32 %v2436, %v3384
    %v3429 = vmul.f32 %v2437, %v3388
    %v3430 = vmul.f32 %v2438, %v3395
    %v3431 = vmul.f32 %v2439, %v3399
    %v3432 = vsel %vm1959, %v3400, 0.0
    %v3433 = vsel %vm1959, %v3401, 0.0
    %v3434 = vadd.f32 %v3432, %v3433
    %v3435 = vrot.slane %v3434, 4
    %v3436 = vadd.f32 %v3434, %v3435
    %v3437 = vrot.slane %v3436, 2
    %v3438 = vadd.f32 %v3436, %v3437
    %v3439 = vrot.slane %v3438, 1
    %v3440 = vadd.f32 %v3438, %v3439
    %v3441 = vsel %vm1959, %v3402, 0.0
    %v3442 = vsel %vm1959, %v3403, 0.0
    %v3443 = vadd.f32 %v3441, %v3442
    %v3444 = vrot.slane %v3443, 4
    %v3445 = vadd.f32 %v3443, %v3444
    %v3446 = vrot.slane %v3445, 2
    %v3447 = vadd.f32 %v3445, %v3446
    %v3448 = vrot.slane %v3447, 1
    %v3449 = vadd.f32 %v3447, %v3448
    %v3450 = vsel %vm1959, %v3404, 0.0
    %v3451 = vsel %vm1959, %v3405, 0.0
    %v3452 = vadd.f32 %v3450, %v3451
    %v3453 = vrot.slane %v3452, 4
    %v3454 = vadd.f32 %v3452, %v3453
    %v3455 = vrot.slane %v3454, 2
    %v3456 = vadd.f32 %v3454, %v3455
    %v3457 = vrot.slane %v3456, 1
    %v3458 = vadd.f32 %v3456, %v3457
    %v3459 = vsel %vm1959, %v3406, 0.0
    %v3460 = vsel %vm1959, %v3407, 0.0
    %v3461 = vadd.f32 %v3459, %v3460
    %v3462 = vrot.slane %v3461, 4
    %v3463 = vadd.f32 %v3461, %v3462
    %v3464 = vrot.slane %v3463, 2
    %v3465 = vadd.f32 %v3463, %v3464
    %v3466 = vrot.slane %v3465, 1
    %v3467 = vadd.f32 %v3465, %v3466
    %v3468 = vsel %vm1959, %v3408, 0.0
    %v3469 = vsel %vm1959, %v3409, 0.0
    %v3470 = vadd.f32 %v3468, %v3469
    %v3471 = vrot.slane %v3470, 4
    %v3472 = vadd.f32 %v3470, %v3471
    %v3473 = vrot.slane %v3472, 2
    %v3474 = vadd.f32 %v3472, %v3473
    %v3475 = vrot.slane %v3474, 1
    %v3476 = vadd.f32 %v3474, %v3475
    %v3477 = vsel %vm1959, %v3410, 0.0
    %v3478 = vsel %vm1959, %v3411, 0.0
    %v3479 = vadd.f32 %v3477, %v3478
    %v3480 = vrot.slane %v3479, 4
    %v3481 = vadd.f32 %v3479, %v3480
    %v3482 = vrot.slane %v3481, 2
    %v3483 = vadd.f32 %v3481, %v3482
    %v3484 = vrot.slane %v3483, 1
    %v3485 = vadd.f32 %v3483, %v3484
    %v3486 = vsel %vm1959, %v3412, 0.0
    %v3487 = vsel %vm1959, %v3413, 0.0
    %v3488 = vadd.f32 %v3486, %v3487
    %v3489 = vrot.slane %v3488, 4
    %v3490 = vadd.f32 %v3488, %v3489
    %v3491 = vrot.slane %v3490, 2
    %v3492 = vadd.f32 %v3490, %v3491
    %v3493 = vrot.slane %v3492, 1
    %v3494 = vadd.f32 %v3492, %v3493
    %v3495 = vsel %vm1959, %v3414, 0.0
    %v3496 = vsel %vm1959, %v3415, 0.0
    %v3497 = vadd.f32 %v3495, %v3496
    %v3498 = vrot.slane %v3497, 4
    %v3499 = vadd.f32 %v3497, %v3498
    %v3500 = vrot.slane %v3499, 2
    %v3501 = vadd.f32 %v3499, %v3500
    %v3502 = vrot.slane %v3501, 1
    %v3503 = vadd.f32 %v3501, %v3502
    %v3504 = vsel %vm1959, %v3416, 0.0
    %v3505 = vsel %vm1959, %v3417, 0.0
    %v3506 = vadd.f32 %v3504, %v3505
    %v3507 = vrot.slane %v3506, 4
    %v3508 = vadd.f32 %v3506, %v3507
    %v3509 = vrot.slane %v3508, 2
    %v3510 = vadd.f32 %v3508, %v3509
    %v3511 = vrot.slane %v3510, 1
    %v3512 = vadd.f32 %v3510, %v3511
    %v3513 = vsel %vm1959, %v3418, 0.0
    %v3514 = vsel %vm1959, %v3419, 0.0
    %v3515 = vadd.f32 %v3513, %v3514
    %v3516 = vrot.slane %v3515, 4
    %v3517 = vadd.f32 %v3515, %v3516
    %v3518 = vrot.slane %v3517, 2
    %v3519 = vadd.f32 %v3517, %v3518
    %v3520 = vrot.slane %v3519, 1
    %v3521 = vadd.f32 %v3519, %v3520
    %v3522 = vsel %vm1959, %v3420, 0.0
    %v3523 = vsel %vm1959, %v3421, 0.0
    %v3524 = vadd.f32 %v3522, %v3523
    %v3525 = vrot.slane %v3524, 4
    %v3526 = vadd.f32 %v3524, %v3525
    %v3527 = vrot.slane %v3526, 2
    %v3528 = vadd.f32 %v3526, %v3527
    %v3529 = vrot.slane %v3528, 1
    %v3530 = vadd.f32 %v3528, %v3529
    %v3531 = vsel %vm1959, %v3422, 0.0
    %v3532 = vsel %vm1959, %v3423, 0.0
    %v3533 = vadd.f32 %v3531, %v3532
    %v3534 = vrot.slane %v3533, 4
    %v3535 = vadd.f32 %v3533, %v3534
    %v3536 = vrot.slane %v3535, 2
    %v3537 = vadd.f32 %v3535, %v3536
    %v3538 = vrot.slane %v3537, 1
    %v3539 = vadd.f32 %v3537, %v3538
    %v3540 = vsel %vm1959, %v3424, 0.0
    %v3541 = vsel %vm1959, %v3425, 0.0
    %v3542 = vadd.f32 %v3540, %v3541
    %v3543 = vrot.slane %v3542, 4
    %v3544 = vadd.f32 %v3542, %v3543
    %v3545 = vrot.slane %v3544, 2
    %v3546 = vadd.f32 %v3544, %v3545
    %v3547 = vrot.slane %v3546, 1
    %v3548 = vadd.f32 %v3546, %v3547
    %v3549 = vsel %vm1959, %v3426, 0.0
    %v3550 = vsel %vm1959, %v3427, 0.0
    %v3551 = vadd.f32 %v3549, %v3550
    %v3552 = vrot.slane %v3551, 4
    %v3553 = vadd.f32 %v3551, %v3552
    %v3554 = vrot.slane %v3553, 2
    %v3555 = vadd.f32 %v3553, %v3554
    %v3556 = vrot.slane %v3555, 1
    %v3557 = vadd.f32 %v3555, %v3556
    %v3558 = vsel %vm1959, %v3428, 0.0
    %v3559 = vsel %vm1959, %v3429, 0.0
    %v3560 = vadd.f32 %v3558, %v3559
    %v3561 = vrot.slane %v3560, 4
    %v3562 = vadd.f32 %v3560, %v3561
    %v3563 = vrot.slane %v3562, 2
    %v3564 = vadd.f32 %v3562, %v3563
    %v3565 = vrot.slane %v3564, 1
    %v3566 = vadd.f32 %v3564, %v3565
    %v3567 = vsel %vm1959, %v3430, 0.0
    %v3568 = vsel %vm1959, %v3431, 0.0
    %v3569 = vadd.f32 %v3567, %v3568
    %v3570 = vrot.slane %v3569, 4
    %v3571 = vadd.f32 %v3569, %v3570
    %v3572 = vrot.slane %v3571, 2
    %v3573 = vadd.f32 %v3571, %v3572
    %v3574 = vrot.slane %v3573, 1
    %v3575 = vadd.f32 %v3573, %v3574
    %v3576 = vadd.f32 %v3085, %v3440
    %v3577 = vadd.f32 %v3094, %v3449
    %v3578 = vadd.f32 %v3103, %v3458
    %v3579 = vadd.f32 %v3112, %v3467
    %v3580 = vadd.f32 %v3121, %v3476
    %v3581 = vadd.f32 %v3130, %v3485
    %v3582 = vadd.f32 %v3139, %v3494
    %v3583 = vadd.f32 %v3148, %v3503
    %v3584 = vadd.f32 %v3157, %v3512
    %v3585 = vadd.f32 %v3166, %v3521
    %v3586 = vadd.f32 %v3175, %v3530
    %v3587 = vadd.f32 %v3184, %v3539
    %v3588 = vadd.f32 %v3193, %v3548
    %v3589 = vadd.f32 %v3202, %v3557
    %v3590 = vadd.f32 %v3211, %v3566
    %v3591 = vadd.f32 %v3220, %v3575
    %s3592 = sld [smem:[#allocation8 + $0x1]]
    %v3593 = vstv %s3592
    %v3594 = vadd.f32 %v3576, %v3593
    %v3595 = vadd.f32 %v3577, %v3593
    %v3596 = vadd.f32 %v3578, %v3593
    %v3597 = vadd.f32 %v3579, %v3593
    %v3598 = vadd.f32 %v3580, %v3593
    %v3599 = vadd.f32 %v3581, %v3593
    %v3600 = vadd.f32 %v3582, %v3593
    %v3601 = vadd.f32 %v3583, %v3593
    %v3602 = vadd.f32 %v3584, %v3593
    %v3603 = vadd.f32 %v3585, %v3593
    %v3604 = vadd.f32 %v3586, %v3593
    %v3605 = vadd.f32 %v3587, %v3593
    %v3606 = vadd.f32 %v3588, %v3593
    %v3607 = vadd.f32 %v3589, %v3593
    %v3608 = vadd.f32 %v3590, %v3593
    %v3609 = vadd.f32 %v3591, %v3593
    %v3626 = vsel %vm3020, %v3595, %v3594
    %v3627 = vsel %vm3022, %v3596, %v3626
    %v3628 = vsel %vm3024, %v3597, %v3627
    %v3629 = vsel %vm3026, %v3598, %v3628
    %v3630 = vsel %vm3028, %v3599, %v3629
    %v3631 = vsel %vm3030, %v3600, %v3630
    %v3632 = vsel %vm3032, %v3601, %v3631
    %v3633 = vsel %vm3020, %v3603, %v3602
    %v3634 = vsel %vm3022, %v3604, %v3633
    %v3635 = vsel %vm3024, %v3605, %v3634
    %v3636 = vsel %vm3026, %v3606, %v3635
    %v3637 = vsel %vm3028, %v3607, %v3636
    %v3638 = vsel %vm3030, %v3608, %v3637
    %v3639 = vsel %vm3032, %v3609, %v3638
    %s3642 = scalar_lea.vmem [#allocation16], 16
    %3643 = vst.msk [vmem:[%s3642] sm:$0xff] %vm1959, %v3632
    %3644 = vst.msk [vmem:[%s3642 + $0x8] sm:$0xff] %vm1959, %v3639
    %v3645 = vmul.f32 %v2408, %v481
    %v3646 = vmul.f32 %v2409, %v482
    %v3647 = vmul.f32 %v2410, %v481
    %v3648 = vmul.f32 %v2411, %v482
    %v3649 = vmul.f32 %v2412, %v481
    %v3650 = vmul.f32 %v2413, %v482
    %v3651 = vmul.f32 %v2414, %v481
    %v3652 = vmul.f32 %v2415, %v482
    %v3653 = vmul.f32 %v2416, %v481
    %v3654 = vmul.f32 %v2417, %v482
    %v3655 = vmul.f32 %v2418, %v481
    %v3656 = vmul.f32 %v2419, %v482
    %v3657 = vmul.f32 %v2420, %v481
    %v3658 = vmul.f32 %v2421, %v482
    %v3659 = vmul.f32 %v2422, %v481
    %v3660 = vmul.f32 %v2423, %v482
    %v3661 = vmul.f32 %v2424, %v481
    %v3662 = vmul.f32 %v2425, %v482
    %v3663 = vmul.f32 %v2426, %v481
    %v3664 = vmul.f32 %v2427, %v482
    %v3665 = vmul.f32 %v2428, %v481
    %v3666 = vmul.f32 %v2429, %v482
    %v3667 = vmul.f32 %v2430, %v481
    %v3668 = vmul.f32 %v2431, %v482
    %v3669 = vmul.f32 %v2432, %v481
    %v3670 = vmul.f32 %v2433, %v482
    %v3671 = vmul.f32 %v2434, %v481
    %v3672 = vmul.f32 %v2435, %v482
    %v3673 = vmul.f32 %v2436, %v481
    %v3674 = vmul.f32 %v2437, %v482
    %v3675 = vmul.f32 %v2438, %v481
    %v3676 = vmul.f32 %v2439, %v482
    %v3677 = vsel %vm1959, %v3645, 0.0
    %v3678 = vsel %vm1959, %v3646, 0.0
    %v3679 = vadd.f32 %v3677, %v3678
    %v3680 = vrot.slane %v3679, 4
    %v3681 = vadd.f32 %v3679, %v3680
    %v3682 = vrot.slane %v3681, 2
    %v3683 = vadd.f32 %v3681, %v3682
    %v3684 = vrot.slane %v3683, 1
    %v3685 = vadd.f32 %v3683, %v3684
    %v3686 = vsel %vm1959, %v3647, 0.0
    %v3687 = vsel %vm1959, %v3648, 0.0
    %v3688 = vadd.f32 %v3686, %v3687
    %v3689 = vrot.slane %v3688, 4
    %v3690 = vadd.f32 %v3688, %v3689
    %v3691 = vrot.slane %v3690, 2
    %v3692 = vadd.f32 %v3690, %v3691
    %v3693 = vrot.slane %v3692, 1
    %v3694 = vadd.f32 %v3692, %v3693
    %v3695 = vsel %vm1959, %v3649, 0.0
    %v3696 = vsel %vm1959, %v3650, 0.0
    %v3697 = vadd.f32 %v3695, %v3696
    %v3698 = vrot.slane %v3697, 4
    %v3699 = vadd.f32 %v3697, %v3698
    %v3700 = vrot.slane %v3699, 2
    %v3701 = vadd.f32 %v3699, %v3700
    %v3702 = vrot.slane %v3701, 1
    %v3703 = vadd.f32 %v3701, %v3702
    %v3704 = vsel %vm1959, %v3651, 0.0
    %v3705 = vsel %vm1959, %v3652, 0.0
    %v3706 = vadd.f32 %v3704, %v3705
    %v3707 = vrot.slane %v3706, 4
    %v3708 = vadd.f32 %v3706, %v3707
    %v3709 = vrot.slane %v3708, 2
    %v3710 = vadd.f32 %v3708, %v3709
    %v3711 = vrot.slane %v3710, 1
    %v3712 = vadd.f32 %v3710, %v3711
    %v3713 = vsel %vm1959, %v3653, 0.0
    %v3714 = vsel %vm1959, %v3654, 0.0
    %v3715 = vadd.f32 %v3713, %v3714
    %v3716 = vrot.slane %v3715, 4
    %v3717 = vadd.f32 %v3715, %v3716
    %v3718 = vrot.slane %v3717, 2
    %v3719 = vadd.f32 %v3717, %v3718
    %v3720 = vrot.slane %v3719, 1
    %v3721 = vadd.f32 %v3719, %v3720
    %v3722 = vsel %vm1959, %v3655, 0.0
    %v3723 = vsel %vm1959, %v3656, 0.0
    %v3724 = vadd.f32 %v3722, %v3723
    %v3725 = vrot.slane %v3724, 4
    %v3726 = vadd.f32 %v3724, %v3725
    %v3727 = vrot.slane %v3726, 2
    %v3728 = vadd.f32 %v3726, %v3727
    %v3729 = vrot.slane %v3728, 1
    %v3730 = vadd.f32 %v3728, %v3729
    %v3731 = vsel %vm1959, %v3657, 0.0
    %v3732 = vsel %vm1959, %v3658, 0.0
    %v3733 = vadd.f32 %v3731, %v3732
    %v3734 = vrot.slane %v3733, 4
    %v3735 = vadd.f32 %v3733, %v3734
    %v3736 = vrot.slane %v3735, 2
    %v3737 = vadd.f32 %v3735, %v3736
    %v3738 = vrot.slane %v3737, 1
    %v3739 = vadd.f32 %v3737, %v3738
    %v3740 = vsel %vm1959, %v3659, 0.0
    %v3741 = vsel %vm1959, %v3660, 0.0
    %v3742 = vadd.f32 %v3740, %v3741
    %v3743 = vrot.slane %v3742, 4
    %v3744 = vadd.f32 %v3742, %v3743
    %v3745 = vrot.slane %v3744, 2
    %v3746 = vadd.f32 %v3744, %v3745
    %v3747 = vrot.slane %v3746, 1
    %v3748 = vadd.f32 %v3746, %v3747
    %v3749 = vsel %vm1959, %v3661, 0.0
    %v3750 = vsel %vm1959, %v3662, 0.0
    %v3751 = vadd.f32 %v3749, %v3750
    %v3752 = vrot.slane %v3751, 4
    %v3753 = vadd.f32 %v3751, %v3752
    %v3754 = vrot.slane %v3753, 2
    %v3755 = vadd.f32 %v3753, %v3754
    %v3756 = vrot.slane %v3755, 1
    %v3757 = vadd.f32 %v3755, %v3756
    %v3758 = vsel %vm1959, %v3663, 0.0
    %v3759 = vsel %vm1959, %v3664, 0.0
    %v3760 = vadd.f32 %v3758, %v3759
    %v3761 = vrot.slane %v3760, 4
    %v3762 = vadd.f32 %v3760, %v3761
    %v3763 = vrot.slane %v3762, 2
    %v3764 = vadd.f32 %v3762, %v3763
    %v3765 = vrot.slane %v3764, 1
    %v3766 = vadd.f32 %v3764, %v3765
    %v3767 = vsel %vm1959, %v3665, 0.0
    %v3768 = vsel %vm1959, %v3666, 0.0
    %v3769 = vadd.f32 %v3767, %v3768
    %v3770 = vrot.slane %v3769, 4
    %v3771 = vadd.f32 %v3769, %v3770
    %v3772 = vrot.slane %v3771, 2
    %v3773 = vadd.f32 %v3771, %v3772
    %v3774 = vrot.slane %v3773, 1
    %v3775 = vadd.f32 %v3773, %v3774
    %v3776 = vsel %vm1959, %v3667, 0.0
    %v3777 = vsel %vm1959, %v3668, 0.0
    %v3778 = vadd.f32 %v3776, %v3777
    %v3779 = vrot.slane %v3778, 4
    %v3780 = vadd.f32 %v3778, %v3779
    %v3781 = vrot.slane %v3780, 2
    %v3782 = vadd.f32 %v3780, %v3781
    %v3783 = vrot.slane %v3782, 1
    %v3784 = vadd.f32 %v3782, %v3783
    %v3785 = vsel %vm1959, %v3669, 0.0
    %v3786 = vsel %vm1959, %v3670, 0.0
    %v3787 = vadd.f32 %v3785, %v3786
    %v3788 = vrot.slane %v3787, 4
    %v3789 = vadd.f32 %v3787, %v3788
    %v3790 = vrot.slane %v3789, 2
    %v3791 = vadd.f32 %v3789, %v3790
    %v3792 = vrot.slane %v3791, 1
    %v3793 = vadd.f32 %v3791, %v3792
    %v3794 = vsel %vm1959, %v3671, 0.0
    %v3795 = vsel %vm1959, %v3672, 0.0
    %v3796 = vadd.f32 %v3794, %v3795
    %v3797 = vrot.slane %v3796, 4
    %v3798 = vadd.f32 %v3796, %v3797
    %v3799 = vrot.slane %v3798, 2
    %v3800 = vadd.f32 %v3798, %v3799
    %v3801 = vrot.slane %v3800, 1
    %v3802 = vadd.f32 %v3800, %v3801
    %v3803 = vsel %vm1959, %v3673, 0.0
    %v3804 = vsel %vm1959, %v3674, 0.0
    %v3805 = vadd.f32 %v3803, %v3804
    %v3806 = vrot.slane %v3805, 4
    %v3807 = vadd.f32 %v3805, %v3806
    %v3808 = vrot.slane %v3807, 2
    %v3809 = vadd.f32 %v3807, %v3808
    %v3810 = vrot.slane %v3809, 1
    %v3811 = vadd.f32 %v3809, %v3810
    %v3812 = vsel %vm1959, %v3675, 0.0
    %v3813 = vsel %vm1959, %v3676, 0.0
    %v3814 = vadd.f32 %v3812, %v3813
    %v3815 = vrot.slane %v3814, 4
    %v3816 = vadd.f32 %v3814, %v3815
    %v3817 = vrot.slane %v3816, 2
    %v3818 = vadd.f32 %v3816, %v3817
    %v3819 = vrot.slane %v3818, 1
    %v3820 = vadd.f32 %v3818, %v3819
    %s3821 = scalar_lea.vmem [#allocation14], 32
    %v3822 = vld [vmem:[%s3821] sm:$0xff]
    %v3823 = vld [vmem:[%s3821 + $0x8] sm:$0xff]
    %v3824 = vlaneseq
    %v3825 = vshrl.u32 %v3824, 7
    %v3826 = vsub.s32 0, %v3825
    %v3827 = vrot.slane %v3822, %v3826
    %3829 = vbcast.lane.b32.xlu0 %v3827, 256
    %v3830 = vpop.permute.xlu0 %3829
    %s3832 = sor.u32 256, 8
    %3833 = vbcast.lane.b32.xlu0 %v3827, %s3832
    %v3834 = vpop.permute.xlu0 %3833
    %v3835 = vlaneseq
    %v3836 = vshrl.u32 %v3835, 7
    %v3837 = vsub.s32 1, %v3836
    %v3838 = vrot.slane %v3822, %v3837
    %3840 = vbcast.lane.b32.xlu0 %v3838, 256
    %v3841 = vpop.permute.xlu0 %3840
    %s3843 = sor.u32 256, 8
    %3844 = vbcast.lane.b32.xlu0 %v3838, %s3843
    %v3845 = vpop.permute.xlu0 %3844
    %v3846 = vlaneseq
    %v3847 = vshrl.u32 %v3846, 7
    %v3848 = vsub.s32 2, %v3847
    %v3849 = vrot.slane %v3822, %v3848
    %3851 = vbcast.lane.b32.xlu0 %v3849, 256
    %v3852 = vpop.permute.xlu0 %3851
    %s3854 = sor.u32 256, 8
    %3855 = vbcast.lane.b32.xlu0 %v3849, %s3854
    %v3856 = vpop.permute.xlu0 %3855
    %v3857 = vlaneseq
    %v3858 = vshrl.u32 %v3857, 7
    %v3859 = vsub.s32 3, %v3858
    %v3860 = vrot.slane %v3822, %v3859
    %3862 = vbcast.lane.b32.xlu0 %v3860, 256
    %v3863 = vpop.permute.xlu0 %3862
    %s3865 = sor.u32 256, 8
    %3866 = vbcast.lane.b32.xlu0 %v3860, %s3865
    %v3867 = vpop.permute.xlu0 %3866
    %v3868 = vlaneseq
    %v3869 = vshrl.u32 %v3868, 7
    %v3870 = vsub.s32 4, %v3869
    %v3871 = vrot.slane %v3822, %v3870
    %3873 = vbcast.lane.b32.xlu0 %v3871, 256
    %v3874 = vpop.permute.xlu0 %3873
    %s3876 = sor.u32 256, 8
    %3877 = vbcast.lane.b32.xlu0 %v3871, %s3876
    %v3878 = vpop.permute.xlu0 %3877
    %v3879 = vlaneseq
    %v3880 = vshrl.u32 %v3879, 7
    %v3881 = vsub.s32 5, %v3880
    %v3882 = vrot.slane %v3822, %v3881
    %3884 = vbcast.lane.b32.xlu0 %v3882, 256
    %v3885 = vpop.permute.xlu0 %3884
    %s3887 = sor.u32 256, 8
    %3888 = vbcast.lane.b32.xlu0 %v3882, %s3887
    %v3889 = vpop.permute.xlu0 %3888
    %v3890 = vlaneseq
    %v3891 = vshrl.u32 %v3890, 7
    %v3892 = vsub.s32 6, %v3891
    %v3893 = vrot.slane %v3822, %v3892
    %3895 = vbcast.lane.b32.xlu0 %v3893, 256
    %v3896 = vpop.permute.xlu0 %3895
    %s3898 = sor.u32 256, 8
    %3899 = vbcast.lane.b32.xlu0 %v3893, %s3898
    %v3900 = vpop.permute.xlu0 %3899
    %v3901 = vlaneseq
    %v3902 = vshrl.u32 %v3901, 7
    %v3903 = vsub.s32 7, %v3902
    %v3904 = vrot.slane %v3822, %v3903
    %3906 = vbcast.lane.b32.xlu0 %v3904, 256
    %v3907 = vpop.permute.xlu0 %3906
    %s3909 = sor.u32 256, 8
    %3910 = vbcast.lane.b32.xlu0 %v3904, %s3909
    %v3911 = vpop.permute.xlu0 %3910
    %v3912 = vlaneseq
    %v3913 = vshrl.u32 %v3912, 7
    %v3914 = vsub.s32 0, %v3913
    %v3915 = vrot.slane %v3823, %v3914
    %3917 = vbcast.lane.b32.xlu0 %v3915, 256
    %v3918 = vpop.permute.xlu0 %3917
    %s3920 = sor.u32 256, 8
    %3921 = vbcast.lane.b32.xlu0 %v3915, %s3920
    %v3922 = vpop.permute.xlu0 %3921
    %v3923 = vlaneseq
    %v3924 = vshrl.u32 %v3923, 7
    %v3925 = vsub.s32 1, %v3924
    %v3926 = vrot.slane %v3823, %v3925
    %3928 = vbcast.lane.b32.xlu0 %v3926, 256
    %v3929 = vpop.permute.xlu0 %3928
    %s3931 = sor.u32 256, 8
    %3932 = vbcast.lane.b32.xlu0 %v3926, %s3931
    %v3933 = vpop.permute.xlu0 %3932
    %v3934 = vlaneseq
    %v3935 = vshrl.u32 %v3934, 7
    %v3936 = vsub.s32 2, %v3935
    %v3937 = vrot.slane %v3823, %v3936
    %3939 = vbcast.lane.b32.xlu0 %v3937, 256
    %v3940 = vpop.permute.xlu0 %3939
    %s3942 = sor.u32 256, 8
    %3943 = vbcast.lane.b32.xlu0 %v3937, %s3942
    %v3944 = vpop.permute.xlu0 %3943
    %v3945 = vlaneseq
    %v3946 = vshrl.u32 %v3945, 7
    %v3947 = vsub.s32 3, %v3946
    %v3948 = vrot.slane %v3823, %v3947
    %3950 = vbcast.lane.b32.xlu0 %v3948, 256
    %v3951 = vpop.permute.xlu0 %3950
    %s3953 = sor.u32 256, 8
    %3954 = vbcast.lane.b32.xlu0 %v3948, %s3953
    %v3955 = vpop.permute.xlu0 %3954
    %v3956 = vlaneseq
    %v3957 = vshrl.u32 %v3956, 7
    %v3958 = vsub.s32 4, %v3957
    %v3959 = vrot.slane %v3823, %v3958
    %3961 = vbcast.lane.b32.xlu0 %v3959, 256
    %v3962 = vpop.permute.xlu0 %3961
    %s3964 = sor.u32 256, 8
    %3965 = vbcast.lane.b32.xlu0 %v3959, %s3964
    %v3966 = vpop.permute.xlu0 %3965
    %v3967 = vlaneseq
    %v3968 = vshrl.u32 %v3967, 7
    %v3969 = vsub.s32 5, %v3968
    %v3970 = vrot.slane %v3823, %v3969
    %3972 = vbcast.lane.b32.xlu0 %v3970, 256
    %v3973 = vpop.permute.xlu0 %3972
    %s3975 = sor.u32 256, 8
    %3976 = vbcast.lane.b32.xlu0 %v3970, %s3975
    %v3977 = vpop.permute.xlu0 %3976
    %v3978 = vlaneseq
    %v3979 = vshrl.u32 %v3978, 7
    %v3980 = vsub.s32 6, %v3979
    %v3981 = vrot.slane %v3823, %v3980
    %3983 = vbcast.lane.b32.xlu0 %v3981, 256
    %v3984 = vpop.permute.xlu0 %3983
    %s3986 = sor.u32 256, 8
    %3987 = vbcast.lane.b32.xlu0 %v3981, %s3986
    %v3988 = vpop.permute.xlu0 %3987
    %v3989 = vlaneseq
    %v3990 = vshrl.u32 %v3989, 7
    %v3991 = vsub.s32 7, %v3990
    %v3992 = vrot.slane %v3823, %v3991
    %3994 = vbcast.lane.b32.xlu0 %v3992, 256
    %v3995 = vpop.permute.xlu0 %3994
    %s3997 = sor.u32 256, 8
    %3998 = vbcast.lane.b32.xlu0 %v3992, %s3997
    %v3999 = vpop.permute.xlu0 %3998
    %v4000 = vmul.f32 %v2408, %v3830
    %v4001 = vmul.f32 %v2409, %v3834
    %v4002 = vmul.f32 %v2410, %v3841
    %v4003 = vmul.f32 %v2411, %v3845
    %v4004 = vmul.f32 %v2412, %v3852
    %v4005 = vmul.f32 %v2413, %v3856
    %v4006 = vmul.f32 %v2414, %v3863
    %v4007 = vmul.f32 %v2415, %v3867
    %v4008 = vmul.f32 %v2416, %v3874
    %v4009 = vmul.f32 %v2417, %v3878
    %v4010 = vmul.f32 %v2418, %v3885
    %v4011 = vmul.f32 %v2419, %v3889
    %v4012 = vmul.f32 %v2420, %v3896
    %v4013 = vmul.f32 %v2421, %v3900
    %v4014 = vmul.f32 %v2422, %v3907
    %v4015 = vmul.f32 %v2423, %v3911
    %v4016 = vmul.f32 %v2424, %v3918
    %v4017 = vmul.f32 %v2425, %v3922
    %v4018 = vmul.f32 %v2426, %v3929
    %v4019 = vmul.f32 %v2427, %v3933
    %v4020 = vmul.f32 %v2428, %v3940
    %v4021 = vmul.f32 %v2429, %v3944
    %v4022 = vmul.f32 %v2430, %v3951
    %v4023 = vmul.f32 %v2431, %v3955
    %v4024 = vmul.f32 %v2432, %v3962
    %v4025 = vmul.f32 %v2433, %v3966
    %v4026 = vmul.f32 %v2434, %v3973
    %v4027 = vmul.f32 %v2435, %v3977
    %v4028 = vmul.f32 %v2436, %v3984
    %v4029 = vmul.f32 %v2437, %v3988
    %v4030 = vmul.f32 %v2438, %v3995
    %v4031 = vmul.f32 %v2439, %v3999
    %v4032 = vsel %vm1959, %v4000, 0.0
    %v4033 = vsel %vm1959, %v4001, 0.0
    %v4034 = vadd.f32 %v4032, %v4033
    %v4035 = vrot.slane %v4034, 4
    %v4036 = vadd.f32 %v4034, %v4035
    %v4037 = vrot.slane %v4036, 2
    %v4038 = vadd.f32 %v4036, %v4037
    %v4039 = vrot.slane %v4038, 1
    %v4040 = vadd.f32 %v4038, %v4039
    %v4041 = vsel %vm1959, %v4002, 0.0
    %v4042 = vsel %vm1959, %v4003, 0.0
    %v4043 = vadd.f32 %v4041, %v4042
    %v4044 = vrot.slane %v4043, 4
    %v4045 = vadd.f32 %v4043, %v4044
    %v4046 = vrot.slane %v4045, 2
    %v4047 = vadd.f32 %v4045, %v4046
    %v4048 = vrot.slane %v4047, 1
    %v4049 = vadd.f32 %v4047, %v4048
    %v4050 = vsel %vm1959, %v4004, 0.0
    %v4051 = vsel %vm1959, %v4005, 0.0
    %v4052 = vadd.f32 %v4050, %v4051
    %v4053 = vrot.slane %v4052, 4
    %v4054 = vadd.f32 %v4052, %v4053
    %v4055 = vrot.slane %v4054, 2
    %v4056 = vadd.f32 %v4054, %v4055
    %v4057 = vrot.slane %v4056, 1
    %v4058 = vadd.f32 %v4056, %v4057
    %v4059 = vsel %vm1959, %v4006, 0.0
    %v4060 = vsel %vm1959, %v4007, 0.0
    %v4061 = vadd.f32 %v4059, %v4060
    %v4062 = vrot.slane %v4061, 4
    %v4063 = vadd.f32 %v4061, %v4062
    %v4064 = vrot.slane %v4063, 2
    %v4065 = vadd.f32 %v4063, %v4064
    %v4066 = vrot.slane %v4065, 1
    %v4067 = vadd.f32 %v4065, %v4066
    %v4068 = vsel %vm1959, %v4008, 0.0
    %v4069 = vsel %vm1959, %v4009, 0.0
    %v4070 = vadd.f32 %v4068, %v4069
    %v4071 = vrot.slane %v4070, 4
    %v4072 = vadd.f32 %v4070, %v4071
    %v4073 = vrot.slane %v4072, 2
    %v4074 = vadd.f32 %v4072, %v4073
    %v4075 = vrot.slane %v4074, 1
    %v4076 = vadd.f32 %v4074, %v4075
    %v4077 = vsel %vm1959, %v4010, 0.0
    %v4078 = vsel %vm1959, %v4011, 0.0
    %v4079 = vadd.f32 %v4077, %v4078
    %v4080 = vrot.slane %v4079, 4
    %v4081 = vadd.f32 %v4079, %v4080
    %v4082 = vrot.slane %v4081, 2
    %v4083 = vadd.f32 %v4081, %v4082
    %v4084 = vrot.slane %v4083, 1
    %v4085 = vadd.f32 %v4083, %v4084
    %v4086 = vsel %vm1959, %v4012, 0.0
    %v4087 = vsel %vm1959, %v4013, 0.0
    %v4088 = vadd.f32 %v4086, %v4087
    %v4089 = vrot.slane %v4088, 4
    %v4090 = vadd.f32 %v4088, %v4089
    %v4091 = vrot.slane %v4090, 2
    %v4092 = vadd.f32 %v4090, %v4091
    %v4093 = vrot.slane %v4092, 1
    %v4094 = vadd.f32 %v4092, %v4093
    %v4095 = vsel %vm1959, %v4014, 0.0
    %v4096 = vsel %vm1959, %v4015, 0.0
    %v4097 = vadd.f32 %v4095, %v4096
    %v4098 = vrot.slane %v4097, 4
    %v4099 = vadd.f32 %v4097, %v4098
    %v4100 = vrot.slane %v4099, 2
    %v4101 = vadd.f32 %v4099, %v4100
    %v4102 = vrot.slane %v4101, 1
    %v4103 = vadd.f32 %v4101, %v4102
    %v4104 = vsel %vm1959, %v4016, 0.0
    %v4105 = vsel %vm1959, %v4017, 0.0
    %v4106 = vadd.f32 %v4104, %v4105
    %v4107 = vrot.slane %v4106, 4
    %v4108 = vadd.f32 %v4106, %v4107
    %v4109 = vrot.slane %v4108, 2
    %v4110 = vadd.f32 %v4108, %v4109
    %v4111 = vrot.slane %v4110, 1
    %v4112 = vadd.f32 %v4110, %v4111
    %v4113 = vsel %vm1959, %v4018, 0.0
    %v4114 = vsel %vm1959, %v4019, 0.0
    %v4115 = vadd.f32 %v4113, %v4114
    %v4116 = vrot.slane %v4115, 4
    %v4117 = vadd.f32 %v4115, %v4116
    %v4118 = vrot.slane %v4117, 2
    %v4119 = vadd.f32 %v4117, %v4118
    %v4120 = vrot.slane %v4119, 1
    %v4121 = vadd.f32 %v4119, %v4120
    %v4122 = vsel %vm1959, %v4020, 0.0
    %v4123 = vsel %vm1959, %v4021, 0.0
    %v4124 = vadd.f32 %v4122, %v4123
    %v4125 = vrot.slane %v4124, 4
    %v4126 = vadd.f32 %v4124, %v4125
    %v4127 = vrot.slane %v4126, 2
    %v4128 = vadd.f32 %v4126, %v4127
    %v4129 = vrot.slane %v4128, 1
    %v4130 = vadd.f32 %v4128, %v4129
    %v4131 = vsel %vm1959, %v4022, 0.0
    %v4132 = vsel %vm1959, %v4023, 0.0
    %v4133 = vadd.f32 %v4131, %v4132
    %v4134 = vrot.slane %v4133, 4
    %v4135 = vadd.f32 %v4133, %v4134
    %v4136 = vrot.slane %v4135, 2
    %v4137 = vadd.f32 %v4135, %v4136
    %v4138 = vrot.slane %v4137, 1
    %v4139 = vadd.f32 %v4137, %v4138
    %v4140 = vsel %vm1959, %v4024, 0.0
    %v4141 = vsel %vm1959, %v4025, 0.0
    %v4142 = vadd.f32 %v4140, %v4141
    %v4143 = vrot.slane %v4142, 4
    %v4144 = vadd.f32 %v4142, %v4143
    %v4145 = vrot.slane %v4144, 2
    %v4146 = vadd.f32 %v4144, %v4145
    %v4147 = vrot.slane %v4146, 1
    %v4148 = vadd.f32 %v4146, %v4147
    %v4149 = vsel %vm1959, %v4026, 0.0
    %v4150 = vsel %vm1959, %v4027, 0.0
    %v4151 = vadd.f32 %v4149, %v4150
    %v4152 = vrot.slane %v4151, 4
    %v4153 = vadd.f32 %v4151, %v4152
    %v4154 = vrot.slane %v4153, 2
    %v4155 = vadd.f32 %v4153, %v4154
    %v4156 = vrot.slane %v4155, 1
    %v4157 = vadd.f32 %v4155, %v4156
    %v4158 = vsel %vm1959, %v4028, 0.0
    %v4159 = vsel %vm1959, %v4029, 0.0
    %v4160 = vadd.f32 %v4158, %v4159
    %v4161 = vrot.slane %v4160, 4
    %v4162 = vadd.f32 %v4160, %v4161
    %v4163 = vrot.slane %v4162, 2
    %v4164 = vadd.f32 %v4162, %v4163
    %v4165 = vrot.slane %v4164, 1
    %v4166 = vadd.f32 %v4164, %v4165
    %v4167 = vsel %vm1959, %v4030, 0.0
    %v4168 = vsel %vm1959, %v4031, 0.0
    %v4169 = vadd.f32 %v4167, %v4168
    %v4170 = vrot.slane %v4169, 4
    %v4171 = vadd.f32 %v4169, %v4170
    %v4172 = vrot.slane %v4171, 2
    %v4173 = vadd.f32 %v4171, %v4172
    %v4174 = vrot.slane %v4173, 1
    %v4175 = vadd.f32 %v4173, %v4174
    %v4176 = vadd.f32 %v3685, %v4040
    %v4177 = vadd.f32 %v3694, %v4049
    %v4178 = vadd.f32 %v3703, %v4058
    %v4179 = vadd.f32 %v3712, %v4067
    %v4180 = vadd.f32 %v3721, %v4076
    %v4181 = vadd.f32 %v3730, %v4085
    %v4182 = vadd.f32 %v3739, %v4094
    %v4183 = vadd.f32 %v3748, %v4103
    %v4184 = vadd.f32 %v3757, %v4112
    %v4185 = vadd.f32 %v3766, %v4121
    %v4186 = vadd.f32 %v3775, %v4130
    %v4187 = vadd.f32 %v3784, %v4139
    %v4188 = vadd.f32 %v3793, %v4148
    %v4189 = vadd.f32 %v3802, %v4157
    %v4190 = vadd.f32 %v3811, %v4166
    %v4191 = vadd.f32 %v3820, %v4175
    %s4192 = sld [smem:[#allocation8 + $0x2]]
    %v4193 = vstv %s4192
    %v4194 = vadd.f32 %v4176, %v4193
    %v4195 = vadd.f32 %v4177, %v4193
    %v4196 = vadd.f32 %v4178, %v4193
    %v4197 = vadd.f32 %v4179, %v4193
    %v4198 = vadd.f32 %v4180, %v4193
    %v4199 = vadd.f32 %v4181, %v4193
    %v4200 = vadd.f32 %v4182, %v4193
    %v4201 = vadd.f32 %v4183, %v4193
    %v4202 = vadd.f32 %v4184, %v4193
    %v4203 = vadd.f32 %v4185, %v4193
    %v4204 = vadd.f32 %v4186, %v4193
    %v4205 = vadd.f32 %v4187, %v4193
    %v4206 = vadd.f32 %v4188, %v4193
    %v4207 = vadd.f32 %v4189, %v4193
    %v4208 = vadd.f32 %v4190, %v4193
    %v4209 = vadd.f32 %v4191, %v4193
    %v4226 = vsel %vm3020, %v4195, %v4194
    %v4227 = vsel %vm3022, %v4196, %v4226
    %v4228 = vsel %vm3024, %v4197, %v4227
    %v4229 = vsel %vm3026, %v4198, %v4228
    %v4230 = vsel %vm3028, %v4199, %v4229
    %v4231 = vsel %vm3030, %v4200, %v4230
    %v4232 = vsel %vm3032, %v4201, %v4231
    %v4233 = vsel %vm3020, %v4203, %v4202
    %v4234 = vsel %vm3022, %v4204, %v4233
    %v4235 = vsel %vm3024, %v4205, %v4234
    %v4236 = vsel %vm3026, %v4206, %v4235
    %v4237 = vsel %vm3028, %v4207, %v4236
    %v4238 = vsel %vm3030, %v4208, %v4237
    %v4239 = vsel %vm3032, %v4209, %v4238
    %s4242 = scalar_lea.vmem [#allocation16], 32
    %4243 = vst.msk [vmem:[%s4242] sm:$0xff] %vm1959, %v4232
    %4244 = vst.msk [vmem:[%s4242 + $0x8] sm:$0xff] %vm1959, %v4239
    %v4245 = vmul.f32 %v2408, %v531
    %v4246 = vmul.f32 %v2409, %v532
    %v4247 = vmul.f32 %v2410, %v531
    %v4248 = vmul.f32 %v2411, %v532
    %v4249 = vmul.f32 %v2412, %v531
    %v4250 = vmul.f32 %v2413, %v532
    %v4251 = vmul.f32 %v2414, %v531
    %v4252 = vmul.f32 %v2415, %v532
    %v4253 = vmul.f32 %v2416, %v531
    %v4254 = vmul.f32 %v2417, %v532
    %v4255 = vmul.f32 %v2418, %v531
    %v4256 = vmul.f32 %v2419, %v532
    %v4257 = vmul.f32 %v2420, %v531
    %v4258 = vmul.f32 %v2421, %v532
    %v4259 = vmul.f32 %v2422, %v531
    %v4260 = vmul.f32 %v2423, %v532
    %v4261 = vmul.f32 %v2424, %v531
    %v4262 = vmul.f32 %v2425, %v532
    %v4263 = vmul.f32 %v2426, %v531
    %v4264 = vmul.f32 %v2427, %v532
    %v4265 = vmul.f32 %v2428, %v531
    %v4266 = vmul.f32 %v2429, %v532
    %v4267 = vmul.f32 %v2430, %v531
    %v4268 = vmul.f32 %v2431, %v532
    %v4269 = vmul.f32 %v2432, %v531
    %v4270 = vmul.f32 %v2433, %v532
    %v4271 = vmul.f32 %v2434, %v531
    %v4272 = vmul.f32 %v2435, %v532
    %v4273 = vmul.f32 %v2436, %v531
    %v4274 = vmul.f32 %v2437, %v532
    %v4275 = vmul.f32 %v2438, %v531
    %v4276 = vmul.f32 %v2439, %v532
    %v4277 = vsel %vm1959, %v4245, 0.0
    %v4278 = vsel %vm1959, %v4246, 0.0
    %v4279 = vadd.f32 %v4277, %v4278
    %v4280 = vrot.slane %v4279, 4
    %v4281 = vadd.f32 %v4279, %v4280
    %v4282 = vrot.slane %v4281, 2
    %v4283 = vadd.f32 %v4281, %v4282
    %v4284 = vrot.slane %v4283, 1
    %v4285 = vadd.f32 %v4283, %v4284
    %v4286 = vsel %vm1959, %v4247, 0.0
    %v4287 = vsel %vm1959, %v4248, 0.0
    %v4288 = vadd.f32 %v4286, %v4287
    %v4289 = vrot.slane %v4288, 4
    %v4290 = vadd.f32 %v4288, %v4289
    %v4291 = vrot.slane %v4290, 2
    %v4292 = vadd.f32 %v4290, %v4291
    %v4293 = vrot.slane %v4292, 1
    %v4294 = vadd.f32 %v4292, %v4293
    %v4295 = vsel %vm1959, %v4249, 0.0
    %v4296 = vsel %vm1959, %v4250, 0.0
    %v4297 = vadd.f32 %v4295, %v4296
    %v4298 = vrot.slane %v4297, 4
    %v4299 = vadd.f32 %v4297, %v4298
    %v4300 = vrot.slane %v4299, 2
    %v4301 = vadd.f32 %v4299, %v4300
    %v4302 = vrot.slane %v4301, 1
    %v4303 = vadd.f32 %v4301, %v4302
    %v4304 = vsel %vm1959, %v4251, 0.0
    %v4305 = vsel %vm1959, %v4252, 0.0
    %v4306 = vadd.f32 %v4304, %v4305
    %v4307 = vrot.slane %v4306, 4
    %v4308 = vadd.f32 %v4306, %v4307
    %v4309 = vrot.slane %v4308, 2
    %v4310 = vadd.f32 %v4308, %v4309
    %v4311 = vrot.slane %v4310, 1
    %v4312 = vadd.f32 %v4310, %v4311
    %v4313 = vsel %vm1959, %v4253, 0.0
    %v4314 = vsel %vm1959, %v4254, 0.0
    %v4315 = vadd.f32 %v4313, %v4314
    %v4316 = vrot.slane %v4315, 4
    %v4317 = vadd.f32 %v4315, %v4316
    %v4318 = vrot.slane %v4317, 2
    %v4319 = vadd.f32 %v4317, %v4318
    %v4320 = vrot.slane %v4319, 1
    %v4321 = vadd.f32 %v4319, %v4320
    %v4322 = vsel %vm1959, %v4255, 0.0
    %v4323 = vsel %vm1959, %v4256, 0.0
    %v4324 = vadd.f32 %v4322, %v4323
    %v4325 = vrot.slane %v4324, 4
    %v4326 = vadd.f32 %v4324, %v4325
    %v4327 = vrot.slane %v4326, 2
    %v4328 = vadd.f32 %v4326, %v4327
    %v4329 = vrot.slane %v4328, 1
    %v4330 = vadd.f32 %v4328, %v4329
    %v4331 = vsel %vm1959, %v4257, 0.0
    %v4332 = vsel %vm1959, %v4258, 0.0
    %v4333 = vadd.f32 %v4331, %v4332
    %v4334 = vrot.slane %v4333, 4
    %v4335 = vadd.f32 %v4333, %v4334
    %v4336 = vrot.slane %v4335, 2
    %v4337 = vadd.f32 %v4335, %v4336
    %v4338 = vrot.slane %v4337, 1
    %v4339 = vadd.f32 %v4337, %v4338
    %v4340 = vsel %vm1959, %v4259, 0.0
    %v4341 = vsel %vm1959, %v4260, 0.0
    %v4342 = vadd.f32 %v4340, %v4341
    %v4343 = vrot.slane %v4342, 4
    %v4344 = vadd.f32 %v4342, %v4343
    %v4345 = vrot.slane %v4344, 2
    %v4346 = vadd.f32 %v4344, %v4345
    %v4347 = vrot.slane %v4346, 1
    %v4348 = vadd.f32 %v4346, %v4347
    %v4349 = vsel %vm1959, %v4261, 0.0
    %v4350 = vsel %vm1959, %v4262, 0.0
    %v4351 = vadd.f32 %v4349, %v4350
    %v4352 = vrot.slane %v4351, 4
    %v4353 = vadd.f32 %v4351, %v4352
    %v4354 = vrot.slane %v4353, 2
    %v4355 = vadd.f32 %v4353, %v4354
    %v4356 = vrot.slane %v4355, 1
    %v4357 = vadd.f32 %v4355, %v4356
    %v4358 = vsel %vm1959, %v4263, 0.0
    %v4359 = vsel %vm1959, %v4264, 0.0
    %v4360 = vadd.f32 %v4358, %v4359
    %v4361 = vrot.slane %v4360, 4
    %v4362 = vadd.f32 %v4360, %v4361
    %v4363 = vrot.slane %v4362, 2
    %v4364 = vadd.f32 %v4362, %v4363
    %v4365 = vrot.slane %v4364, 1
    %v4366 = vadd.f32 %v4364, %v4365
    %v4367 = vsel %vm1959, %v4265, 0.0
    %v4368 = vsel %vm1959, %v4266, 0.0
    %v4369 = vadd.f32 %v4367, %v4368
    %v4370 = vrot.slane %v4369, 4
    %v4371 = vadd.f32 %v4369, %v4370
    %v4372 = vrot.slane %v4371, 2
    %v4373 = vadd.f32 %v4371, %v4372
    %v4374 = vrot.slane %v4373, 1
    %v4375 = vadd.f32 %v4373, %v4374
    %v4376 = vsel %vm1959, %v4267, 0.0
    %v4377 = vsel %vm1959, %v4268, 0.0
    %v4378 = vadd.f32 %v4376, %v4377
    %v4379 = vrot.slane %v4378, 4
    %v4380 = vadd.f32 %v4378, %v4379
    %v4381 = vrot.slane %v4380, 2
    %v4382 = vadd.f32 %v4380, %v4381
    %v4383 = vrot.slane %v4382, 1
    %v4384 = vadd.f32 %v4382, %v4383
    %v4385 = vsel %vm1959, %v4269, 0.0
    %v4386 = vsel %vm1959, %v4270, 0.0
    %v4387 = vadd.f32 %v4385, %v4386
    %v4388 = vrot.slane %v4387, 4
    %v4389 = vadd.f32 %v4387, %v4388
    %v4390 = vrot.slane %v4389, 2
    %v4391 = vadd.f32 %v4389, %v4390
    %v4392 = vrot.slane %v4391, 1
    %v4393 = vadd.f32 %v4391, %v4392
    %v4394 = vsel %vm1959, %v4271, 0.0
    %v4395 = vsel %vm1959, %v4272, 0.0
    %v4396 = vadd.f32 %v4394, %v4395
    %v4397 = vrot.slane %v4396, 4
    %v4398 = vadd.f32 %v4396, %v4397
    %v4399 = vrot.slane %v4398, 2
    %v4400 = vadd.f32 %v4398, %v4399
    %v4401 = vrot.slane %v4400, 1
    %v4402 = vadd.f32 %v4400, %v4401
    %v4403 = vsel %vm1959, %v4273, 0.0
    %v4404 = vsel %vm1959, %v4274, 0.0
    %v4405 = vadd.f32 %v4403, %v4404
    %v4406 = vrot.slane %v4405, 4
    %v4407 = vadd.f32 %v4405, %v4406
    %v4408 = vrot.slane %v4407, 2
    %v4409 = vadd.f32 %v4407, %v4408
    %v4410 = vrot.slane %v4409, 1
    %v4411 = vadd.f32 %v4409, %v4410
    %v4412 = vsel %vm1959, %v4275, 0.0
    %v4413 = vsel %vm1959, %v4276, 0.0
    %v4414 = vadd.f32 %v4412, %v4413
    %v4415 = vrot.slane %v4414, 4
    %v4416 = vadd.f32 %v4414, %v4415
    %v4417 = vrot.slane %v4416, 2
    %v4418 = vadd.f32 %v4416, %v4417
    %v4419 = vrot.slane %v4418, 1
    %v4420 = vadd.f32 %v4418, %v4419
    %s4421 = scalar_lea.vmem [#allocation14], 48
    %v4422 = vld [vmem:[%s4421] sm:$0xff]
    %v4423 = vld [vmem:[%s4421 + $0x8] sm:$0xff]
    %v4424 = vlaneseq
    %v4425 = vshrl.u32 %v4424, 7
    %v4426 = vsub.s32 0, %v4425
    %v4427 = vrot.slane %v4422, %v4426
    %4429 = vbcast.lane.b32.xlu0 %v4427, 256
    %v4430 = vpop.permute.xlu0 %4429
    %s4432 = sor.u32 256, 8
    %4433 = vbcast.lane.b32.xlu0 %v4427, %s4432
    %v4434 = vpop.permute.xlu0 %4433
    %v4435 = vlaneseq
    %v4436 = vshrl.u32 %v4435, 7
    %v4437 = vsub.s32 1, %v4436
    %v4438 = vrot.slane %v4422, %v4437
    %4440 = vbcast.lane.b32.xlu0 %v4438, 256
    %v4441 = vpop.permute.xlu0 %4440
    %s4443 = sor.u32 256, 8
    %4444 = vbcast.lane.b32.xlu0 %v4438, %s4443
    %v4445 = vpop.permute.xlu0 %4444
    %v4446 = vlaneseq
    %v4447 = vshrl.u32 %v4446, 7
    %v4448 = vsub.s32 2, %v4447
    %v4449 = vrot.slane %v4422, %v4448
    %4451 = vbcast.lane.b32.xlu0 %v4449, 256
    %v4452 = vpop.permute.xlu0 %4451
    %s4454 = sor.u32 256, 8
    %4455 = vbcast.lane.b32.xlu0 %v4449, %s4454
    %v4456 = vpop.permute.xlu0 %4455
    %v4457 = vlaneseq
    %v4458 = vshrl.u32 %v4457, 7
    %v4459 = vsub.s32 3, %v4458
    %v4460 = vrot.slane %v4422, %v4459
    %4462 = vbcast.lane.b32.xlu0 %v4460, 256
    %v4463 = vpop.permute.xlu0 %4462
    %s4465 = sor.u32 256, 8
    %4466 = vbcast.lane.b32.xlu0 %v4460, %s4465
    %v4467 = vpop.permute.xlu0 %4466
    %v4468 = vlaneseq
    %v4469 = vshrl.u32 %v4468, 7
    %v4470 = vsub.s32 4, %v4469
    %v4471 = vrot.slane %v4422, %v4470
    %4473 = vbcast.lane.b32.xlu0 %v4471, 256
    %v4474 = vpop.permute.xlu0 %4473
    %s4476 = sor.u32 256, 8
    %4477 = vbcast.lane.b32.xlu0 %v4471, %s4476
    %v4478 = vpop.permute.xlu0 %4477
    %v4479 = vlaneseq
    %v4480 = vshrl.u32 %v4479, 7
    %v4481 = vsub.s32 5, %v4480
    %v4482 = vrot.slane %v4422, %v4481
    %4484 = vbcast.lane.b32.xlu0 %v4482, 256
    %v4485 = vpop.permute.xlu0 %4484
    %s4487 = sor.u32 256, 8
    %4488 = vbcast.lane.b32.xlu0 %v4482, %s4487
    %v4489 = vpop.permute.xlu0 %4488
    %v4490 = vlaneseq
    %v4491 = vshrl.u32 %v4490, 7
    %v4492 = vsub.s32 6, %v4491
    %v4493 = vrot.slane %v4422, %v4492
    %4495 = vbcast.lane.b32.xlu0 %v4493, 256
    %v4496 = vpop.permute.xlu0 %4495
    %s4498 = sor.u32 256, 8
    %4499 = vbcast.lane.b32.xlu0 %v4493, %s4498
    %v4500 = vpop.permute.xlu0 %4499
    %v4501 = vlaneseq
    %v4502 = vshrl.u32 %v4501, 7
    %v4503 = vsub.s32 7, %v4502
    %v4504 = vrot.slane %v4422, %v4503
    %4506 = vbcast.lane.b32.xlu0 %v4504, 256
    %v4507 = vpop.permute.xlu0 %4506
    %s4509 = sor.u32 256, 8
    %4510 = vbcast.lane.b32.xlu0 %v4504, %s4509
    %v4511 = vpop.permute.xlu0 %4510
    %v4512 = vlaneseq
    %v4513 = vshrl.u32 %v4512, 7
    %v4514 = vsub.s32 0, %v4513
    %v4515 = vrot.slane %v4423, %v4514
    %4517 = vbcast.lane.b32.xlu0 %v4515, 256
    %v4518 = vpop.permute.xlu0 %4517
    %s4520 = sor.u32 256, 8
    %4521 = vbcast.lane.b32.xlu0 %v4515, %s4520
    %v4522 = vpop.permute.xlu0 %4521
    %v4523 = vlaneseq
    %v4524 = vshrl.u32 %v4523, 7
    %v4525 = vsub.s32 1, %v4524
    %v4526 = vrot.slane %v4423, %v4525
    %4528 = vbcast.lane.b32.xlu0 %v4526, 256
    %v4529 = vpop.permute.xlu0 %4528
    %s4531 = sor.u32 256, 8
    %4532 = vbcast.lane.b32.xlu0 %v4526, %s4531
    %v4533 = vpop.permute.xlu0 %4532
    %v4534 = vlaneseq
    %v4535 = vshrl.u32 %v4534, 7
    %v4536 = vsub.s32 2, %v4535
    %v4537 = vrot.slane %v4423, %v4536
    %4539 = vbcast.lane.b32.xlu0 %v4537, 256
    %v4540 = vpop.permute.xlu0 %4539
    %s4542 = sor.u32 256, 8
    %4543 = vbcast.lane.b32.xlu0 %v4537, %s4542
    %v4544 = vpop.permute.xlu0 %4543
    %v4545 = vlaneseq
    %v4546 = vshrl.u32 %v4545, 7
    %v4547 = vsub.s32 3, %v4546
    %v4548 = vrot.slane %v4423, %v4547
    %4550 = vbcast.lane.b32.xlu0 %v4548, 256
    %v4551 = vpop.permute.xlu0 %4550
    %s4553 = sor.u32 256, 8
    %4554 = vbcast.lane.b32.xlu0 %v4548, %s4553
    %v4555 = vpop.permute.xlu0 %4554
    %v4556 = vlaneseq
    %v4557 = vshrl.u32 %v4556, 7
    %v4558 = vsub.s32 4, %v4557
    %v4559 = vrot.slane %v4423, %v4558
    %4561 = vbcast.lane.b32.xlu0 %v4559, 256
    %v4562 = vpop.permute.xlu0 %4561
    %s4564 = sor.u32 256, 8
    %4565 = vbcast.lane.b32.xlu0 %v4559, %s4564
    %v4566 = vpop.permute.xlu0 %4565
    %v4567 = vlaneseq
    %v4568 = vshrl.u32 %v4567, 7
    %v4569 = vsub.s32 5, %v4568
    %v4570 = vrot.slane %v4423, %v4569
    %4572 = vbcast.lane.b32.xlu0 %v4570, 256
    %v4573 = vpop.permute.xlu0 %4572
    %s4575 = sor.u32 256, 8
    %4576 = vbcast.lane.b32.xlu0 %v4570, %s4575
    %v4577 = vpop.permute.xlu0 %4576
    %v4578 = vlaneseq
    %v4579 = vshrl.u32 %v4578, 7
    %v4580 = vsub.s32 6, %v4579
    %v4581 = vrot.slane %v4423, %v4580
    %4583 = vbcast.lane.b32.xlu0 %v4581, 256
    %v4584 = vpop.permute.xlu0 %4583
    %s4586 = sor.u32 256, 8
    %4587 = vbcast.lane.b32.xlu0 %v4581, %s4586
    %v4588 = vpop.permute.xlu0 %4587
    %v4589 = vlaneseq
    %v4590 = vshrl.u32 %v4589, 7
    %v4591 = vsub.s32 7, %v4590
    %v4592 = vrot.slane %v4423, %v4591
    %4594 = vbcast.lane.b32.xlu0 %v4592, 256
    %v4595 = vpop.permute.xlu0 %4594
    %s4597 = sor.u32 256, 8
    %4598 = vbcast.lane.b32.xlu0 %v4592, %s4597
    %v4599 = vpop.permute.xlu0 %4598
    %v4600 = vmul.f32 %v2408, %v4430
    %v4601 = vmul.f32 %v2409, %v4434
    %v4602 = vmul.f32 %v2410, %v4441
    %v4603 = vmul.f32 %v2411, %v4445
    %v4604 = vmul.f32 %v2412, %v4452
    %v4605 = vmul.f32 %v2413, %v4456
    %v4606 = vmul.f32 %v2414, %v4463
    %v4607 = vmul.f32 %v2415, %v4467
    %v4608 = vmul.f32 %v2416, %v4474
    %v4609 = vmul.f32 %v2417, %v4478
    %v4610 = vmul.f32 %v2418, %v4485
    %v4611 = vmul.f32 %v2419, %v4489
    %v4612 = vmul.f32 %v2420, %v4496
    %v4613 = vmul.f32 %v2421, %v4500
    %v4614 = vmul.f32 %v2422, %v4507
    %v4615 = vmul.f32 %v2423, %v4511
    %v4616 = vmul.f32 %v2424, %v4518
    %v4617 = vmul.f32 %v2425, %v4522
    %v4618 = vmul.f32 %v2426, %v4529
    %v4619 = vmul.f32 %v2427, %v4533
    %v4620 = vmul.f32 %v2428, %v4540
    %v4621 = vmul.f32 %v2429, %v4544
    %v4622 = vmul.f32 %v2430, %v4551
    %v4623 = vmul.f32 %v2431, %v4555
    %v4624 = vmul.f32 %v2432, %v4562
    %v4625 = vmul.f32 %v2433, %v4566
    %v4626 = vmul.f32 %v2434, %v4573
    %v4627 = vmul.f32 %v2435, %v4577
    %v4628 = vmul.f32 %v2436, %v4584
    %v4629 = vmul.f32 %v2437, %v4588
    %v4630 = vmul.f32 %v2438, %v4595
    %v4631 = vmul.f32 %v2439, %v4599
    %v4632 = vsel %vm1959, %v4600, 0.0
    %v4633 = vsel %vm1959, %v4601, 0.0
    %v4634 = vadd.f32 %v4632, %v4633
    %v4635 = vrot.slane %v4634, 4
    %v4636 = vadd.f32 %v4634, %v4635
    %v4637 = vrot.slane %v4636, 2
    %v4638 = vadd.f32 %v4636, %v4637
    %v4639 = vrot.slane %v4638, 1
    %v4640 = vadd.f32 %v4638, %v4639
    %v4641 = vsel %vm1959, %v4602, 0.0
    %v4642 = vsel %vm1959, %v4603, 0.0
    %v4643 = vadd.f32 %v4641, %v4642
    %v4644 = vrot.slane %v4643, 4
    %v4645 = vadd.f32 %v4643, %v4644
    %v4646 = vrot.slane %v4645, 2
    %v4647 = vadd.f32 %v4645, %v4646
    %v4648 = vrot.slane %v4647, 1
    %v4649 = vadd.f32 %v4647, %v4648
    %v4650 = vsel %vm1959, %v4604, 0.0
    %v4651 = vsel %vm1959, %v4605, 0.0
    %v4652 = vadd.f32 %v4650, %v4651
    %v4653 = vrot.slane %v4652, 4
    %v4654 = vadd.f32 %v4652, %v4653
    %v4655 = vrot.slane %v4654, 2
    %v4656 = vadd.f32 %v4654, %v4655
    %v4657 = vrot.slane %v4656, 1
    %v4658 = vadd.f32 %v4656, %v4657
    %v4659 = vsel %vm1959, %v4606, 0.0
    %v4660 = vsel %vm1959, %v4607, 0.0
    %v4661 = vadd.f32 %v4659, %v4660
    %v4662 = vrot.slane %v4661, 4
    %v4663 = vadd.f32 %v4661, %v4662
    %v4664 = vrot.slane %v4663, 2
    %v4665 = vadd.f32 %v4663, %v4664
    %v4666 = vrot.slane %v4665, 1
    %v4667 = vadd.f32 %v4665, %v4666
    %v4668 = vsel %vm1959, %v4608, 0.0
    %v4669 = vsel %vm1959, %v4609, 0.0
    %v4670 = vadd.f32 %v4668, %v4669
    %v4671 = vrot.slane %v4670, 4
    %v4672 = vadd.f32 %v4670, %v4671
    %v4673 = vrot.slane %v4672, 2
    %v4674 = vadd.f32 %v4672, %v4673
    %v4675 = vrot.slane %v4674, 1
    %v4676 = vadd.f32 %v4674, %v4675
    %v4677 = vsel %vm1959, %v4610, 0.0
    %v4678 = vsel %vm1959, %v4611, 0.0
    %v4679 = vadd.f32 %v4677, %v4678
    %v4680 = vrot.slane %v4679, 4
    %v4681 = vadd.f32 %v4679, %v4680
    %v4682 = vrot.slane %v4681, 2
    %v4683 = vadd.f32 %v4681, %v4682
    %v4684 = vrot.slane %v4683, 1
    %v4685 = vadd.f32 %v4683, %v4684
    %v4686 = vsel %vm1959, %v4612, 0.0
    %v4687 = vsel %vm1959, %v4613, 0.0
    %v4688 = vadd.f32 %v4686, %v4687
    %v4689 = vrot.slane %v4688, 4
    %v4690 = vadd.f32 %v4688, %v4689
    %v4691 = vrot.slane %v4690, 2
    %v4692 = vadd.f32 %v4690, %v4691
    %v4693 = vrot.slane %v4692, 1
    %v4694 = vadd.f32 %v4692, %v4693
    %v4695 = vsel %vm1959, %v4614, 0.0
    %v4696 = vsel %vm1959, %v4615, 0.0
    %v4697 = vadd.f32 %v4695, %v4696
    %v4698 = vrot.slane %v4697, 4
    %v4699 = vadd.f32 %v4697, %v4698
    %v4700 = vrot.slane %v4699, 2
    %v4701 = vadd.f32 %v4699, %v4700
    %v4702 = vrot.slane %v4701, 1
    %v4703 = vadd.f32 %v4701, %v4702
    %v4704 = vsel %vm1959, %v4616, 0.0
    %v4705 = vsel %vm1959, %v4617, 0.0
    %v4706 = vadd.f32 %v4704, %v4705
    %v4707 = vrot.slane %v4706, 4
    %v4708 = vadd.f32 %v4706, %v4707
    %v4709 = vrot.slane %v4708, 2
    %v4710 = vadd.f32 %v4708, %v4709
    %v4711 = vrot.slane %v4710, 1
    %v4712 = vadd.f32 %v4710, %v4711
    %v4713 = vsel %vm1959, %v4618, 0.0
    %v4714 = vsel %vm1959, %v4619, 0.0
    %v4715 = vadd.f32 %v4713, %v4714
    %v4716 = vrot.slane %v4715, 4
    %v4717 = vadd.f32 %v4715, %v4716
    %v4718 = vrot.slane %v4717, 2
    %v4719 = vadd.f32 %v4717, %v4718
    %v4720 = vrot.slane %v4719, 1
    %v4721 = vadd.f32 %v4719, %v4720
    %v4722 = vsel %vm1959, %v4620, 0.0
    %v4723 = vsel %vm1959, %v4621, 0.0
    %v4724 = vadd.f32 %v4722, %v4723
    %v4725 = vrot.slane %v4724, 4
    %v4726 = vadd.f32 %v4724, %v4725
    %v4727 = vrot.slane %v4726, 2
    %v4728 = vadd.f32 %v4726, %v4727
    %v4729 = vrot.slane %v4728, 1
    %v4730 = vadd.f32 %v4728, %v4729
    %v4731 = vsel %vm1959, %v4622, 0.0
    %v4732 = vsel %vm1959, %v4623, 0.0
    %v4733 = vadd.f32 %v4731, %v4732
    %v4734 = vrot.slane %v4733, 4
    %v4735 = vadd.f32 %v4733, %v4734
    %v4736 = vrot.slane %v4735, 2
    %v4737 = vadd.f32 %v4735, %v4736
    %v4738 = vrot.slane %v4737, 1
    %v4739 = vadd.f32 %v4737, %v4738
    %v4740 = vsel %vm1959, %v4624, 0.0
    %v4741 = vsel %vm1959, %v4625, 0.0
    %v4742 = vadd.f32 %v4740, %v4741
    %v4743 = vrot.slane %v4742, 4
    %v4744 = vadd.f32 %v4742, %v4743
    %v4745 = vrot.slane %v4744, 2
    %v4746 = vadd.f32 %v4744, %v4745
    %v4747 = vrot.slane %v4746, 1
    %v4748 = vadd.f32 %v4746, %v4747
    %v4749 = vsel %vm1959, %v4626, 0.0
    %v4750 = vsel %vm1959, %v4627, 0.0
    %v4751 = vadd.f32 %v4749, %v4750
    %v4752 = vrot.slane %v4751, 4
    %v4753 = vadd.f32 %v4751, %v4752
    %v4754 = vrot.slane %v4753, 2
    %v4755 = vadd.f32 %v4753, %v4754
    %v4756 = vrot.slane %v4755, 1
    %v4757 = vadd.f32 %v4755, %v4756
    %v4758 = vsel %vm1959, %v4628, 0.0
    %v4759 = vsel %vm1959, %v4629, 0.0
    %v4760 = vadd.f32 %v4758, %v4759
    %v4761 = vrot.slane %v4760, 4
    %v4762 = vadd.f32 %v4760, %v4761
    %v4763 = vrot.slane %v4762, 2
    %v4764 = vadd.f32 %v4762, %v4763
    %v4765 = vrot.slane %v4764, 1
    %v4766 = vadd.f32 %v4764, %v4765
    %v4767 = vsel %vm1959, %v4630, 0.0
    %v4768 = vsel %vm1959, %v4631, 0.0
    %v4769 = vadd.f32 %v4767, %v4768
    %v4770 = vrot.slane %v4769, 4
    %v4771 = vadd.f32 %v4769, %v4770
    %v4772 = vrot.slane %v4771, 2
    %v4773 = vadd.f32 %v4771, %v4772
    %v4774 = vrot.slane %v4773, 1
    %v4775 = vadd.f32 %v4773, %v4774
    %v4776 = vadd.f32 %v4285, %v4640
    %v4777 = vadd.f32 %v4294, %v4649
    %v4778 = vadd.f32 %v4303, %v4658
    %v4779 = vadd.f32 %v4312, %v4667
    %v4780 = vadd.f32 %v4321, %v4676
    %v4781 = vadd.f32 %v4330, %v4685
    %v4782 = vadd.f32 %v4339, %v4694
    %v4783 = vadd.f32 %v4348, %v4703
    %v4784 = vadd.f32 %v4357, %v4712
    %v4785 = vadd.f32 %v4366, %v4721
    %v4786 = vadd.f32 %v4375, %v4730
    %v4787 = vadd.f32 %v4384, %v4739
    %v4788 = vadd.f32 %v4393, %v4748
    %v4789 = vadd.f32 %v4402, %v4757
    %v4790 = vadd.f32 %v4411, %v4766
    %v4791 = vadd.f32 %v4420, %v4775
    %s4792 = sld [smem:[#allocation8 + $0x3]]
    %v4793 = vstv %s4792
    %v4794 = vadd.f32 %v4776, %v4793
    %v4795 = vadd.f32 %v4777, %v4793
    %v4796 = vadd.f32 %v4778, %v4793
    %v4797 = vadd.f32 %v4779, %v4793
    %v4798 = vadd.f32 %v4780, %v4793
    %v4799 = vadd.f32 %v4781, %v4793
    %v4800 = vadd.f32 %v4782, %v4793
    %v4801 = vadd.f32 %v4783, %v4793
    %v4802 = vadd.f32 %v4784, %v4793
    %v4803 = vadd.f32 %v4785, %v4793
    %v4804 = vadd.f32 %v4786, %v4793
    %v4805 = vadd.f32 %v4787, %v4793
    %v4806 = vadd.f32 %v4788, %v4793
    %v4807 = vadd.f32 %v4789, %v4793
    %v4808 = vadd.f32 %v4790, %v4793
    %v4809 = vadd.f32 %v4791, %v4793
    %v4826 = vsel %vm3020, %v4795, %v4794
    %v4827 = vsel %vm3022, %v4796, %v4826
    %v4828 = vsel %vm3024, %v4797, %v4827
    %v4829 = vsel %vm3026, %v4798, %v4828
    %v4830 = vsel %vm3028, %v4799, %v4829
    %v4831 = vsel %vm3030, %v4800, %v4830
    %v4832 = vsel %vm3032, %v4801, %v4831
    %v4833 = vsel %vm3020, %v4803, %v4802
    %v4834 = vsel %vm3022, %v4804, %v4833
    %v4835 = vsel %vm3024, %v4805, %v4834
    %v4836 = vsel %vm3026, %v4806, %v4835
    %v4837 = vsel %vm3028, %v4807, %v4836
    %v4838 = vsel %vm3030, %v4808, %v4837
    %v4839 = vsel %vm3032, %v4809, %v4838
    %s4842 = scalar_lea.vmem [#allocation16], 48
    %4843 = vst.msk [vmem:[%s4842] sm:$0xff] %vm1959, %v4832
    %4844 = vst.msk [vmem:[%s4842 + $0x8] sm:$0xff] %vm1959, %v4839
    %s4845 = sld [smem:[#allocation2 + $0x40]]
    %v4846 = vstv %s4845
    %v4847 = vmul.f32 %v4846, %v117
    %v4848 = vmul.f32 %v4846, %v118
    %s4849 = sld [smem:[#allocation2 + $0x41]]
    %v4850 = vstv %s4849
    %v4851 = vmul.f32 %v4850, %v119
    %v4852 = vmul.f32 %v4850, %v120
    %v4853 = vadd.f32 %v4847, %v4851
    %v4854 = vadd.f32 %v4848, %v4852
    %s4855 = sld [smem:[#allocation2 + $0x42]]
    %v4856 = vstv %s4855
    %v4857 = vmul.f32 %v4856, %v121
    %v4858 = vmul.f32 %v4856, %v122
    %v4859 = vadd.f32 %v4853, %v4857
    %v4860 = vadd.f32 %v4854, %v4858
    %s4861 = sld [smem:[#allocation2 + $0x43]]
    %v4862 = vstv %s4861
    %v4863 = vmul.f32 %v4862, %v123
    %v4864 = vmul.f32 %v4862, %v124
    %v4865 = vadd.f32 %v4859, %v4863
    %v4866 = vadd.f32 %v4860, %v4864
    %s4867 = sld [smem:[#allocation2 + $0x44]]
    %v4868 = vstv %s4867
    %v4869 = vmul.f32 %v4868, %v125
    %v4870 = vmul.f32 %v4868, %v126
    %v4871 = vadd.f32 %v4865, %v4869
    %v4872 = vadd.f32 %v4866, %v4870
    %s4873 = sld [smem:[#allocation2 + $0x45]]
    %v4874 = vstv %s4873
    %v4875 = vmul.f32 %v4874, %v127
    %v4876 = vmul.f32 %v4874, %v128
    %v4877 = vadd.f32 %v4871, %v4875
    %v4878 = vadd.f32 %v4872, %v4876
    %s4879 = sld [smem:[#allocation2 + $0x46]]
    %v4880 = vstv %s4879
    %v4881 = vmul.f32 %v4880, %v129
    %v4882 = vmul.f32 %v4880, %v130
    %v4883 = vadd.f32 %v4877, %v4881
    %v4884 = vadd.f32 %v4878, %v4882
    %s4885 = sld [smem:[#allocation2 + $0x47]]
    %v4886 = vstv %s4885
    %v4887 = vmul.f32 %v4886, %v131
    %v4888 = vmul.f32 %v4886, %v132
    %v4889 = vadd.f32 %v4883, %v4887
    %v4890 = vadd.f32 %v4884, %v4888
    %s4891 = sld [smem:[#allocation7 + $0x8]]
    %v4892 = vstv %s4891
    %v4893 = vadd.f32 %v4889, %v4892
    %v4894 = vadd.f32 %v4890, %v4892
    %s4895 = sld [smem:[#allocation2 + $0x48]]
    %v4896 = vstv %s4895
    %v4897 = vmul.f32 %v4896, %v117
    %v4898 = vmul.f32 %v4896, %v118
    %s4899 = sld [smem:[#allocation2 + $0x49]]
    %v4900 = vstv %s4899
    %v4901 = vmul.f32 %v4900, %v119
    %v4902 = vmul.f32 %v4900, %v120
    %v4903 = vadd.f32 %v4897, %v4901
    %v4904 = vadd.f32 %v4898, %v4902
    %s4905 = sld [smem:[#allocation2 + $0x4a]]
    %v4906 = vstv %s4905
    %v4907 = vmul.f32 %v4906, %v121
    %v4908 = vmul.f32 %v4906, %v122
    %v4909 = vadd.f32 %v4903, %v4907
    %v4910 = vadd.f32 %v4904, %v4908
    %s4911 = sld [smem:[#allocation2 + $0x4b]]
    %v4912 = vstv %s4911
    %v4913 = vmul.f32 %v4912, %v123
    %v4914 = vmul.f32 %v4912, %v124
    %v4915 = vadd.f32 %v4909, %v4913
    %v4916 = vadd.f32 %v4910, %v4914
    %s4917 = sld [smem:[#allocation2 + $0x4c]]
    %v4918 = vstv %s4917
    %v4919 = vmul.f32 %v4918, %v125
    %v4920 = vmul.f32 %v4918, %v126
    %v4921 = vadd.f32 %v4915, %v4919
    %v4922 = vadd.f32 %v4916, %v4920
    %s4923 = sld [smem:[#allocation2 + $0x4d]]
    %v4924 = vstv %s4923
    %v4925 = vmul.f32 %v4924, %v127
    %v4926 = vmul.f32 %v4924, %v128
    %v4927 = vadd.f32 %v4921, %v4925
    %v4928 = vadd.f32 %v4922, %v4926
    %s4929 = sld [smem:[#allocation2 + $0x4e]]
    %v4930 = vstv %s4929
    %v4931 = vmul.f32 %v4930, %v129
    %v4932 = vmul.f32 %v4930, %v130
    %v4933 = vadd.f32 %v4927, %v4931
    %v4934 = vadd.f32 %v4928, %v4932
    %s4935 = sld [smem:[#allocation2 + $0x4f]]
    %v4936 = vstv %s4935
    %v4937 = vmul.f32 %v4936, %v131
    %v4938 = vmul.f32 %v4936, %v132
    %v4939 = vadd.f32 %v4933, %v4937
    %v4940 = vadd.f32 %v4934, %v4938
    %s4941 = sld [smem:[#allocation7 + $0x9]]
    %v4942 = vstv %s4941
    %v4943 = vadd.f32 %v4939, %v4942
    %v4944 = vadd.f32 %v4940, %v4942
    %s4945 = sld [smem:[#allocation2 + $0x50]]
    %v4946 = vstv %s4945
    %v4947 = vmul.f32 %v4946, %v117
    %v4948 = vmul.f32 %v4946, %v118
    %s4949 = sld [smem:[#allocation2 + $0x51]]
    %v4950 = vstv %s4949
    %v4951 = vmul.f32 %v4950, %v119
    %v4952 = vmul.f32 %v4950, %v120
    %v4953 = vadd.f32 %v4947, %v4951
    %v4954 = vadd.f32 %v4948, %v4952
    %s4955 = sld [smem:[#allocation2 + $0x52]]
    %v4956 = vstv %s4955
    %v4957 = vmul.f32 %v4956, %v121
    %v4958 = vmul.f32 %v4956, %v122
    %v4959 = vadd.f32 %v4953, %v4957
    %v4960 = vadd.f32 %v4954, %v4958
    %s4961 = sld [smem:[#allocation2 + $0x53]]
    %v4962 = vstv %s4961
    %v4963 = vmul.f32 %v4962, %v123
    %v4964 = vmul.f32 %v4962, %v124
    %v4965 = vadd.f32 %v4959, %v4963
    %v4966 = vadd.f32 %v4960, %v4964
    %s4967 = sld [smem:[#allocation2 + $0x54]]
    %v4968 = vstv %s4967
    %v4969 = vmul.f32 %v4968, %v125
    %v4970 = vmul.f32 %v4968, %v126
    %v4971 = vadd.f32 %v4965, %v4969
    %v4972 = vadd.f32 %v4966, %v4970
    %s4973 = sld [smem:[#allocation2 + $0x55]]
    %v4974 = vstv %s4973
    %v4975 = vmul.f32 %v4974, %v127
    %v4976 = vmul.f32 %v4974, %v128
    %v4977 = vadd.f32 %v4971, %v4975
    %v4978 = vadd.f32 %v4972, %v4976
    %s4979 = sld [smem:[#allocation2 + $0x56]]
    %v4980 = vstv %s4979
    %v4981 = vmul.f32 %v4980, %v129
    %v4982 = vmul.f32 %v4980, %v130
    %v4983 = vadd.f32 %v4977, %v4981
    %v4984 = vadd.f32 %v4978, %v4982
    %s4985 = sld [smem:[#allocation2 + $0x57]]
    %v4986 = vstv %s4985
    %v4987 = vmul.f32 %v4986, %v131
    %v4988 = vmul.f32 %v4986, %v132
    %v4989 = vadd.f32 %v4983, %v4987
    %v4990 = vadd.f32 %v4984, %v4988
    %s4991 = sld [smem:[#allocation7 + $0xa]]
    %v4992 = vstv %s4991
    %v4993 = vadd.f32 %v4989, %v4992
    %v4994 = vadd.f32 %v4990, %v4992
    %s4995 = sld [smem:[#allocation2 + $0x58]]
    %v4996 = vstv %s4995
    %v4997 = vmul.f32 %v4996, %v117
    %v4998 = vmul.f32 %v4996, %v118
    %s4999 = sld [smem:[#allocation2 + $0x59]]
    %v5000 = vstv %s4999
    %v5001 = vmul.f32 %v5000, %v119
    %v5002 = vmul.f32 %v5000, %v120
    %v5003 = vadd.f32 %v4997, %v5001
    %v5004 = vadd.f32 %v4998, %v5002
    %s5005 = sld [smem:[#allocation2 + $0x5a]]
    %v5006 = vstv %s5005
    %v5007 = vmul.f32 %v5006, %v121
    %v5008 = vmul.f32 %v5006, %v122
    %v5009 = vadd.f32 %v5003, %v5007
    %v5010 = vadd.f32 %v5004, %v5008
    %s5011 = sld [smem:[#allocation2 + $0x5b]]
    %v5012 = vstv %s5011
    %v5013 = vmul.f32 %v5012, %v123
    %v5014 = vmul.f32 %v5012, %v124
    %v5015 = vadd.f32 %v5009, %v5013
    %v5016 = vadd.f32 %v5010, %v5014
    %s5017 = sld [smem:[#allocation2 + $0x5c]]
    %v5018 = vstv %s5017
    %v5019 = vmul.f32 %v5018, %v125
    %v5020 = vmul.f32 %v5018, %v126
    %v5021 = vadd.f32 %v5015, %v5019
    %v5022 = vadd.f32 %v5016, %v5020
    %s5023 = sld [smem:[#allocation2 + $0x5d]]
    %v5024 = vstv %s5023
    %v5025 = vmul.f32 %v5024, %v127
    %v5026 = vmul.f32 %v5024, %v128
    %v5027 = vadd.f32 %v5021, %v5025
    %v5028 = vadd.f32 %v5022, %v5026
    %s5029 = sld [smem:[#allocation2 + $0x5e]]
    %v5030 = vstv %s5029
    %v5031 = vmul.f32 %v5030, %v129
    %v5032 = vmul.f32 %v5030, %v130
    %v5033 = vadd.f32 %v5027, %v5031
    %v5034 = vadd.f32 %v5028, %v5032
    %s5035 = sld [smem:[#allocation2 + $0x5f]]
    %v5036 = vstv %s5035
    %v5037 = vmul.f32 %v5036, %v131
    %v5038 = vmul.f32 %v5036, %v132
    %v5039 = vadd.f32 %v5033, %v5037
    %v5040 = vadd.f32 %v5034, %v5038
    %s5041 = sld [smem:[#allocation7 + $0xb]]
    %v5042 = vstv %s5041
    %v5043 = vadd.f32 %v5039, %v5042
    %v5044 = vadd.f32 %v5040, %v5042
    %s5045 = sld [smem:[#allocation2 + $0x60]]
    %v5046 = vstv %s5045
    %v5047 = vmul.f32 %v5046, %v117
    %v5048 = vmul.f32 %v5046, %v118
    %s5049 = sld [smem:[#allocation2 + $0x61]]
    %v5050 = vstv %s5049
    %v5051 = vmul.f32 %v5050, %v119
    %v5052 = vmul.f32 %v5050, %v120
    %v5053 = vadd.f32 %v5047, %v5051
    %v5054 = vadd.f32 %v5048, %v5052
    %s5055 = sld [smem:[#allocation2 + $0x62]]
    %v5056 = vstv %s5055
    %v5057 = vmul.f32 %v5056, %v121
    %v5058 = vmul.f32 %v5056, %v122
    %v5059 = vadd.f32 %v5053, %v5057
    %v5060 = vadd.f32 %v5054, %v5058
    %s5061 = sld [smem:[#allocation2 + $0x63]]
    %v5062 = vstv %s5061
    %v5063 = vmul.f32 %v5062, %v123
    %v5064 = vmul.f32 %v5062, %v124
    %v5065 = vadd.f32 %v5059, %v5063
    %v5066 = vadd.f32 %v5060, %v5064
    %s5067 = sld [smem:[#allocation2 + $0x64]]
    %v5068 = vstv %s5067
    %v5069 = vmul.f32 %v5068, %v125
    %v5070 = vmul.f32 %v5068, %v126
    %v5071 = vadd.f32 %v5065, %v5069
    %v5072 = vadd.f32 %v5066, %v5070
    %s5073 = sld [smem:[#allocation2 + $0x65]]
    %v5074 = vstv %s5073
    %v5075 = vmul.f32 %v5074, %v127
    %v5076 = vmul.f32 %v5074, %v128
    %v5077 = vadd.f32 %v5071, %v5075
    %v5078 = vadd.f32 %v5072, %v5076
    %s5079 = sld [smem:[#allocation2 + $0x66]]
    %v5080 = vstv %s5079
    %v5081 = vmul.f32 %v5080, %v129
    %v5082 = vmul.f32 %v5080, %v130
    %v5083 = vadd.f32 %v5077, %v5081
    %v5084 = vadd.f32 %v5078, %v5082
    %s5085 = sld [smem:[#allocation2 + $0x67]]
    %v5086 = vstv %s5085
    %v5087 = vmul.f32 %v5086, %v131
    %v5088 = vmul.f32 %v5086, %v132
    %v5089 = vadd.f32 %v5083, %v5087
    %v5090 = vadd.f32 %v5084, %v5088
    %s5091 = sld [smem:[#allocation7 + $0xc]]
    %v5092 = vstv %s5091
    %v5093 = vadd.f32 %v5089, %v5092
    %v5094 = vadd.f32 %v5090, %v5092
    %s5095 = sld [smem:[#allocation2 + $0x68]]
    %v5096 = vstv %s5095
    %v5097 = vmul.f32 %v5096, %v117
    %v5098 = vmul.f32 %v5096, %v118
    %s5099 = sld [smem:[#allocation2 + $0x69]]
    %v5100 = vstv %s5099
    %v5101 = vmul.f32 %v5100, %v119
    %v5102 = vmul.f32 %v5100, %v120
    %v5103 = vadd.f32 %v5097, %v5101
    %v5104 = vadd.f32 %v5098, %v5102
    %s5105 = sld [smem:[#allocation2 + $0x6a]]
    %v5106 = vstv %s5105
    %v5107 = vmul.f32 %v5106, %v121
    %v5108 = vmul.f32 %v5106, %v122
    %v5109 = vadd.f32 %v5103, %v5107
    %v5110 = vadd.f32 %v5104, %v5108
    %s5111 = sld [smem:[#allocation2 + $0x6b]]
    %v5112 = vstv %s5111
    %v5113 = vmul.f32 %v5112, %v123
    %v5114 = vmul.f32 %v5112, %v124
    %v5115 = vadd.f32 %v5109, %v5113
    %v5116 = vadd.f32 %v5110, %v5114
    %s5117 = sld [smem:[#allocation2 + $0x6c]]
    %v5118 = vstv %s5117
    %v5119 = vmul.f32 %v5118, %v125
    %v5120 = vmul.f32 %v5118, %v126
    %v5121 = vadd.f32 %v5115, %v5119
    %v5122 = vadd.f32 %v5116, %v5120
    %s5123 = sld [smem:[#allocation2 + $0x6d]]
    %v5124 = vstv %s5123
    %v5125 = vmul.f32 %v5124, %v127
    %v5126 = vmul.f32 %v5124, %v128
    %v5127 = vadd.f32 %v5121, %v5125
    %v5128 = vadd.f32 %v5122, %v5126
    %s5129 = sld [smem:[#allocation2 + $0x6e]]
    %v5130 = vstv %s5129
    %v5131 = vmul.f32 %v5130, %v129
    %v5132 = vmul.f32 %v5130, %v130
    %v5133 = vadd.f32 %v5127, %v5131
    %v5134 = vadd.f32 %v5128, %v5132
    %s5135 = sld [smem:[#allocation2 + $0x6f]]
    %v5136 = vstv %s5135
    %v5137 = vmul.f32 %v5136, %v131
    %v5138 = vmul.f32 %v5136, %v132
    %v5139 = vadd.f32 %v5133, %v5137
    %v5140 = vadd.f32 %v5134, %v5138
    %s5141 = sld [smem:[#allocation7 + $0xd]]
    %v5142 = vstv %s5141
    %v5143 = vadd.f32 %v5139, %v5142
    %v5144 = vadd.f32 %v5140, %v5142
    %s5145 = sld [smem:[#allocation2 + $0x70]]
    %v5146 = vstv %s5145
    %v5147 = vmul.f32 %v5146, %v117
    %v5148 = vmul.f32 %v5146, %v118
    %s5149 = sld [smem:[#allocation2 + $0x71]]
    %v5150 = vstv %s5149
    %v5151 = vmul.f32 %v5150, %v119
    %v5152 = vmul.f32 %v5150, %v120
    %v5153 = vadd.f32 %v5147, %v5151
    %v5154 = vadd.f32 %v5148, %v5152
    %s5155 = sld [smem:[#allocation2 + $0x72]]
    %v5156 = vstv %s5155
    %v5157 = vmul.f32 %v5156, %v121
    %v5158 = vmul.f32 %v5156, %v122
    %v5159 = vadd.f32 %v5153, %v5157
    %v5160 = vadd.f32 %v5154, %v5158
    %s5161 = sld [smem:[#allocation2 + $0x73]]
    %v5162 = vstv %s5161
    %v5163 = vmul.f32 %v5162, %v123
    %v5164 = vmul.f32 %v5162, %v124
    %v5165 = vadd.f32 %v5159, %v5163
    %v5166 = vadd.f32 %v5160, %v5164
    %s5167 = sld [smem:[#allocation2 + $0x74]]
    %v5168 = vstv %s5167
    %v5169 = vmul.f32 %v5168, %v125
    %v5170 = vmul.f32 %v5168, %v126
    %v5171 = vadd.f32 %v5165, %v5169
    %v5172 = vadd.f32 %v5166, %v5170
    %s5173 = sld [smem:[#allocation2 + $0x75]]
    %v5174 = vstv %s5173
    %v5175 = vmul.f32 %v5174, %v127
    %v5176 = vmul.f32 %v5174, %v128
    %v5177 = vadd.f32 %v5171, %v5175
    %v5178 = vadd.f32 %v5172, %v5176
    %s5179 = sld [smem:[#allocation2 + $0x76]]
    %v5180 = vstv %s5179
    %v5181 = vmul.f32 %v5180, %v129
    %v5182 = vmul.f32 %v5180, %v130
    %v5183 = vadd.f32 %v5177, %v5181
    %v5184 = vadd.f32 %v5178, %v5182
    %s5185 = sld [smem:[#allocation2 + $0x77]]
    %v5186 = vstv %s5185
    %v5187 = vmul.f32 %v5186, %v131
    %v5188 = vmul.f32 %v5186, %v132
    %v5189 = vadd.f32 %v5183, %v5187
    %v5190 = vadd.f32 %v5184, %v5188
    %s5191 = sld [smem:[#allocation7 + $0xe]]
    %v5192 = vstv %s5191
    %v5193 = vadd.f32 %v5189, %v5192
    %v5194 = vadd.f32 %v5190, %v5192
    %s5195 = sld [smem:[#allocation2 + $0x78]]
    %v5196 = vstv %s5195
    %v5197 = vmul.f32 %v5196, %v117
    %v5198 = vmul.f32 %v5196, %v118
    %s5199 = sld [smem:[#allocation2 + $0x79]]
    %v5200 = vstv %s5199
    %v5201 = vmul.f32 %v5200, %v119
    %v5202 = vmul.f32 %v5200, %v120
    %v5203 = vadd.f32 %v5197, %v5201
    %v5204 = vadd.f32 %v5198, %v5202
    %s5205 = sld [smem:[#allocation2 + $0x7a]]
    %v5206 = vstv %s5205
    %v5207 = vmul.f32 %v5206, %v121
    %v5208 = vmul.f32 %v5206, %v122
    %v5209 = vadd.f32 %v5203, %v5207
    %v5210 = vadd.f32 %v5204, %v5208
    %s5211 = sld [smem:[#allocation2 + $0x7b]]
    %v5212 = vstv %s5211
    %v5213 = vmul.f32 %v5212, %v123
    %v5214 = vmul.f32 %v5212, %v124
    %v5215 = vadd.f32 %v5209, %v5213
    %v5216 = vadd.f32 %v5210, %v5214
    %s5217 = sld [smem:[#allocation2 + $0x7c]]
    %v5218 = vstv %s5217
    %v5219 = vmul.f32 %v5218, %v125
    %v5220 = vmul.f32 %v5218, %v126
    %v5221 = vadd.f32 %v5215, %v5219
    %v5222 = vadd.f32 %v5216, %v5220
    %s5223 = sld [smem:[#allocation2 + $0x7d]]
    %v5224 = vstv %s5223
    %v5225 = vmul.f32 %v5224, %v127
    %v5226 = vmul.f32 %v5224, %v128
    %v5227 = vadd.f32 %v5221, %v5225
    %v5228 = vadd.f32 %v5222, %v5226
    %s5229 = sld [smem:[#allocation2 + $0x7e]]
    %v5230 = vstv %s5229
    %v5231 = vmul.f32 %v5230, %v129
    %v5232 = vmul.f32 %v5230, %v130
    %v5233 = vadd.f32 %v5227, %v5231
    %v5234 = vadd.f32 %v5228, %v5232
    %s5235 = sld [smem:[#allocation2 + $0x7f]]
    %v5236 = vstv %s5235
    %v5237 = vmul.f32 %v5236, %v131
    %v5238 = vmul.f32 %v5236, %v132
    %v5239 = vadd.f32 %v5233, %v5237
    %v5240 = vadd.f32 %v5234, %v5238
    %s5241 = sld [smem:[#allocation7 + $0xf]]
    %v5242 = vstv %s5241
    %v5243 = vadd.f32 %v5239, %v5242
    %v5244 = vadd.f32 %v5240, %v5242
    %v5247 = vcombine.high %v4893, %v4893
    %v5249 = vunpack.c.l.s4 1966171168
    %v5250 = vunpack.c.0.s8 %v5249
    %v5251 = vlaneseq
    %v5252 = vshrl.u32 %v5251, 7
    %v5253 = vsub.s32 %v5250, %v5252
    %v5254 = vrot.slane %v4893, %v5253
    %v5256 = vunpack.c.l.s4 1966171168
    %v5257 = vunpack.c.0.s8 %v5256
    %v5258 = vlaneseq
    %v5259 = vshrl.u32 %v5258, 7
    %v5260 = vsub.s32 %v5257, %v5259
    %v5261 = vrot.slane %v5247, %v5260
    %v5262 = vcombine.high %v5254, %v5254
    %v5263 = vcombine.high %v5261, %v5261
    %v5265 = vunpack.c.l.s4 1966171168
    %v5266 = vunpack.c.0.s8 %v5265
    %v5267 = vlaneseq
    %v5268 = vshrl.u32 %v5267, 7
    %v5269 = vsub.s32 %v5266, %v5268
    %v5270 = vrot.slane %v5254, %v5269
    %v5272 = vunpack.c.l.s4 1966171168
    %v5273 = vunpack.c.0.s8 %v5272
    %v5274 = vlaneseq
    %v5275 = vshrl.u32 %v5274, 7
    %v5276 = vsub.s32 %v5273, %v5275
    %v5277 = vrot.slane %v5261, %v5276
    %v5279 = vunpack.c.l.s4 1966171168
    %v5280 = vunpack.c.0.s8 %v5279
    %v5281 = vlaneseq
    %v5282 = vshrl.u32 %v5281, 7
    %v5283 = vsub.s32 %v5280, %v5282
    %v5284 = vrot.slane %v5262, %v5283
    %v5286 = vunpack.c.l.s4 1966171168
    %v5287 = vunpack.c.0.s8 %v5286
    %v5288 = vlaneseq
    %v5289 = vshrl.u32 %v5288, 7
    %v5290 = vsub.s32 %v5287, %v5289
    %v5291 = vrot.slane %v5263, %v5290
    %v5292 = vcombine.high %v5270, %v5270
    %v5293 = vcombine.high %v5277, %v5277
    %v5294 = vcombine.high %v5284, %v5284
    %v5295 = vcombine.high %v5291, %v5291
    %v5296 = vcombine.high %v4894, %v4894
    %v5298 = vunpack.c.l.s4 1966171168
    %v5299 = vunpack.c.0.s8 %v5298
    %v5300 = vlaneseq
    %v5301 = vshrl.u32 %v5300, 7
    %v5302 = vsub.s32 %v5299, %v5301
    %v5303 = vrot.slane %v4894, %v5302
    %v5305 = vunpack.c.l.s4 1966171168
    %v5306 = vunpack.c.0.s8 %v5305
    %v5307 = vlaneseq
    %v5308 = vshrl.u32 %v5307, 7
    %v5309 = vsub.s32 %v5306, %v5308
    %v5310 = vrot.slane %v5296, %v5309
    %v5311 = vcombine.high %v5303, %v5303
    %v5312 = vcombine.high %v5310, %v5310
    %v5314 = vunpack.c.l.s4 1966171168
    %v5315 = vunpack.c.0.s8 %v5314
    %v5316 = vlaneseq
    %v5317 = vshrl.u32 %v5316, 7
    %v5318 = vsub.s32 %v5315, %v5317
    %v5319 = vrot.slane %v5303, %v5318
    %v5321 = vunpack.c.l.s4 1966171168
    %v5322 = vunpack.c.0.s8 %v5321
    %v5323 = vlaneseq
    %v5324 = vshrl.u32 %v5323, 7
    %v5325 = vsub.s32 %v5322, %v5324
    %v5326 = vrot.slane %v5310, %v5325
    %v5328 = vunpack.c.l.s4 1966171168
    %v5329 = vunpack.c.0.s8 %v5328
    %v5330 = vlaneseq
    %v5331 = vshrl.u32 %v5330, 7
    %v5332 = vsub.s32 %v5329, %v5331
    %v5333 = vrot.slane %v5311, %v5332
    %v5335 = vunpack.c.l.s4 1966171168
    %v5336 = vunpack.c.0.s8 %v5335
    %v5337 = vlaneseq
    %v5338 = vshrl.u32 %v5337, 7
    %v5339 = vsub.s32 %v5336, %v5338
    %v5340 = vrot.slane %v5312, %v5339
    %v5341 = vcombine.high %v5319, %v5319
    %v5342 = vcombine.high %v5326, %v5326
    %v5343 = vcombine.high %v5333, %v5333
    %v5344 = vcombine.high %v5340, %v5340
    %v5345 = vlaneseq
    %v5346 = vshrl.u32 %v5345, 7
    %v5347 = vsub.s32 0, %v5346
    %v5348 = vrot.slane %v5270, %v5347
    %v5349 = vlaneseq
    %v5350 = vshrl.u32 %v5349, 7
    %v5351 = vsub.s32 0, %v5350
    %v5352 = vrot.slane %v5284, %v5351
    %v5353 = vlaneseq
    %v5354 = vshrl.u32 %v5353, 7
    %v5355 = vsub.s32 0, %v5354
    %v5356 = vrot.slane %v5292, %v5355
    %v5357 = vlaneseq
    %v5358 = vshrl.u32 %v5357, 7
    %v5359 = vsub.s32 0, %v5358
    %v5360 = vrot.slane %v5294, %v5359
    %v5361 = vlaneseq
    %v5362 = vshrl.u32 %v5361, 7
    %v5363 = vsub.s32 0, %v5362
    %v5364 = vrot.slane %v5277, %v5363
    %v5365 = vlaneseq
    %v5366 = vshrl.u32 %v5365, 7
    %v5367 = vsub.s32 0, %v5366
    %v5368 = vrot.slane %v5291, %v5367
    %v5369 = vlaneseq
    %v5370 = vshrl.u32 %v5369, 7
    %v5371 = vsub.s32 0, %v5370
    %v5372 = vrot.slane %v5293, %v5371
    %v5373 = vlaneseq
    %v5374 = vshrl.u32 %v5373, 7
    %v5375 = vsub.s32 0, %v5374
    %v5376 = vrot.slane %v5295, %v5375
    %v5377 = vlaneseq
    %v5378 = vshrl.u32 %v5377, 7
    %v5379 = vsub.s32 0, %v5378
    %v5380 = vrot.slane %v5319, %v5379
    %v5381 = vlaneseq
    %v5382 = vshrl.u32 %v5381, 7
    %v5383 = vsub.s32 0, %v5382
    %v5384 = vrot.slane %v5333, %v5383
    %v5385 = vlaneseq
    %v5386 = vshrl.u32 %v5385, 7
    %v5387 = vsub.s32 0, %v5386
    %v5388 = vrot.slane %v5341, %v5387
    %v5389 = vlaneseq
    %v5390 = vshrl.u32 %v5389, 7
    %v5391 = vsub.s32 0, %v5390
    %v5392 = vrot.slane %v5343, %v5391
    %v5393 = vlaneseq
    %v5394 = vshrl.u32 %v5393, 7
    %v5395 = vsub.s32 0, %v5394
    %v5396 = vrot.slane %v5326, %v5395
    %v5397 = vlaneseq
    %v5398 = vshrl.u32 %v5397, 7
    %v5399 = vsub.s32 0, %v5398
    %v5400 = vrot.slane %v5340, %v5399
    %v5401 = vlaneseq
    %v5402 = vshrl.u32 %v5401, 7
    %v5403 = vsub.s32 0, %v5402
    %v5404 = vrot.slane %v5342, %v5403
    %v5405 = vlaneseq
    %v5406 = vshrl.u32 %v5405, 7
    %v5407 = vsub.s32 0, %v5406
    %v5408 = vrot.slane %v5344, %v5407
    %v5425 = vmul.f32 %v5348, %v4993
    %v5426 = vmul.f32 %v5348, %v4994
    %v5427 = vmul.f32 %v5352, %v4993
    %v5428 = vmul.f32 %v5352, %v4994
    %v5429 = vmul.f32 %v5356, %v4993
    %v5430 = vmul.f32 %v5356, %v4994
    %v5431 = vmul.f32 %v5360, %v4993
    %v5432 = vmul.f32 %v5360, %v4994
    %v5433 = vmul.f32 %v5364, %v4993
    %v5434 = vmul.f32 %v5364, %v4994
    %v5435 = vmul.f32 %v5368, %v4993
    %v5436 = vmul.f32 %v5368, %v4994
    %v5437 = vmul.f32 %v5372, %v4993
    %v5438 = vmul.f32 %v5372, %v4994
    %v5439 = vmul.f32 %v5376, %v4993
    %v5440 = vmul.f32 %v5376, %v4994
    %v5441 = vmul.f32 %v5380, %v4993
    %v5442 = vmul.f32 %v5380, %v4994
    %v5443 = vmul.f32 %v5384, %v4993
    %v5444 = vmul.f32 %v5384, %v4994
    %v5445 = vmul.f32 %v5388, %v4993
    %v5446 = vmul.f32 %v5388, %v4994
    %v5447 = vmul.f32 %v5392, %v4993
    %v5448 = vmul.f32 %v5392, %v4994
    %v5449 = vmul.f32 %v5396, %v4993
    %v5450 = vmul.f32 %v5396, %v4994
    %v5451 = vmul.f32 %v5400, %v4993
    %v5452 = vmul.f32 %v5400, %v4994
    %v5453 = vmul.f32 %v5404, %v4993
    %v5454 = vmul.f32 %v5404, %v4994
    %v5455 = vmul.f32 %v5408, %v4993
    %v5456 = vmul.f32 %v5408, %v4994
    %s5457 = scalar_lea.vmem [#allocation11], 32
    %v5458 = vld [vmem:[%s5457] sm:$0xff]
    %v5459 = vld [vmem:[%s5457 + $0x8] sm:$0xff]
    %v5460 = vlaneseq
    %v5461 = vshrl.u32 %v5460, 7
    %v5462 = vsub.s32 0, %v5461
    %v5463 = vrot.slane %v5458, %v5462
    %5465 = vbcast.lane.b32.xlu0 %v5463, 256
    %v5466 = vpop.permute.xlu0 %5465
    %s5468 = sor.u32 256, 8
    %5469 = vbcast.lane.b32.xlu0 %v5463, %s5468
    %v5470 = vpop.permute.xlu0 %5469
    %v5471 = vlaneseq
    %v5472 = vshrl.u32 %v5471, 7
    %v5473 = vsub.s32 1, %v5472
    %v5474 = vrot.slane %v5458, %v5473
    %5476 = vbcast.lane.b32.xlu0 %v5474, 256
    %v5477 = vpop.permute.xlu0 %5476
    %s5479 = sor.u32 256, 8
    %5480 = vbcast.lane.b32.xlu0 %v5474, %s5479
    %v5481 = vpop.permute.xlu0 %5480
    %v5482 = vlaneseq
    %v5483 = vshrl.u32 %v5482, 7
    %v5484 = vsub.s32 2, %v5483
    %v5485 = vrot.slane %v5458, %v5484
    %5487 = vbcast.lane.b32.xlu0 %v5485, 256
    %v5488 = vpop.permute.xlu0 %5487
    %s5490 = sor.u32 256, 8
    %5491 = vbcast.lane.b32.xlu0 %v5485, %s5490
    %v5492 = vpop.permute.xlu0 %5491
    %v5493 = vlaneseq
    %v5494 = vshrl.u32 %v5493, 7
    %v5495 = vsub.s32 3, %v5494
    %v5496 = vrot.slane %v5458, %v5495
    %5498 = vbcast.lane.b32.xlu0 %v5496, 256
    %v5499 = vpop.permute.xlu0 %5498
    %s5501 = sor.u32 256, 8
    %5502 = vbcast.lane.b32.xlu0 %v5496, %s5501
    %v5503 = vpop.permute.xlu0 %5502
    %v5504 = vlaneseq
    %v5505 = vshrl.u32 %v5504, 7
    %v5506 = vsub.s32 4, %v5505
    %v5507 = vrot.slane %v5458, %v5506
    %5509 = vbcast.lane.b32.xlu0 %v5507, 256
    %v5510 = vpop.permute.xlu0 %5509
    %s5512 = sor.u32 256, 8
    %5513 = vbcast.lane.b32.xlu0 %v5507, %s5512
    %v5514 = vpop.permute.xlu0 %5513
    %v5515 = vlaneseq
    %v5516 = vshrl.u32 %v5515, 7
    %v5517 = vsub.s32 5, %v5516
    %v5518 = vrot.slane %v5458, %v5517
    %5520 = vbcast.lane.b32.xlu0 %v5518, 256
    %v5521 = vpop.permute.xlu0 %5520
    %s5523 = sor.u32 256, 8
    %5524 = vbcast.lane.b32.xlu0 %v5518, %s5523
    %v5525 = vpop.permute.xlu0 %5524
    %v5526 = vlaneseq
    %v5527 = vshrl.u32 %v5526, 7
    %v5528 = vsub.s32 6, %v5527
    %v5529 = vrot.slane %v5458, %v5528
    %5531 = vbcast.lane.b32.xlu0 %v5529, 256
    %v5532 = vpop.permute.xlu0 %5531
    %s5534 = sor.u32 256, 8
    %5535 = vbcast.lane.b32.xlu0 %v5529, %s5534
    %v5536 = vpop.permute.xlu0 %5535
    %v5537 = vlaneseq
    %v5538 = vshrl.u32 %v5537, 7
    %v5539 = vsub.s32 7, %v5538
    %v5540 = vrot.slane %v5458, %v5539
    %5542 = vbcast.lane.b32.xlu0 %v5540, 256
    %v5543 = vpop.permute.xlu0 %5542
    %s5545 = sor.u32 256, 8
    %5546 = vbcast.lane.b32.xlu0 %v5540, %s5545
    %v5547 = vpop.permute.xlu0 %5546
    %v5548 = vlaneseq
    %v5549 = vshrl.u32 %v5548, 7
    %v5550 = vsub.s32 0, %v5549
    %v5551 = vrot.slane %v5459, %v5550
    %5553 = vbcast.lane.b32.xlu0 %v5551, 256
    %v5554 = vpop.permute.xlu0 %5553
    %s5556 = sor.u32 256, 8
    %5557 = vbcast.lane.b32.xlu0 %v5551, %s5556
    %v5558 = vpop.permute.xlu0 %5557
    %v5559 = vlaneseq
    %v5560 = vshrl.u32 %v5559, 7
    %v5561 = vsub.s32 1, %v5560
    %v5562 = vrot.slane %v5459, %v5561
    %5564 = vbcast.lane.b32.xlu0 %v5562, 256
    %v5565 = vpop.permute.xlu0 %5564
    %s5567 = sor.u32 256, 8
    %5568 = vbcast.lane.b32.xlu0 %v5562, %s5567
    %v5569 = vpop.permute.xlu0 %5568
    %v5570 = vlaneseq
    %v5571 = vshrl.u32 %v5570, 7
    %v5572 = vsub.s32 2, %v5571
    %v5573 = vrot.slane %v5459, %v5572
    %5575 = vbcast.lane.b32.xlu0 %v5573, 256
    %v5576 = vpop.permute.xlu0 %5575
    %s5578 = sor.u32 256, 8
    %5579 = vbcast.lane.b32.xlu0 %v5573, %s5578
    %v5580 = vpop.permute.xlu0 %5579
    %v5581 = vlaneseq
    %v5582 = vshrl.u32 %v5581, 7
    %v5583 = vsub.s32 3, %v5582
    %v5584 = vrot.slane %v5459, %v5583
    %5586 = vbcast.lane.b32.xlu0 %v5584, 256
    %v5587 = vpop.permute.xlu0 %5586
    %s5589 = sor.u32 256, 8
    %5590 = vbcast.lane.b32.xlu0 %v5584, %s5589
    %v5591 = vpop.permute.xlu0 %5590
    %v5592 = vlaneseq
    %v5593 = vshrl.u32 %v5592, 7
    %v5594 = vsub.s32 4, %v5593
    %v5595 = vrot.slane %v5459, %v5594
    %5597 = vbcast.lane.b32.xlu0 %v5595, 256
    %v5598 = vpop.permute.xlu0 %5597
    %s5600 = sor.u32 256, 8
    %5601 = vbcast.lane.b32.xlu0 %v5595, %s5600
    %v5602 = vpop.permute.xlu0 %5601
    %v5603 = vlaneseq
    %v5604 = vshrl.u32 %v5603, 7
    %v5605 = vsub.s32 5, %v5604
    %v5606 = vrot.slane %v5459, %v5605
    %5608 = vbcast.lane.b32.xlu0 %v5606, 256
    %v5609 = vpop.permute.xlu0 %5608
    %s5611 = sor.u32 256, 8
    %5612 = vbcast.lane.b32.xlu0 %v5606, %s5611
    %v5613 = vpop.permute.xlu0 %5612
    %v5614 = vlaneseq
    %v5615 = vshrl.u32 %v5614, 7
    %v5616 = vsub.s32 6, %v5615
    %v5617 = vrot.slane %v5459, %v5616
    %5619 = vbcast.lane.b32.xlu0 %v5617, 256
    %v5620 = vpop.permute.xlu0 %5619
    %s5622 = sor.u32 256, 8
    %5623 = vbcast.lane.b32.xlu0 %v5617, %s5622
    %v5624 = vpop.permute.xlu0 %5623
    %v5625 = vlaneseq
    %v5626 = vshrl.u32 %v5625, 7
    %v5627 = vsub.s32 7, %v5626
    %v5628 = vrot.slane %v5459, %v5627
    %5630 = vbcast.lane.b32.xlu0 %v5628, 256
    %v5631 = vpop.permute.xlu0 %5630
    %s5633 = sor.u32 256, 8
    %5634 = vbcast.lane.b32.xlu0 %v5628, %s5633
    %v5635 = vpop.permute.xlu0 %5634
    %v5636 = vmul.f32 %v5348, %v5466
    %v5637 = vmul.f32 %v5348, %v5470
    %v5638 = vmul.f32 %v5352, %v5477
    %v5639 = vmul.f32 %v5352, %v5481
    %v5640 = vmul.f32 %v5356, %v5488
    %v5641 = vmul.f32 %v5356, %v5492
    %v5642 = vmul.f32 %v5360, %v5499
    %v5643 = vmul.f32 %v5360, %v5503
    %v5644 = vmul.f32 %v5364, %v5510
    %v5645 = vmul.f32 %v5364, %v5514
    %v5646 = vmul.f32 %v5368, %v5521
    %v5647 = vmul.f32 %v5368, %v5525
    %v5648 = vmul.f32 %v5372, %v5532
    %v5649 = vmul.f32 %v5372, %v5536
    %v5650 = vmul.f32 %v5376, %v5543
    %v5651 = vmul.f32 %v5376, %v5547
    %v5652 = vmul.f32 %v5380, %v5554
    %v5653 = vmul.f32 %v5380, %v5558
    %v5654 = vmul.f32 %v5384, %v5565
    %v5655 = vmul.f32 %v5384, %v5569
    %v5656 = vmul.f32 %v5388, %v5576
    %v5657 = vmul.f32 %v5388, %v5580
    %v5658 = vmul.f32 %v5392, %v5587
    %v5659 = vmul.f32 %v5392, %v5591
    %v5660 = vmul.f32 %v5396, %v5598
    %v5661 = vmul.f32 %v5396, %v5602
    %v5662 = vmul.f32 %v5400, %v5609
    %v5663 = vmul.f32 %v5400, %v5613
    %v5664 = vmul.f32 %v5404, %v5620
    %v5665 = vmul.f32 %v5404, %v5624
    %v5666 = vmul.f32 %v5408, %v5631
    %v5667 = vmul.f32 %v5408, %v5635
    %v5668 = vadd.f32 %v5425, %v5636
    %v5669 = vadd.f32 %v5426, %v5637
    %v5670 = vadd.f32 %v5427, %v5638
    %v5671 = vadd.f32 %v5428, %v5639
    %v5672 = vadd.f32 %v5429, %v5640
    %v5673 = vadd.f32 %v5430, %v5641
    %v5674 = vadd.f32 %v5431, %v5642
    %v5675 = vadd.f32 %v5432, %v5643
    %v5676 = vadd.f32 %v5433, %v5644
    %v5677 = vadd.f32 %v5434, %v5645
    %v5678 = vadd.f32 %v5435, %v5646
    %v5679 = vadd.f32 %v5436, %v5647
    %v5680 = vadd.f32 %v5437, %v5648
    %v5681 = vadd.f32 %v5438, %v5649
    %v5682 = vadd.f32 %v5439, %v5650
    %v5683 = vadd.f32 %v5440, %v5651
    %v5684 = vadd.f32 %v5441, %v5652
    %v5685 = vadd.f32 %v5442, %v5653
    %v5686 = vadd.f32 %v5443, %v5654
    %v5687 = vadd.f32 %v5444, %v5655
    %v5688 = vadd.f32 %v5445, %v5656
    %v5689 = vadd.f32 %v5446, %v5657
    %v5690 = vadd.f32 %v5447, %v5658
    %v5691 = vadd.f32 %v5448, %v5659
    %v5692 = vadd.f32 %v5449, %v5660
    %v5693 = vadd.f32 %v5450, %v5661
    %v5694 = vadd.f32 %v5451, %v5662
    %v5695 = vadd.f32 %v5452, %v5663
    %v5696 = vadd.f32 %v5453, %v5664
    %v5697 = vadd.f32 %v5454, %v5665
    %v5698 = vadd.f32 %v5455, %v5666
    %v5699 = vadd.f32 %v5456, %v5667
    %s5700 = scalar_lea.vmem [#allocation13], 32
    %v5701 = vld [vmem:[%s5700] sm:$0xff]
    %v5702 = vld [vmem:[%s5700 + $0x8] sm:$0xff]
    %v5703 = vlaneseq
    %v5704 = vshrl.u32 %v5703, 7
    %v5705 = vsub.s32 0, %v5704
    %v5706 = vrot.slane %v5701, %v5705
    %5708 = vbcast.lane.b32.xlu0 %v5706, 256
    %v5709 = vpop.permute.xlu0 %5708
    %s5711 = sor.u32 256, 8
    %5712 = vbcast.lane.b32.xlu0 %v5706, %s5711
    %v5713 = vpop.permute.xlu0 %5712
    %v5714 = vlaneseq
    %v5715 = vshrl.u32 %v5714, 7
    %v5716 = vsub.s32 1, %v5715
    %v5717 = vrot.slane %v5701, %v5716
    %5719 = vbcast.lane.b32.xlu0 %v5717, 256
    %v5720 = vpop.permute.xlu0 %5719
    %s5722 = sor.u32 256, 8
    %5723 = vbcast.lane.b32.xlu0 %v5717, %s5722
    %v5724 = vpop.permute.xlu0 %5723
    %v5725 = vlaneseq
    %v5726 = vshrl.u32 %v5725, 7
    %v5727 = vsub.s32 2, %v5726
    %v5728 = vrot.slane %v5701, %v5727
    %5730 = vbcast.lane.b32.xlu0 %v5728, 256
    %v5731 = vpop.permute.xlu0 %5730
    %s5733 = sor.u32 256, 8
    %5734 = vbcast.lane.b32.xlu0 %v5728, %s5733
    %v5735 = vpop.permute.xlu0 %5734
    %v5736 = vlaneseq
    %v5737 = vshrl.u32 %v5736, 7
    %v5738 = vsub.s32 3, %v5737
    %v5739 = vrot.slane %v5701, %v5738
    %5741 = vbcast.lane.b32.xlu0 %v5739, 256
    %v5742 = vpop.permute.xlu0 %5741
    %s5744 = sor.u32 256, 8
    %5745 = vbcast.lane.b32.xlu0 %v5739, %s5744
    %v5746 = vpop.permute.xlu0 %5745
    %v5747 = vlaneseq
    %v5748 = vshrl.u32 %v5747, 7
    %v5749 = vsub.s32 4, %v5748
    %v5750 = vrot.slane %v5701, %v5749
    %5752 = vbcast.lane.b32.xlu0 %v5750, 256
    %v5753 = vpop.permute.xlu0 %5752
    %s5755 = sor.u32 256, 8
    %5756 = vbcast.lane.b32.xlu0 %v5750, %s5755
    %v5757 = vpop.permute.xlu0 %5756
    %v5758 = vlaneseq
    %v5759 = vshrl.u32 %v5758, 7
    %v5760 = vsub.s32 5, %v5759
    %v5761 = vrot.slane %v5701, %v5760
    %5763 = vbcast.lane.b32.xlu0 %v5761, 256
    %v5764 = vpop.permute.xlu0 %5763
    %s5766 = sor.u32 256, 8
    %5767 = vbcast.lane.b32.xlu0 %v5761, %s5766
    %v5768 = vpop.permute.xlu0 %5767
    %v5769 = vlaneseq
    %v5770 = vshrl.u32 %v5769, 7
    %v5771 = vsub.s32 6, %v5770
    %v5772 = vrot.slane %v5701, %v5771
    %5774 = vbcast.lane.b32.xlu0 %v5772, 256
    %v5775 = vpop.permute.xlu0 %5774
    %s5777 = sor.u32 256, 8
    %5778 = vbcast.lane.b32.xlu0 %v5772, %s5777
    %v5779 = vpop.permute.xlu0 %5778
    %v5780 = vlaneseq
    %v5781 = vshrl.u32 %v5780, 7
    %v5782 = vsub.s32 7, %v5781
    %v5783 = vrot.slane %v5701, %v5782
    %5785 = vbcast.lane.b32.xlu0 %v5783, 256
    %v5786 = vpop.permute.xlu0 %5785
    %s5788 = sor.u32 256, 8
    %5789 = vbcast.lane.b32.xlu0 %v5783, %s5788
    %v5790 = vpop.permute.xlu0 %5789
    %v5791 = vlaneseq
    %v5792 = vshrl.u32 %v5791, 7
    %v5793 = vsub.s32 0, %v5792
    %v5794 = vrot.slane %v5702, %v5793
    %5796 = vbcast.lane.b32.xlu0 %v5794, 256
    %v5797 = vpop.permute.xlu0 %5796
    %s5799 = sor.u32 256, 8
    %5800 = vbcast.lane.b32.xlu0 %v5794, %s5799
    %v5801 = vpop.permute.xlu0 %5800
    %v5802 = vlaneseq
    %v5803 = vshrl.u32 %v5802, 7
    %v5804 = vsub.s32 1, %v5803
    %v5805 = vrot.slane %v5702, %v5804
    %5807 = vbcast.lane.b32.xlu0 %v5805, 256
    %v5808 = vpop.permute.xlu0 %5807
    %s5810 = sor.u32 256, 8
    %5811 = vbcast.lane.b32.xlu0 %v5805, %s5810
    %v5812 = vpop.permute.xlu0 %5811
    %v5813 = vlaneseq
    %v5814 = vshrl.u32 %v5813, 7
    %v5815 = vsub.s32 2, %v5814
    %v5816 = vrot.slane %v5702, %v5815
    %5818 = vbcast.lane.b32.xlu0 %v5816, 256
    %v5819 = vpop.permute.xlu0 %5818
    %s5821 = sor.u32 256, 8
    %5822 = vbcast.lane.b32.xlu0 %v5816, %s5821
    %v5823 = vpop.permute.xlu0 %5822
    %v5824 = vlaneseq
    %v5825 = vshrl.u32 %v5824, 7
    %v5826 = vsub.s32 3, %v5825
    %v5827 = vrot.slane %v5702, %v5826
    %5829 = vbcast.lane.b32.xlu0 %v5827, 256
    %v5830 = vpop.permute.xlu0 %5829
    %s5832 = sor.u32 256, 8
    %5833 = vbcast.lane.b32.xlu0 %v5827, %s5832
    %v5834 = vpop.permute.xlu0 %5833
    %v5835 = vlaneseq
    %v5836 = vshrl.u32 %v5835, 7
    %v5837 = vsub.s32 4, %v5836
    %v5838 = vrot.slane %v5702, %v5837
    %5840 = vbcast.lane.b32.xlu0 %v5838, 256
    %v5841 = vpop.permute.xlu0 %5840
    %s5843 = sor.u32 256, 8
    %5844 = vbcast.lane.b32.xlu0 %v5838, %s5843
    %v5845 = vpop.permute.xlu0 %5844
    %v5846 = vlaneseq
    %v5847 = vshrl.u32 %v5846, 7
    %v5848 = vsub.s32 5, %v5847
    %v5849 = vrot.slane %v5702, %v5848
    %5851 = vbcast.lane.b32.xlu0 %v5849, 256
    %v5852 = vpop.permute.xlu0 %5851
    %s5854 = sor.u32 256, 8
    %5855 = vbcast.lane.b32.xlu0 %v5849, %s5854
    %v5856 = vpop.permute.xlu0 %5855
    %v5857 = vlaneseq
    %v5858 = vshrl.u32 %v5857, 7
    %v5859 = vsub.s32 6, %v5858
    %v5860 = vrot.slane %v5702, %v5859
    %5862 = vbcast.lane.b32.xlu0 %v5860, 256
    %v5863 = vpop.permute.xlu0 %5862
    %s5865 = sor.u32 256, 8
    %5866 = vbcast.lane.b32.xlu0 %v5860, %s5865
    %v5867 = vpop.permute.xlu0 %5866
    %v5868 = vlaneseq
    %v5869 = vshrl.u32 %v5868, 7
    %v5870 = vsub.s32 7, %v5869
    %v5871 = vrot.slane %v5702, %v5870
    %5873 = vbcast.lane.b32.xlu0 %v5871, 256
    %v5874 = vpop.permute.xlu0 %5873
    %s5876 = sor.u32 256, 8
    %5877 = vbcast.lane.b32.xlu0 %v5871, %s5876
    %v5878 = vpop.permute.xlu0 %5877
    %v5879 = vmul.f32 %v4993, %v5709
    %v5880 = vmul.f32 %v4994, %v5713
    %v5881 = vmul.f32 %v4993, %v5720
    %v5882 = vmul.f32 %v4994, %v5724
    %v5883 = vmul.f32 %v4993, %v5731
    %v5884 = vmul.f32 %v4994, %v5735
    %v5885 = vmul.f32 %v4993, %v5742
    %v5886 = vmul.f32 %v4994, %v5746
    %v5887 = vmul.f32 %v4993, %v5753
    %v5888 = vmul.f32 %v4994, %v5757
    %v5889 = vmul.f32 %v4993, %v5764
    %v5890 = vmul.f32 %v4994, %v5768
    %v5891 = vmul.f32 %v4993, %v5775
    %v5892 = vmul.f32 %v4994, %v5779
    %v5893 = vmul.f32 %v4993, %v5786
    %v5894 = vmul.f32 %v4994, %v5790
    %v5895 = vmul.f32 %v4993, %v5797
    %v5896 = vmul.f32 %v4994, %v5801
    %v5897 = vmul.f32 %v4993, %v5808
    %v5898 = vmul.f32 %v4994, %v5812
    %v5899 = vmul.f32 %v4993, %v5819
    %v5900 = vmul.f32 %v4994, %v5823
    %v5901 = vmul.f32 %v4993, %v5830
    %v5902 = vmul.f32 %v4994, %v5834
    %v5903 = vmul.f32 %v4993, %v5841
    %v5904 = vmul.f32 %v4994, %v5845
    %v5905 = vmul.f32 %v4993, %v5852
    %v5906 = vmul.f32 %v4994, %v5856
    %v5907 = vmul.f32 %v4993, %v5863
    %v5908 = vmul.f32 %v4994, %v5867
    %v5909 = vmul.f32 %v4993, %v5874
    %v5910 = vmul.f32 %v4994, %v5878
    %v5911 = vadd.f32 %v5668, %v5879
    %v5912 = vadd.f32 %v5669, %v5880
    %v5913 = vadd.f32 %v5670, %v5881
    %v5914 = vadd.f32 %v5671, %v5882
    %v5915 = vadd.f32 %v5672, %v5883
    %v5916 = vadd.f32 %v5673, %v5884
    %v5917 = vadd.f32 %v5674, %v5885
    %v5918 = vadd.f32 %v5675, %v5886
    %v5919 = vadd.f32 %v5676, %v5887
    %v5920 = vadd.f32 %v5677, %v5888
    %v5921 = vadd.f32 %v5678, %v5889
    %v5922 = vadd.f32 %v5679, %v5890
    %v5923 = vadd.f32 %v5680, %v5891
    %v5924 = vadd.f32 %v5681, %v5892
    %v5925 = vadd.f32 %v5682, %v5893
    %v5926 = vadd.f32 %v5683, %v5894
    %v5927 = vadd.f32 %v5684, %v5895
    %v5928 = vadd.f32 %v5685, %v5896
    %v5929 = vadd.f32 %v5686, %v5897
    %v5930 = vadd.f32 %v5687, %v5898
    %v5931 = vadd.f32 %v5688, %v5899
    %v5932 = vadd.f32 %v5689, %v5900
    %v5933 = vadd.f32 %v5690, %v5901
    %v5934 = vadd.f32 %v5691, %v5902
    %v5935 = vadd.f32 %v5692, %v5903
    %v5936 = vadd.f32 %v5693, %v5904
    %v5937 = vadd.f32 %v5694, %v5905
    %v5938 = vadd.f32 %v5695, %v5906
    %v5939 = vadd.f32 %v5696, %v5907
    %v5940 = vadd.f32 %v5697, %v5908
    %v5941 = vadd.f32 %v5698, %v5909
    %v5942 = vadd.f32 %v5699, %v5910
    %v5945 = vcombine.high %v4943, %v4943
    %v5947 = vunpack.c.l.s4 1966171168
    %v5948 = vunpack.c.0.s8 %v5947
    %v5949 = vlaneseq
    %v5950 = vshrl.u32 %v5949, 7
    %v5951 = vsub.s32 %v5948, %v5950
    %v5952 = vrot.slane %v4943, %v5951
    %v5954 = vunpack.c.l.s4 1966171168
    %v5955 = vunpack.c.0.s8 %v5954
    %v5956 = vlaneseq
    %v5957 = vshrl.u32 %v5956, 7
    %v5958 = vsub.s32 %v5955, %v5957
    %v5959 = vrot.slane %v5945, %v5958
    %v5960 = vcombine.high %v5952, %v5952
    %v5961 = vcombine.high %v5959, %v5959
    %v5963 = vunpack.c.l.s4 1966171168
    %v5964 = vunpack.c.0.s8 %v5963
    %v5965 = vlaneseq
    %v5966 = vshrl.u32 %v5965, 7
    %v5967 = vsub.s32 %v5964, %v5966
    %v5968 = vrot.slane %v5952, %v5967
    %v5970 = vunpack.c.l.s4 1966171168
    %v5971 = vunpack.c.0.s8 %v5970
    %v5972 = vlaneseq
    %v5973 = vshrl.u32 %v5972, 7
    %v5974 = vsub.s32 %v5971, %v5973
    %v5975 = vrot.slane %v5959, %v5974
    %v5977 = vunpack.c.l.s4 1966171168
    %v5978 = vunpack.c.0.s8 %v5977
    %v5979 = vlaneseq
    %v5980 = vshrl.u32 %v5979, 7
    %v5981 = vsub.s32 %v5978, %v5980
    %v5982 = vrot.slane %v5960, %v5981
    %v5984 = vunpack.c.l.s4 1966171168
    %v5985 = vunpack.c.0.s8 %v5984
    %v5986 = vlaneseq
    %v5987 = vshrl.u32 %v5986, 7
    %v5988 = vsub.s32 %v5985, %v5987
    %v5989 = vrot.slane %v5961, %v5988
    %v5990 = vcombine.high %v5968, %v5968
    %v5991 = vcombine.high %v5975, %v5975
    %v5992 = vcombine.high %v5982, %v5982
    %v5993 = vcombine.high %v5989, %v5989
    %v5994 = vcombine.high %v4944, %v4944
    %v5996 = vunpack.c.l.s4 1966171168
    %v5997 = vunpack.c.0.s8 %v5996
    %v5998 = vlaneseq
    %v5999 = vshrl.u32 %v5998, 7
    %v6000 = vsub.s32 %v5997, %v5999
    %v6001 = vrot.slane %v4944, %v6000
    %v6003 = vunpack.c.l.s4 1966171168
    %v6004 = vunpack.c.0.s8 %v6003
    %v6005 = vlaneseq
    %v6006 = vshrl.u32 %v6005, 7
    %v6007 = vsub.s32 %v6004, %v6006
    %v6008 = vrot.slane %v5994, %v6007
    %v6009 = vcombine.high %v6001, %v6001
    %v6010 = vcombine.high %v6008, %v6008
    %v6012 = vunpack.c.l.s4 1966171168
    %v6013 = vunpack.c.0.s8 %v6012
    %v6014 = vlaneseq
    %v6015 = vshrl.u32 %v6014, 7
    %v6016 = vsub.s32 %v6013, %v6015
    %v6017 = vrot.slane %v6001, %v6016
    %v6019 = vunpack.c.l.s4 1966171168
    %v6020 = vunpack.c.0.s8 %v6019
    %v6021 = vlaneseq
    %v6022 = vshrl.u32 %v6021, 7
    %v6023 = vsub.s32 %v6020, %v6022
    %v6024 = vrot.slane %v6008, %v6023
    %v6026 = vunpack.c.l.s4 1966171168
    %v6027 = vunpack.c.0.s8 %v6026
    %v6028 = vlaneseq
    %v6029 = vshrl.u32 %v6028, 7
    %v6030 = vsub.s32 %v6027, %v6029
    %v6031 = vrot.slane %v6009, %v6030
    %v6033 = vunpack.c.l.s4 1966171168
    %v6034 = vunpack.c.0.s8 %v6033
    %v6035 = vlaneseq
    %v6036 = vshrl.u32 %v6035, 7
    %v6037 = vsub.s32 %v6034, %v6036
    %v6038 = vrot.slane %v6010, %v6037
    %v6039 = vcombine.high %v6017, %v6017
    %v6040 = vcombine.high %v6024, %v6024
    %v6041 = vcombine.high %v6031, %v6031
    %v6042 = vcombine.high %v6038, %v6038
    %v6043 = vlaneseq
    %v6044 = vshrl.u32 %v6043, 7
    %v6045 = vsub.s32 0, %v6044
    %v6046 = vrot.slane %v5968, %v6045
    %v6047 = vlaneseq
    %v6048 = vshrl.u32 %v6047, 7
    %v6049 = vsub.s32 0, %v6048
    %v6050 = vrot.slane %v5982, %v6049
    %v6051 = vlaneseq
    %v6052 = vshrl.u32 %v6051, 7
    %v6053 = vsub.s32 0, %v6052
    %v6054 = vrot.slane %v5990, %v6053
    %v6055 = vlaneseq
    %v6056 = vshrl.u32 %v6055, 7
    %v6057 = vsub.s32 0, %v6056
    %v6058 = vrot.slane %v5992, %v6057
    %v6059 = vlaneseq
    %v6060 = vshrl.u32 %v6059, 7
    %v6061 = vsub.s32 0, %v6060
    %v6062 = vrot.slane %v5975, %v6061
    %v6063 = vlaneseq
    %v6064 = vshrl.u32 %v6063, 7
    %v6065 = vsub.s32 0, %v6064
    %v6066 = vrot.slane %v5989, %v6065
    %v6067 = vlaneseq
    %v6068 = vshrl.u32 %v6067, 7
    %v6069 = vsub.s32 0, %v6068
    %v6070 = vrot.slane %v5991, %v6069
    %v6071 = vlaneseq
    %v6072 = vshrl.u32 %v6071, 7
    %v6073 = vsub.s32 0, %v6072
    %v6074 = vrot.slane %v5993, %v6073
    %v6075 = vlaneseq
    %v6076 = vshrl.u32 %v6075, 7
    %v6077 = vsub.s32 0, %v6076
    %v6078 = vrot.slane %v6017, %v6077
    %v6079 = vlaneseq
    %v6080 = vshrl.u32 %v6079, 7
    %v6081 = vsub.s32 0, %v6080
    %v6082 = vrot.slane %v6031, %v6081
    %v6083 = vlaneseq
    %v6084 = vshrl.u32 %v6083, 7
    %v6085 = vsub.s32 0, %v6084
    %v6086 = vrot.slane %v6039, %v6085
    %v6087 = vlaneseq
    %v6088 = vshrl.u32 %v6087, 7
    %v6089 = vsub.s32 0, %v6088
    %v6090 = vrot.slane %v6041, %v6089
    %v6091 = vlaneseq
    %v6092 = vshrl.u32 %v6091, 7
    %v6093 = vsub.s32 0, %v6092
    %v6094 = vrot.slane %v6024, %v6093
    %v6095 = vlaneseq
    %v6096 = vshrl.u32 %v6095, 7
    %v6097 = vsub.s32 0, %v6096
    %v6098 = vrot.slane %v6038, %v6097
    %v6099 = vlaneseq
    %v6100 = vshrl.u32 %v6099, 7
    %v6101 = vsub.s32 0, %v6100
    %v6102 = vrot.slane %v6040, %v6101
    %v6103 = vlaneseq
    %v6104 = vshrl.u32 %v6103, 7
    %v6105 = vsub.s32 0, %v6104
    %v6106 = vrot.slane %v6042, %v6105
    %v6123 = vmul.f32 %v6046, %v5043
    %v6124 = vmul.f32 %v6046, %v5044
    %v6125 = vmul.f32 %v6050, %v5043
    %v6126 = vmul.f32 %v6050, %v5044
    %v6127 = vmul.f32 %v6054, %v5043
    %v6128 = vmul.f32 %v6054, %v5044
    %v6129 = vmul.f32 %v6058, %v5043
    %v6130 = vmul.f32 %v6058, %v5044
    %v6131 = vmul.f32 %v6062, %v5043
    %v6132 = vmul.f32 %v6062, %v5044
    %v6133 = vmul.f32 %v6066, %v5043
    %v6134 = vmul.f32 %v6066, %v5044
    %v6135 = vmul.f32 %v6070, %v5043
    %v6136 = vmul.f32 %v6070, %v5044
    %v6137 = vmul.f32 %v6074, %v5043
    %v6138 = vmul.f32 %v6074, %v5044
    %v6139 = vmul.f32 %v6078, %v5043
    %v6140 = vmul.f32 %v6078, %v5044
    %v6141 = vmul.f32 %v6082, %v5043
    %v6142 = vmul.f32 %v6082, %v5044
    %v6143 = vmul.f32 %v6086, %v5043
    %v6144 = vmul.f32 %v6086, %v5044
    %v6145 = vmul.f32 %v6090, %v5043
    %v6146 = vmul.f32 %v6090, %v5044
    %v6147 = vmul.f32 %v6094, %v5043
    %v6148 = vmul.f32 %v6094, %v5044
    %v6149 = vmul.f32 %v6098, %v5043
    %v6150 = vmul.f32 %v6098, %v5044
    %v6151 = vmul.f32 %v6102, %v5043
    %v6152 = vmul.f32 %v6102, %v5044
    %v6153 = vmul.f32 %v6106, %v5043
    %v6154 = vmul.f32 %v6106, %v5044
    %s6155 = scalar_lea.vmem [#allocation11], 48
    %v6156 = vld [vmem:[%s6155] sm:$0xff]
    %v6157 = vld [vmem:[%s6155 + $0x8] sm:$0xff]
    %v6158 = vlaneseq
    %v6159 = vshrl.u32 %v6158, 7
    %v6160 = vsub.s32 0, %v6159
    %v6161 = vrot.slane %v6156, %v6160
    %6163 = vbcast.lane.b32.xlu0 %v6161, 256
    %v6164 = vpop.permute.xlu0 %6163
    %s6166 = sor.u32 256, 8
    %6167 = vbcast.lane.b32.xlu0 %v6161, %s6166
    %v6168 = vpop.permute.xlu0 %6167
    %v6169 = vlaneseq
    %v6170 = vshrl.u32 %v6169, 7
    %v6171 = vsub.s32 1, %v6170
    %v6172 = vrot.slane %v6156, %v6171
    %6174 = vbcast.lane.b32.xlu0 %v6172, 256
    %v6175 = vpop.permute.xlu0 %6174
    %s6177 = sor.u32 256, 8
    %6178 = vbcast.lane.b32.xlu0 %v6172, %s6177
    %v6179 = vpop.permute.xlu0 %6178
    %v6180 = vlaneseq
    %v6181 = vshrl.u32 %v6180, 7
    %v6182 = vsub.s32 2, %v6181
    %v6183 = vrot.slane %v6156, %v6182
    %6185 = vbcast.lane.b32.xlu0 %v6183, 256
    %v6186 = vpop.permute.xlu0 %6185
    %s6188 = sor.u32 256, 8
    %6189 = vbcast.lane.b32.xlu0 %v6183, %s6188
    %v6190 = vpop.permute.xlu0 %6189
    %v6191 = vlaneseq
    %v6192 = vshrl.u32 %v6191, 7
    %v6193 = vsub.s32 3, %v6192
    %v6194 = vrot.slane %v6156, %v6193
    %6196 = vbcast.lane.b32.xlu0 %v6194, 256
    %v6197 = vpop.permute.xlu0 %6196
    %s6199 = sor.u32 256, 8
    %6200 = vbcast.lane.b32.xlu0 %v6194, %s6199
    %v6201 = vpop.permute.xlu0 %6200
    %v6202 = vlaneseq
    %v6203 = vshrl.u32 %v6202, 7
    %v6204 = vsub.s32 4, %v6203
    %v6205 = vrot.slane %v6156, %v6204
    %6207 = vbcast.lane.b32.xlu0 %v6205, 256
    %v6208 = vpop.permute.xlu0 %6207
    %s6210 = sor.u32 256, 8
    %6211 = vbcast.lane.b32.xlu0 %v6205, %s6210
    %v6212 = vpop.permute.xlu0 %6211
    %v6213 = vlaneseq
    %v6214 = vshrl.u32 %v6213, 7
    %v6215 = vsub.s32 5, %v6214
    %v6216 = vrot.slane %v6156, %v6215
    %6218 = vbcast.lane.b32.xlu0 %v6216, 256
    %v6219 = vpop.permute.xlu0 %6218
    %s6221 = sor.u32 256, 8
    %6222 = vbcast.lane.b32.xlu0 %v6216, %s6221
    %v6223 = vpop.permute.xlu0 %6222
    %v6224 = vlaneseq
    %v6225 = vshrl.u32 %v6224, 7
    %v6226 = vsub.s32 6, %v6225
    %v6227 = vrot.slane %v6156, %v6226
    %6229 = vbcast.lane.b32.xlu0 %v6227, 256
    %v6230 = vpop.permute.xlu0 %6229
    %s6232 = sor.u32 256, 8
    %6233 = vbcast.lane.b32.xlu0 %v6227, %s6232
    %v6234 = vpop.permute.xlu0 %6233
    %v6235 = vlaneseq
    %v6236 = vshrl.u32 %v6235, 7
    %v6237 = vsub.s32 7, %v6236
    %v6238 = vrot.slane %v6156, %v6237
    %6240 = vbcast.lane.b32.xlu0 %v6238, 256
    %v6241 = vpop.permute.xlu0 %6240
    %s6243 = sor.u32 256, 8
    %6244 = vbcast.lane.b32.xlu0 %v6238, %s6243
    %v6245 = vpop.permute.xlu0 %6244
    %v6246 = vlaneseq
    %v6247 = vshrl.u32 %v6246, 7
    %v6248 = vsub.s32 0, %v6247
    %v6249 = vrot.slane %v6157, %v6248
    %6251 = vbcast.lane.b32.xlu0 %v6249, 256
    %v6252 = vpop.permute.xlu0 %6251
    %s6254 = sor.u32 256, 8
    %6255 = vbcast.lane.b32.xlu0 %v6249, %s6254
    %v6256 = vpop.permute.xlu0 %6255
    %v6257 = vlaneseq
    %v6258 = vshrl.u32 %v6257, 7
    %v6259 = vsub.s32 1, %v6258
    %v6260 = vrot.slane %v6157, %v6259
    %6262 = vbcast.lane.b32.xlu0 %v6260, 256
    %v6263 = vpop.permute.xlu0 %6262
    %s6265 = sor.u32 256, 8
    %6266 = vbcast.lane.b32.xlu0 %v6260, %s6265
    %v6267 = vpop.permute.xlu0 %6266
    %v6268 = vlaneseq
    %v6269 = vshrl.u32 %v6268, 7
    %v6270 = vsub.s32 2, %v6269
    %v6271 = vrot.slane %v6157, %v6270
    %6273 = vbcast.lane.b32.xlu0 %v6271, 256
    %v6274 = vpop.permute.xlu0 %6273
    %s6276 = sor.u32 256, 8
    %6277 = vbcast.lane.b32.xlu0 %v6271, %s6276
    %v6278 = vpop.permute.xlu0 %6277
    %v6279 = vlaneseq
    %v6280 = vshrl.u32 %v6279, 7
    %v6281 = vsub.s32 3, %v6280
    %v6282 = vrot.slane %v6157, %v6281
    %6284 = vbcast.lane.b32.xlu0 %v6282, 256
    %v6285 = vpop.permute.xlu0 %6284
    %s6287 = sor.u32 256, 8
    %6288 = vbcast.lane.b32.xlu0 %v6282, %s6287
    %v6289 = vpop.permute.xlu0 %6288
    %v6290 = vlaneseq
    %v6291 = vshrl.u32 %v6290, 7
    %v6292 = vsub.s32 4, %v6291
    %v6293 = vrot.slane %v6157, %v6292
    %6295 = vbcast.lane.b32.xlu0 %v6293, 256
    %v6296 = vpop.permute.xlu0 %6295
    %s6298 = sor.u32 256, 8
    %6299 = vbcast.lane.b32.xlu0 %v6293, %s6298
    %v6300 = vpop.permute.xlu0 %6299
    %v6301 = vlaneseq
    %v6302 = vshrl.u32 %v6301, 7
    %v6303 = vsub.s32 5, %v6302
    %v6304 = vrot.slane %v6157, %v6303
    %6306 = vbcast.lane.b32.xlu0 %v6304, 256
    %v6307 = vpop.permute.xlu0 %6306
    %s6309 = sor.u32 256, 8
    %6310 = vbcast.lane.b32.xlu0 %v6304, %s6309
    %v6311 = vpop.permute.xlu0 %6310
    %v6312 = vlaneseq
    %v6313 = vshrl.u32 %v6312, 7
    %v6314 = vsub.s32 6, %v6313
    %v6315 = vrot.slane %v6157, %v6314
    %6317 = vbcast.lane.b32.xlu0 %v6315, 256
    %v6318 = vpop.permute.xlu0 %6317
    %s6320 = sor.u32 256, 8
    %6321 = vbcast.lane.b32.xlu0 %v6315, %s6320
    %v6322 = vpop.permute.xlu0 %6321
    %v6323 = vlaneseq
    %v6324 = vshrl.u32 %v6323, 7
    %v6325 = vsub.s32 7, %v6324
    %v6326 = vrot.slane %v6157, %v6325
    %6328 = vbcast.lane.b32.xlu0 %v6326, 256
    %v6329 = vpop.permute.xlu0 %6328
    %s6331 = sor.u32 256, 8
    %6332 = vbcast.lane.b32.xlu0 %v6326, %s6331
    %v6333 = vpop.permute.xlu0 %6332
    %v6334 = vmul.f32 %v6046, %v6164
    %v6335 = vmul.f32 %v6046, %v6168
    %v6336 = vmul.f32 %v6050, %v6175
    %v6337 = vmul.f32 %v6050, %v6179
    %v6338 = vmul.f32 %v6054, %v6186
    %v6339 = vmul.f32 %v6054, %v6190
    %v6340 = vmul.f32 %v6058, %v6197
    %v6341 = vmul.f32 %v6058, %v6201
    %v6342 = vmul.f32 %v6062, %v6208
    %v6343 = vmul.f32 %v6062, %v6212
    %v6344 = vmul.f32 %v6066, %v6219
    %v6345 = vmul.f32 %v6066, %v6223
    %v6346 = vmul.f32 %v6070, %v6230
    %v6347 = vmul.f32 %v6070, %v6234
    %v6348 = vmul.f32 %v6074, %v6241
    %v6349 = vmul.f32 %v6074, %v6245
    %v6350 = vmul.f32 %v6078, %v6252
    %v6351 = vmul.f32 %v6078, %v6256
    %v6352 = vmul.f32 %v6082, %v6263
    %v6353 = vmul.f32 %v6082, %v6267
    %v6354 = vmul.f32 %v6086, %v6274
    %v6355 = vmul.f32 %v6086, %v6278
    %v6356 = vmul.f32 %v6090, %v6285
    %v6357 = vmul.f32 %v6090, %v6289
    %v6358 = vmul.f32 %v6094, %v6296
    %v6359 = vmul.f32 %v6094, %v6300
    %v6360 = vmul.f32 %v6098, %v6307
    %v6361 = vmul.f32 %v6098, %v6311
    %v6362 = vmul.f32 %v6102, %v6318
    %v6363 = vmul.f32 %v6102, %v6322
    %v6364 = vmul.f32 %v6106, %v6329
    %v6365 = vmul.f32 %v6106, %v6333
    %v6366 = vadd.f32 %v6123, %v6334
    %v6367 = vadd.f32 %v6124, %v6335
    %v6368 = vadd.f32 %v6125, %v6336
    %v6369 = vadd.f32 %v6126, %v6337
    %v6370 = vadd.f32 %v6127, %v6338
    %v6371 = vadd.f32 %v6128, %v6339
    %v6372 = vadd.f32 %v6129, %v6340
    %v6373 = vadd.f32 %v6130, %v6341
    %v6374 = vadd.f32 %v6131, %v6342
    %v6375 = vadd.f32 %v6132, %v6343
    %v6376 = vadd.f32 %v6133, %v6344
    %v6377 = vadd.f32 %v6134, %v6345
    %v6378 = vadd.f32 %v6135, %v6346
    %v6379 = vadd.f32 %v6136, %v6347
    %v6380 = vadd.f32 %v6137, %v6348
    %v6381 = vadd.f32 %v6138, %v6349
    %v6382 = vadd.f32 %v6139, %v6350
    %v6383 = vadd.f32 %v6140, %v6351
    %v6384 = vadd.f32 %v6141, %v6352
    %v6385 = vadd.f32 %v6142, %v6353
    %v6386 = vadd.f32 %v6143, %v6354
    %v6387 = vadd.f32 %v6144, %v6355
    %v6388 = vadd.f32 %v6145, %v6356
    %v6389 = vadd.f32 %v6146, %v6357
    %v6390 = vadd.f32 %v6147, %v6358
    %v6391 = vadd.f32 %v6148, %v6359
    %v6392 = vadd.f32 %v6149, %v6360
    %v6393 = vadd.f32 %v6150, %v6361
    %v6394 = vadd.f32 %v6151, %v6362
    %v6395 = vadd.f32 %v6152, %v6363
    %v6396 = vadd.f32 %v6153, %v6364
    %v6397 = vadd.f32 %v6154, %v6365
    %s6398 = scalar_lea.vmem [#allocation13], 48
    %v6399 = vld [vmem:[%s6398] sm:$0xff]
    %v6400 = vld [vmem:[%s6398 + $0x8] sm:$0xff]
    %v6401 = vlaneseq
    %v6402 = vshrl.u32 %v6401, 7
    %v6403 = vsub.s32 0, %v6402
    %v6404 = vrot.slane %v6399, %v6403
    %6406 = vbcast.lane.b32.xlu0 %v6404, 256
    %v6407 = vpop.permute.xlu0 %6406
    %s6409 = sor.u32 256, 8
    %6410 = vbcast.lane.b32.xlu0 %v6404, %s6409
    %v6411 = vpop.permute.xlu0 %6410
    %v6412 = vlaneseq
    %v6413 = vshrl.u32 %v6412, 7
    %v6414 = vsub.s32 1, %v6413
    %v6415 = vrot.slane %v6399, %v6414
    %6417 = vbcast.lane.b32.xlu0 %v6415, 256
    %v6418 = vpop.permute.xlu0 %6417
    %s6420 = sor.u32 256, 8
    %6421 = vbcast.lane.b32.xlu0 %v6415, %s6420
    %v6422 = vpop.permute.xlu0 %6421
    %v6423 = vlaneseq
    %v6424 = vshrl.u32 %v6423, 7
    %v6425 = vsub.s32 2, %v6424
    %v6426 = vrot.slane %v6399, %v6425
    %6428 = vbcast.lane.b32.xlu0 %v6426, 256
    %v6429 = vpop.permute.xlu0 %6428
    %s6431 = sor.u32 256, 8
    %6432 = vbcast.lane.b32.xlu0 %v6426, %s6431
    %v6433 = vpop.permute.xlu0 %6432
    %v6434 = vlaneseq
    %v6435 = vshrl.u32 %v6434, 7
    %v6436 = vsub.s32 3, %v6435
    %v6437 = vrot.slane %v6399, %v6436
    %6439 = vbcast.lane.b32.xlu0 %v6437, 256
    %v6440 = vpop.permute.xlu0 %6439
    %s6442 = sor.u32 256, 8
    %6443 = vbcast.lane.b32.xlu0 %v6437, %s6442
    %v6444 = vpop.permute.xlu0 %6443
    %v6445 = vlaneseq
    %v6446 = vshrl.u32 %v6445, 7
    %v6447 = vsub.s32 4, %v6446
    %v6448 = vrot.slane %v6399, %v6447
    %6450 = vbcast.lane.b32.xlu0 %v6448, 256
    %v6451 = vpop.permute.xlu0 %6450
    %s6453 = sor.u32 256, 8
    %6454 = vbcast.lane.b32.xlu0 %v6448, %s6453
    %v6455 = vpop.permute.xlu0 %6454
    %v6456 = vlaneseq
    %v6457 = vshrl.u32 %v6456, 7
    %v6458 = vsub.s32 5, %v6457
    %v6459 = vrot.slane %v6399, %v6458
    %6461 = vbcast.lane.b32.xlu0 %v6459, 256
    %v6462 = vpop.permute.xlu0 %6461
    %s6464 = sor.u32 256, 8
    %6465 = vbcast.lane.b32.xlu0 %v6459, %s6464
    %v6466 = vpop.permute.xlu0 %6465
    %v6467 = vlaneseq
    %v6468 = vshrl.u32 %v6467, 7
    %v6469 = vsub.s32 6, %v6468
    %v6470 = vrot.slane %v6399, %v6469
    %6472 = vbcast.lane.b32.xlu0 %v6470, 256
    %v6473 = vpop.permute.xlu0 %6472
    %s6475 = sor.u32 256, 8
    %6476 = vbcast.lane.b32.xlu0 %v6470, %s6475
    %v6477 = vpop.permute.xlu0 %6476
    %v6478 = vlaneseq
    %v6479 = vshrl.u32 %v6478, 7
    %v6480 = vsub.s32 7, %v6479
    %v6481 = vrot.slane %v6399, %v6480
    %6483 = vbcast.lane.b32.xlu0 %v6481, 256
    %v6484 = vpop.permute.xlu0 %6483
    %s6486 = sor.u32 256, 8
    %6487 = vbcast.lane.b32.xlu0 %v6481, %s6486
    %v6488 = vpop.permute.xlu0 %6487
    %v6489 = vlaneseq
    %v6490 = vshrl.u32 %v6489, 7
    %v6491 = vsub.s32 0, %v6490
    %v6492 = vrot.slane %v6400, %v6491
    %6494 = vbcast.lane.b32.xlu0 %v6492, 256
    %v6495 = vpop.permute.xlu0 %6494
    %s6497 = sor.u32 256, 8
    %6498 = vbcast.lane.b32.xlu0 %v6492, %s6497
    %v6499 = vpop.permute.xlu0 %6498
    %v6500 = vlaneseq
    %v6501 = vshrl.u32 %v6500, 7
    %v6502 = vsub.s32 1, %v6501
    %v6503 = vrot.slane %v6400, %v6502
    %6505 = vbcast.lane.b32.xlu0 %v6503, 256
    %v6506 = vpop.permute.xlu0 %6505
    %s6508 = sor.u32 256, 8
    %6509 = vbcast.lane.b32.xlu0 %v6503, %s6508
    %v6510 = vpop.permute.xlu0 %6509
    %v6511 = vlaneseq
    %v6512 = vshrl.u32 %v6511, 7
    %v6513 = vsub.s32 2, %v6512
    %v6514 = vrot.slane %v6400, %v6513
    %6516 = vbcast.lane.b32.xlu0 %v6514, 256
    %v6517 = vpop.permute.xlu0 %6516
    %s6519 = sor.u32 256, 8
    %6520 = vbcast.lane.b32.xlu0 %v6514, %s6519
    %v6521 = vpop.permute.xlu0 %6520
    %v6522 = vlaneseq
    %v6523 = vshrl.u32 %v6522, 7
    %v6524 = vsub.s32 3, %v6523
    %v6525 = vrot.slane %v6400, %v6524
    %6527 = vbcast.lane.b32.xlu0 %v6525, 256
    %v6528 = vpop.permute.xlu0 %6527
    %s6530 = sor.u32 256, 8
    %6531 = vbcast.lane.b32.xlu0 %v6525, %s6530
    %v6532 = vpop.permute.xlu0 %6531
    %v6533 = vlaneseq
    %v6534 = vshrl.u32 %v6533, 7
    %v6535 = vsub.s32 4, %v6534
    %v6536 = vrot.slane %v6400, %v6535
    %6538 = vbcast.lane.b32.xlu0 %v6536, 256
    %v6539 = vpop.permute.xlu0 %6538
    %s6541 = sor.u32 256, 8
    %6542 = vbcast.lane.b32.xlu0 %v6536, %s6541
    %v6543 = vpop.permute.xlu0 %6542
    %v6544 = vlaneseq
    %v6545 = vshrl.u32 %v6544, 7
    %v6546 = vsub.s32 5, %v6545
    %v6547 = vrot.slane %v6400, %v6546
    %6549 = vbcast.lane.b32.xlu0 %v6547, 256
    %v6550 = vpop.permute.xlu0 %6549
    %s6552 = sor.u32 256, 8
    %6553 = vbcast.lane.b32.xlu0 %v6547, %s6552
    %v6554 = vpop.permute.xlu0 %6553
    %v6555 = vlaneseq
    %v6556 = vshrl.u32 %v6555, 7
    %v6557 = vsub.s32 6, %v6556
    %v6558 = vrot.slane %v6400, %v6557
    %6560 = vbcast.lane.b32.xlu0 %v6558, 256
    %v6561 = vpop.permute.xlu0 %6560
    %s6563 = sor.u32 256, 8
    %6564 = vbcast.lane.b32.xlu0 %v6558, %s6563
    %v6565 = vpop.permute.xlu0 %6564
    %v6566 = vlaneseq
    %v6567 = vshrl.u32 %v6566, 7
    %v6568 = vsub.s32 7, %v6567
    %v6569 = vrot.slane %v6400, %v6568
    %6571 = vbcast.lane.b32.xlu0 %v6569, 256
    %v6572 = vpop.permute.xlu0 %6571
    %s6574 = sor.u32 256, 8
    %6575 = vbcast.lane.b32.xlu0 %v6569, %s6574
    %v6576 = vpop.permute.xlu0 %6575
    %v6577 = vmul.f32 %v5043, %v6407
    %v6578 = vmul.f32 %v5044, %v6411
    %v6579 = vmul.f32 %v5043, %v6418
    %v6580 = vmul.f32 %v5044, %v6422
    %v6581 = vmul.f32 %v5043, %v6429
    %v6582 = vmul.f32 %v5044, %v6433
    %v6583 = vmul.f32 %v5043, %v6440
    %v6584 = vmul.f32 %v5044, %v6444
    %v6585 = vmul.f32 %v5043, %v6451
    %v6586 = vmul.f32 %v5044, %v6455
    %v6587 = vmul.f32 %v5043, %v6462
    %v6588 = vmul.f32 %v5044, %v6466
    %v6589 = vmul.f32 %v5043, %v6473
    %v6590 = vmul.f32 %v5044, %v6477
    %v6591 = vmul.f32 %v5043, %v6484
    %v6592 = vmul.f32 %v5044, %v6488
    %v6593 = vmul.f32 %v5043, %v6495
    %v6594 = vmul.f32 %v5044, %v6499
    %v6595 = vmul.f32 %v5043, %v6506
    %v6596 = vmul.f32 %v5044, %v6510
    %v6597 = vmul.f32 %v5043, %v6517
    %v6598 = vmul.f32 %v5044, %v6521
    %v6599 = vmul.f32 %v5043, %v6528
    %v6600 = vmul.f32 %v5044, %v6532
    %v6601 = vmul.f32 %v5043, %v6539
    %v6602 = vmul.f32 %v5044, %v6543
    %v6603 = vmul.f32 %v5043, %v6550
    %v6604 = vmul.f32 %v5044, %v6554
    %v6605 = vmul.f32 %v5043, %v6561
    %v6606 = vmul.f32 %v5044, %v6565
    %v6607 = vmul.f32 %v5043, %v6572
    %v6608 = vmul.f32 %v5044, %v6576
    %v6609 = vadd.f32 %v6366, %v6577
    %v6610 = vadd.f32 %v6367, %v6578
    %v6611 = vadd.f32 %v6368, %v6579
    %v6612 = vadd.f32 %v6369, %v6580
    %v6613 = vadd.f32 %v6370, %v6581
    %v6614 = vadd.f32 %v6371, %v6582
    %v6615 = vadd.f32 %v6372, %v6583
    %v6616 = vadd.f32 %v6373, %v6584
    %v6617 = vadd.f32 %v6374, %v6585
    %v6618 = vadd.f32 %v6375, %v6586
    %v6619 = vadd.f32 %v6376, %v6587
    %v6620 = vadd.f32 %v6377, %v6588
    %v6621 = vadd.f32 %v6378, %v6589
    %v6622 = vadd.f32 %v6379, %v6590
    %v6623 = vadd.f32 %v6380, %v6591
    %v6624 = vadd.f32 %v6381, %v6592
    %v6625 = vadd.f32 %v6382, %v6593
    %v6626 = vadd.f32 %v6383, %v6594
    %v6627 = vadd.f32 %v6384, %v6595
    %v6628 = vadd.f32 %v6385, %v6596
    %v6629 = vadd.f32 %v6386, %v6597
    %v6630 = vadd.f32 %v6387, %v6598
    %v6631 = vadd.f32 %v6388, %v6599
    %v6632 = vadd.f32 %v6389, %v6600
    %v6633 = vadd.f32 %v6390, %v6601
    %v6634 = vadd.f32 %v6391, %v6602
    %v6635 = vadd.f32 %v6392, %v6603
    %v6636 = vadd.f32 %v6393, %v6604
    %v6637 = vadd.f32 %v6394, %v6605
    %v6638 = vadd.f32 %v6395, %v6606
    %v6639 = vadd.f32 %v6396, %v6607
    %v6640 = vadd.f32 %v6397, %v6608
    %v6641 = vadd.f32 %v5911, %v6609
    %v6642 = vadd.f32 %v5912, %v6610
    %v6643 = vadd.f32 %v5913, %v6611
    %v6644 = vadd.f32 %v5914, %v6612
    %v6645 = vadd.f32 %v5915, %v6613
    %v6646 = vadd.f32 %v5916, %v6614
    %v6647 = vadd.f32 %v5917, %v6615
    %v6648 = vadd.f32 %v5918, %v6616
    %v6649 = vadd.f32 %v5919, %v6617
    %v6650 = vadd.f32 %v5920, %v6618
    %v6651 = vadd.f32 %v5921, %v6619
    %v6652 = vadd.f32 %v5922, %v6620
    %v6653 = vadd.f32 %v5923, %v6621
    %v6654 = vadd.f32 %v5924, %v6622
    %v6655 = vadd.f32 %v5925, %v6623
    %v6656 = vadd.f32 %v5926, %v6624
    %v6657 = vadd.f32 %v5927, %v6625
    %v6658 = vadd.f32 %v5928, %v6626
    %v6659 = vadd.f32 %v5929, %v6627
    %v6660 = vadd.f32 %v5930, %v6628
    %v6661 = vadd.f32 %v5931, %v6629
    %v6662 = vadd.f32 %v5932, %v6630
    %v6663 = vadd.f32 %v5933, %v6631
    %v6664 = vadd.f32 %v5934, %v6632
    %v6665 = vadd.f32 %v5935, %v6633
    %v6666 = vadd.f32 %v5936, %v6634
    %v6667 = vadd.f32 %v5937, %v6635
    %v6668 = vadd.f32 %v5938, %v6636
    %v6669 = vadd.f32 %v5939, %v6637
    %v6670 = vadd.f32 %v5940, %v6638
    %v6671 = vadd.f32 %v5941, %v6639
    %v6672 = vadd.f32 %v5942, %v6640
    %v6673 = vsel %vm1959, %v6641, -inf
    %v6674 = vsel %vm1959, %v6642, -inf
    %v6675 = vmax.f32 %v6673, %v6674
    %v6676 = vrot.slane %v6675, 4
    %v6677 = vmax.f32 %v6675, %v6676
    %v6678 = vrot.slane %v6677, 2
    %v6679 = vmax.f32 %v6677, %v6678
    %v6680 = vrot.slane %v6679, 1
    %v6681 = vmax.f32 %v6679, %v6680
    %v6682 = vsel %vm1959, %v6643, -inf
    %v6683 = vsel %vm1959, %v6644, -inf
    %v6684 = vmax.f32 %v6682, %v6683
    %v6685 = vrot.slane %v6684, 4
    %v6686 = vmax.f32 %v6684, %v6685
    %v6687 = vrot.slane %v6686, 2
    %v6688 = vmax.f32 %v6686, %v6687
    %v6689 = vrot.slane %v6688, 1
    %v6690 = vmax.f32 %v6688, %v6689
    %v6691 = vsel %vm1959, %v6645, -inf
    %v6692 = vsel %vm1959, %v6646, -inf
    %v6693 = vmax.f32 %v6691, %v6692
    %v6694 = vrot.slane %v6693, 4
    %v6695 = vmax.f32 %v6693, %v6694
    %v6696 = vrot.slane %v6695, 2
    %v6697 = vmax.f32 %v6695, %v6696
    %v6698 = vrot.slane %v6697, 1
    %v6699 = vmax.f32 %v6697, %v6698
    %v6700 = vsel %vm1959, %v6647, -inf
    %v6701 = vsel %vm1959, %v6648, -inf
    %v6702 = vmax.f32 %v6700, %v6701
    %v6703 = vrot.slane %v6702, 4
    %v6704 = vmax.f32 %v6702, %v6703
    %v6705 = vrot.slane %v6704, 2
    %v6706 = vmax.f32 %v6704, %v6705
    %v6707 = vrot.slane %v6706, 1
    %v6708 = vmax.f32 %v6706, %v6707
    %v6709 = vsel %vm1959, %v6649, -inf
    %v6710 = vsel %vm1959, %v6650, -inf
    %v6711 = vmax.f32 %v6709, %v6710
    %v6712 = vrot.slane %v6711, 4
    %v6713 = vmax.f32 %v6711, %v6712
    %v6714 = vrot.slane %v6713, 2
    %v6715 = vmax.f32 %v6713, %v6714
    %v6716 = vrot.slane %v6715, 1
    %v6717 = vmax.f32 %v6715, %v6716
    %v6718 = vsel %vm1959, %v6651, -inf
    %v6719 = vsel %vm1959, %v6652, -inf
    %v6720 = vmax.f32 %v6718, %v6719
    %v6721 = vrot.slane %v6720, 4
    %v6722 = vmax.f32 %v6720, %v6721
    %v6723 = vrot.slane %v6722, 2
    %v6724 = vmax.f32 %v6722, %v6723
    %v6725 = vrot.slane %v6724, 1
    %v6726 = vmax.f32 %v6724, %v6725
    %v6727 = vsel %vm1959, %v6653, -inf
    %v6728 = vsel %vm1959, %v6654, -inf
    %v6729 = vmax.f32 %v6727, %v6728
    %v6730 = vrot.slane %v6729, 4
    %v6731 = vmax.f32 %v6729, %v6730
    %v6732 = vrot.slane %v6731, 2
    %v6733 = vmax.f32 %v6731, %v6732
    %v6734 = vrot.slane %v6733, 1
    %v6735 = vmax.f32 %v6733, %v6734
    %v6736 = vsel %vm1959, %v6655, -inf
    %v6737 = vsel %vm1959, %v6656, -inf
    %v6738 = vmax.f32 %v6736, %v6737
    %v6739 = vrot.slane %v6738, 4
    %v6740 = vmax.f32 %v6738, %v6739
    %v6741 = vrot.slane %v6740, 2
    %v6742 = vmax.f32 %v6740, %v6741
    %v6743 = vrot.slane %v6742, 1
    %v6744 = vmax.f32 %v6742, %v6743
    %v6745 = vsel %vm1959, %v6657, -inf
    %v6746 = vsel %vm1959, %v6658, -inf
    %v6747 = vmax.f32 %v6745, %v6746
    %v6748 = vrot.slane %v6747, 4
    %v6749 = vmax.f32 %v6747, %v6748
    %v6750 = vrot.slane %v6749, 2
    %v6751 = vmax.f32 %v6749, %v6750
    %v6752 = vrot.slane %v6751, 1
    %v6753 = vmax.f32 %v6751, %v6752
    %v6754 = vsel %vm1959, %v6659, -inf
    %v6755 = vsel %vm1959, %v6660, -inf
    %v6756 = vmax.f32 %v6754, %v6755
    %v6757 = vrot.slane %v6756, 4
    %v6758 = vmax.f32 %v6756, %v6757
    %v6759 = vrot.slane %v6758, 2
    %v6760 = vmax.f32 %v6758, %v6759
    %v6761 = vrot.slane %v6760, 1
    %v6762 = vmax.f32 %v6760, %v6761
    %v6763 = vsel %vm1959, %v6661, -inf
    %v6764 = vsel %vm1959, %v6662, -inf
    %v6765 = vmax.f32 %v6763, %v6764
    %v6766 = vrot.slane %v6765, 4
    %v6767 = vmax.f32 %v6765, %v6766
    %v6768 = vrot.slane %v6767, 2
    %v6769 = vmax.f32 %v6767, %v6768
    %v6770 = vrot.slane %v6769, 1
    %v6771 = vmax.f32 %v6769, %v6770
    %v6772 = vsel %vm1959, %v6663, -inf
    %v6773 = vsel %vm1959, %v6664, -inf
    %v6774 = vmax.f32 %v6772, %v6773
    %v6775 = vrot.slane %v6774, 4
    %v6776 = vmax.f32 %v6774, %v6775
    %v6777 = vrot.slane %v6776, 2
    %v6778 = vmax.f32 %v6776, %v6777
    %v6779 = vrot.slane %v6778, 1
    %v6780 = vmax.f32 %v6778, %v6779
    %v6781 = vsel %vm1959, %v6665, -inf
    %v6782 = vsel %vm1959, %v6666, -inf
    %v6783 = vmax.f32 %v6781, %v6782
    %v6784 = vrot.slane %v6783, 4
    %v6785 = vmax.f32 %v6783, %v6784
    %v6786 = vrot.slane %v6785, 2
    %v6787 = vmax.f32 %v6785, %v6786
    %v6788 = vrot.slane %v6787, 1
    %v6789 = vmax.f32 %v6787, %v6788
    %v6790 = vsel %vm1959, %v6667, -inf
    %v6791 = vsel %vm1959, %v6668, -inf
    %v6792 = vmax.f32 %v6790, %v6791
    %v6793 = vrot.slane %v6792, 4
    %v6794 = vmax.f32 %v6792, %v6793
    %v6795 = vrot.slane %v6794, 2
    %v6796 = vmax.f32 %v6794, %v6795
    %v6797 = vrot.slane %v6796, 1
    %v6798 = vmax.f32 %v6796, %v6797
    %v6799 = vsel %vm1959, %v6669, -inf
    %v6800 = vsel %vm1959, %v6670, -inf
    %v6801 = vmax.f32 %v6799, %v6800
    %v6802 = vrot.slane %v6801, 4
    %v6803 = vmax.f32 %v6801, %v6802
    %v6804 = vrot.slane %v6803, 2
    %v6805 = vmax.f32 %v6803, %v6804
    %v6806 = vrot.slane %v6805, 1
    %v6807 = vmax.f32 %v6805, %v6806
    %v6808 = vsel %vm1959, %v6671, -inf
    %v6809 = vsel %vm1959, %v6672, -inf
    %v6810 = vmax.f32 %v6808, %v6809
    %v6811 = vrot.slane %v6810, 4
    %v6812 = vmax.f32 %v6810, %v6811
    %v6813 = vrot.slane %v6812, 2
    %v6814 = vmax.f32 %v6812, %v6813
    %v6815 = vrot.slane %v6814, 1
    %v6816 = vmax.f32 %v6814, %v6815
    %v6817 = vsub.f32 %v6641, %v6681
    %v6818 = vsub.f32 %v6642, %v6681
    %v6819 = vsub.f32 %v6643, %v6690
    %v6820 = vsub.f32 %v6644, %v6690
    %v6821 = vsub.f32 %v6645, %v6699
    %v6822 = vsub.f32 %v6646, %v6699
    %v6823 = vsub.f32 %v6647, %v6708
    %v6824 = vsub.f32 %v6648, %v6708
    %v6825 = vsub.f32 %v6649, %v6717
    %v6826 = vsub.f32 %v6650, %v6717
    %v6827 = vsub.f32 %v6651, %v6726
    %v6828 = vsub.f32 %v6652, %v6726
    %v6829 = vsub.f32 %v6653, %v6735
    %v6830 = vsub.f32 %v6654, %v6735
    %v6831 = vsub.f32 %v6655, %v6744
    %v6832 = vsub.f32 %v6656, %v6744
    %v6833 = vsub.f32 %v6657, %v6753
    %v6834 = vsub.f32 %v6658, %v6753
    %v6835 = vsub.f32 %v6659, %v6762
    %v6836 = vsub.f32 %v6660, %v6762
    %v6837 = vsub.f32 %v6661, %v6771
    %v6838 = vsub.f32 %v6662, %v6771
    %v6839 = vsub.f32 %v6663, %v6780
    %v6840 = vsub.f32 %v6664, %v6780
    %v6841 = vsub.f32 %v6665, %v6789
    %v6842 = vsub.f32 %v6666, %v6789
    %v6843 = vsub.f32 %v6667, %v6798
    %v6844 = vsub.f32 %v6668, %v6798
    %v6845 = vsub.f32 %v6669, %v6807
    %v6846 = vsub.f32 %v6670, %v6807
    %v6847 = vsub.f32 %v6671, %v6816
    %v6848 = vsub.f32 %v6672, %v6816
    %v6849 = vmul.f32 %v6817, 1.442695
    %v6850 = vpow.pop %v6849
    %v6851 = vmul.f32 %v6818, 1.442695
    %v6852 = vpow.pop %v6851
    %v6853 = vmul.f32 %v6819, 1.442695
    %v6854 = vpow.pop %v6853
    %v6855 = vmul.f32 %v6820, 1.442695
    %v6856 = vpow.pop %v6855
    %v6857 = vmul.f32 %v6821, 1.442695
    %v6858 = vpow.pop %v6857
    %v6859 = vmul.f32 %v6822, 1.442695
    %v6860 = vpow.pop %v6859
    %v6861 = vmul.f32 %v6823, 1.442695
    %v6862 = vpow.pop %v6861
    %v6863 = vmul.f32 %v6824, 1.442695
    %v6864 = vpow.pop %v6863
    %v6865 = vmul.f32 %v6825, 1.442695
    %v6866 = vpow.pop %v6865
    %v6867 = vmul.f32 %v6826, 1.442695
    %v6868 = vpow.pop %v6867
    %v6869 = vmul.f32 %v6827, 1.442695
    %v6870 = vpow.pop %v6869
    %v6871 = vmul.f32 %v6828, 1.442695
    %v6872 = vpow.pop %v6871
    %v6873 = vmul.f32 %v6829, 1.442695
    %v6874 = vpow.pop %v6873
    %v6875 = vmul.f32 %v6830, 1.442695
    %v6876 = vpow.pop %v6875
    %v6877 = vmul.f32 %v6831, 1.442695
    %v6878 = vpow.pop %v6877
    %v6879 = vmul.f32 %v6832, 1.442695
    %v6880 = vpow.pop %v6879
    %v6881 = vmul.f32 %v6833, 1.442695
    %v6882 = vpow.pop %v6881
    %v6883 = vmul.f32 %v6834, 1.442695
    %v6884 = vpow.pop %v6883
    %v6885 = vmul.f32 %v6835, 1.442695
    %v6886 = vpow.pop %v6885
    %v6887 = vmul.f32 %v6836, 1.442695
    %v6888 = vpow.pop %v6887
    %v6889 = vmul.f32 %v6837, 1.442695
    %v6890 = vpow.pop %v6889
    %v6891 = vmul.f32 %v6838, 1.442695
    %v6892 = vpow.pop %v6891
    %v6893 = vmul.f32 %v6839, 1.442695
    %v6894 = vpow.pop %v6893
    %v6895 = vmul.f32 %v6840, 1.442695
    %v6896 = vpow.pop %v6895
    %v6897 = vmul.f32 %v6841, 1.442695
    %v6898 = vpow.pop %v6897
    %v6899 = vmul.f32 %v6842, 1.442695
    %v6900 = vpow.pop %v6899
    %v6901 = vmul.f32 %v6843, 1.442695
    %v6902 = vpow.pop %v6901
    %v6903 = vmul.f32 %v6844, 1.442695
    %v6904 = vpow.pop %v6903
    %v6905 = vmul.f32 %v6845, 1.442695
    %v6906 = vpow.pop %v6905
    %v6907 = vmul.f32 %v6846, 1.442695
    %v6908 = vpow.pop %v6907
    %v6909 = vmul.f32 %v6847, 1.442695
    %v6910 = vpow.pop %v6909
    %v6911 = vmul.f32 %v6848, 1.442695
    %v6912 = vpow.pop %v6911
    %v6913 = vsel %vm1959, %v6850, 0.0
    %v6914 = vsel %vm1959, %v6852, 0.0
    %v6915 = vadd.f32 %v6913, %v6914
    %v6916 = vrot.slane %v6915, 4
    %v6917 = vadd.f32 %v6915, %v6916
    %v6918 = vrot.slane %v6917, 2
    %v6919 = vadd.f32 %v6917, %v6918
    %v6920 = vrot.slane %v6919, 1
    %v6921 = vadd.f32 %v6919, %v6920
    %v6922 = vsel %vm1959, %v6854, 0.0
    %v6923 = vsel %vm1959, %v6856, 0.0
    %v6924 = vadd.f32 %v6922, %v6923
    %v6925 = vrot.slane %v6924, 4
    %v6926 = vadd.f32 %v6924, %v6925
    %v6927 = vrot.slane %v6926, 2
    %v6928 = vadd.f32 %v6926, %v6927
    %v6929 = vrot.slane %v6928, 1
    %v6930 = vadd.f32 %v6928, %v6929
    %v6931 = vsel %vm1959, %v6858, 0.0
    %v6932 = vsel %vm1959, %v6860, 0.0
    %v6933 = vadd.f32 %v6931, %v6932
    %v6934 = vrot.slane %v6933, 4
    %v6935 = vadd.f32 %v6933, %v6934
    %v6936 = vrot.slane %v6935, 2
    %v6937 = vadd.f32 %v6935, %v6936
    %v6938 = vrot.slane %v6937, 1
    %v6939 = vadd.f32 %v6937, %v6938
    %v6940 = vsel %vm1959, %v6862, 0.0
    %v6941 = vsel %vm1959, %v6864, 0.0
    %v6942 = vadd.f32 %v6940, %v6941
    %v6943 = vrot.slane %v6942, 4
    %v6944 = vadd.f32 %v6942, %v6943
    %v6945 = vrot.slane %v6944, 2
    %v6946 = vadd.f32 %v6944, %v6945
    %v6947 = vrot.slane %v6946, 1
    %v6948 = vadd.f32 %v6946, %v6947
    %v6949 = vsel %vm1959, %v6866, 0.0
    %v6950 = vsel %vm1959, %v6868, 0.0
    %v6951 = vadd.f32 %v6949, %v6950
    %v6952 = vrot.slane %v6951, 4
    %v6953 = vadd.f32 %v6951, %v6952
    %v6954 = vrot.slane %v6953, 2
    %v6955 = vadd.f32 %v6953, %v6954
    %v6956 = vrot.slane %v6955, 1
    %v6957 = vadd.f32 %v6955, %v6956
    %v6958 = vsel %vm1959, %v6870, 0.0
    %v6959 = vsel %vm1959, %v6872, 0.0
    %v6960 = vadd.f32 %v6958, %v6959
    %v6961 = vrot.slane %v6960, 4
    %v6962 = vadd.f32 %v6960, %v6961
    %v6963 = vrot.slane %v6962, 2
    %v6964 = vadd.f32 %v6962, %v6963
    %v6965 = vrot.slane %v6964, 1
    %v6966 = vadd.f32 %v6964, %v6965
    %v6967 = vsel %vm1959, %v6874, 0.0
    %v6968 = vsel %vm1959, %v6876, 0.0
    %v6969 = vadd.f32 %v6967, %v6968
    %v6970 = vrot.slane %v6969, 4
    %v6971 = vadd.f32 %v6969, %v6970
    %v6972 = vrot.slane %v6971, 2
    %v6973 = vadd.f32 %v6971, %v6972
    %v6974 = vrot.slane %v6973, 1
    %v6975 = vadd.f32 %v6973, %v6974
    %v6976 = vsel %vm1959, %v6878, 0.0
    %v6977 = vsel %vm1959, %v6880, 0.0
    %v6978 = vadd.f32 %v6976, %v6977
    %v6979 = vrot.slane %v6978, 4
    %v6980 = vadd.f32 %v6978, %v6979
    %v6981 = vrot.slane %v6980, 2
    %v6982 = vadd.f32 %v6980, %v6981
    %v6983 = vrot.slane %v6982, 1
    %v6984 = vadd.f32 %v6982, %v6983
    %v6985 = vsel %vm1959, %v6882, 0.0
    %v6986 = vsel %vm1959, %v6884, 0.0
    %v6987 = vadd.f32 %v6985, %v6986
    %v6988 = vrot.slane %v6987, 4
    %v6989 = vadd.f32 %v6987, %v6988
    %v6990 = vrot.slane %v6989, 2
    %v6991 = vadd.f32 %v6989, %v6990
    %v6992 = vrot.slane %v6991, 1
    %v6993 = vadd.f32 %v6991, %v6992
    %v6994 = vsel %vm1959, %v6886, 0.0
    %v6995 = vsel %vm1959, %v6888, 0.0
    %v6996 = vadd.f32 %v6994, %v6995
    %v6997 = vrot.slane %v6996, 4
    %v6998 = vadd.f32 %v6996, %v6997
    %v6999 = vrot.slane %v6998, 2
    %v7000 = vadd.f32 %v6998, %v6999
    %v7001 = vrot.slane %v7000, 1
    %v7002 = vadd.f32 %v7000, %v7001
    %v7003 = vsel %vm1959, %v6890, 0.0
    %v7004 = vsel %vm1959, %v6892, 0.0
    %v7005 = vadd.f32 %v7003, %v7004
    %v7006 = vrot.slane %v7005, 4
    %v7007 = vadd.f32 %v7005, %v7006
    %v7008 = vrot.slane %v7007, 2
    %v7009 = vadd.f32 %v7007, %v7008
    %v7010 = vrot.slane %v7009, 1
    %v7011 = vadd.f32 %v7009, %v7010
    %v7012 = vsel %vm1959, %v6894, 0.0
    %v7013 = vsel %vm1959, %v6896, 0.0
    %v7014 = vadd.f32 %v7012, %v7013
    %v7015 = vrot.slane %v7014, 4
    %v7016 = vadd.f32 %v7014, %v7015
    %v7017 = vrot.slane %v7016, 2
    %v7018 = vadd.f32 %v7016, %v7017
    %v7019 = vrot.slane %v7018, 1
    %v7020 = vadd.f32 %v7018, %v7019
    %v7021 = vsel %vm1959, %v6898, 0.0
    %v7022 = vsel %vm1959, %v6900, 0.0
    %v7023 = vadd.f32 %v7021, %v7022
    %v7024 = vrot.slane %v7023, 4
    %v7025 = vadd.f32 %v7023, %v7024
    %v7026 = vrot.slane %v7025, 2
    %v7027 = vadd.f32 %v7025, %v7026
    %v7028 = vrot.slane %v7027, 1
    %v7029 = vadd.f32 %v7027, %v7028
    %v7030 = vsel %vm1959, %v6902, 0.0
    %v7031 = vsel %vm1959, %v6904, 0.0
    %v7032 = vadd.f32 %v7030, %v7031
    %v7033 = vrot.slane %v7032, 4
    %v7034 = vadd.f32 %v7032, %v7033
    %v7035 = vrot.slane %v7034, 2
    %v7036 = vadd.f32 %v7034, %v7035
    %v7037 = vrot.slane %v7036, 1
    %v7038 = vadd.f32 %v7036, %v7037
    %v7039 = vsel %vm1959, %v6906, 0.0
    %v7040 = vsel %vm1959, %v6908, 0.0
    %v7041 = vadd.f32 %v7039, %v7040
    %v7042 = vrot.slane %v7041, 4
    %v7043 = vadd.f32 %v7041, %v7042
    %v7044 = vrot.slane %v7043, 2
    %v7045 = vadd.f32 %v7043, %v7044
    %v7046 = vrot.slane %v7045, 1
    %v7047 = vadd.f32 %v7045, %v7046
    %v7048 = vsel %vm1959, %v6910, 0.0
    %v7049 = vsel %vm1959, %v6912, 0.0
    %v7050 = vadd.f32 %v7048, %v7049
    %v7051 = vrot.slane %v7050, 4
    %v7052 = vadd.f32 %v7050, %v7051
    %v7053 = vrot.slane %v7052, 2
    %v7054 = vadd.f32 %v7052, %v7053
    %v7055 = vrot.slane %v7054, 1
    %v7056 = vadd.f32 %v7054, %v7055
    %v7057 = vrcp.pop %v6921
    %v7058 = vrcp.pop %v6930
    %v7059 = vrcp.pop %v6939
    %v7060 = vrcp.pop %v6948
    %v7061 = vrcp.pop %v6957
    %v7062 = vrcp.pop %v6966
    %v7063 = vrcp.pop %v6975
    %v7064 = vrcp.pop %v6984
    %v7065 = vrcp.pop %v6993
    %v7066 = vrcp.pop %v7002
    %v7067 = vrcp.pop %v7011
    %v7068 = vrcp.pop %v7020
    %v7069 = vrcp.pop %v7029
    %v7070 = vrcp.pop %v7038
    %v7071 = vrcp.pop %v7047
    %v7072 = vrcp.pop %v7056
    %v7073 = vmul.f32 %v6921, %v7057
    %v7074 = vmul.f32 %v6930, %v7058
    %v7075 = vmul.f32 %v6939, %v7059
    %v7076 = vmul.f32 %v6948, %v7060
    %v7077 = vmul.f32 %v6957, %v7061
    %v7078 = vmul.f32 %v6966, %v7062
    %v7079 = vmul.f32 %v6975, %v7063
    %v7080 = vmul.f32 %v6984, %v7064
    %v7081 = vmul.f32 %v6993, %v7065
    %v7082 = vmul.f32 %v7002, %v7066
    %v7083 = vmul.f32 %v7011, %v7067
    %v7084 = vmul.f32 %v7020, %v7068
    %v7085 = vmul.f32 %v7029, %v7069
    %v7086 = vmul.f32 %v7038, %v7070
    %v7087 = vmul.f32 %v7047, %v7071
    %v7088 = vmul.f32 %v7056, %v7072
    %v7089 = vsub.f32 2.0, %v7073
    %v7090 = vsub.f32 2.0, %v7074
    %v7091 = vsub.f32 2.0, %v7075
    %v7092 = vsub.f32 2.0, %v7076
    %v7093 = vsub.f32 2.0, %v7077
    %v7094 = vsub.f32 2.0, %v7078
    %v7095 = vsub.f32 2.0, %v7079
    %v7096 = vsub.f32 2.0, %v7080
    %v7097 = vsub.f32 2.0, %v7081
    %v7098 = vsub.f32 2.0, %v7082
    %v7099 = vsub.f32 2.0, %v7083
    %v7100 = vsub.f32 2.0, %v7084
    %v7101 = vsub.f32 2.0, %v7085
    %v7102 = vsub.f32 2.0, %v7086
    %v7103 = vsub.f32 2.0, %v7087
    %v7104 = vsub.f32 2.0, %v7088
    %v7105 = vmul.f32 %v7057, %v7089
    %v7106 = vmul.f32 %v7058, %v7090
    %v7107 = vmul.f32 %v7059, %v7091
    %v7108 = vmul.f32 %v7060, %v7092
    %v7109 = vmul.f32 %v7061, %v7093
    %v7110 = vmul.f32 %v7062, %v7094
    %v7111 = vmul.f32 %v7063, %v7095
    %v7112 = vmul.f32 %v7064, %v7096
    %v7113 = vmul.f32 %v7065, %v7097
    %v7114 = vmul.f32 %v7066, %v7098
    %v7115 = vmul.f32 %v7067, %v7099
    %v7116 = vmul.f32 %v7068, %v7100
    %v7117 = vmul.f32 %v7069, %v7101
    %v7118 = vmul.f32 %v7070, %v7102
    %v7119 = vmul.f32 %v7071, %v7103
    %v7120 = vmul.f32 %v7072, %v7104
    %v7121 = vmul.f32 %v6850, %v7105
    %v7122 = vmul.f32 %v6852, %v7105
    %v7123 = vmul.f32 %v6854, %v7106
    %v7124 = vmul.f32 %v6856, %v7106
    %v7125 = vmul.f32 %v6858, %v7107
    %v7126 = vmul.f32 %v6860, %v7107
    %v7127 = vmul.f32 %v6862, %v7108
    %v7128 = vmul.f32 %v6864, %v7108
    %v7129 = vmul.f32 %v6866, %v7109
    %v7130 = vmul.f32 %v6868, %v7109
    %v7131 = vmul.f32 %v6870, %v7110
    %v7132 = vmul.f32 %v6872, %v7110
    %v7133 = vmul.f32 %v6874, %v7111
    %v7134 = vmul.f32 %v6876, %v7111
    %v7135 = vmul.f32 %v6878, %v7112
    %v7136 = vmul.f32 %v6880, %v7112
    %v7137 = vmul.f32 %v6882, %v7113
    %v7138 = vmul.f32 %v6884, %v7113
    %v7139 = vmul.f32 %v6886, %v7114
    %v7140 = vmul.f32 %v6888, %v7114
    %v7141 = vmul.f32 %v6890, %v7115
    %v7142 = vmul.f32 %v6892, %v7115
    %v7143 = vmul.f32 %v6894, %v7116
    %v7144 = vmul.f32 %v6896, %v7116
    %v7145 = vmul.f32 %v6898, %v7117
    %v7146 = vmul.f32 %v6900, %v7117
    %v7147 = vmul.f32 %v6902, %v7118
    %v7148 = vmul.f32 %v6904, %v7118
    %v7149 = vmul.f32 %v6906, %v7119
    %v7150 = vmul.f32 %v6908, %v7119
    %v7151 = vmul.f32 %v6910, %v7120
    %v7152 = vmul.f32 %v6912, %v7120
    %v7153 = vmul.f32 %v7121, %v5093
    %v7154 = vmul.f32 %v7122, %v5094
    %v7155 = vmul.f32 %v7123, %v5093
    %v7156 = vmul.f32 %v7124, %v5094
    %v7157 = vmul.f32 %v7125, %v5093
    %v7158 = vmul.f32 %v7126, %v5094
    %v7159 = vmul.f32 %v7127, %v5093
    %v7160 = vmul.f32 %v7128, %v5094
    %v7161 = vmul.f32 %v7129, %v5093
    %v7162 = vmul.f32 %v7130, %v5094
    %v7163 = vmul.f32 %v7131, %v5093
    %v7164 = vmul.f32 %v7132, %v5094
    %v7165 = vmul.f32 %v7133, %v5093
    %v7166 = vmul.f32 %v7134, %v5094
    %v7167 = vmul.f32 %v7135, %v5093
    %v7168 = vmul.f32 %v7136, %v5094
    %v7169 = vmul.f32 %v7137, %v5093
    %v7170 = vmul.f32 %v7138, %v5094
    %v7171 = vmul.f32 %v7139, %v5093
    %v7172 = vmul.f32 %v7140, %v5094
    %v7173 = vmul.f32 %v7141, %v5093
    %v7174 = vmul.f32 %v7142, %v5094
    %v7175 = vmul.f32 %v7143, %v5093
    %v7176 = vmul.f32 %v7144, %v5094
    %v7177 = vmul.f32 %v7145, %v5093
    %v7178 = vmul.f32 %v7146, %v5094
    %v7179 = vmul.f32 %v7147, %v5093
    %v7180 = vmul.f32 %v7148, %v5094
    %v7181 = vmul.f32 %v7149, %v5093
    %v7182 = vmul.f32 %v7150, %v5094
    %v7183 = vmul.f32 %v7151, %v5093
    %v7184 = vmul.f32 %v7152, %v5094
    %v7185 = vsel %vm1959, %v7153, 0.0
    %v7186 = vsel %vm1959, %v7154, 0.0
    %v7187 = vadd.f32 %v7185, %v7186
    %v7188 = vrot.slane %v7187, 4
    %v7189 = vadd.f32 %v7187, %v7188
    %v7190 = vrot.slane %v7189, 2
    %v7191 = vadd.f32 %v7189, %v7190
    %v7192 = vrot.slane %v7191, 1
    %v7193 = vadd.f32 %v7191, %v7192
    %v7194 = vsel %vm1959, %v7155, 0.0
    %v7195 = vsel %vm1959, %v7156, 0.0
    %v7196 = vadd.f32 %v7194, %v7195
    %v7197 = vrot.slane %v7196, 4
    %v7198 = vadd.f32 %v7196, %v7197
    %v7199 = vrot.slane %v7198, 2
    %v7200 = vadd.f32 %v7198, %v7199
    %v7201 = vrot.slane %v7200, 1
    %v7202 = vadd.f32 %v7200, %v7201
    %v7203 = vsel %vm1959, %v7157, 0.0
    %v7204 = vsel %vm1959, %v7158, 0.0
    %v7205 = vadd.f32 %v7203, %v7204
    %v7206 = vrot.slane %v7205, 4
    %v7207 = vadd.f32 %v7205, %v7206
    %v7208 = vrot.slane %v7207, 2
    %v7209 = vadd.f32 %v7207, %v7208
    %v7210 = vrot.slane %v7209, 1
    %v7211 = vadd.f32 %v7209, %v7210
    %v7212 = vsel %vm1959, %v7159, 0.0
    %v7213 = vsel %vm1959, %v7160, 0.0
    %v7214 = vadd.f32 %v7212, %v7213
    %v7215 = vrot.slane %v7214, 4
    %v7216 = vadd.f32 %v7214, %v7215
    %v7217 = vrot.slane %v7216, 2
    %v7218 = vadd.f32 %v7216, %v7217
    %v7219 = vrot.slane %v7218, 1
    %v7220 = vadd.f32 %v7218, %v7219
    %v7221 = vsel %vm1959, %v7161, 0.0
    %v7222 = vsel %vm1959, %v7162, 0.0
    %v7223 = vadd.f32 %v7221, %v7222
    %v7224 = vrot.slane %v7223, 4
    %v7225 = vadd.f32 %v7223, %v7224
    %v7226 = vrot.slane %v7225, 2
    %v7227 = vadd.f32 %v7225, %v7226
    %v7228 = vrot.slane %v7227, 1
    %v7229 = vadd.f32 %v7227, %v7228
    %v7230 = vsel %vm1959, %v7163, 0.0
    %v7231 = vsel %vm1959, %v7164, 0.0
    %v7232 = vadd.f32 %v7230, %v7231
    %v7233 = vrot.slane %v7232, 4
    %v7234 = vadd.f32 %v7232, %v7233
    %v7235 = vrot.slane %v7234, 2
    %v7236 = vadd.f32 %v7234, %v7235
    %v7237 = vrot.slane %v7236, 1
    %v7238 = vadd.f32 %v7236, %v7237
    %v7239 = vsel %vm1959, %v7165, 0.0
    %v7240 = vsel %vm1959, %v7166, 0.0
    %v7241 = vadd.f32 %v7239, %v7240
    %v7242 = vrot.slane %v7241, 4
    %v7243 = vadd.f32 %v7241, %v7242
    %v7244 = vrot.slane %v7243, 2
    %v7245 = vadd.f32 %v7243, %v7244
    %v7246 = vrot.slane %v7245, 1
    %v7247 = vadd.f32 %v7245, %v7246
    %v7248 = vsel %vm1959, %v7167, 0.0
    %v7249 = vsel %vm1959, %v7168, 0.0
    %v7250 = vadd.f32 %v7248, %v7249
    %v7251 = vrot.slane %v7250, 4
    %v7252 = vadd.f32 %v7250, %v7251
    %v7253 = vrot.slane %v7252, 2
    %v7254 = vadd.f32 %v7252, %v7253
    %v7255 = vrot.slane %v7254, 1
    %v7256 = vadd.f32 %v7254, %v7255
    %v7257 = vsel %vm1959, %v7169, 0.0
    %v7258 = vsel %vm1959, %v7170, 0.0
    %v7259 = vadd.f32 %v7257, %v7258
    %v7260 = vrot.slane %v7259, 4
    %v7261 = vadd.f32 %v7259, %v7260
    %v7262 = vrot.slane %v7261, 2
    %v7263 = vadd.f32 %v7261, %v7262
    %v7264 = vrot.slane %v7263, 1
    %v7265 = vadd.f32 %v7263, %v7264
    %v7266 = vsel %vm1959, %v7171, 0.0
    %v7267 = vsel %vm1959, %v7172, 0.0
    %v7268 = vadd.f32 %v7266, %v7267
    %v7269 = vrot.slane %v7268, 4
    %v7270 = vadd.f32 %v7268, %v7269
    %v7271 = vrot.slane %v7270, 2
    %v7272 = vadd.f32 %v7270, %v7271
    %v7273 = vrot.slane %v7272, 1
    %v7274 = vadd.f32 %v7272, %v7273
    %v7275 = vsel %vm1959, %v7173, 0.0
    %v7276 = vsel %vm1959, %v7174, 0.0
    %v7277 = vadd.f32 %v7275, %v7276
    %v7278 = vrot.slane %v7277, 4
    %v7279 = vadd.f32 %v7277, %v7278
    %v7280 = vrot.slane %v7279, 2
    %v7281 = vadd.f32 %v7279, %v7280
    %v7282 = vrot.slane %v7281, 1
    %v7283 = vadd.f32 %v7281, %v7282
    %v7284 = vsel %vm1959, %v7175, 0.0
    %v7285 = vsel %vm1959, %v7176, 0.0
    %v7286 = vadd.f32 %v7284, %v7285
    %v7287 = vrot.slane %v7286, 4
    %v7288 = vadd.f32 %v7286, %v7287
    %v7289 = vrot.slane %v7288, 2
    %v7290 = vadd.f32 %v7288, %v7289
    %v7291 = vrot.slane %v7290, 1
    %v7292 = vadd.f32 %v7290, %v7291
    %v7293 = vsel %vm1959, %v7177, 0.0
    %v7294 = vsel %vm1959, %v7178, 0.0
    %v7295 = vadd.f32 %v7293, %v7294
    %v7296 = vrot.slane %v7295, 4
    %v7297 = vadd.f32 %v7295, %v7296
    %v7298 = vrot.slane %v7297, 2
    %v7299 = vadd.f32 %v7297, %v7298
    %v7300 = vrot.slane %v7299, 1
    %v7301 = vadd.f32 %v7299, %v7300
    %v7302 = vsel %vm1959, %v7179, 0.0
    %v7303 = vsel %vm1959, %v7180, 0.0
    %v7304 = vadd.f32 %v7302, %v7303
    %v7305 = vrot.slane %v7304, 4
    %v7306 = vadd.f32 %v7304, %v7305
    %v7307 = vrot.slane %v7306, 2
    %v7308 = vadd.f32 %v7306, %v7307
    %v7309 = vrot.slane %v7308, 1
    %v7310 = vadd.f32 %v7308, %v7309
    %v7311 = vsel %vm1959, %v7181, 0.0
    %v7312 = vsel %vm1959, %v7182, 0.0
    %v7313 = vadd.f32 %v7311, %v7312
    %v7314 = vrot.slane %v7313, 4
    %v7315 = vadd.f32 %v7313, %v7314
    %v7316 = vrot.slane %v7315, 2
    %v7317 = vadd.f32 %v7315, %v7316
    %v7318 = vrot.slane %v7317, 1
    %v7319 = vadd.f32 %v7317, %v7318
    %v7320 = vsel %vm1959, %v7183, 0.0
    %v7321 = vsel %vm1959, %v7184, 0.0
    %v7322 = vadd.f32 %v7320, %v7321
    %v7323 = vrot.slane %v7322, 4
    %v7324 = vadd.f32 %v7322, %v7323
    %v7325 = vrot.slane %v7324, 2
    %v7326 = vadd.f32 %v7324, %v7325
    %v7327 = vrot.slane %v7326, 1
    %v7328 = vadd.f32 %v7326, %v7327
    %s7329 = scalar_lea.vmem [#allocation14], 64
    %v7330 = vld [vmem:[%s7329] sm:$0xff]
    %v7331 = vld [vmem:[%s7329 + $0x8] sm:$0xff]
    %v7332 = vlaneseq
    %v7333 = vshrl.u32 %v7332, 7
    %v7334 = vsub.s32 0, %v7333
    %v7335 = vrot.slane %v7330, %v7334
    %7337 = vbcast.lane.b32.xlu0 %v7335, 256
    %v7338 = vpop.permute.xlu0 %7337
    %s7340 = sor.u32 256, 8
    %7341 = vbcast.lane.b32.xlu0 %v7335, %s7340
    %v7342 = vpop.permute.xlu0 %7341
    %v7343 = vlaneseq
    %v7344 = vshrl.u32 %v7343, 7
    %v7345 = vsub.s32 1, %v7344
    %v7346 = vrot.slane %v7330, %v7345
    %7348 = vbcast.lane.b32.xlu0 %v7346, 256
    %v7349 = vpop.permute.xlu0 %7348
    %s7351 = sor.u32 256, 8
    %7352 = vbcast.lane.b32.xlu0 %v7346, %s7351
    %v7353 = vpop.permute.xlu0 %7352
    %v7354 = vlaneseq
    %v7355 = vshrl.u32 %v7354, 7
    %v7356 = vsub.s32 2, %v7355
    %v7357 = vrot.slane %v7330, %v7356
    %7359 = vbcast.lane.b32.xlu0 %v7357, 256
    %v7360 = vpop.permute.xlu0 %7359
    %s7362 = sor.u32 256, 8
    %7363 = vbcast.lane.b32.xlu0 %v7357, %s7362
    %v7364 = vpop.permute.xlu0 %7363
    %v7365 = vlaneseq
    %v7366 = vshrl.u32 %v7365, 7
    %v7367 = vsub.s32 3, %v7366
    %v7368 = vrot.slane %v7330, %v7367
    %7370 = vbcast.lane.b32.xlu0 %v7368, 256
    %v7371 = vpop.permute.xlu0 %7370
    %s7373 = sor.u32 256, 8
    %7374 = vbcast.lane.b32.xlu0 %v7368, %s7373
    %v7375 = vpop.permute.xlu0 %7374
    %v7376 = vlaneseq
    %v7377 = vshrl.u32 %v7376, 7
    %v7378 = vsub.s32 4, %v7377
    %v7379 = vrot.slane %v7330, %v7378
    %7381 = vbcast.lane.b32.xlu0 %v7379, 256
    %v7382 = vpop.permute.xlu0 %7381
    %s7384 = sor.u32 256, 8
    %7385 = vbcast.lane.b32.xlu0 %v7379, %s7384
    %v7386 = vpop.permute.xlu0 %7385
    %v7387 = vlaneseq
    %v7388 = vshrl.u32 %v7387, 7
    %v7389 = vsub.s32 5, %v7388
    %v7390 = vrot.slane %v7330, %v7389
    %7392 = vbcast.lane.b32.xlu0 %v7390, 256
    %v7393 = vpop.permute.xlu0 %7392
    %s7395 = sor.u32 256, 8
    %7396 = vbcast.lane.b32.xlu0 %v7390, %s7395
    %v7397 = vpop.permute.xlu0 %7396
    %v7398 = vlaneseq
    %v7399 = vshrl.u32 %v7398, 7
    %v7400 = vsub.s32 6, %v7399
    %v7401 = vrot.slane %v7330, %v7400
    %7403 = vbcast.lane.b32.xlu0 %v7401, 256
    %v7404 = vpop.permute.xlu0 %7403
    %s7406 = sor.u32 256, 8
    %7407 = vbcast.lane.b32.xlu0 %v7401, %s7406
    %v7408 = vpop.permute.xlu0 %7407
    %v7409 = vlaneseq
    %v7410 = vshrl.u32 %v7409, 7
    %v7411 = vsub.s32 7, %v7410
    %v7412 = vrot.slane %v7330, %v7411
    %7414 = vbcast.lane.b32.xlu0 %v7412, 256
    %v7415 = vpop.permute.xlu0 %7414
    %s7417 = sor.u32 256, 8
    %7418 = vbcast.lane.b32.xlu0 %v7412, %s7417
    %v7419 = vpop.permute.xlu0 %7418
    %v7420 = vlaneseq
    %v7421 = vshrl.u32 %v7420, 7
    %v7422 = vsub.s32 0, %v7421
    %v7423 = vrot.slane %v7331, %v7422
    %7425 = vbcast.lane.b32.xlu0 %v7423, 256
    %v7426 = vpop.permute.xlu0 %7425
    %s7428 = sor.u32 256, 8
    %7429 = vbcast.lane.b32.xlu0 %v7423, %s7428
    %v7430 = vpop.permute.xlu0 %7429
    %v7431 = vlaneseq
    %v7432 = vshrl.u32 %v7431, 7
    %v7433 = vsub.s32 1, %v7432
    %v7434 = vrot.slane %v7331, %v7433
    %7436 = vbcast.lane.b32.xlu0 %v7434, 256
    %v7437 = vpop.permute.xlu0 %7436
    %s7439 = sor.u32 256, 8
    %7440 = vbcast.lane.b32.xlu0 %v7434, %s7439
    %v7441 = vpop.permute.xlu0 %7440
    %v7442 = vlaneseq
    %v7443 = vshrl.u32 %v7442, 7
    %v7444 = vsub.s32 2, %v7443
    %v7445 = vrot.slane %v7331, %v7444
    %7447 = vbcast.lane.b32.xlu0 %v7445, 256
    %v7448 = vpop.permute.xlu0 %7447
    %s7450 = sor.u32 256, 8
    %7451 = vbcast.lane.b32.xlu0 %v7445, %s7450
    %v7452 = vpop.permute.xlu0 %7451
    %v7453 = vlaneseq
    %v7454 = vshrl.u32 %v7453, 7
    %v7455 = vsub.s32 3, %v7454
    %v7456 = vrot.slane %v7331, %v7455
    %7458 = vbcast.lane.b32.xlu0 %v7456, 256
    %v7459 = vpop.permute.xlu0 %7458
    %s7461 = sor.u32 256, 8
    %7462 = vbcast.lane.b32.xlu0 %v7456, %s7461
    %v7463 = vpop.permute.xlu0 %7462
    %v7464 = vlaneseq
    %v7465 = vshrl.u32 %v7464, 7
    %v7466 = vsub.s32 4, %v7465
    %v7467 = vrot.slane %v7331, %v7466
    %7469 = vbcast.lane.b32.xlu0 %v7467, 256
    %v7470 = vpop.permute.xlu0 %7469
    %s7472 = sor.u32 256, 8
    %7473 = vbcast.lane.b32.xlu0 %v7467, %s7472
    %v7474 = vpop.permute.xlu0 %7473
    %v7475 = vlaneseq
    %v7476 = vshrl.u32 %v7475, 7
    %v7477 = vsub.s32 5, %v7476
    %v7478 = vrot.slane %v7331, %v7477
    %7480 = vbcast.lane.b32.xlu0 %v7478, 256
    %v7481 = vpop.permute.xlu0 %7480
    %s7483 = sor.u32 256, 8
    %7484 = vbcast.lane.b32.xlu0 %v7478, %s7483
    %v7485 = vpop.permute.xlu0 %7484
    %v7486 = vlaneseq
    %v7487 = vshrl.u32 %v7486, 7
    %v7488 = vsub.s32 6, %v7487
    %v7489 = vrot.slane %v7331, %v7488
    %7491 = vbcast.lane.b32.xlu0 %v7489, 256
    %v7492 = vpop.permute.xlu0 %7491
    %s7494 = sor.u32 256, 8
    %7495 = vbcast.lane.b32.xlu0 %v7489, %s7494
    %v7496 = vpop.permute.xlu0 %7495
    %v7497 = vlaneseq
    %v7498 = vshrl.u32 %v7497, 7
    %v7499 = vsub.s32 7, %v7498
    %v7500 = vrot.slane %v7331, %v7499
    %7502 = vbcast.lane.b32.xlu0 %v7500, 256
    %v7503 = vpop.permute.xlu0 %7502
    %s7505 = sor.u32 256, 8
    %7506 = vbcast.lane.b32.xlu0 %v7500, %s7505
    %v7507 = vpop.permute.xlu0 %7506
    %v7508 = vmul.f32 %v7121, %v7338
    %v7509 = vmul.f32 %v7122, %v7342
    %v7510 = vmul.f32 %v7123, %v7349
    %v7511 = vmul.f32 %v7124, %v7353
    %v7512 = vmul.f32 %v7125, %v7360
    %v7513 = vmul.f32 %v7126, %v7364
    %v7514 = vmul.f32 %v7127, %v7371
    %v7515 = vmul.f32 %v7128, %v7375
    %v7516 = vmul.f32 %v7129, %v7382
    %v7517 = vmul.f32 %v7130, %v7386
    %v7518 = vmul.f32 %v7131, %v7393
    %v7519 = vmul.f32 %v7132, %v7397
    %v7520 = vmul.f32 %v7133, %v7404
    %v7521 = vmul.f32 %v7134, %v7408
    %v7522 = vmul.f32 %v7135, %v7415
    %v7523 = vmul.f32 %v7136, %v7419
    %v7524 = vmul.f32 %v7137, %v7426
    %v7525 = vmul.f32 %v7138, %v7430
    %v7526 = vmul.f32 %v7139, %v7437
    %v7527 = vmul.f32 %v7140, %v7441
    %v7528 = vmul.f32 %v7141, %v7448
    %v7529 = vmul.f32 %v7142, %v7452
    %v7530 = vmul.f32 %v7143, %v7459
    %v7531 = vmul.f32 %v7144, %v7463
    %v7532 = vmul.f32 %v7145, %v7470
    %v7533 = vmul.f32 %v7146, %v7474
    %v7534 = vmul.f32 %v7147, %v7481
    %v7535 = vmul.f32 %v7148, %v7485
    %v7536 = vmul.f32 %v7149, %v7492
    %v7537 = vmul.f32 %v7150, %v7496
    %v7538 = vmul.f32 %v7151, %v7503
    %v7539 = vmul.f32 %v7152, %v7507
    %v7540 = vsel %vm1959, %v7508, 0.0
    %v7541 = vsel %vm1959, %v7509, 0.0
    %v7542 = vadd.f32 %v7540, %v7541
    %v7543 = vrot.slane %v7542, 4
    %v7544 = vadd.f32 %v7542, %v7543
    %v7545 = vrot.slane %v7544, 2
    %v7546 = vadd.f32 %v7544, %v7545
    %v7547 = vrot.slane %v7546, 1
    %v7548 = vadd.f32 %v7546, %v7547
    %v7549 = vsel %vm1959, %v7510, 0.0
    %v7550 = vsel %vm1959, %v7511, 0.0
    %v7551 = vadd.f32 %v7549, %v7550
    %v7552 = vrot.slane %v7551, 4
    %v7553 = vadd.f32 %v7551, %v7552
    %v7554 = vrot.slane %v7553, 2
    %v7555 = vadd.f32 %v7553, %v7554
    %v7556 = vrot.slane %v7555, 1
    %v7557 = vadd.f32 %v7555, %v7556
    %v7558 = vsel %vm1959, %v7512, 0.0
    %v7559 = vsel %vm1959, %v7513, 0.0
    %v7560 = vadd.f32 %v7558, %v7559
    %v7561 = vrot.slane %v7560, 4
    %v7562 = vadd.f32 %v7560, %v7561
    %v7563 = vrot.slane %v7562, 2
    %v7564 = vadd.f32 %v7562, %v7563
    %v7565 = vrot.slane %v7564, 1
    %v7566 = vadd.f32 %v7564, %v7565
    %v7567 = vsel %vm1959, %v7514, 0.0
    %v7568 = vsel %vm1959, %v7515, 0.0
    %v7569 = vadd.f32 %v7567, %v7568
    %v7570 = vrot.slane %v7569, 4
    %v7571 = vadd.f32 %v7569, %v7570
    %v7572 = vrot.slane %v7571, 2
    %v7573 = vadd.f32 %v7571, %v7572
    %v7574 = vrot.slane %v7573, 1
    %v7575 = vadd.f32 %v7573, %v7574
    %v7576 = vsel %vm1959, %v7516, 0.0
    %v7577 = vsel %vm1959, %v7517, 0.0
    %v7578 = vadd.f32 %v7576, %v7577
    %v7579 = vrot.slane %v7578, 4
    %v7580 = vadd.f32 %v7578, %v7579
    %v7581 = vrot.slane %v7580, 2
    %v7582 = vadd.f32 %v7580, %v7581
    %v7583 = vrot.slane %v7582, 1
    %v7584 = vadd.f32 %v7582, %v7583
    %v7585 = vsel %vm1959, %v7518, 0.0
    %v7586 = vsel %vm1959, %v7519, 0.0
    %v7587 = vadd.f32 %v7585, %v7586
    %v7588 = vrot.slane %v7587, 4
    %v7589 = vadd.f32 %v7587, %v7588
    %v7590 = vrot.slane %v7589, 2
    %v7591 = vadd.f32 %v7589, %v7590
    %v7592 = vrot.slane %v7591, 1
    %v7593 = vadd.f32 %v7591, %v7592
    %v7594 = vsel %vm1959, %v7520, 0.0
    %v7595 = vsel %vm1959, %v7521, 0.0
    %v7596 = vadd.f32 %v7594, %v7595
    %v7597 = vrot.slane %v7596, 4
    %v7598 = vadd.f32 %v7596, %v7597
    %v7599 = vrot.slane %v7598, 2
    %v7600 = vadd.f32 %v7598, %v7599
    %v7601 = vrot.slane %v7600, 1
    %v7602 = vadd.f32 %v7600, %v7601
    %v7603 = vsel %vm1959, %v7522, 0.0
    %v7604 = vsel %vm1959, %v7523, 0.0
    %v7605 = vadd.f32 %v7603, %v7604
    %v7606 = vrot.slane %v7605, 4
    %v7607 = vadd.f32 %v7605, %v7606
    %v7608 = vrot.slane %v7607, 2
    %v7609 = vadd.f32 %v7607, %v7608
    %v7610 = vrot.slane %v7609, 1
    %v7611 = vadd.f32 %v7609, %v7610
    %v7612 = vsel %vm1959, %v7524, 0.0
    %v7613 = vsel %vm1959, %v7525, 0.0
    %v7614 = vadd.f32 %v7612, %v7613
    %v7615 = vrot.slane %v7614, 4
    %v7616 = vadd.f32 %v7614, %v7615
    %v7617 = vrot.slane %v7616, 2
    %v7618 = vadd.f32 %v7616, %v7617
    %v7619 = vrot.slane %v7618, 1
    %v7620 = vadd.f32 %v7618, %v7619
    %v7621 = vsel %vm1959, %v7526, 0.0
    %v7622 = vsel %vm1959, %v7527, 0.0
    %v7623 = vadd.f32 %v7621, %v7622
    %v7624 = vrot.slane %v7623, 4
    %v7625 = vadd.f32 %v7623, %v7624
    %v7626 = vrot.slane %v7625, 2
    %v7627 = vadd.f32 %v7625, %v7626
    %v7628 = vrot.slane %v7627, 1
    %v7629 = vadd.f32 %v7627, %v7628
    %v7630 = vsel %vm1959, %v7528, 0.0
    %v7631 = vsel %vm1959, %v7529, 0.0
    %v7632 = vadd.f32 %v7630, %v7631
    %v7633 = vrot.slane %v7632, 4
    %v7634 = vadd.f32 %v7632, %v7633
    %v7635 = vrot.slane %v7634, 2
    %v7636 = vadd.f32 %v7634, %v7635
    %v7637 = vrot.slane %v7636, 1
    %v7638 = vadd.f32 %v7636, %v7637
    %v7639 = vsel %vm1959, %v7530, 0.0
    %v7640 = vsel %vm1959, %v7531, 0.0
    %v7641 = vadd.f32 %v7639, %v7640
    %v7642 = vrot.slane %v7641, 4
    %v7643 = vadd.f32 %v7641, %v7642
    %v7644 = vrot.slane %v7643, 2
    %v7645 = vadd.f32 %v7643, %v7644
    %v7646 = vrot.slane %v7645, 1
    %v7647 = vadd.f32 %v7645, %v7646
    %v7648 = vsel %vm1959, %v7532, 0.0
    %v7649 = vsel %vm1959, %v7533, 0.0
    %v7650 = vadd.f32 %v7648, %v7649
    %v7651 = vrot.slane %v7650, 4
    %v7652 = vadd.f32 %v7650, %v7651
    %v7653 = vrot.slane %v7652, 2
    %v7654 = vadd.f32 %v7652, %v7653
    %v7655 = vrot.slane %v7654, 1
    %v7656 = vadd.f32 %v7654, %v7655
    %v7657 = vsel %vm1959, %v7534, 0.0
    %v7658 = vsel %vm1959, %v7535, 0.0
    %v7659 = vadd.f32 %v7657, %v7658
    %v7660 = vrot.slane %v7659, 4
    %v7661 = vadd.f32 %v7659, %v7660
    %v7662 = vrot.slane %v7661, 2
    %v7663 = vadd.f32 %v7661, %v7662
    %v7664 = vrot.slane %v7663, 1
    %v7665 = vadd.f32 %v7663, %v7664
    %v7666 = vsel %vm1959, %v7536, 0.0
    %v7667 = vsel %vm1959, %v7537, 0.0
    %v7668 = vadd.f32 %v7666, %v7667
    %v7669 = vrot.slane %v7668, 4
    %v7670 = vadd.f32 %v7668, %v7669
    %v7671 = vrot.slane %v7670, 2
    %v7672 = vadd.f32 %v7670, %v7671
    %v7673 = vrot.slane %v7672, 1
    %v7674 = vadd.f32 %v7672, %v7673
    %v7675 = vsel %vm1959, %v7538, 0.0
    %v7676 = vsel %vm1959, %v7539, 0.0
    %v7677 = vadd.f32 %v7675, %v7676
    %v7678 = vrot.slane %v7677, 4
    %v7679 = vadd.f32 %v7677, %v7678
    %v7680 = vrot.slane %v7679, 2
    %v7681 = vadd.f32 %v7679, %v7680
    %v7682 = vrot.slane %v7681, 1
    %v7683 = vadd.f32 %v7681, %v7682
    %v7684 = vadd.f32 %v7193, %v7548
    %v7685 = vadd.f32 %v7202, %v7557
    %v7686 = vadd.f32 %v7211, %v7566
    %v7687 = vadd.f32 %v7220, %v7575
    %v7688 = vadd.f32 %v7229, %v7584
    %v7689 = vadd.f32 %v7238, %v7593
    %v7690 = vadd.f32 %v7247, %v7602
    %v7691 = vadd.f32 %v7256, %v7611
    %v7692 = vadd.f32 %v7265, %v7620
    %v7693 = vadd.f32 %v7274, %v7629
    %v7694 = vadd.f32 %v7283, %v7638
    %v7695 = vadd.f32 %v7292, %v7647
    %v7696 = vadd.f32 %v7301, %v7656
    %v7697 = vadd.f32 %v7310, %v7665
    %v7698 = vadd.f32 %v7319, %v7674
    %v7699 = vadd.f32 %v7328, %v7683
    %s7700 = sld [smem:[#allocation8 + $0x4]]
    %v7701 = vstv %s7700
    %v7702 = vadd.f32 %v7684, %v7701
    %v7703 = vadd.f32 %v7685, %v7701
    %v7704 = vadd.f32 %v7686, %v7701
    %v7705 = vadd.f32 %v7687, %v7701
    %v7706 = vadd.f32 %v7688, %v7701
    %v7707 = vadd.f32 %v7689, %v7701
    %v7708 = vadd.f32 %v7690, %v7701
    %v7709 = vadd.f32 %v7691, %v7701
    %v7710 = vadd.f32 %v7692, %v7701
    %v7711 = vadd.f32 %v7693, %v7701
    %v7712 = vadd.f32 %v7694, %v7701
    %v7713 = vadd.f32 %v7695, %v7701
    %v7714 = vadd.f32 %v7696, %v7701
    %v7715 = vadd.f32 %v7697, %v7701
    %v7716 = vadd.f32 %v7698, %v7701
    %v7717 = vadd.f32 %v7699, %v7701
    %v7734 = vsel %vm3020, %v7703, %v7702
    %v7735 = vsel %vm3022, %v7704, %v7734
    %v7736 = vsel %vm3024, %v7705, %v7735
    %v7737 = vsel %vm3026, %v7706, %v7736
    %v7738 = vsel %vm3028, %v7707, %v7737
    %v7739 = vsel %vm3030, %v7708, %v7738
    %v7740 = vsel %vm3032, %v7709, %v7739
    %v7741 = vsel %vm3020, %v7711, %v7710
    %v7742 = vsel %vm3022, %v7712, %v7741
    %v7743 = vsel %vm3024, %v7713, %v7742
    %v7744 = vsel %vm3026, %v7714, %v7743
    %v7745 = vsel %vm3028, %v7715, %v7744
    %v7746 = vsel %vm3030, %v7716, %v7745
    %v7747 = vsel %vm3032, %v7717, %v7746
    %s7750 = scalar_lea.vmem [#allocation16], 64
    %7751 = vst.msk [vmem:[%s7750] sm:$0xff] %vm1959, %v7740
    %7752 = vst.msk [vmem:[%s7750 + $0x8] sm:$0xff] %vm1959, %v7747
    %v7753 = vmul.f32 %v7121, %v5143
    %v7754 = vmul.f32 %v7122, %v5144
    %v7755 = vmul.f32 %v7123, %v5143
    %v7756 = vmul.f32 %v7124, %v5144
    %v7757 = vmul.f32 %v7125, %v5143
    %v7758 = vmul.f32 %v7126, %v5144
    %v7759 = vmul.f32 %v7127, %v5143
    %v7760 = vmul.f32 %v7128, %v5144
    %v7761 = vmul.f32 %v7129, %v5143
    %v7762 = vmul.f32 %v7130, %v5144
    %v7763 = vmul.f32 %v7131, %v5143
    %v7764 = vmul.f32 %v7132, %v5144
    %v7765 = vmul.f32 %v7133, %v5143
    %v7766 = vmul.f32 %v7134, %v5144
    %v7767 = vmul.f32 %v7135, %v5143
    %v7768 = vmul.f32 %v7136, %v5144
    %v7769 = vmul.f32 %v7137, %v5143
    %v7770 = vmul.f32 %v7138, %v5144
    %v7771 = vmul.f32 %v7139, %v5143
    %v7772 = vmul.f32 %v7140, %v5144
    %v7773 = vmul.f32 %v7141, %v5143
    %v7774 = vmul.f32 %v7142, %v5144
    %v7775 = vmul.f32 %v7143, %v5143
    %v7776 = vmul.f32 %v7144, %v5144
    %v7777 = vmul.f32 %v7145, %v5143
    %v7778 = vmul.f32 %v7146, %v5144
    %v7779 = vmul.f32 %v7147, %v5143
    %v7780 = vmul.f32 %v7148, %v5144
    %v7781 = vmul.f32 %v7149, %v5143
    %v7782 = vmul.f32 %v7150, %v5144
    %v7783 = vmul.f32 %v7151, %v5143
    %v7784 = vmul.f32 %v7152, %v5144
    %v7785 = vsel %vm1959, %v7753, 0.0
    %v7786 = vsel %vm1959, %v7754, 0.0
    %v7787 = vadd.f32 %v7785, %v7786
    %v7788 = vrot.slane %v7787, 4
    %v7789 = vadd.f32 %v7787, %v7788
    %v7790 = vrot.slane %v7789, 2
    %v7791 = vadd.f32 %v7789, %v7790
    %v7792 = vrot.slane %v7791, 1
    %v7793 = vadd.f32 %v7791, %v7792
    %v7794 = vsel %vm1959, %v7755, 0.0
    %v7795 = vsel %vm1959, %v7756, 0.0
    %v7796 = vadd.f32 %v7794, %v7795
    %v7797 = vrot.slane %v7796, 4
    %v7798 = vadd.f32 %v7796, %v7797
    %v7799 = vrot.slane %v7798, 2
    %v7800 = vadd.f32 %v7798, %v7799
    %v7801 = vrot.slane %v7800, 1
    %v7802 = vadd.f32 %v7800, %v7801
    %v7803 = vsel %vm1959, %v7757, 0.0
    %v7804 = vsel %vm1959, %v7758, 0.0
    %v7805 = vadd.f32 %v7803, %v7804
    %v7806 = vrot.slane %v7805, 4
    %v7807 = vadd.f32 %v7805, %v7806
    %v7808 = vrot.slane %v7807, 2
    %v7809 = vadd.f32 %v7807, %v7808
    %v7810 = vrot.slane %v7809, 1
    %v7811 = vadd.f32 %v7809, %v7810
    %v7812 = vsel %vm1959, %v7759, 0.0
    %v7813 = vsel %vm1959, %v7760, 0.0
    %v7814 = vadd.f32 %v7812, %v7813
    %v7815 = vrot.slane %v7814, 4
    %v7816 = vadd.f32 %v7814, %v7815
    %v7817 = vrot.slane %v7816, 2
    %v7818 = vadd.f32 %v7816, %v7817
    %v7819 = vrot.slane %v7818, 1
    %v7820 = vadd.f32 %v7818, %v7819
    %v7821 = vsel %vm1959, %v7761, 0.0
    %v7822 = vsel %vm1959, %v7762, 0.0
    %v7823 = vadd.f32 %v7821, %v7822
    %v7824 = vrot.slane %v7823, 4
    %v7825 = vadd.f32 %v7823, %v7824
    %v7826 = vrot.slane %v7825, 2
    %v7827 = vadd.f32 %v7825, %v7826
    %v7828 = vrot.slane %v7827, 1
    %v7829 = vadd.f32 %v7827, %v7828
    %v7830 = vsel %vm1959, %v7763, 0.0
    %v7831 = vsel %vm1959, %v7764, 0.0
    %v7832 = vadd.f32 %v7830, %v7831
    %v7833 = vrot.slane %v7832, 4
    %v7834 = vadd.f32 %v7832, %v7833
    %v7835 = vrot.slane %v7834, 2
    %v7836 = vadd.f32 %v7834, %v7835
    %v7837 = vrot.slane %v7836, 1
    %v7838 = vadd.f32 %v7836, %v7837
    %v7839 = vsel %vm1959, %v7765, 0.0
    %v7840 = vsel %vm1959, %v7766, 0.0
    %v7841 = vadd.f32 %v7839, %v7840
    %v7842 = vrot.slane %v7841, 4
    %v7843 = vadd.f32 %v7841, %v7842
    %v7844 = vrot.slane %v7843, 2
    %v7845 = vadd.f32 %v7843, %v7844
    %v7846 = vrot.slane %v7845, 1
    %v7847 = vadd.f32 %v7845, %v7846
    %v7848 = vsel %vm1959, %v7767, 0.0
    %v7849 = vsel %vm1959, %v7768, 0.0
    %v7850 = vadd.f32 %v7848, %v7849
    %v7851 = vrot.slane %v7850, 4
    %v7852 = vadd.f32 %v7850, %v7851
    %v7853 = vrot.slane %v7852, 2
    %v7854 = vadd.f32 %v7852, %v7853
    %v7855 = vrot.slane %v7854, 1
    %v7856 = vadd.f32 %v7854, %v7855
    %v7857 = vsel %vm1959, %v7769, 0.0
    %v7858 = vsel %vm1959, %v7770, 0.0
    %v7859 = vadd.f32 %v7857, %v7858
    %v7860 = vrot.slane %v7859, 4
    %v7861 = vadd.f32 %v7859, %v7860
    %v7862 = vrot.slane %v7861, 2
    %v7863 = vadd.f32 %v7861, %v7862
    %v7864 = vrot.slane %v7863, 1
    %v7865 = vadd.f32 %v7863, %v7864
    %v7866 = vsel %vm1959, %v7771, 0.0
    %v7867 = vsel %vm1959, %v7772, 0.0
    %v7868 = vadd.f32 %v7866, %v7867
    %v7869 = vrot.slane %v7868, 4
    %v7870 = vadd.f32 %v7868, %v7869
    %v7871 = vrot.slane %v7870, 2
    %v7872 = vadd.f32 %v7870, %v7871
    %v7873 = vrot.slane %v7872, 1
    %v7874 = vadd.f32 %v7872, %v7873
    %v7875 = vsel %vm1959, %v7773, 0.0
    %v7876 = vsel %vm1959, %v7774, 0.0
    %v7877 = vadd.f32 %v7875, %v7876
    %v7878 = vrot.slane %v7877, 4
    %v7879 = vadd.f32 %v7877, %v7878
    %v7880 = vrot.slane %v7879, 2
    %v7881 = vadd.f32 %v7879, %v7880
    %v7882 = vrot.slane %v7881, 1
    %v7883 = vadd.f32 %v7881, %v7882
    %v7884 = vsel %vm1959, %v7775, 0.0
    %v7885 = vsel %vm1959, %v7776, 0.0
    %v7886 = vadd.f32 %v7884, %v7885
    %v7887 = vrot.slane %v7886, 4
    %v7888 = vadd.f32 %v7886, %v7887
    %v7889 = vrot.slane %v7888, 2
    %v7890 = vadd.f32 %v7888, %v7889
    %v7891 = vrot.slane %v7890, 1
    %v7892 = vadd.f32 %v7890, %v7891
    %v7893 = vsel %vm1959, %v7777, 0.0
    %v7894 = vsel %vm1959, %v7778, 0.0
    %v7895 = vadd.f32 %v7893, %v7894
    %v7896 = vrot.slane %v7895, 4
    %v7897 = vadd.f32 %v7895, %v7896
    %v7898 = vrot.slane %v7897, 2
    %v7899 = vadd.f32 %v7897, %v7898
    %v7900 = vrot.slane %v7899, 1
    %v7901 = vadd.f32 %v7899, %v7900
    %v7902 = vsel %vm1959, %v7779, 0.0
    %v7903 = vsel %vm1959, %v7780, 0.0
    %v7904 = vadd.f32 %v7902, %v7903
    %v7905 = vrot.slane %v7904, 4
    %v7906 = vadd.f32 %v7904, %v7905
    %v7907 = vrot.slane %v7906, 2
    %v7908 = vadd.f32 %v7906, %v7907
    %v7909 = vrot.slane %v7908, 1
    %v7910 = vadd.f32 %v7908, %v7909
    %v7911 = vsel %vm1959, %v7781, 0.0
    %v7912 = vsel %vm1959, %v7782, 0.0
    %v7913 = vadd.f32 %v7911, %v7912
    %v7914 = vrot.slane %v7913, 4
    %v7915 = vadd.f32 %v7913, %v7914
    %v7916 = vrot.slane %v7915, 2
    %v7917 = vadd.f32 %v7915, %v7916
    %v7918 = vrot.slane %v7917, 1
    %v7919 = vadd.f32 %v7917, %v7918
    %v7920 = vsel %vm1959, %v7783, 0.0
    %v7921 = vsel %vm1959, %v7784, 0.0
    %v7922 = vadd.f32 %v7920, %v7921
    %v7923 = vrot.slane %v7922, 4
    %v7924 = vadd.f32 %v7922, %v7923
    %v7925 = vrot.slane %v7924, 2
    %v7926 = vadd.f32 %v7924, %v7925
    %v7927 = vrot.slane %v7926, 1
    %v7928 = vadd.f32 %v7926, %v7927
    %s7929 = scalar_lea.vmem [#allocation14], 80
    %v7930 = vld [vmem:[%s7929] sm:$0xff]
    %v7931 = vld [vmem:[%s7929 + $0x8] sm:$0xff]
    %v7932 = vlaneseq
    %v7933 = vshrl.u32 %v7932, 7
    %v7934 = vsub.s32 0, %v7933
    %v7935 = vrot.slane %v7930, %v7934
    %7937 = vbcast.lane.b32.xlu0 %v7935, 256
    %v7938 = vpop.permute.xlu0 %7937
    %s7940 = sor.u32 256, 8
    %7941 = vbcast.lane.b32.xlu0 %v7935, %s7940
    %v7942 = vpop.permute.xlu0 %7941
    %v7943 = vlaneseq
    %v7944 = vshrl.u32 %v7943, 7
    %v7945 = vsub.s32 1, %v7944
    %v7946 = vrot.slane %v7930, %v7945
    %7948 = vbcast.lane.b32.xlu0 %v7946, 256
    %v7949 = vpop.permute.xlu0 %7948
    %s7951 = sor.u32 256, 8
    %7952 = vbcast.lane.b32.xlu0 %v7946, %s7951
    %v7953 = vpop.permute.xlu0 %7952
    %v7954 = vlaneseq
    %v7955 = vshrl.u32 %v7954, 7
    %v7956 = vsub.s32 2, %v7955
    %v7957 = vrot.slane %v7930, %v7956
    %7959 = vbcast.lane.b32.xlu0 %v7957, 256
    %v7960 = vpop.permute.xlu0 %7959
    %s7962 = sor.u32 256, 8
    %7963 = vbcast.lane.b32.xlu0 %v7957, %s7962
    %v7964 = vpop.permute.xlu0 %7963
    %v7965 = vlaneseq
    %v7966 = vshrl.u32 %v7965, 7
    %v7967 = vsub.s32 3, %v7966
    %v7968 = vrot.slane %v7930, %v7967
    %7970 = vbcast.lane.b32.xlu0 %v7968, 256
    %v7971 = vpop.permute.xlu0 %7970
    %s7973 = sor.u32 256, 8
    %7974 = vbcast.lane.b32.xlu0 %v7968, %s7973
    %v7975 = vpop.permute.xlu0 %7974
    %v7976 = vlaneseq
    %v7977 = vshrl.u32 %v7976, 7
    %v7978 = vsub.s32 4, %v7977
    %v7979 = vrot.slane %v7930, %v7978
    %7981 = vbcast.lane.b32.xlu0 %v7979, 256
    %v7982 = vpop.permute.xlu0 %7981
    %s7984 = sor.u32 256, 8
    %7985 = vbcast.lane.b32.xlu0 %v7979, %s7984
    %v7986 = vpop.permute.xlu0 %7985
    %v7987 = vlaneseq
    %v7988 = vshrl.u32 %v7987, 7
    %v7989 = vsub.s32 5, %v7988
    %v7990 = vrot.slane %v7930, %v7989
    %7992 = vbcast.lane.b32.xlu0 %v7990, 256
    %v7993 = vpop.permute.xlu0 %7992
    %s7995 = sor.u32 256, 8
    %7996 = vbcast.lane.b32.xlu0 %v7990, %s7995
    %v7997 = vpop.permute.xlu0 %7996
    %v7998 = vlaneseq
    %v7999 = vshrl.u32 %v7998, 7
    %v8000 = vsub.s32 6, %v7999
    %v8001 = vrot.slane %v7930, %v8000
    %8003 = vbcast.lane.b32.xlu0 %v8001, 256
    %v8004 = vpop.permute.xlu0 %8003
    %s8006 = sor.u32 256, 8
    %8007 = vbcast.lane.b32.xlu0 %v8001, %s8006
    %v8008 = vpop.permute.xlu0 %8007
    %v8009 = vlaneseq
    %v8010 = vshrl.u32 %v8009, 7
    %v8011 = vsub.s32 7, %v8010
    %v8012 = vrot.slane %v7930, %v8011
    %8014 = vbcast.lane.b32.xlu0 %v8012, 256
    %v8015 = vpop.permute.xlu0 %8014
    %s8017 = sor.u32 256, 8
    %8018 = vbcast.lane.b32.xlu0 %v8012, %s8017
    %v8019 = vpop.permute.xlu0 %8018
    %v8020 = vlaneseq
    %v8021 = vshrl.u32 %v8020, 7
    %v8022 = vsub.s32 0, %v8021
    %v8023 = vrot.slane %v7931, %v8022
    %8025 = vbcast.lane.b32.xlu0 %v8023, 256
    %v8026 = vpop.permute.xlu0 %8025
    %s8028 = sor.u32 256, 8
    %8029 = vbcast.lane.b32.xlu0 %v8023, %s8028
    %v8030 = vpop.permute.xlu0 %8029
    %v8031 = vlaneseq
    %v8032 = vshrl.u32 %v8031, 7
    %v8033 = vsub.s32 1, %v8032
    %v8034 = vrot.slane %v7931, %v8033
    %8036 = vbcast.lane.b32.xlu0 %v8034, 256
    %v8037 = vpop.permute.xlu0 %8036
    %s8039 = sor.u32 256, 8
    %8040 = vbcast.lane.b32.xlu0 %v8034, %s8039
    %v8041 = vpop.permute.xlu0 %8040
    %v8042 = vlaneseq
    %v8043 = vshrl.u32 %v8042, 7
    %v8044 = vsub.s32 2, %v8043
    %v8045 = vrot.slane %v7931, %v8044
    %8047 = vbcast.lane.b32.xlu0 %v8045, 256
    %v8048 = vpop.permute.xlu0 %8047
    %s8050 = sor.u32 256, 8
    %8051 = vbcast.lane.b32.xlu0 %v8045, %s8050
    %v8052 = vpop.permute.xlu0 %8051
    %v8053 = vlaneseq
    %v8054 = vshrl.u32 %v8053, 7
    %v8055 = vsub.s32 3, %v8054
    %v8056 = vrot.slane %v7931, %v8055
    %8058 = vbcast.lane.b32.xlu0 %v8056, 256
    %v8059 = vpop.permute.xlu0 %8058
    %s8061 = sor.u32 256, 8
    %8062 = vbcast.lane.b32.xlu0 %v8056, %s8061
    %v8063 = vpop.permute.xlu0 %8062
    %v8064 = vlaneseq
    %v8065 = vshrl.u32 %v8064, 7
    %v8066 = vsub.s32 4, %v8065
    %v8067 = vrot.slane %v7931, %v8066
    %8069 = vbcast.lane.b32.xlu0 %v8067, 256
    %v8070 = vpop.permute.xlu0 %8069
    %s8072 = sor.u32 256, 8
    %8073 = vbcast.lane.b32.xlu0 %v8067, %s8072
    %v8074 = vpop.permute.xlu0 %8073
    %v8075 = vlaneseq
    %v8076 = vshrl.u32 %v8075, 7
    %v8077 = vsub.s32 5, %v8076
    %v8078 = vrot.slane %v7931, %v8077
    %8080 = vbcast.lane.b32.xlu0 %v8078, 256
    %v8081 = vpop.permute.xlu0 %8080
    %s8083 = sor.u32 256, 8
    %8084 = vbcast.lane.b32.xlu0 %v8078, %s8083
    %v8085 = vpop.permute.xlu0 %8084
    %v8086 = vlaneseq
    %v8087 = vshrl.u32 %v8086, 7
    %v8088 = vsub.s32 6, %v8087
    %v8089 = vrot.slane %v7931, %v8088
    %8091 = vbcast.lane.b32.xlu0 %v8089, 256
    %v8092 = vpop.permute.xlu0 %8091
    %s8094 = sor.u32 256, 8
    %8095 = vbcast.lane.b32.xlu0 %v8089, %s8094
    %v8096 = vpop.permute.xlu0 %8095
    %v8097 = vlaneseq
    %v8098 = vshrl.u32 %v8097, 7
    %v8099 = vsub.s32 7, %v8098
    %v8100 = vrot.slane %v7931, %v8099
    %8102 = vbcast.lane.b32.xlu0 %v8100, 256
    %v8103 = vpop.permute.xlu0 %8102
    %s8105 = sor.u32 256, 8
    %8106 = vbcast.lane.b32.xlu0 %v8100, %s8105
    %v8107 = vpop.permute.xlu0 %8106
    %v8108 = vmul.f32 %v7121, %v7938
    %v8109 = vmul.f32 %v7122, %v7942
    %v8110 = vmul.f32 %v7123, %v7949
    %v8111 = vmul.f32 %v7124, %v7953
    %v8112 = vmul.f32 %v7125, %v7960
    %v8113 = vmul.f32 %v7126, %v7964
    %v8114 = vmul.f32 %v7127, %v7971
    %v8115 = vmul.f32 %v7128, %v7975
    %v8116 = vmul.f32 %v7129, %v7982
    %v8117 = vmul.f32 %v7130, %v7986
    %v8118 = vmul.f32 %v7131, %v7993
    %v8119 = vmul.f32 %v7132, %v7997
    %v8120 = vmul.f32 %v7133, %v8004
    %v8121 = vmul.f32 %v7134, %v8008
    %v8122 = vmul.f32 %v7135, %v8015
    %v8123 = vmul.f32 %v7136, %v8019
    %v8124 = vmul.f32 %v7137, %v8026
    %v8125 = vmul.f32 %v7138, %v8030
    %v8126 = vmul.f32 %v7139, %v8037
    %v8127 = vmul.f32 %v7140, %v8041
    %v8128 = vmul.f32 %v7141, %v8048
    %v8129 = vmul.f32 %v7142, %v8052
    %v8130 = vmul.f32 %v7143, %v8059
    %v8131 = vmul.f32 %v7144, %v8063
    %v8132 = vmul.f32 %v7145, %v8070
    %v8133 = vmul.f32 %v7146, %v8074
    %v8134 = vmul.f32 %v7147, %v8081
    %v8135 = vmul.f32 %v7148, %v8085
    %v8136 = vmul.f32 %v7149, %v8092
    %v8137 = vmul.f32 %v7150, %v8096
    %v8138 = vmul.f32 %v7151, %v8103
    %v8139 = vmul.f32 %v7152, %v8107
    %v8140 = vsel %vm1959, %v8108, 0.0
    %v8141 = vsel %vm1959, %v8109, 0.0
    %v8142 = vadd.f32 %v8140, %v8141
    %v8143 = vrot.slane %v8142, 4
    %v8144 = vadd.f32 %v8142, %v8143
    %v8145 = vrot.slane %v8144, 2
    %v8146 = vadd.f32 %v8144, %v8145
    %v8147 = vrot.slane %v8146, 1
    %v8148 = vadd.f32 %v8146, %v8147
    %v8149 = vsel %vm1959, %v8110, 0.0
    %v8150 = vsel %vm1959, %v8111, 0.0
    %v8151 = vadd.f32 %v8149, %v8150
    %v8152 = vrot.slane %v8151, 4
    %v8153 = vadd.f32 %v8151, %v8152
    %v8154 = vrot.slane %v8153, 2
    %v8155 = vadd.f32 %v8153, %v8154
    %v8156 = vrot.slane %v8155, 1
    %v8157 = vadd.f32 %v8155, %v8156
    %v8158 = vsel %vm1959, %v8112, 0.0
    %v8159 = vsel %vm1959, %v8113, 0.0
    %v8160 = vadd.f32 %v8158, %v8159
    %v8161 = vrot.slane %v8160, 4
    %v8162 = vadd.f32 %v8160, %v8161
    %v8163 = vrot.slane %v8162, 2
    %v8164 = vadd.f32 %v8162, %v8163
    %v8165 = vrot.slane %v8164, 1
    %v8166 = vadd.f32 %v8164, %v8165
    %v8167 = vsel %vm1959, %v8114, 0.0
    %v8168 = vsel %vm1959, %v8115, 0.0
    %v8169 = vadd.f32 %v8167, %v8168
    %v8170 = vrot.slane %v8169, 4
    %v8171 = vadd.f32 %v8169, %v8170
    %v8172 = vrot.slane %v8171, 2
    %v8173 = vadd.f32 %v8171, %v8172
    %v8174 = vrot.slane %v8173, 1
    %v8175 = vadd.f32 %v8173, %v8174
    %v8176 = vsel %vm1959, %v8116, 0.0
    %v8177 = vsel %vm1959, %v8117, 0.0
    %v8178 = vadd.f32 %v8176, %v8177
    %v8179 = vrot.slane %v8178, 4
    %v8180 = vadd.f32 %v8178, %v8179
    %v8181 = vrot.slane %v8180, 2
    %v8182 = vadd.f32 %v8180, %v8181
    %v8183 = vrot.slane %v8182, 1
    %v8184 = vadd.f32 %v8182, %v8183
    %v8185 = vsel %vm1959, %v8118, 0.0
    %v8186 = vsel %vm1959, %v8119, 0.0
    %v8187 = vadd.f32 %v8185, %v8186
    %v8188 = vrot.slane %v8187, 4
    %v8189 = vadd.f32 %v8187, %v8188
    %v8190 = vrot.slane %v8189, 2
    %v8191 = vadd.f32 %v8189, %v8190
    %v8192 = vrot.slane %v8191, 1
    %v8193 = vadd.f32 %v8191, %v8192
    %v8194 = vsel %vm1959, %v8120, 0.0
    %v8195 = vsel %vm1959, %v8121, 0.0
    %v8196 = vadd.f32 %v8194, %v8195
    %v8197 = vrot.slane %v8196, 4
    %v8198 = vadd.f32 %v8196, %v8197
    %v8199 = vrot.slane %v8198, 2
    %v8200 = vadd.f32 %v8198, %v8199
    %v8201 = vrot.slane %v8200, 1
    %v8202 = vadd.f32 %v8200, %v8201
    %v8203 = vsel %vm1959, %v8122, 0.0
    %v8204 = vsel %vm1959, %v8123, 0.0
    %v8205 = vadd.f32 %v8203, %v8204
    %v8206 = vrot.slane %v8205, 4
    %v8207 = vadd.f32 %v8205, %v8206
    %v8208 = vrot.slane %v8207, 2
    %v8209 = vadd.f32 %v8207, %v8208
    %v8210 = vrot.slane %v8209, 1
    %v8211 = vadd.f32 %v8209, %v8210
    %v8212 = vsel %vm1959, %v8124, 0.0
    %v8213 = vsel %vm1959, %v8125, 0.0
    %v8214 = vadd.f32 %v8212, %v8213
    %v8215 = vrot.slane %v8214, 4
    %v8216 = vadd.f32 %v8214, %v8215
    %v8217 = vrot.slane %v8216, 2
    %v8218 = vadd.f32 %v8216, %v8217
    %v8219 = vrot.slane %v8218, 1
    %v8220 = vadd.f32 %v8218, %v8219
    %v8221 = vsel %vm1959, %v8126, 0.0
    %v8222 = vsel %vm1959, %v8127, 0.0
    %v8223 = vadd.f32 %v8221, %v8222
    %v8224 = vrot.slane %v8223, 4
    %v8225 = vadd.f32 %v8223, %v8224
    %v8226 = vrot.slane %v8225, 2
    %v8227 = vadd.f32 %v8225, %v8226
    %v8228 = vrot.slane %v8227, 1
    %v8229 = vadd.f32 %v8227, %v8228
    %v8230 = vsel %vm1959, %v8128, 0.0
    %v8231 = vsel %vm1959, %v8129, 0.0
    %v8232 = vadd.f32 %v8230, %v8231
    %v8233 = vrot.slane %v8232, 4
    %v8234 = vadd.f32 %v8232, %v8233
    %v8235 = vrot.slane %v8234, 2
    %v8236 = vadd.f32 %v8234, %v8235
    %v8237 = vrot.slane %v8236, 1
    %v8238 = vadd.f32 %v8236, %v8237
    %v8239 = vsel %vm1959, %v8130, 0.0
    %v8240 = vsel %vm1959, %v8131, 0.0
    %v8241 = vadd.f32 %v8239, %v8240
    %v8242 = vrot.slane %v8241, 4
    %v8243 = vadd.f32 %v8241, %v8242
    %v8244 = vrot.slane %v8243, 2
    %v8245 = vadd.f32 %v8243, %v8244
    %v8246 = vrot.slane %v8245, 1
    %v8247 = vadd.f32 %v8245, %v8246
    %v8248 = vsel %vm1959, %v8132, 0.0
    %v8249 = vsel %vm1959, %v8133, 0.0
    %v8250 = vadd.f32 %v8248, %v8249
    %v8251 = vrot.slane %v8250, 4
    %v8252 = vadd.f32 %v8250, %v8251
    %v8253 = vrot.slane %v8252, 2
    %v8254 = vadd.f32 %v8252, %v8253
    %v8255 = vrot.slane %v8254, 1
    %v8256 = vadd.f32 %v8254, %v8255
    %v8257 = vsel %vm1959, %v8134, 0.0
    %v8258 = vsel %vm1959, %v8135, 0.0
    %v8259 = vadd.f32 %v8257, %v8258
    %v8260 = vrot.slane %v8259, 4
    %v8261 = vadd.f32 %v8259, %v8260
    %v8262 = vrot.slane %v8261, 2
    %v8263 = vadd.f32 %v8261, %v8262
    %v8264 = vrot.slane %v8263, 1
    %v8265 = vadd.f32 %v8263, %v8264
    %v8266 = vsel %vm1959, %v8136, 0.0
    %v8267 = vsel %vm1959, %v8137, 0.0
    %v8268 = vadd.f32 %v8266, %v8267
    %v8269 = vrot.slane %v8268, 4
    %v8270 = vadd.f32 %v8268, %v8269
    %v8271 = vrot.slane %v8270, 2
    %v8272 = vadd.f32 %v8270, %v8271
    %v8273 = vrot.slane %v8272, 1
    %v8274 = vadd.f32 %v8272, %v8273
    %v8275 = vsel %vm1959, %v8138, 0.0
    %v8276 = vsel %vm1959, %v8139, 0.0
    %v8277 = vadd.f32 %v8275, %v8276
    %v8278 = vrot.slane %v8277, 4
    %v8279 = vadd.f32 %v8277, %v8278
    %v8280 = vrot.slane %v8279, 2
    %v8281 = vadd.f32 %v8279, %v8280
    %v8282 = vrot.slane %v8281, 1
    %v8283 = vadd.f32 %v8281, %v8282
    %v8284 = vadd.f32 %v7793, %v8148
    %v8285 = vadd.f32 %v7802, %v8157
    %v8286 = vadd.f32 %v7811, %v8166
    %v8287 = vadd.f32 %v7820, %v8175
    %v8288 = vadd.f32 %v7829, %v8184
    %v8289 = vadd.f32 %v7838, %v8193
    %v8290 = vadd.f32 %v7847, %v8202
    %v8291 = vadd.f32 %v7856, %v8211
    %v8292 = vadd.f32 %v7865, %v8220
    %v8293 = vadd.f32 %v7874, %v8229
    %v8294 = vadd.f32 %v7883, %v8238
    %v8295 = vadd.f32 %v7892, %v8247
    %v8296 = vadd.f32 %v7901, %v8256
    %v8297 = vadd.f32 %v7910, %v8265
    %v8298 = vadd.f32 %v7919, %v8274
    %v8299 = vadd.f32 %v7928, %v8283
    %s8300 = sld [smem:[#allocation8 + $0x5]]
    %v8301 = vstv %s8300
    %v8302 = vadd.f32 %v8284, %v8301
    %v8303 = vadd.f32 %v8285, %v8301
    %v8304 = vadd.f32 %v8286, %v8301
    %v8305 = vadd.f32 %v8287, %v8301
    %v8306 = vadd.f32 %v8288, %v8301
    %v8307 = vadd.f32 %v8289, %v8301
    %v8308 = vadd.f32 %v8290, %v8301
    %v8309 = vadd.f32 %v8291, %v8301
    %v8310 = vadd.f32 %v8292, %v8301
    %v8311 = vadd.f32 %v8293, %v8301
    %v8312 = vadd.f32 %v8294, %v8301
    %v8313 = vadd.f32 %v8295, %v8301
    %v8314 = vadd.f32 %v8296, %v8301
    %v8315 = vadd.f32 %v8297, %v8301
    %v8316 = vadd.f32 %v8298, %v8301
    %v8317 = vadd.f32 %v8299, %v8301
    %v8334 = vsel %vm3020, %v8303, %v8302
    %v8335 = vsel %vm3022, %v8304, %v8334
    %v8336 = vsel %vm3024, %v8305, %v8335
    %v8337 = vsel %vm3026, %v8306, %v8336
    %v8338 = vsel %vm3028, %v8307, %v8337
    %v8339 = vsel %vm3030, %v8308, %v8338
    %v8340 = vsel %vm3032, %v8309, %v8339
    %v8341 = vsel %vm3020, %v8311, %v8310
    %v8342 = vsel %vm3022, %v8312, %v8341
    %v8343 = vsel %vm3024, %v8313, %v8342
    %v8344 = vsel %vm3026, %v8314, %v8343
    %v8345 = vsel %vm3028, %v8315, %v8344
    %v8346 = vsel %vm3030, %v8316, %v8345
    %v8347 = vsel %vm3032, %v8317, %v8346
    %s8350 = scalar_lea.vmem [#allocation16], 80
    %8351 = vst.msk [vmem:[%s8350] sm:$0xff] %vm1959, %v8340
    %8352 = vst.msk [vmem:[%s8350 + $0x8] sm:$0xff] %vm1959, %v8347
    %v8353 = vmul.f32 %v7121, %v5193
    %v8354 = vmul.f32 %v7122, %v5194
    %v8355 = vmul.f32 %v7123, %v5193
    %v8356 = vmul.f32 %v7124, %v5194
    %v8357 = vmul.f32 %v7125, %v5193
    %v8358 = vmul.f32 %v7126, %v5194
    %v8359 = vmul.f32 %v7127, %v5193
    %v8360 = vmul.f32 %v7128, %v5194
    %v8361 = vmul.f32 %v7129, %v5193
    %v8362 = vmul.f32 %v7130, %v5194
    %v8363 = vmul.f32 %v7131, %v5193
    %v8364 = vmul.f32 %v7132, %v5194
    %v8365 = vmul.f32 %v7133, %v5193
    %v8366 = vmul.f32 %v7134, %v5194
    %v8367 = vmul.f32 %v7135, %v5193
    %v8368 = vmul.f32 %v7136, %v5194
    %v8369 = vmul.f32 %v7137, %v5193
    %v8370 = vmul.f32 %v7138, %v5194
    %v8371 = vmul.f32 %v7139, %v5193
    %v8372 = vmul.f32 %v7140, %v5194
    %v8373 = vmul.f32 %v7141, %v5193
    %v8374 = vmul.f32 %v7142, %v5194
    %v8375 = vmul.f32 %v7143, %v5193
    %v8376 = vmul.f32 %v7144, %v5194
    %v8377 = vmul.f32 %v7145, %v5193
    %v8378 = vmul.f32 %v7146, %v5194
    %v8379 = vmul.f32 %v7147, %v5193
    %v8380 = vmul.f32 %v7148, %v5194
    %v8381 = vmul.f32 %v7149, %v5193
    %v8382 = vmul.f32 %v7150, %v5194
    %v8383 = vmul.f32 %v7151, %v5193
    %v8384 = vmul.f32 %v7152, %v5194
    %v8385 = vsel %vm1959, %v8353, 0.0
    %v8386 = vsel %vm1959, %v8354, 0.0
    %v8387 = vadd.f32 %v8385, %v8386
    %v8388 = vrot.slane %v8387, 4
    %v8389 = vadd.f32 %v8387, %v8388
    %v8390 = vrot.slane %v8389, 2
    %v8391 = vadd.f32 %v8389, %v8390
    %v8392 = vrot.slane %v8391, 1
    %v8393 = vadd.f32 %v8391, %v8392
    %v8394 = vsel %vm1959, %v8355, 0.0
    %v8395 = vsel %vm1959, %v8356, 0.0
    %v8396 = vadd.f32 %v8394, %v8395
    %v8397 = vrot.slane %v8396, 4
    %v8398 = vadd.f32 %v8396, %v8397
    %v8399 = vrot.slane %v8398, 2
    %v8400 = vadd.f32 %v8398, %v8399
    %v8401 = vrot.slane %v8400, 1
    %v8402 = vadd.f32 %v8400, %v8401
    %v8403 = vsel %vm1959, %v8357, 0.0
    %v8404 = vsel %vm1959, %v8358, 0.0
    %v8405 = vadd.f32 %v8403, %v8404
    %v8406 = vrot.slane %v8405, 4
    %v8407 = vadd.f32 %v8405, %v8406
    %v8408 = vrot.slane %v8407, 2
    %v8409 = vadd.f32 %v8407, %v8408
    %v8410 = vrot.slane %v8409, 1
    %v8411 = vadd.f32 %v8409, %v8410
    %v8412 = vsel %vm1959, %v8359, 0.0
    %v8413 = vsel %vm1959, %v8360, 0.0
    %v8414 = vadd.f32 %v8412, %v8413
    %v8415 = vrot.slane %v8414, 4
    %v8416 = vadd.f32 %v8414, %v8415
    %v8417 = vrot.slane %v8416, 2
    %v8418 = vadd.f32 %v8416, %v8417
    %v8419 = vrot.slane %v8418, 1
    %v8420 = vadd.f32 %v8418, %v8419
    %v8421 = vsel %vm1959, %v8361, 0.0
    %v8422 = vsel %vm1959, %v8362, 0.0
    %v8423 = vadd.f32 %v8421, %v8422
    %v8424 = vrot.slane %v8423, 4
    %v8425 = vadd.f32 %v8423, %v8424
    %v8426 = vrot.slane %v8425, 2
    %v8427 = vadd.f32 %v8425, %v8426
    %v8428 = vrot.slane %v8427, 1
    %v8429 = vadd.f32 %v8427, %v8428
    %v8430 = vsel %vm1959, %v8363, 0.0
    %v8431 = vsel %vm1959, %v8364, 0.0
    %v8432 = vadd.f32 %v8430, %v8431
    %v8433 = vrot.slane %v8432, 4
    %v8434 = vadd.f32 %v8432, %v8433
    %v8435 = vrot.slane %v8434, 2
    %v8436 = vadd.f32 %v8434, %v8435
    %v8437 = vrot.slane %v8436, 1
    %v8438 = vadd.f32 %v8436, %v8437
    %v8439 = vsel %vm1959, %v8365, 0.0
    %v8440 = vsel %vm1959, %v8366, 0.0
    %v8441 = vadd.f32 %v8439, %v8440
    %v8442 = vrot.slane %v8441, 4
    %v8443 = vadd.f32 %v8441, %v8442
    %v8444 = vrot.slane %v8443, 2
    %v8445 = vadd.f32 %v8443, %v8444
    %v8446 = vrot.slane %v8445, 1
    %v8447 = vadd.f32 %v8445, %v8446
    %v8448 = vsel %vm1959, %v8367, 0.0
    %v8449 = vsel %vm1959, %v8368, 0.0
    %v8450 = vadd.f32 %v8448, %v8449
    %v8451 = vrot.slane %v8450, 4
    %v8452 = vadd.f32 %v8450, %v8451
    %v8453 = vrot.slane %v8452, 2
    %v8454 = vadd.f32 %v8452, %v8453
    %v8455 = vrot.slane %v8454, 1
    %v8456 = vadd.f32 %v8454, %v8455
    %v8457 = vsel %vm1959, %v8369, 0.0
    %v8458 = vsel %vm1959, %v8370, 0.0
    %v8459 = vadd.f32 %v8457, %v8458
    %v8460 = vrot.slane %v8459, 4
    %v8461 = vadd.f32 %v8459, %v8460
    %v8462 = vrot.slane %v8461, 2
    %v8463 = vadd.f32 %v8461, %v8462
    %v8464 = vrot.slane %v8463, 1
    %v8465 = vadd.f32 %v8463, %v8464
    %v8466 = vsel %vm1959, %v8371, 0.0
    %v8467 = vsel %vm1959, %v8372, 0.0
    %v8468 = vadd.f32 %v8466, %v8467
    %v8469 = vrot.slane %v8468, 4
    %v8470 = vadd.f32 %v8468, %v8469
    %v8471 = vrot.slane %v8470, 2
    %v8472 = vadd.f32 %v8470, %v8471
    %v8473 = vrot.slane %v8472, 1
    %v8474 = vadd.f32 %v8472, %v8473
    %v8475 = vsel %vm1959, %v8373, 0.0
    %v8476 = vsel %vm1959, %v8374, 0.0
    %v8477 = vadd.f32 %v8475, %v8476
    %v8478 = vrot.slane %v8477, 4
    %v8479 = vadd.f32 %v8477, %v8478
    %v8480 = vrot.slane %v8479, 2
    %v8481 = vadd.f32 %v8479, %v8480
    %v8482 = vrot.slane %v8481, 1
    %v8483 = vadd.f32 %v8481, %v8482
    %v8484 = vsel %vm1959, %v8375, 0.0
    %v8485 = vsel %vm1959, %v8376, 0.0
    %v8486 = vadd.f32 %v8484, %v8485
    %v8487 = vrot.slane %v8486, 4
    %v8488 = vadd.f32 %v8486, %v8487
    %v8489 = vrot.slane %v8488, 2
    %v8490 = vadd.f32 %v8488, %v8489
    %v8491 = vrot.slane %v8490, 1
    %v8492 = vadd.f32 %v8490, %v8491
    %v8493 = vsel %vm1959, %v8377, 0.0
    %v8494 = vsel %vm1959, %v8378, 0.0
    %v8495 = vadd.f32 %v8493, %v8494
    %v8496 = vrot.slane %v8495, 4
    %v8497 = vadd.f32 %v8495, %v8496
    %v8498 = vrot.slane %v8497, 2
    %v8499 = vadd.f32 %v8497, %v8498
    %v8500 = vrot.slane %v8499, 1
    %v8501 = vadd.f32 %v8499, %v8500
    %v8502 = vsel %vm1959, %v8379, 0.0
    %v8503 = vsel %vm1959, %v8380, 0.0
    %v8504 = vadd.f32 %v8502, %v8503
    %v8505 = vrot.slane %v8504, 4
    %v8506 = vadd.f32 %v8504, %v8505
    %v8507 = vrot.slane %v8506, 2
    %v8508 = vadd.f32 %v8506, %v8507
    %v8509 = vrot.slane %v8508, 1
    %v8510 = vadd.f32 %v8508, %v8509
    %v8511 = vsel %vm1959, %v8381, 0.0
    %v8512 = vsel %vm1959, %v8382, 0.0
    %v8513 = vadd.f32 %v8511, %v8512
    %v8514 = vrot.slane %v8513, 4
    %v8515 = vadd.f32 %v8513, %v8514
    %v8516 = vrot.slane %v8515, 2
    %v8517 = vadd.f32 %v8515, %v8516
    %v8518 = vrot.slane %v8517, 1
    %v8519 = vadd.f32 %v8517, %v8518
    %v8520 = vsel %vm1959, %v8383, 0.0
    %v8521 = vsel %vm1959, %v8384, 0.0
    %v8522 = vadd.f32 %v8520, %v8521
    %v8523 = vrot.slane %v8522, 4
    %v8524 = vadd.f32 %v8522, %v8523
    %v8525 = vrot.slane %v8524, 2
    %v8526 = vadd.f32 %v8524, %v8525
    %v8527 = vrot.slane %v8526, 1
    %v8528 = vadd.f32 %v8526, %v8527
    %s8529 = scalar_lea.vmem [#allocation14], 96
    %v8530 = vld [vmem:[%s8529] sm:$0xff]
    %v8531 = vld [vmem:[%s8529 + $0x8] sm:$0xff]
    %v8532 = vlaneseq
    %v8533 = vshrl.u32 %v8532, 7
    %v8534 = vsub.s32 0, %v8533
    %v8535 = vrot.slane %v8530, %v8534
    %8537 = vbcast.lane.b32.xlu0 %v8535, 256
    %v8538 = vpop.permute.xlu0 %8537
    %s8540 = sor.u32 256, 8
    %8541 = vbcast.lane.b32.xlu0 %v8535, %s8540
    %v8542 = vpop.permute.xlu0 %8541
    %v8543 = vlaneseq
    %v8544 = vshrl.u32 %v8543, 7
    %v8545 = vsub.s32 1, %v8544
    %v8546 = vrot.slane %v8530, %v8545
    %8548 = vbcast.lane.b32.xlu0 %v8546, 256
    %v8549 = vpop.permute.xlu0 %8548
    %s8551 = sor.u32 256, 8
    %8552 = vbcast.lane.b32.xlu0 %v8546, %s8551
    %v8553 = vpop.permute.xlu0 %8552
    %v8554 = vlaneseq
    %v8555 = vshrl.u32 %v8554, 7
    %v8556 = vsub.s32 2, %v8555
    %v8557 = vrot.slane %v8530, %v8556
    %8559 = vbcast.lane.b32.xlu0 %v8557, 256
    %v8560 = vpop.permute.xlu0 %8559
    %s8562 = sor.u32 256, 8
    %8563 = vbcast.lane.b32.xlu0 %v8557, %s8562
    %v8564 = vpop.permute.xlu0 %8563
    %v8565 = vlaneseq
    %v8566 = vshrl.u32 %v8565, 7
    %v8567 = vsub.s32 3, %v8566
    %v8568 = vrot.slane %v8530, %v8567
    %8570 = vbcast.lane.b32.xlu0 %v8568, 256
    %v8571 = vpop.permute.xlu0 %8570
    %s8573 = sor.u32 256, 8
    %8574 = vbcast.lane.b32.xlu0 %v8568, %s8573
    %v8575 = vpop.permute.xlu0 %8574
    %v8576 = vlaneseq
    %v8577 = vshrl.u32 %v8576, 7
    %v8578 = vsub.s32 4, %v8577
    %v8579 = vrot.slane %v8530, %v8578
    %8581 = vbcast.lane.b32.xlu0 %v8579, 256
    %v8582 = vpop.permute.xlu0 %8581
    %s8584 = sor.u32 256, 8
    %8585 = vbcast.lane.b32.xlu0 %v8579, %s8584
    %v8586 = vpop.permute.xlu0 %8585
    %v8587 = vlaneseq
    %v8588 = vshrl.u32 %v8587, 7
    %v8589 = vsub.s32 5, %v8588
    %v8590 = vrot.slane %v8530, %v8589
    %8592 = vbcast.lane.b32.xlu0 %v8590, 256
    %v8593 = vpop.permute.xlu0 %8592
    %s8595 = sor.u32 256, 8
    %8596 = vbcast.lane.b32.xlu0 %v8590, %s8595
    %v8597 = vpop.permute.xlu0 %8596
    %v8598 = vlaneseq
    %v8599 = vshrl.u32 %v8598, 7
    %v8600 = vsub.s32 6, %v8599
    %v8601 = vrot.slane %v8530, %v8600
    %8603 = vbcast.lane.b32.xlu0 %v8601, 256
    %v8604 = vpop.permute.xlu0 %8603
    %s8606 = sor.u32 256, 8
    %8607 = vbcast.lane.b32.xlu0 %v8601, %s8606
    %v8608 = vpop.permute.xlu0 %8607
    %v8609 = vlaneseq
    %v8610 = vshrl.u32 %v8609, 7
    %v8611 = vsub.s32 7, %v8610
    %v8612 = vrot.slane %v8530, %v8611
    %8614 = vbcast.lane.b32.xlu0 %v8612, 256
    %v8615 = vpop.permute.xlu0 %8614
    %s8617 = sor.u32 256, 8
    %8618 = vbcast.lane.b32.xlu0 %v8612, %s8617
    %v8619 = vpop.permute.xlu0 %8618
    %v8620 = vlaneseq
    %v8621 = vshrl.u32 %v8620, 7
    %v8622 = vsub.s32 0, %v8621
    %v8623 = vrot.slane %v8531, %v8622
    %8625 = vbcast.lane.b32.xlu0 %v8623, 256
    %v8626 = vpop.permute.xlu0 %8625
    %s8628 = sor.u32 256, 8
    %8629 = vbcast.lane.b32.xlu0 %v8623, %s8628
    %v8630 = vpop.permute.xlu0 %8629
    %v8631 = vlaneseq
    %v8632 = vshrl.u32 %v8631, 7
    %v8633 = vsub.s32 1, %v8632
    %v8634 = vrot.slane %v8531, %v8633
    %8636 = vbcast.lane.b32.xlu0 %v8634, 256
    %v8637 = vpop.permute.xlu0 %8636
    %s8639 = sor.u32 256, 8
    %8640 = vbcast.lane.b32.xlu0 %v8634, %s8639
    %v8641 = vpop.permute.xlu0 %8640
    %v8642 = vlaneseq
    %v8643 = vshrl.u32 %v8642, 7
    %v8644 = vsub.s32 2, %v8643
    %v8645 = vrot.slane %v8531, %v8644
    %8647 = vbcast.lane.b32.xlu0 %v8645, 256
    %v8648 = vpop.permute.xlu0 %8647
    %s8650 = sor.u32 256, 8
    %8651 = vbcast.lane.b32.xlu0 %v8645, %s8650
    %v8652 = vpop.permute.xlu0 %8651
    %v8653 = vlaneseq
    %v8654 = vshrl.u32 %v8653, 7
    %v8655 = vsub.s32 3, %v8654
    %v8656 = vrot.slane %v8531, %v8655
    %8658 = vbcast.lane.b32.xlu0 %v8656, 256
    %v8659 = vpop.permute.xlu0 %8658
    %s8661 = sor.u32 256, 8
    %8662 = vbcast.lane.b32.xlu0 %v8656, %s8661
    %v8663 = vpop.permute.xlu0 %8662
    %v8664 = vlaneseq
    %v8665 = vshrl.u32 %v8664, 7
    %v8666 = vsub.s32 4, %v8665
    %v8667 = vrot.slane %v8531, %v8666
    %8669 = vbcast.lane.b32.xlu0 %v8667, 256
    %v8670 = vpop.permute.xlu0 %8669
    %s8672 = sor.u32 256, 8
    %8673 = vbcast.lane.b32.xlu0 %v8667, %s8672
    %v8674 = vpop.permute.xlu0 %8673
    %v8675 = vlaneseq
    %v8676 = vshrl.u32 %v8675, 7
    %v8677 = vsub.s32 5, %v8676
    %v8678 = vrot.slane %v8531, %v8677
    %8680 = vbcast.lane.b32.xlu0 %v8678, 256
    %v8681 = vpop.permute.xlu0 %8680
    %s8683 = sor.u32 256, 8
    %8684 = vbcast.lane.b32.xlu0 %v8678, %s8683
    %v8685 = vpop.permute.xlu0 %8684
    %v8686 = vlaneseq
    %v8687 = vshrl.u32 %v8686, 7
    %v8688 = vsub.s32 6, %v8687
    %v8689 = vrot.slane %v8531, %v8688
    %8691 = vbcast.lane.b32.xlu0 %v8689, 256
    %v8692 = vpop.permute.xlu0 %8691
    %s8694 = sor.u32 256, 8
    %8695 = vbcast.lane.b32.xlu0 %v8689, %s8694
    %v8696 = vpop.permute.xlu0 %8695
    %v8697 = vlaneseq
    %v8698 = vshrl.u32 %v8697, 7
    %v8699 = vsub.s32 7, %v8698
    %v8700 = vrot.slane %v8531, %v8699
    %8702 = vbcast.lane.b32.xlu0 %v8700, 256
    %v8703 = vpop.permute.xlu0 %8702
    %s8705 = sor.u32 256, 8
    %8706 = vbcast.lane.b32.xlu0 %v8700, %s8705
    %v8707 = vpop.permute.xlu0 %8706
    %v8708 = vmul.f32 %v7121, %v8538
    %v8709 = vmul.f32 %v7122, %v8542
    %v8710 = vmul.f32 %v7123, %v8549
    %v8711 = vmul.f32 %v7124, %v8553
    %v8712 = vmul.f32 %v7125, %v8560
    %v8713 = vmul.f32 %v7126, %v8564
    %v8714 = vmul.f32 %v7127, %v8571
    %v8715 = vmul.f32 %v7128, %v8575
    %v8716 = vmul.f32 %v7129, %v8582
    %v8717 = vmul.f32 %v7130, %v8586
    %v8718 = vmul.f32 %v7131, %v8593
    %v8719 = vmul.f32 %v7132, %v8597
    %v8720 = vmul.f32 %v7133, %v8604
    %v8721 = vmul.f32 %v7134, %v8608
    %v8722 = vmul.f32 %v7135, %v8615
    %v8723 = vmul.f32 %v7136, %v8619
    %v8724 = vmul.f32 %v7137, %v8626
    %v8725 = vmul.f32 %v7138, %v8630
    %v8726 = vmul.f32 %v7139, %v8637
    %v8727 = vmul.f32 %v7140, %v8641
    %v8728 = vmul.f32 %v7141, %v8648
    %v8729 = vmul.f32 %v7142, %v8652
    %v8730 = vmul.f32 %v7143, %v8659
    %v8731 = vmul.f32 %v7144, %v8663
    %v8732 = vmul.f32 %v7145, %v8670
    %v8733 = vmul.f32 %v7146, %v8674
    %v8734 = vmul.f32 %v7147, %v8681
    %v8735 = vmul.f32 %v7148, %v8685
    %v8736 = vmul.f32 %v7149, %v8692
    %v8737 = vmul.f32 %v7150, %v8696
    %v8738 = vmul.f32 %v7151, %v8703
    %v8739 = vmul.f32 %v7152, %v8707
    %v8740 = vsel %vm1959, %v8708, 0.0
    %v8741 = vsel %vm1959, %v8709, 0.0
    %v8742 = vadd.f32 %v8740, %v8741
    %v8743 = vrot.slane %v8742, 4
    %v8744 = vadd.f32 %v8742, %v8743
    %v8745 = vrot.slane %v8744, 2
    %v8746 = vadd.f32 %v8744, %v8745
    %v8747 = vrot.slane %v8746, 1
    %v8748 = vadd.f32 %v8746, %v8747
    %v8749 = vsel %vm1959, %v8710, 0.0
    %v8750 = vsel %vm1959, %v8711, 0.0
    %v8751 = vadd.f32 %v8749, %v8750
    %v8752 = vrot.slane %v8751, 4
    %v8753 = vadd.f32 %v8751, %v8752
    %v8754 = vrot.slane %v8753, 2
    %v8755 = vadd.f32 %v8753, %v8754
    %v8756 = vrot.slane %v8755, 1
    %v8757 = vadd.f32 %v8755, %v8756
    %v8758 = vsel %vm1959, %v8712, 0.0
    %v8759 = vsel %vm1959, %v8713, 0.0
    %v8760 = vadd.f32 %v8758, %v8759
    %v8761 = vrot.slane %v8760, 4
    %v8762 = vadd.f32 %v8760, %v8761
    %v8763 = vrot.slane %v8762, 2
    %v8764 = vadd.f32 %v8762, %v8763
    %v8765 = vrot.slane %v8764, 1
    %v8766 = vadd.f32 %v8764, %v8765
    %v8767 = vsel %vm1959, %v8714, 0.0
    %v8768 = vsel %vm1959, %v8715, 0.0
    %v8769 = vadd.f32 %v8767, %v8768
    %v8770 = vrot.slane %v8769, 4
    %v8771 = vadd.f32 %v8769, %v8770
    %v8772 = vrot.slane %v8771, 2
    %v8773 = vadd.f32 %v8771, %v8772
    %v8774 = vrot.slane %v8773, 1
    %v8775 = vadd.f32 %v8773, %v8774
    %v8776 = vsel %vm1959, %v8716, 0.0
    %v8777 = vsel %vm1959, %v8717, 0.0
    %v8778 = vadd.f32 %v8776, %v8777
    %v8779 = vrot.slane %v8778, 4
    %v8780 = vadd.f32 %v8778, %v8779
    %v8781 = vrot.slane %v8780, 2
    %v8782 = vadd.f32 %v8780, %v8781
    %v8783 = vrot.slane %v8782, 1
    %v8784 = vadd.f32 %v8782, %v8783
    %v8785 = vsel %vm1959, %v8718, 0.0
    %v8786 = vsel %vm1959, %v8719, 0.0
    %v8787 = vadd.f32 %v8785, %v8786
    %v8788 = vrot.slane %v8787, 4
    %v8789 = vadd.f32 %v8787, %v8788
    %v8790 = vrot.slane %v8789, 2
    %v8791 = vadd.f32 %v8789, %v8790
    %v8792 = vrot.slane %v8791, 1
    %v8793 = vadd.f32 %v8791, %v8792
    %v8794 = vsel %vm1959, %v8720, 0.0
    %v8795 = vsel %vm1959, %v8721, 0.0
    %v8796 = vadd.f32 %v8794, %v8795
    %v8797 = vrot.slane %v8796, 4
    %v8798 = vadd.f32 %v8796, %v8797
    %v8799 = vrot.slane %v8798, 2
    %v8800 = vadd.f32 %v8798, %v8799
    %v8801 = vrot.slane %v8800, 1
    %v8802 = vadd.f32 %v8800, %v8801
    %v8803 = vsel %vm1959, %v8722, 0.0
    %v8804 = vsel %vm1959, %v8723, 0.0
    %v8805 = vadd.f32 %v8803, %v8804
    %v8806 = vrot.slane %v8805, 4
    %v8807 = vadd.f32 %v8805, %v8806
    %v8808 = vrot.slane %v8807, 2
    %v8809 = vadd.f32 %v8807, %v8808
    %v8810 = vrot.slane %v8809, 1
    %v8811 = vadd.f32 %v8809, %v8810
    %v8812 = vsel %vm1959, %v8724, 0.0
    %v8813 = vsel %vm1959, %v8725, 0.0
    %v8814 = vadd.f32 %v8812, %v8813
    %v8815 = vrot.slane %v8814, 4
    %v8816 = vadd.f32 %v8814, %v8815
    %v8817 = vrot.slane %v8816, 2
    %v8818 = vadd.f32 %v8816, %v8817
    %v8819 = vrot.slane %v8818, 1
    %v8820 = vadd.f32 %v8818, %v8819
    %v8821 = vsel %vm1959, %v8726, 0.0
    %v8822 = vsel %vm1959, %v8727, 0.0
    %v8823 = vadd.f32 %v8821, %v8822
    %v8824 = vrot.slane %v8823, 4
    %v8825 = vadd.f32 %v8823, %v8824
    %v8826 = vrot.slane %v8825, 2
    %v8827 = vadd.f32 %v8825, %v8826
    %v8828 = vrot.slane %v8827, 1
    %v8829 = vadd.f32 %v8827, %v8828
    %v8830 = vsel %vm1959, %v8728, 0.0
    %v8831 = vsel %vm1959, %v8729, 0.0
    %v8832 = vadd.f32 %v8830, %v8831
    %v8833 = vrot.slane %v8832, 4
    %v8834 = vadd.f32 %v8832, %v8833
    %v8835 = vrot.slane %v8834, 2
    %v8836 = vadd.f32 %v8834, %v8835
    %v8837 = vrot.slane %v8836, 1
    %v8838 = vadd.f32 %v8836, %v8837
    %v8839 = vsel %vm1959, %v8730, 0.0
    %v8840 = vsel %vm1959, %v8731, 0.0
    %v8841 = vadd.f32 %v8839, %v8840
    %v8842 = vrot.slane %v8841, 4
    %v8843 = vadd.f32 %v8841, %v8842
    %v8844 = vrot.slane %v8843, 2
    %v8845 = vadd.f32 %v8843, %v8844
    %v8846 = vrot.slane %v8845, 1
    %v8847 = vadd.f32 %v8845, %v8846
    %v8848 = vsel %vm1959, %v8732, 0.0
    %v8849 = vsel %vm1959, %v8733, 0.0
    %v8850 = vadd.f32 %v8848, %v8849
    %v8851 = vrot.slane %v8850, 4
    %v8852 = vadd.f32 %v8850, %v8851
    %v8853 = vrot.slane %v8852, 2
    %v8854 = vadd.f32 %v8852, %v8853
    %v8855 = vrot.slane %v8854, 1
    %v8856 = vadd.f32 %v8854, %v8855
    %v8857 = vsel %vm1959, %v8734, 0.0
    %v8858 = vsel %vm1959, %v8735, 0.0
    %v8859 = vadd.f32 %v8857, %v8858
    %v8860 = vrot.slane %v8859, 4
    %v8861 = vadd.f32 %v8859, %v8860
    %v8862 = vrot.slane %v8861, 2
    %v8863 = vadd.f32 %v8861, %v8862
    %v8864 = vrot.slane %v8863, 1
    %v8865 = vadd.f32 %v8863, %v8864
    %v8866 = vsel %vm1959, %v8736, 0.0
    %v8867 = vsel %vm1959, %v8737, 0.0
    %v8868 = vadd.f32 %v8866, %v8867
    %v8869 = vrot.slane %v8868, 4
    %v8870 = vadd.f32 %v8868, %v8869
    %v8871 = vrot.slane %v8870, 2
    %v8872 = vadd.f32 %v8870, %v8871
    %v8873 = vrot.slane %v8872, 1
    %v8874 = vadd.f32 %v8872, %v8873
    %v8875 = vsel %vm1959, %v8738, 0.0
    %v8876 = vsel %vm1959, %v8739, 0.0
    %v8877 = vadd.f32 %v8875, %v8876
    %v8878 = vrot.slane %v8877, 4
    %v8879 = vadd.f32 %v8877, %v8878
    %v8880 = vrot.slane %v8879, 2
    %v8881 = vadd.f32 %v8879, %v8880
    %v8882 = vrot.slane %v8881, 1
    %v8883 = vadd.f32 %v8881, %v8882
    %v8884 = vadd.f32 %v8393, %v8748
    %v8885 = vadd.f32 %v8402, %v8757
    %v8886 = vadd.f32 %v8411, %v8766
    %v8887 = vadd.f32 %v8420, %v8775
    %v8888 = vadd.f32 %v8429, %v8784
    %v8889 = vadd.f32 %v8438, %v8793
    %v8890 = vadd.f32 %v8447, %v8802
    %v8891 = vadd.f32 %v8456, %v8811
    %v8892 = vadd.f32 %v8465, %v8820
    %v8893 = vadd.f32 %v8474, %v8829
    %v8894 = vadd.f32 %v8483, %v8838
    %v8895 = vadd.f32 %v8492, %v8847
    %v8896 = vadd.f32 %v8501, %v8856
    %v8897 = vadd.f32 %v8510, %v8865
    %v8898 = vadd.f32 %v8519, %v8874
    %v8899 = vadd.f32 %v8528, %v8883
    %s8900 = sld [smem:[#allocation8 + $0x6]]
    %v8901 = vstv %s8900
    %v8902 = vadd.f32 %v8884, %v8901
    %v8903 = vadd.f32 %v8885, %v8901
    %v8904 = vadd.f32 %v8886, %v8901
    %v8905 = vadd.f32 %v8887, %v8901
    %v8906 = vadd.f32 %v8888, %v8901
    %v8907 = vadd.f32 %v8889, %v8901
    %v8908 = vadd.f32 %v8890, %v8901
    %v8909 = vadd.f32 %v8891, %v8901
    %v8910 = vadd.f32 %v8892, %v8901
    %v8911 = vadd.f32 %v8893, %v8901
    %v8912 = vadd.f32 %v8894, %v8901
    %v8913 = vadd.f32 %v8895, %v8901
    %v8914 = vadd.f32 %v8896, %v8901
    %v8915 = vadd.f32 %v8897, %v8901
    %v8916 = vadd.f32 %v8898, %v8901
    %v8917 = vadd.f32 %v8899, %v8901
    %v8934 = vsel %vm3020, %v8903, %v8902
    %v8935 = vsel %vm3022, %v8904, %v8934
    %v8936 = vsel %vm3024, %v8905, %v8935
    %v8937 = vsel %vm3026, %v8906, %v8936
    %v8938 = vsel %vm3028, %v8907, %v8937
    %v8939 = vsel %vm3030, %v8908, %v8938
    %v8940 = vsel %vm3032, %v8909, %v8939
    %v8941 = vsel %vm3020, %v8911, %v8910
    %v8942 = vsel %vm3022, %v8912, %v8941
    %v8943 = vsel %vm3024, %v8913, %v8942
    %v8944 = vsel %vm3026, %v8914, %v8943
    %v8945 = vsel %vm3028, %v8915, %v8944
    %v8946 = vsel %vm3030, %v8916, %v8945
    %v8947 = vsel %vm3032, %v8917, %v8946
    %s8950 = scalar_lea.vmem [#allocation16], 96
    %8951 = vst.msk [vmem:[%s8950] sm:$0xff] %vm1959, %v8940
    %8952 = vst.msk [vmem:[%s8950 + $0x8] sm:$0xff] %vm1959, %v8947
    %v8953 = vmul.f32 %v7121, %v5243
    %v8954 = vmul.f32 %v7122, %v5244
    %v8955 = vmul.f32 %v7123, %v5243
    %v8956 = vmul.f32 %v7124, %v5244
    %v8957 = vmul.f32 %v7125, %v5243
    %v8958 = vmul.f32 %v7126, %v5244
    %v8959 = vmul.f32 %v7127, %v5243
    %v8960 = vmul.f32 %v7128, %v5244
    %v8961 = vmul.f32 %v7129, %v5243
    %v8962 = vmul.f32 %v7130, %v5244
    %v8963 = vmul.f32 %v7131, %v5243
    %v8964 = vmul.f32 %v7132, %v5244
    %v8965 = vmul.f32 %v7133, %v5243
    %v8966 = vmul.f32 %v7134, %v5244
    %v8967 = vmul.f32 %v7135, %v5243
    %v8968 = vmul.f32 %v7136, %v5244
    %v8969 = vmul.f32 %v7137, %v5243
    %v8970 = vmul.f32 %v7138, %v5244
    %v8971 = vmul.f32 %v7139, %v5243
    %v8972 = vmul.f32 %v7140, %v5244
    %v8973 = vmul.f32 %v7141, %v5243
    %v8974 = vmul.f32 %v7142, %v5244
    %v8975 = vmul.f32 %v7143, %v5243
    %v8976 = vmul.f32 %v7144, %v5244
    %v8977 = vmul.f32 %v7145, %v5243
    %v8978 = vmul.f32 %v7146, %v5244
    %v8979 = vmul.f32 %v7147, %v5243
    %v8980 = vmul.f32 %v7148, %v5244
    %v8981 = vmul.f32 %v7149, %v5243
    %v8982 = vmul.f32 %v7150, %v5244
    %v8983 = vmul.f32 %v7151, %v5243
    %v8984 = vmul.f32 %v7152, %v5244
    %v8985 = vsel %vm1959, %v8953, 0.0
    %v8986 = vsel %vm1959, %v8954, 0.0
    %v8987 = vadd.f32 %v8985, %v8986
    %v8988 = vrot.slane %v8987, 4
    %v8989 = vadd.f32 %v8987, %v8988
    %v8990 = vrot.slane %v8989, 2
    %v8991 = vadd.f32 %v8989, %v8990
    %v8992 = vrot.slane %v8991, 1
    %v8993 = vadd.f32 %v8991, %v8992
    %v8994 = vsel %vm1959, %v8955, 0.0
    %v8995 = vsel %vm1959, %v8956, 0.0
    %v8996 = vadd.f32 %v8994, %v8995
    %v8997 = vrot.slane %v8996, 4
    %v8998 = vadd.f32 %v8996, %v8997
    %v8999 = vrot.slane %v8998, 2
    %v9000 = vadd.f32 %v8998, %v8999
    %v9001 = vrot.slane %v9000, 1
    %v9002 = vadd.f32 %v9000, %v9001
    %v9003 = vsel %vm1959, %v8957, 0.0
    %v9004 = vsel %vm1959, %v8958, 0.0
    %v9005 = vadd.f32 %v9003, %v9004
    %v9006 = vrot.slane %v9005, 4
    %v9007 = vadd.f32 %v9005, %v9006
    %v9008 = vrot.slane %v9007, 2
    %v9009 = vadd.f32 %v9007, %v9008
    %v9010 = vrot.slane %v9009, 1
    %v9011 = vadd.f32 %v9009, %v9010
    %v9012 = vsel %vm1959, %v8959, 0.0
    %v9013 = vsel %vm1959, %v8960, 0.0
    %v9014 = vadd.f32 %v9012, %v9013
    %v9015 = vrot.slane %v9014, 4
    %v9016 = vadd.f32 %v9014, %v9015
    %v9017 = vrot.slane %v9016, 2
    %v9018 = vadd.f32 %v9016, %v9017
    %v9019 = vrot.slane %v9018, 1
    %v9020 = vadd.f32 %v9018, %v9019
    %v9021 = vsel %vm1959, %v8961, 0.0
    %v9022 = vsel %vm1959, %v8962, 0.0
    %v9023 = vadd.f32 %v9021, %v9022
    %v9024 = vrot.slane %v9023, 4
    %v9025 = vadd.f32 %v9023, %v9024
    %v9026 = vrot.slane %v9025, 2
    %v9027 = vadd.f32 %v9025, %v9026
    %v9028 = vrot.slane %v9027, 1
    %v9029 = vadd.f32 %v9027, %v9028
    %v9030 = vsel %vm1959, %v8963, 0.0
    %v9031 = vsel %vm1959, %v8964, 0.0
    %v9032 = vadd.f32 %v9030, %v9031
    %v9033 = vrot.slane %v9032, 4
    %v9034 = vadd.f32 %v9032, %v9033
    %v9035 = vrot.slane %v9034, 2
    %v9036 = vadd.f32 %v9034, %v9035
    %v9037 = vrot.slane %v9036, 1
    %v9038 = vadd.f32 %v9036, %v9037
    %v9039 = vsel %vm1959, %v8965, 0.0
    %v9040 = vsel %vm1959, %v8966, 0.0
    %v9041 = vadd.f32 %v9039, %v9040
    %v9042 = vrot.slane %v9041, 4
    %v9043 = vadd.f32 %v9041, %v9042
    %v9044 = vrot.slane %v9043, 2
    %v9045 = vadd.f32 %v9043, %v9044
    %v9046 = vrot.slane %v9045, 1
    %v9047 = vadd.f32 %v9045, %v9046
    %v9048 = vsel %vm1959, %v8967, 0.0
    %v9049 = vsel %vm1959, %v8968, 0.0
    %v9050 = vadd.f32 %v9048, %v9049
    %v9051 = vrot.slane %v9050, 4
    %v9052 = vadd.f32 %v9050, %v9051
    %v9053 = vrot.slane %v9052, 2
    %v9054 = vadd.f32 %v9052, %v9053
    %v9055 = vrot.slane %v9054, 1
    %v9056 = vadd.f32 %v9054, %v9055
    %v9057 = vsel %vm1959, %v8969, 0.0
    %v9058 = vsel %vm1959, %v8970, 0.0
    %v9059 = vadd.f32 %v9057, %v9058
    %v9060 = vrot.slane %v9059, 4
    %v9061 = vadd.f32 %v9059, %v9060
    %v9062 = vrot.slane %v9061, 2
    %v9063 = vadd.f32 %v9061, %v9062
    %v9064 = vrot.slane %v9063, 1
    %v9065 = vadd.f32 %v9063, %v9064
    %v9066 = vsel %vm1959, %v8971, 0.0
    %v9067 = vsel %vm1959, %v8972, 0.0
    %v9068 = vadd.f32 %v9066, %v9067
    %v9069 = vrot.slane %v9068, 4
    %v9070 = vadd.f32 %v9068, %v9069
    %v9071 = vrot.slane %v9070, 2
    %v9072 = vadd.f32 %v9070, %v9071
    %v9073 = vrot.slane %v9072, 1
    %v9074 = vadd.f32 %v9072, %v9073
    %v9075 = vsel %vm1959, %v8973, 0.0
    %v9076 = vsel %vm1959, %v8974, 0.0
    %v9077 = vadd.f32 %v9075, %v9076
    %v9078 = vrot.slane %v9077, 4
    %v9079 = vadd.f32 %v9077, %v9078
    %v9080 = vrot.slane %v9079, 2
    %v9081 = vadd.f32 %v9079, %v9080
    %v9082 = vrot.slane %v9081, 1
    %v9083 = vadd.f32 %v9081, %v9082
    %v9084 = vsel %vm1959, %v8975, 0.0
    %v9085 = vsel %vm1959, %v8976, 0.0
    %v9086 = vadd.f32 %v9084, %v9085
    %v9087 = vrot.slane %v9086, 4
    %v9088 = vadd.f32 %v9086, %v9087
    %v9089 = vrot.slane %v9088, 2
    %v9090 = vadd.f32 %v9088, %v9089
    %v9091 = vrot.slane %v9090, 1
    %v9092 = vadd.f32 %v9090, %v9091
    %v9093 = vsel %vm1959, %v8977, 0.0
    %v9094 = vsel %vm1959, %v8978, 0.0
    %v9095 = vadd.f32 %v9093, %v9094
    %v9096 = vrot.slane %v9095, 4
    %v9097 = vadd.f32 %v9095, %v9096
    %v9098 = vrot.slane %v9097, 2
    %v9099 = vadd.f32 %v9097, %v9098
    %v9100 = vrot.slane %v9099, 1
    %v9101 = vadd.f32 %v9099, %v9100
    %v9102 = vsel %vm1959, %v8979, 0.0
    %v9103 = vsel %vm1959, %v8980, 0.0
    %v9104 = vadd.f32 %v9102, %v9103
    %v9105 = vrot.slane %v9104, 4
    %v9106 = vadd.f32 %v9104, %v9105
    %v9107 = vrot.slane %v9106, 2
    %v9108 = vadd.f32 %v9106, %v9107
    %v9109 = vrot.slane %v9108, 1
    %v9110 = vadd.f32 %v9108, %v9109
    %v9111 = vsel %vm1959, %v8981, 0.0
    %v9112 = vsel %vm1959, %v8982, 0.0
    %v9113 = vadd.f32 %v9111, %v9112
    %v9114 = vrot.slane %v9113, 4
    %v9115 = vadd.f32 %v9113, %v9114
    %v9116 = vrot.slane %v9115, 2
    %v9117 = vadd.f32 %v9115, %v9116
    %v9118 = vrot.slane %v9117, 1
    %v9119 = vadd.f32 %v9117, %v9118
    %v9120 = vsel %vm1959, %v8983, 0.0
    %v9121 = vsel %vm1959, %v8984, 0.0
    %v9122 = vadd.f32 %v9120, %v9121
    %v9123 = vrot.slane %v9122, 4
    %v9124 = vadd.f32 %v9122, %v9123
    %v9125 = vrot.slane %v9124, 2
    %v9126 = vadd.f32 %v9124, %v9125
    %v9127 = vrot.slane %v9126, 1
    %v9128 = vadd.f32 %v9126, %v9127
    %s9129 = scalar_lea.vmem [#allocation14], 112
    %v9130 = vld [vmem:[%s9129] sm:$0xff]
    %v9131 = vld [vmem:[%s9129 + $0x8] sm:$0xff]
    %v9132 = vlaneseq
    %v9133 = vshrl.u32 %v9132, 7
    %v9134 = vsub.s32 0, %v9133
    %v9135 = vrot.slane %v9130, %v9134
    %9137 = vbcast.lane.b32.xlu0 %v9135, 256
    %v9138 = vpop.permute.xlu0 %9137
    %s9140 = sor.u32 256, 8
    %9141 = vbcast.lane.b32.xlu0 %v9135, %s9140
    %v9142 = vpop.permute.xlu0 %9141
    %v9143 = vlaneseq
    %v9144 = vshrl.u32 %v9143, 7
    %v9145 = vsub.s32 1, %v9144
    %v9146 = vrot.slane %v9130, %v9145
    %9148 = vbcast.lane.b32.xlu0 %v9146, 256
    %v9149 = vpop.permute.xlu0 %9148
    %s9151 = sor.u32 256, 8
    %9152 = vbcast.lane.b32.xlu0 %v9146, %s9151
    %v9153 = vpop.permute.xlu0 %9152
    %v9154 = vlaneseq
    %v9155 = vshrl.u32 %v9154, 7
    %v9156 = vsub.s32 2, %v9155
    %v9157 = vrot.slane %v9130, %v9156
    %9159 = vbcast.lane.b32.xlu0 %v9157, 256
    %v9160 = vpop.permute.xlu0 %9159
    %s9162 = sor.u32 256, 8
    %9163 = vbcast.lane.b32.xlu0 %v9157, %s9162
    %v9164 = vpop.permute.xlu0 %9163
    %v9165 = vlaneseq
    %v9166 = vshrl.u32 %v9165, 7
    %v9167 = vsub.s32 3, %v9166
    %v9168 = vrot.slane %v9130, %v9167
    %9170 = vbcast.lane.b32.xlu0 %v9168, 256
    %v9171 = vpop.permute.xlu0 %9170
    %s9173 = sor.u32 256, 8
    %9174 = vbcast.lane.b32.xlu0 %v9168, %s9173
    %v9175 = vpop.permute.xlu0 %9174
    %v9176 = vlaneseq
    %v9177 = vshrl.u32 %v9176, 7
    %v9178 = vsub.s32 4, %v9177
    %v9179 = vrot.slane %v9130, %v9178
    %9181 = vbcast.lane.b32.xlu0 %v9179, 256
    %v9182 = vpop.permute.xlu0 %9181
    %s9184 = sor.u32 256, 8
    %9185 = vbcast.lane.b32.xlu0 %v9179, %s9184
    %v9186 = vpop.permute.xlu0 %9185
    %v9187 = vlaneseq
    %v9188 = vshrl.u32 %v9187, 7
    %v9189 = vsub.s32 5, %v9188
    %v9190 = vrot.slane %v9130, %v9189
    %9192 = vbcast.lane.b32.xlu0 %v9190, 256
    %v9193 = vpop.permute.xlu0 %9192
    %s9195 = sor.u32 256, 8
    %9196 = vbcast.lane.b32.xlu0 %v9190, %s9195
    %v9197 = vpop.permute.xlu0 %9196
    %v9198 = vlaneseq
    %v9199 = vshrl.u32 %v9198, 7
    %v9200 = vsub.s32 6, %v9199
    %v9201 = vrot.slane %v9130, %v9200
    %9203 = vbcast.lane.b32.xlu0 %v9201, 256
    %v9204 = vpop.permute.xlu0 %9203
    %s9206 = sor.u32 256, 8
    %9207 = vbcast.lane.b32.xlu0 %v9201, %s9206
    %v9208 = vpop.permute.xlu0 %9207
    %v9209 = vlaneseq
    %v9210 = vshrl.u32 %v9209, 7
    %v9211 = vsub.s32 7, %v9210
    %v9212 = vrot.slane %v9130, %v9211
    %9214 = vbcast.lane.b32.xlu0 %v9212, 256
    %v9215 = vpop.permute.xlu0 %9214
    %s9217 = sor.u32 256, 8
    %9218 = vbcast.lane.b32.xlu0 %v9212, %s9217
    %v9219 = vpop.permute.xlu0 %9218
    %v9220 = vlaneseq
    %v9221 = vshrl.u32 %v9220, 7
    %v9222 = vsub.s32 0, %v9221
    %v9223 = vrot.slane %v9131, %v9222
    %9225 = vbcast.lane.b32.xlu0 %v9223, 256
    %v9226 = vpop.permute.xlu0 %9225
    %s9228 = sor.u32 256, 8
    %9229 = vbcast.lane.b32.xlu0 %v9223, %s9228
    %v9230 = vpop.permute.xlu0 %9229
    %v9231 = vlaneseq
    %v9232 = vshrl.u32 %v9231, 7
    %v9233 = vsub.s32 1, %v9232
    %v9234 = vrot.slane %v9131, %v9233
    %9236 = vbcast.lane.b32.xlu0 %v9234, 256
    %v9237 = vpop.permute.xlu0 %9236
    %s9239 = sor.u32 256, 8
    %9240 = vbcast.lane.b32.xlu0 %v9234, %s9239
    %v9241 = vpop.permute.xlu0 %9240
    %v9242 = vlaneseq
    %v9243 = vshrl.u32 %v9242, 7
    %v9244 = vsub.s32 2, %v9243
    %v9245 = vrot.slane %v9131, %v9244
    %9247 = vbcast.lane.b32.xlu0 %v9245, 256
    %v9248 = vpop.permute.xlu0 %9247
    %s9250 = sor.u32 256, 8
    %9251 = vbcast.lane.b32.xlu0 %v9245, %s9250
    %v9252 = vpop.permute.xlu0 %9251
    %v9253 = vlaneseq
    %v9254 = vshrl.u32 %v9253, 7
    %v9255 = vsub.s32 3, %v9254
    %v9256 = vrot.slane %v9131, %v9255
    %9258 = vbcast.lane.b32.xlu0 %v9256, 256
    %v9259 = vpop.permute.xlu0 %9258
    %s9261 = sor.u32 256, 8
    %9262 = vbcast.lane.b32.xlu0 %v9256, %s9261
    %v9263 = vpop.permute.xlu0 %9262
    %v9264 = vlaneseq
    %v9265 = vshrl.u32 %v9264, 7
    %v9266 = vsub.s32 4, %v9265
    %v9267 = vrot.slane %v9131, %v9266
    %9269 = vbcast.lane.b32.xlu0 %v9267, 256
    %v9270 = vpop.permute.xlu0 %9269
    %s9272 = sor.u32 256, 8
    %9273 = vbcast.lane.b32.xlu0 %v9267, %s9272
    %v9274 = vpop.permute.xlu0 %9273
    %v9275 = vlaneseq
    %v9276 = vshrl.u32 %v9275, 7
    %v9277 = vsub.s32 5, %v9276
    %v9278 = vrot.slane %v9131, %v9277
    %9280 = vbcast.lane.b32.xlu0 %v9278, 256
    %v9281 = vpop.permute.xlu0 %9280
    %s9283 = sor.u32 256, 8
    %9284 = vbcast.lane.b32.xlu0 %v9278, %s9283
    %v9285 = vpop.permute.xlu0 %9284
    %v9286 = vlaneseq
    %v9287 = vshrl.u32 %v9286, 7
    %v9288 = vsub.s32 6, %v9287
    %v9289 = vrot.slane %v9131, %v9288
    %9291 = vbcast.lane.b32.xlu0 %v9289, 256
    %v9292 = vpop.permute.xlu0 %9291
    %s9294 = sor.u32 256, 8
    %9295 = vbcast.lane.b32.xlu0 %v9289, %s9294
    %v9296 = vpop.permute.xlu0 %9295
    %v9297 = vlaneseq
    %v9298 = vshrl.u32 %v9297, 7
    %v9299 = vsub.s32 7, %v9298
    %v9300 = vrot.slane %v9131, %v9299
    %9302 = vbcast.lane.b32.xlu0 %v9300, 256
    %v9303 = vpop.permute.xlu0 %9302
    %s9305 = sor.u32 256, 8
    %9306 = vbcast.lane.b32.xlu0 %v9300, %s9305
    %v9307 = vpop.permute.xlu0 %9306
    %v9308 = vmul.f32 %v7121, %v9138
    %v9309 = vmul.f32 %v7122, %v9142
    %v9310 = vmul.f32 %v7123, %v9149
    %v9311 = vmul.f32 %v7124, %v9153
    %v9312 = vmul.f32 %v7125, %v9160
    %v9313 = vmul.f32 %v7126, %v9164
    %v9314 = vmul.f32 %v7127, %v9171
    %v9315 = vmul.f32 %v7128, %v9175
    %v9316 = vmul.f32 %v7129, %v9182
    %v9317 = vmul.f32 %v7130, %v9186
    %v9318 = vmul.f32 %v7131, %v9193
    %v9319 = vmul.f32 %v7132, %v9197
    %v9320 = vmul.f32 %v7133, %v9204
    %v9321 = vmul.f32 %v7134, %v9208
    %v9322 = vmul.f32 %v7135, %v9215
    %v9323 = vmul.f32 %v7136, %v9219
    %v9324 = vmul.f32 %v7137, %v9226
    %v9325 = vmul.f32 %v7138, %v9230
    %v9326 = vmul.f32 %v7139, %v9237
    %v9327 = vmul.f32 %v7140, %v9241
    %v9328 = vmul.f32 %v7141, %v9248
    %v9329 = vmul.f32 %v7142, %v9252
    %v9330 = vmul.f32 %v7143, %v9259
    %v9331 = vmul.f32 %v7144, %v9263
    %v9332 = vmul.f32 %v7145, %v9270
    %v9333 = vmul.f32 %v7146, %v9274
    %v9334 = vmul.f32 %v7147, %v9281
    %v9335 = vmul.f32 %v7148, %v9285
    %v9336 = vmul.f32 %v7149, %v9292
    %v9337 = vmul.f32 %v7150, %v9296
    %v9338 = vmul.f32 %v7151, %v9303
    %v9339 = vmul.f32 %v7152, %v9307
    %v9340 = vsel %vm1959, %v9308, 0.0
    %v9341 = vsel %vm1959, %v9309, 0.0
    %v9342 = vadd.f32 %v9340, %v9341
    %v9343 = vrot.slane %v9342, 4
    %v9344 = vadd.f32 %v9342, %v9343
    %v9345 = vrot.slane %v9344, 2
    %v9346 = vadd.f32 %v9344, %v9345
    %v9347 = vrot.slane %v9346, 1
    %v9348 = vadd.f32 %v9346, %v9347
    %v9349 = vsel %vm1959, %v9310, 0.0
    %v9350 = vsel %vm1959, %v9311, 0.0
    %v9351 = vadd.f32 %v9349, %v9350
    %v9352 = vrot.slane %v9351, 4
    %v9353 = vadd.f32 %v9351, %v9352
    %v9354 = vrot.slane %v9353, 2
    %v9355 = vadd.f32 %v9353, %v9354
    %v9356 = vrot.slane %v9355, 1
    %v9357 = vadd.f32 %v9355, %v9356
    %v9358 = vsel %vm1959, %v9312, 0.0
    %v9359 = vsel %vm1959, %v9313, 0.0
    %v9360 = vadd.f32 %v9358, %v9359
    %v9361 = vrot.slane %v9360, 4
    %v9362 = vadd.f32 %v9360, %v9361
    %v9363 = vrot.slane %v9362, 2
    %v9364 = vadd.f32 %v9362, %v9363
    %v9365 = vrot.slane %v9364, 1
    %v9366 = vadd.f32 %v9364, %v9365
    %v9367 = vsel %vm1959, %v9314, 0.0
    %v9368 = vsel %vm1959, %v9315, 0.0
    %v9369 = vadd.f32 %v9367, %v9368
    %v9370 = vrot.slane %v9369, 4
    %v9371 = vadd.f32 %v9369, %v9370
    %v9372 = vrot.slane %v9371, 2
    %v9373 = vadd.f32 %v9371, %v9372
    %v9374 = vrot.slane %v9373, 1
    %v9375 = vadd.f32 %v9373, %v9374
    %v9376 = vsel %vm1959, %v9316, 0.0
    %v9377 = vsel %vm1959, %v9317, 0.0
    %v9378 = vadd.f32 %v9376, %v9377
    %v9379 = vrot.slane %v9378, 4
    %v9380 = vadd.f32 %v9378, %v9379
    %v9381 = vrot.slane %v9380, 2
    %v9382 = vadd.f32 %v9380, %v9381
    %v9383 = vrot.slane %v9382, 1
    %v9384 = vadd.f32 %v9382, %v9383
    %v9385 = vsel %vm1959, %v9318, 0.0
    %v9386 = vsel %vm1959, %v9319, 0.0
    %v9387 = vadd.f32 %v9385, %v9386
    %v9388 = vrot.slane %v9387, 4
    %v9389 = vadd.f32 %v9387, %v9388
    %v9390 = vrot.slane %v9389, 2
    %v9391 = vadd.f32 %v9389, %v9390
    %v9392 = vrot.slane %v9391, 1
    %v9393 = vadd.f32 %v9391, %v9392
    %v9394 = vsel %vm1959, %v9320, 0.0
    %v9395 = vsel %vm1959, %v9321, 0.0
    %v9396 = vadd.f32 %v9394, %v9395
    %v9397 = vrot.slane %v9396, 4
    %v9398 = vadd.f32 %v9396, %v9397
    %v9399 = vrot.slane %v9398, 2
    %v9400 = vadd.f32 %v9398, %v9399
    %v9401 = vrot.slane %v9400, 1
    %v9402 = vadd.f32 %v9400, %v9401
    %v9403 = vsel %vm1959, %v9322, 0.0
    %v9404 = vsel %vm1959, %v9323, 0.0
    %v9405 = vadd.f32 %v9403, %v9404
    %v9406 = vrot.slane %v9405, 4
    %v9407 = vadd.f32 %v9405, %v9406
    %v9408 = vrot.slane %v9407, 2
    %v9409 = vadd.f32 %v9407, %v9408
    %v9410 = vrot.slane %v9409, 1
    %v9411 = vadd.f32 %v9409, %v9410
    %v9412 = vsel %vm1959, %v9324, 0.0
    %v9413 = vsel %vm1959, %v9325, 0.0
    %v9414 = vadd.f32 %v9412, %v9413
    %v9415 = vrot.slane %v9414, 4
    %v9416 = vadd.f32 %v9414, %v9415
    %v9417 = vrot.slane %v9416, 2
    %v9418 = vadd.f32 %v9416, %v9417
    %v9419 = vrot.slane %v9418, 1
    %v9420 = vadd.f32 %v9418, %v9419
    %v9421 = vsel %vm1959, %v9326, 0.0
    %v9422 = vsel %vm1959, %v9327, 0.0
    %v9423 = vadd.f32 %v9421, %v9422
    %v9424 = vrot.slane %v9423, 4
    %v9425 = vadd.f32 %v9423, %v9424
    %v9426 = vrot.slane %v9425, 2
    %v9427 = vadd.f32 %v9425, %v9426
    %v9428 = vrot.slane %v9427, 1
    %v9429 = vadd.f32 %v9427, %v9428
    %v9430 = vsel %vm1959, %v9328, 0.0
    %v9431 = vsel %vm1959, %v9329, 0.0
    %v9432 = vadd.f32 %v9430, %v9431
    %v9433 = vrot.slane %v9432, 4
    %v9434 = vadd.f32 %v9432, %v9433
    %v9435 = vrot.slane %v9434, 2
    %v9436 = vadd.f32 %v9434, %v9435
    %v9437 = vrot.slane %v9436, 1
    %v9438 = vadd.f32 %v9436, %v9437
    %v9439 = vsel %vm1959, %v9330, 0.0
    %v9440 = vsel %vm1959, %v9331, 0.0
    %v9441 = vadd.f32 %v9439, %v9440
    %v9442 = vrot.slane %v9441, 4
    %v9443 = vadd.f32 %v9441, %v9442
    %v9444 = vrot.slane %v9443, 2
    %v9445 = vadd.f32 %v9443, %v9444
    %v9446 = vrot.slane %v9445, 1
    %v9447 = vadd.f32 %v9445, %v9446
    %v9448 = vsel %vm1959, %v9332, 0.0
    %v9449 = vsel %vm1959, %v9333, 0.0
    %v9450 = vadd.f32 %v9448, %v9449
    %v9451 = vrot.slane %v9450, 4
    %v9452 = vadd.f32 %v9450, %v9451
    %v9453 = vrot.slane %v9452, 2
    %v9454 = vadd.f32 %v9452, %v9453
    %v9455 = vrot.slane %v9454, 1
    %v9456 = vadd.f32 %v9454, %v9455
    %v9457 = vsel %vm1959, %v9334, 0.0
    %v9458 = vsel %vm1959, %v9335, 0.0
    %v9459 = vadd.f32 %v9457, %v9458
    %v9460 = vrot.slane %v9459, 4
    %v9461 = vadd.f32 %v9459, %v9460
    %v9462 = vrot.slane %v9461, 2
    %v9463 = vadd.f32 %v9461, %v9462
    %v9464 = vrot.slane %v9463, 1
    %v9465 = vadd.f32 %v9463, %v9464
    %v9466 = vsel %vm1959, %v9336, 0.0
    %v9467 = vsel %vm1959, %v9337, 0.0
    %v9468 = vadd.f32 %v9466, %v9467
    %v9469 = vrot.slane %v9468, 4
    %v9470 = vadd.f32 %v9468, %v9469
    %v9471 = vrot.slane %v9470, 2
    %v9472 = vadd.f32 %v9470, %v9471
    %v9473 = vrot.slane %v9472, 1
    %v9474 = vadd.f32 %v9472, %v9473
    %v9475 = vsel %vm1959, %v9338, 0.0
    %v9476 = vsel %vm1959, %v9339, 0.0
    %v9477 = vadd.f32 %v9475, %v9476
    %v9478 = vrot.slane %v9477, 4
    %v9479 = vadd.f32 %v9477, %v9478
    %v9480 = vrot.slane %v9479, 2
    %v9481 = vadd.f32 %v9479, %v9480
    %v9482 = vrot.slane %v9481, 1
    %v9483 = vadd.f32 %v9481, %v9482
    %v9484 = vadd.f32 %v8993, %v9348
    %v9485 = vadd.f32 %v9002, %v9357
    %v9486 = vadd.f32 %v9011, %v9366
    %v9487 = vadd.f32 %v9020, %v9375
    %v9488 = vadd.f32 %v9029, %v9384
    %v9489 = vadd.f32 %v9038, %v9393
    %v9490 = vadd.f32 %v9047, %v9402
    %v9491 = vadd.f32 %v9056, %v9411
    %v9492 = vadd.f32 %v9065, %v9420
    %v9493 = vadd.f32 %v9074, %v9429
    %v9494 = vadd.f32 %v9083, %v9438
    %v9495 = vadd.f32 %v9092, %v9447
    %v9496 = vadd.f32 %v9101, %v9456
    %v9497 = vadd.f32 %v9110, %v9465
    %v9498 = vadd.f32 %v9119, %v9474
    %v9499 = vadd.f32 %v9128, %v9483
    %s9500 = sld [smem:[#allocation8 + $0x7]]
    %v9501 = vstv %s9500
    %v9502 = vadd.f32 %v9484, %v9501
    %v9503 = vadd.f32 %v9485, %v9501
    %v9504 = vadd.f32 %v9486, %v9501
    %v9505 = vadd.f32 %v9487, %v9501
    %v9506 = vadd.f32 %v9488, %v9501
    %v9507 = vadd.f32 %v9489, %v9501
    %v9508 = vadd.f32 %v9490, %v9501
    %v9509 = vadd.f32 %v9491, %v9501
    %v9510 = vadd.f32 %v9492, %v9501
    %v9511 = vadd.f32 %v9493, %v9501
    %v9512 = vadd.f32 %v9494, %v9501
    %v9513 = vadd.f32 %v9495, %v9501
    %v9514 = vadd.f32 %v9496, %v9501
    %v9515 = vadd.f32 %v9497, %v9501
    %v9516 = vadd.f32 %v9498, %v9501
    %v9517 = vadd.f32 %v9499, %v9501
    %v9534 = vsel %vm3020, %v9503, %v9502
    %v9535 = vsel %vm3022, %v9504, %v9534
    %v9536 = vsel %vm3024, %v9505, %v9535
    %v9537 = vsel %vm3026, %v9506, %v9536
    %v9538 = vsel %vm3028, %v9507, %v9537
    %v9539 = vsel %vm3030, %v9508, %v9538
    %v9540 = vsel %vm3032, %v9509, %v9539
    %v9541 = vsel %vm3020, %v9511, %v9510
    %v9542 = vsel %vm3022, %v9512, %v9541
    %v9543 = vsel %vm3024, %v9513, %v9542
    %v9544 = vsel %vm3026, %v9514, %v9543
    %v9545 = vsel %vm3028, %v9515, %v9544
    %v9546 = vsel %vm3030, %v9516, %v9545
    %v9547 = vsel %vm3032, %v9517, %v9546
    %s9550 = scalar_lea.vmem [#allocation16], 112
    %9551 = vst.msk [vmem:[%s9550] sm:$0xff] %vm1959, %v9540
    %9552 = vst.msk [vmem:[%s9550 + $0x8] sm:$0xff] %vm1959, %v9547
    // Predicated region
    $region58: #{tpu_custom_call.1} parent=1 // pred_check
      _
    $region59: #{tpu_custom_call.1} parent=1 // pred_check_branch
      %9554 = sbr.rel (0) target = $region61
    $region60: #{tpu_custom_call.1} parent=1 // pred_region
      %s9556 = ssub.s32 2048, 2048
      %9557 = vsyncadd [#allocation4], %s9556
      %s9558 = sshll.u32 [#allocation16], 4
      %s9559 = int_to_ptr.vmem [resolvable:$true] %s9558
      %9564 = dma.vmem_to_hbm [thread:$0]  %s9559, 2048, %s7, [#allocation4], 128, 128, 8
    $region61: #{tpu_custom_call.1} parent=1 // pred_fallthru
      _
    // Predicated region
    $region62: #{tpu_custom_call.1} parent=1 // pred_check
      _
    $region63: #{tpu_custom_call.1} parent=1 // pred_check_branch
      %9566 = sbr.rel (0) target = $region65
    $region64: #{tpu_custom_call.1} parent=1 // pred_region
      %9567 = dma.done [#allocation4], 2048
    $region65: #{tpu_custom_call.1} parent=1 // pred_fallthru
      _
    %9568 = vsyncpa [#allocation3], 1
    %9569 = vsyncpa [#allocation12], 1
    %9570 = vsyncpa [#allocation15], 1
    %9571 = vsyncpa [#allocation4], 1
    %9572 = vsyncpa [#allocation5], 1
    %9573 = vsyncpa [#allocation6], 1
    %9574 = vsyncpa [#allocation9], 1

</llo_original>
